<compile_context>
chip_gen: v7x
topology: tpu7x:2x2x1
jax: 0.10.0
libtpu: 0.0.40
codegen_flags: <defaults>
</compile_context>

<pallas_src>
import functools
import math

import jax
import jax.numpy as jnp
from jax.experimental import pallas as pl
from jax.experimental.pallas import tpu as pltpu

EPS = 1e-6
NEG_INF = -1e9

# Per-layer parameter list layout (26 entries):
#  0 ln1_g  1 ln1_b  2 Wq1  3 bq1  4 Wk1  5 bk1  6 Wv1  7 bv1  8 Wo1  9 bo1
# 10 ln2_g 11 ln2_b 12 Wq2 13 bq2 14 Wk2 15 bk2 16 Wv2 17 bv2 18 Wo2 19 bo2
# 20 ln3_g 21 ln3_b 22 W1  23 b1  24 W2  25 b2
_MATMUL_W_IDX = (2, 4, 6, 8, 12, 14, 16, 18, 22, 24)   # bf16 MXU operands
_SCALE_IDX = (2, 3, 12, 13)                              # fold 1/sqrt(head_dim)


# ---------------------------------------------------------------------------
# In-kernel math helpers
# ---------------------------------------------------------------------------
def _layer_norm(x, gamma, beta, eps=EPS):
    # PyTorch: x.std() is unbiased (ddof=1); normalization is (x - mean)/(std + eps)
    d = x.shape[-1]
    mean = jnp.mean(x, axis=-1, keepdims=True)
    xc = x - mean
    var = jnp.sum(xc * xc, axis=-1, keepdims=True) * (1.0 / (d - 1))
    inv = pl.reciprocal(jnp.sqrt(var) + eps)      # exact 1/x; normalization is a mul
    return gamma * (xc * inv) + beta


def _mha(q16, q_rows, kv16, kv_rows, wq, bq, wk, bk, wv, bv, wo, bo, bias3, heads):
    """Multi-head attention on flattened (batch*seq, D) bf16 activations.

    q16 : (bb*sq, D) bf16, kv16 : (bb*sk, D) bf16,
    bias3 : (bb, sq, sk) additive mask bias (already broadcast once).
    The 1/sqrt(head_dim) scale is pre-folded into wq / bq by the wrapper.
    Accumulation is f32; the per-head output projection is accumulated
    (no lane-dim concatenate).
    """
    bb, sq = q_rows
    _, sk = kv_rows
    d = wq.shape[-1]
    hd = d // heads

    # Large-M MXU matmuls over the full (B*S, D) slab, bf16 in / f32 accumulate.
    q = jnp.dot(q16, wq, preferred_element_type=jnp.float32) + bq
    k = jnp.dot(kv16, wk, preferred_element_type=jnp.float32) + bk
    v = jnp.dot(kv16, wv, preferred_element_type=jnp.float32) + bv

    q3 = q.astype(jnp.bfloat16).reshape(bb, sq, d)
    k3 = k.astype(jnp.bfloat16).reshape(bb, sk, d)
    v3 = v.astype(jnp.bfloat16).reshape(bb, sk, d)

    out = None
    for h in range(heads):                        # static, small unrolled loop
        sl = slice(h * hd, (h + 1) * hd)
        s = jnp.einsum("bqd,bkd->bqk", q3[:, :, sl], k3[:, :, sl],
                       preferred_element_type=jnp.float32)
        s = s + bias3                             # hoisted additive mask bias
        mx = jnp.max(s, axis=-1, keepdims=True)
        p = jnp.exp(s - mx)
        p = p * pl.reciprocal(jnp.sum(p, axis=-1, keepdims=True), approx=True)
        o = jnp.einsum("bqk,bkd->bqd", p.astype(jnp.bfloat16), v3[:, :, sl],
                       preferred_element_type=jnp.float32)
        # Per-head output projection accumulate (row-slice of Wo: sublane dim).
        contrib = jnp.dot(o.reshape(bb * sq, hd).astype(jnp.bfloat16), wo[sl, :],
                          preferred_element_type=jnp.float32)
        out = contrib if out is None else out + contrib
    return out + bo


# ---------------------------------------------------------------------------
# Fused decoder-stack Pallas kernel
#   grid = (batch_chunks, layers); activation resident in VMEM scratch across
#   the layer axis; final LayerNorm applied on the last layer step.
# ---------------------------------------------------------------------------
def decoder_stack_kernel(
    enc_ref, dec_ref, tgt_bias_ref, src_bias_ref,
    ln1_g, ln1_b, wq1, bq1, wk1, bk1, wv1, bv1, wo1, bo1,
    ln2_g, ln2_b, wq2, bq2, wk2, bk2, wv2, bv2, wo2, bo2,
    ln3_g, ln3_b, w1, b1, w2, b2,
    lnf_g, lnf_b,
    out_ref,
    x_scratch,
    *, heads,
):
    layer = pl.program_id(1)
    n_layers = pl.num_programs(1)

    bb, sd, d = dec_ref.shape
    se = enc_ref.shape[1]
    m = bb * sd

    # Initialize the resident activation once per batch chunk.
    @pl.when(layer == 0)
    def _():
        x_scratch[...] = dec_ref[...].reshape(m, d).astype(jnp.float32)

    x = x_scratch[...]                                       # (B*Sd, D) f32
    enc16 = enc_ref[...].reshape(bb * se, d).astype(jnp.bfloat16)

    # Hoist the mask-bias broadcasts out of the unrolled head loops.
    tgt_bias3 = jnp.broadcast_to(tgt_bias_ref[...], (bb, sd, sd))
    src_bias3 = jnp.broadcast_to(src_bias_ref[...], (bb, sd, se))

    # 1) masked self-attention with pre-LN + residual
    h1 = _layer_norm(x, ln1_g[0], ln1_b[0]).astype(jnp.bfloat16)
    x = x + _mha(h1, (bb, sd), h1, (bb, sd),
                 wq1[0], bq1[0], wk1[0], bk1[0], wv1[0], bv1[0], wo1[0], bo1[0],
                 tgt_bias3, heads)

    # 2) cross-attention against the (raw) encoder output with pre-LN + residual
    h2 = _layer_norm(x, ln2_g[0], ln2_b[0]).astype(jnp.bfloat16)
    x = x + _mha(h2, (bb, sd), enc16, (bb, se),
                 wq2[0], bq2[0], wk2[0], bk2[0], wv2[0], bv2[0], wo2[0], bo2[0],
                 src_bias3, heads)

    # 3) FFN (Linear -> ReLU -> Linear) with pre-LN + residual
    h3 = _layer_norm(x, ln3_g[0], ln3_b[0]).astype(jnp.bfloat16)
    f = jnp.maximum(jnp.dot(h3, w1[0], preferred_element_type=jnp.float32) + b1[0], 0.0)
    x = x + jnp.dot(f.astype(jnp.bfloat16), w2[0],
                    preferred_element_type=jnp.float32) + b2[0]

    x_scratch[...] = x

    # Final LayerNorm of the whole Decoder on the last layer step.
    @pl.when(layer == n_layers - 1)
    def _():
        y = _layer_norm(x, lnf_g[...], lnf_b[...])
        out_ref[...] = y.reshape(bb, sd, d).astype(out_ref.dtype)


# ---------------------------------------------------------------------------
# Wrapper: full Decoder forward in ONE pallas_call
# ---------------------------------------------------------------------------
def _tensorcores_per_chip():
    """Best-effort TC count: 2 on v7x, 1 on v5e/v6e. Falls back to 1."""
    try:
        dev = jax.devices()[0]
        n = getattr(dev, "num_cores", None)
        if isinstance(n, int) and n > 0:
            return n
        kind = str(getattr(dev, "device_kind", "")).lower()
        if "v7" in kind or "7x" in kind:
            return 2
    except Exception:
        pass
    return 1


def decoder_forward(encode, decode, params, tgt_mask, src_mask, *, heads,
                    batch_block=None):
    B, Sd, D = decode.shape
    Se = encode.shape[1]
    L = len(params["layers"])
    assert D % heads == 0

    if batch_block is None:
        # One batch chunk per TensorCore; never split finer (each extra chunk
        # re-streams the whole L-layer weight stack from HBM).
        nb = max(1, min(_tensorcores_per_chip(), B))
        while B % nb != 0:
            nb -= 1
        bb = B // nb
    else:
        bb = batch_block
        assert B % bb == 0
    nb = B // bb
    # NOTE: MXU M-utilization wants bb*Sd >= 128 (v5e) / 256 (v6e, v7x); at toy
    # sizes this is inherently overhead-bound.

    # Fold the 1/sqrt(head_dim) attention scale into Wq / bq (zero kernel cost),
    # then cast the matmul weights to bf16 (MXU-native; halves DMA + VMEM).
    scale = 1.0 / math.sqrt(D // heads)
    stacked = [jnp.stack([lp[i] for lp in params["layers"]], axis=0)
               for i in range(len(params["layers"][0]))]
    for idx in _SCALE_IDX:
        stacked[idx] = stacked[idx] * scale
    stacked = [a.astype(jnp.bfloat16) if i in _MATMUL_W_IDX else a
               for i, a in enumerate(stacked)]

    # Precompute additive mask biases: 0 where attended, -1e9 where masked out.
    # NOTE: equivalent to the reference's hard masking as long as every row has
    # at least one unmasked key; shared across batch and heads.
    tgt_bias = jnp.where(tgt_mask == 0, NEG_INF, 0.0).astype(jnp.float32)
    src_bias = jnp.where(src_mask == 0, NEG_INF, 0.0).astype(jnp.float32)

    in_specs = (
        [pl.BlockSpec((bb, Se, D), lambda b, l: (b, 0, 0)),    # encoder activations
         pl.BlockSpec((bb, Sd, D), lambda b, l: (b, 0, 0)),    # decoder input
         pl.BlockSpec((Sd, Sd), lambda b, l: (0, 0)),          # tgt mask bias
         pl.BlockSpec((Sd, Se), lambda b, l: (0, 0))]          # src mask bias
        # stacked per-layer params: layer index selected by the grid (pipelined)
        + [pl.BlockSpec((1,) + a.shape[1:], lambda b, l: (l, 0, 0)) for a in stacked]
        + [pl.BlockSpec((1, D), lambda b, l: (0, 0)),          # final LN gamma
           pl.BlockSpec((1, D), lambda b, l: (0, 0))]          # final LN beta
    )

    # Explicit VMEM budget: double-buffered per-layer weights + activation
    # blocks + resident scratch + live FFN intermediate (+ headroom).
    per_layer_w_bytes = sum(int(math.prod(a.shape[1:])) * a.dtype.itemsize
                            for a in stacked)
    act_block_bytes = (bb * Se * D + 2 * bb * Sd * D) * 4      # enc + dec + out
    scratch_bytes = bb * Sd * D * 4
    ffn_live_bytes = bb * Sd * 4 * D * 4
    mask_bytes = (Sd * Sd + Sd * Se) * 4
    budget = (2 * per_layer_w_bytes + 2 * act_block_bytes + 2 * mask_bytes
              + scratch_bytes + ffn_live_bytes + (8 << 20))
    vmem_limit = int(min(64 << 20, max(32 << 20, budget)))     # <= v7x physical

    out = pl.pallas_call(
        functools.partial(decoder_stack_kernel, heads=heads),
        out_shape=jax.ShapeDtypeStruct(decode.shape, decode.dtype),
        grid=(nb, L),
        in_specs=in_specs,
        # Output block index is constant along the layer axis -> stays resident,
        # written back once per batch chunk.
        out_specs=pl.BlockSpec((bb, Sd, D), lambda b, l: (b, 0, 0)),
        scratch_shapes=[pltpu.VMEM((bb * Sd, D), jnp.float32)],
        compiler_params=pltpu.CompilerParams(
            dimension_semantics=("parallel", "arbitrary"),
            vmem_limit_bytes=vmem_limit),
    )(encode, decode, tgt_bias, src_bias, *stacked, params["ln_g"], params["ln_b"])
    return out


# ---------------------------------------------------------------------------
# Pure-JAX reference (PyTorch semantics, f32) for the correctness check
# ---------------------------------------------------------------------------
def _layer_norm_ref(x, g, b, eps=EPS):
    d = x.shape[-1]
    mean = jnp.mean(x, axis=-1, keepdims=True)
    var = jnp.sum((x - mean) ** 2, axis=-1, keepdims=True) / (d - 1)
    return g * (x - mean) / (jnp.sqrt(var) + eps) + b


def _mha_ref(q_in, k_in, v_in, wq, bq, wk, bk, wv, bv, wo, bo, mask, heads):
    B, sq, d = q_in.shape
    sk = k_in.shape[1]
    hd = d // heads
    q = (q_in @ wq + bq).reshape(B, sq, heads, hd).transpose(0, 2, 1, 3)
    k = (k_in @ wk + bk).reshape(B, sk, heads, hd).transpose(0, 2, 1, 3)
    v = (v_in @ wv + bv).reshape(B, sk, heads, hd).transpose(0, 2, 1, 3)
    s = jnp.einsum("bhqd,bhkd->bhqk", q, k) / math.sqrt(hd)
    s = jnp.where(mask == 0, NEG_INF, s)
    p = jax.nn.softmax(s, axis=-1)
    o = jnp.einsum("bhqk,bhkd->bhqd", p, v).transpose(0, 2, 1, 3).reshape(B, sq, d)
    return o @ wo + bo


def decoder_forward_ref(encode, decode, params, tgt_mask, src_mask, *, heads):
    x = decode
    for lp in params["layers"]:
        (ln1_g, ln1_b, wq1, bq1, wk1, bk1, wv1, bv1, wo1, bo1,
         ln2_g, ln2_b, wq2, bq2, wk2, bk2, wv2, bv2, wo2, bo2,
         ln3_g, ln3_b, w1, b1, w2, b2) = lp
        h1 = _layer_norm_ref(x, ln1_g, ln1_b)
        x = x + _mha_ref(h1, h1, h1, wq1, bq1, wk1, bk1, wv1, bv1, wo1, bo1,
                         tgt_mask, heads)
        h2 = _layer_norm_ref(x, ln2_g, ln2_b)
        x = x + _mha_ref(h2, encode, encode, wq2, bq2, wk2, bk2, wv2, bv2, wo2, bo2,
                         src_mask, heads)
        h3 = _layer_norm_ref(x, ln3_g, ln3_b)
        f = jnp.maximum(h3 @ w1 + b1, 0.0)
        x = x + f @ w2 + b2
    return _layer_norm_ref(x, params["ln_g"], params["ln_b"])


# ---------------------------------------------------------------------------
# Deterministic parameter init
# ---------------------------------------------------------------------------
def init_params(key, dim, layers, ffn_mult=4):
    params = {"layers": []}
    for _ in range(layers):
        lp = []
        # ln1
        lp += [jnp.ones((1, dim), jnp.float32), jnp.zeros((1, dim), jnp.float32)]
        # self-attn Wq, Wk, Wv, Wo (stored as (in, out) so the kernel does x @ W + b)
        for _ in range(4):
            key, sub = jax.random.split(key)
            lp += [0.02 * jax.random.normal(sub, (dim, dim), jnp.float32),
                   jnp.zeros((1, dim), jnp.float32)]
        # ln2
        lp += [jnp.ones((1, dim), jnp.float32), jnp.zeros((1, dim), jnp.float32)]
        # cross-attn Wq, Wk, Wv, Wo
        for _ in range(4):
            key, sub = jax.random.split(key)
            lp += [0.02 * jax.random.normal(sub, (dim, dim), jnp.float32),
                   jnp.zeros((1, dim), jnp.float32)]
        # ln3
        lp += [jnp.ones((1, dim), jnp.float32), jnp.zeros((1, dim), jnp.float32)]
        # ffn
        key, s1 = jax.random.split(key)
        key, s2 = jax.random.split(key)
        lp += [0.02 * jax.random.normal(s1, (dim, dim * ffn_mult), jnp.float32),
               jnp.zeros((1, dim * ffn_mult), jnp.float32),
               0.02 * jax.random.normal(s2, (dim * ffn_mult, dim), jnp.float32),
               jnp.zeros((1, dim), jnp.float32)]
        params["layers"].append(lp)
    params["ln_g"] = jnp.ones((1, dim), jnp.float32)
    params["ln_b"] = jnp.zeros((1, dim), jnp.float32)
    return params


if __name__ == "__main__":
    B, S_DEC, S_ENC, DIM, HEADS, LAYERS = 2, 8, 8, 128, 4, 2

    key = jax.random.PRNGKey(0)
    key, k_enc, k_dec = jax.random.split(key, 3)
    encode = jax.random.normal(k_enc, (B, S_ENC, DIM), jnp.float32)
    decode = jax.random.normal(k_dec, (B, S_DEC, DIM), jnp.float32)

    params = init_params(key, DIM, LAYERS)

    # causal mask for self-attention, all-ones (no masking) for cross-attention
    tgt_mask = jnp.tril(jnp.ones((S_DEC, S_DEC), jnp.float32))
    src_mask = jnp.ones((S_DEC, S_ENC), jnp.float32)

    out = decoder_forward(encode, decode, params, tgt_mask, src_mask, heads=HEADS)
    out = jax.block_until_ready(out)

    ref = decoder_forward_ref(encode, decode, params, tgt_mask, src_mask, heads=HEADS)
    ref = jax.block_until_ready(ref)

    assert out.shape == (B, S_DEC, DIM)
    # Tolerance accounts for bf16 MXU inputs (f32 accumulation / LN / softmax).
    err = float(jnp.max(jnp.abs(out - ref)))
    assert err < 5e-2, f"Pallas output mismatch vs JAX reference: {err}"

    print("KERNEL_OK")
</pallas_src>

<mosaic_0001>
module attributes {stable_mosaic.version = 11 : i64} {
  func.func @decoder_stack_kernel(%arg0: i32, %arg1: i32, %arg2: memref<2x8x128xf32, #tpu.memory_space<vmem>>, %arg3: memref<2x8x128xf32, #tpu.memory_space<vmem>>, %arg4: memref<8x8xf32, #tpu.memory_space<vmem>>, %arg5: memref<8x8xf32, #tpu.memory_space<vmem>>, %arg6: memref<1x1x128xf32, #tpu.memory_space<vmem>>, %arg7: memref<1x1x128xf32, #tpu.memory_space<vmem>>, %arg8: memref<1x128x128xbf16, #tpu.memory_space<vmem>>, %arg9: memref<1x1x128xf32, #tpu.memory_space<vmem>>, %arg10: memref<1x128x128xbf16, #tpu.memory_space<vmem>>, %arg11: memref<1x1x128xf32, #tpu.memory_space<vmem>>, %arg12: memref<1x128x128xbf16, #tpu.memory_space<vmem>>, %arg13: memref<1x1x128xf32, #tpu.memory_space<vmem>>, %arg14: memref<1x128x128xbf16, #tpu.memory_space<vmem>>, %arg15: memref<1x1x128xf32, #tpu.memory_space<vmem>>, %arg16: memref<1x1x128xf32, #tpu.memory_space<vmem>>, %arg17: memref<1x1x128xf32, #tpu.memory_space<vmem>>, %arg18: memref<1x128x128xbf16, #tpu.memory_space<vmem>>, %arg19: memref<1x1x128xf32, #tpu.memory_space<vmem>>, %arg20: memref<1x128x128xbf16, #tpu.memory_space<vmem>>, %arg21: memref<1x1x128xf32, #tpu.memory_space<vmem>>, %arg22: memref<1x128x128xbf16, #tpu.memory_space<vmem>>, %arg23: memref<1x1x128xf32, #tpu.memory_space<vmem>>, %arg24: memref<1x128x128xbf16, #tpu.memory_space<vmem>>, %arg25: memref<1x1x128xf32, #tpu.memory_space<vmem>>, %arg26: memref<1x1x128xf32, #tpu.memory_space<vmem>>, %arg27: memref<1x1x128xf32, #tpu.memory_space<vmem>>, %arg28: memref<1x128x512xbf16, #tpu.memory_space<vmem>>, %arg29: memref<1x1x512xf32, #tpu.memory_space<vmem>>, %arg30: memref<1x512x128xbf16, #tpu.memory_space<vmem>>, %arg31: memref<1x1x128xf32, #tpu.memory_space<vmem>>, %arg32: memref<1x128xf32, #tpu.memory_space<vmem>>, %arg33: memref<1x128xf32, #tpu.memory_space<vmem>>, %arg34: memref<2x8x128xf32, #tpu.memory_space<vmem>>, %arg35: memref<16x128xf32, #tpu.memory_space<vmem>>) attributes {dimension_semantics = [#tpu.dimension_semantics<parallel>, #tpu.dimension_semantics<arbitrary>], iteration_bounds = array<i64: 1, 2>, scalar_prefetch = 0 : i64, scratch_operands = 1 : i64, tpu.core_type = #tpu.core_type<tc>, window_params = [{transform_indices = @transform_0, window_bounds = array<i64: 2, 8, 128>}, {transform_indices = @transform_1, window_bounds = array<i64: 2, 8, 128>}, {pipeline_mode = #tpu.pipeline_mode<synchronous>, transform_indices = @transform_2, window_bounds = array<i64: 8, 8>}, {pipeline_mode = #tpu.pipeline_mode<synchronous>, transform_indices = @transform_3, window_bounds = array<i64: 8, 8>}, {transform_indices = @transform_4, window_bounds = array<i64: 1, 1, 128>}, {transform_indices = @transform_5, window_bounds = array<i64: 1, 1, 128>}, {transform_indices = @transform_6, window_bounds = array<i64: 1, 128, 128>}, {transform_indices = @transform_7, window_bounds = array<i64: 1, 1, 128>}, {transform_indices = @transform_8, window_bounds = array<i64: 1, 128, 128>}, {transform_indices = @transform_9, window_bounds = array<i64: 1, 1, 128>}, {transform_indices = @transform_10, window_bounds = array<i64: 1, 128, 128>}, {transform_indices = @transform_11, window_bounds = array<i64: 1, 1, 128>}, {transform_indices = @transform_12, window_bounds = array<i64: 1, 128, 128>}, {transform_indices = @transform_13, window_bounds = array<i64: 1, 1, 128>}, {transform_indices = @transform_14, window_bounds = array<i64: 1, 1, 128>}, {transform_indices = @transform_15, window_bounds = array<i64: 1, 1, 128>}, {transform_indices = @transform_16, window_bounds = array<i64: 1, 128, 128>}, {transform_indices = @transform_17, window_bounds = array<i64: 1, 1, 128>}, {transform_indices = @transform_18, window_bounds = array<i64: 1, 128, 128>}, {transform_indices = @transform_19, window_bounds = array<i64: 1, 1, 128>}, {transform_indices = @transform_20, window_bounds = array<i64: 1, 128, 128>}, {transform_indices = @transform_21, window_bounds = array<i64: 1, 1, 128>}, {transform_indices = @transform_22, window_bounds = array<i64: 1, 128, 128>}, {transform_indices = @transform_23, window_bounds = array<i64: 1, 1, 128>}, {transform_indices = @transform_24, window_bounds = array<i64: 1, 1, 128>}, {transform_indices = @transform_25, window_bounds = array<i64: 1, 1, 128>}, {transform_indices = @transform_26, window_bounds = array<i64: 1, 128, 512>}, {transform_indices = @transform_27, window_bounds = array<i64: 1, 1, 512>}, {transform_indices = @transform_28, window_bounds = array<i64: 1, 512, 128>}, {transform_indices = @transform_29, window_bounds = array<i64: 1, 1, 128>}, {pipeline_mode = #tpu.pipeline_mode<synchronous>, transform_indices = @transform_30, window_bounds = array<i64: 1, 128>}, {pipeline_mode = #tpu.pipeline_mode<synchronous>, transform_indices = @transform_31, window_bounds = array<i64: 1, 128>}, {transform_indices = @transform_32, window_bounds = array<i64: 2, 8, 128>}]} {
    %c0_i32 = arith.constant 0 : i32
    %0 = arith.cmpi eq, %arg1, %c0_i32 : i32
    %1 = arith.extui %0 : i1 to i32
    %c0_i32_0 = arith.constant 0 : i32
    %2 = arith.cmpi ne, %1, %c0_i32_0 : i32
    scf.if %2 {
      %c0_153 = arith.constant 0 : index
      %c0_154 = arith.constant 0 : index
      %c0_155 = arith.constant 0 : index
      %355 = vector.load %arg3[%c0_153, %c0_154, %c0_155] : memref<2x8x128xf32, #tpu.memory_space<vmem>>, vector<2x8x128xf32>
      %356 = vector.shape_cast %355 : vector<2x8x128xf32> to vector<16x128xf32>
      %c0_156 = arith.constant 0 : index
      %c0_157 = arith.constant 0 : index
      %357 = vector.load %arg35[%c0_156, %c0_157] : memref<16x128xf32, #tpu.memory_space<vmem>>, vector<16x128xf32>
      tpu.vector_store %arg35[%c0_156, %c0_157], %356 {strides = array<i32>} : memref<16x128xf32, #tpu.memory_space<vmem>>, vector<16x128xf32>,
    } else {
    }
    %c0 = arith.constant 0 : index
    %c0_1 = arith.constant 0 : index
    %3 = vector.load %arg35[%c0, %c0_1] : memref<16x128xf32, #tpu.memory_space<vmem>>, vector<16x128xf32>
    %c0_2 = arith.constant 0 : index
    %c0_3 = arith.constant 0 : index
    %c0_4 = arith.constant 0 : index
    %4 = vector.load %arg2[%c0_2, %c0_3, %c0_4] : memref<2x8x128xf32, #tpu.memory_space<vmem>>, vector<2x8x128xf32>
    %5 = vector.shape_cast %4 : vector<2x8x128xf32> to vector<16x128xf32>
    %6 = arith.truncf %5 : vector<16x128xf32> to vector<16x128xbf16>
    %c0_5 = arith.constant 0 : index
    %c0_6 = arith.constant 0 : index
    %7 = vector.load %arg4[%c0_5, %c0_6] : memref<8x8xf32, #tpu.memory_space<vmem>>, vector<8x8xf32>
    %8 = vector.shape_cast %7 : vector<8x8xf32> to vector<1x8x8xf32>
    %9 = vector.broadcast %8 : vector<1x8x8xf32> to vector<2x8x8xf32>
    %c0_7 = arith.constant 0 : index
    %c0_8 = arith.constant 0 : index
    %10 = vector.load %arg5[%c0_7, %c0_8] : memref<8x8xf32, #tpu.memory_space<vmem>>, vector<8x8xf32>
    %11 = vector.shape_cast %10 : vector<8x8xf32> to vector<1x8x8xf32>
    %12 = vector.broadcast %11 : vector<1x8x8xf32> to vector<2x8x8xf32>
    %c0_9 = arith.constant 0 : index
    %c0_10 = arith.constant 0 : index
    %c0_11 = arith.constant 0 : index
    %13 = vector.load %arg6[%c0_9, %c0_10, %c0_11] : memref<1x1x128xf32, #tpu.memory_space<vmem>>, vector<1x1x128xf32>
    %14 = vector.shape_cast %13 : vector<1x1x128xf32> to vector<1x128xf32>
    %c0_12 = arith.constant 0 : index
    %c0_13 = arith.constant 0 : index
    %c0_14 = arith.constant 0 : index
    %15 = vector.load %arg7[%c0_12, %c0_13, %c0_14] : memref<1x1x128xf32, #tpu.memory_space<vmem>>, vector<1x1x128xf32>
    %16 = vector.shape_cast %15 : vector<1x1x128xf32> to vector<1x128xf32>
    %cst = arith.constant dense<0.000000e+00> : vector<16xf32>
    %17 = vector.multi_reduction <add>, %3, %cst [1] : vector<16x128xf32> to vector<16xf32>
    %18 = vector.shape_cast %17 : vector<16xf32> to vector<16x1xf32>
    %cst_15 = arith.constant 1.280000e+02 : f32
    %19 = vector.broadcast %cst_15 : f32 to vector<16x1xf32>
    %20 = arith.divf %18, %19 : vector<16x1xf32>
    %21 = vector.broadcast %20 : vector<16x1xf32> to vector<16x128xf32>
    %22 = arith.subf %3, %21 : vector<16x128xf32>
    %23 = arith.mulf %22, %22 : vector<16x128xf32>
    %cst_16 = arith.constant dense<0.000000e+00> : vector<16xf32>
    %24 = vector.multi_reduction <add>, %23, %cst_16 [1] : vector<16x128xf32> to vector<16xf32>
    %25 = vector.shape_cast %24 : vector<16xf32> to vector<16x1xf32>
    %cst_17 = arith.constant 0.00787401571 : f32
    %26 = vector.broadcast %cst_17 : f32 to vector<16x1xf32>
    %27 = arith.mulf %25, %26 : vector<16x1xf32>
    %28 = math.sqrt %27 : vector<16x1xf32>
    %cst_18 = arith.constant 9.99999997E-7 : f32
    %29 = vector.broadcast %cst_18 : f32 to vector<16x1xf32>
    %30 = arith.addf %28, %29 : vector<16x1xf32>
    %31 = tpu.reciprocal %30 : vector<16x1xf32> -> vector<16x1xf32>
    %32 = vector.broadcast %31 : vector<16x1xf32> to vector<16x128xf32>
    %33 = arith.mulf %22, %32 : vector<16x128xf32>
    %34 = vector.broadcast %14 : vector<1x128xf32> to vector<16x128xf32>
    %35 = arith.mulf %34, %33 : vector<16x128xf32>
    %36 = vector.broadcast %16 : vector<1x128xf32> to vector<16x128xf32>
    %37 = arith.addf %35, %36 : vector<16x128xf32>
    %38 = arith.truncf %37 : vector<16x128xf32> to vector<16x128xbf16>
    %c0_19 = arith.constant 0 : index
    %c0_20 = arith.constant 0 : index
    %c0_21 = arith.constant 0 : index
    %39 = vector.load %arg8[%c0_19, %c0_20, %c0_21] : memref<1x128x128xbf16, #tpu.memory_space<vmem>>, vector<1x128x128xbf16>
    %40 = vector.shape_cast %39 : vector<1x128x128xbf16> to vector<128x128xbf16>
    %c0_22 = arith.constant 0 : index
    %c0_23 = arith.constant 0 : index
    %c0_24 = arith.constant 0 : index
    %41 = vector.load %arg9[%c0_22, %c0_23, %c0_24] : memref<1x1x128xf32, #tpu.memory_space<vmem>>, vector<1x1x128xf32>
    %42 = vector.shape_cast %41 : vector<1x1x128xf32> to vector<1x128xf32>
    %c0_25 = arith.constant 0 : index
    %c0_26 = arith.constant 0 : index
    %c0_27 = arith.constant 0 : index
    %43 = vector.load %arg10[%c0_25, %c0_26, %c0_27] : memref<1x128x128xbf16, #tpu.memory_space<vmem>>, vector<1x128x128xbf16>
    %44 = vector.shape_cast %43 : vector<1x128x128xbf16> to vector<128x128xbf16>
    %c0_28 = arith.constant 0 : index
    %c0_29 = arith.constant 0 : index
    %c0_30 = arith.constant 0 : index
    %45 = vector.load %arg11[%c0_28, %c0_29, %c0_30] : memref<1x1x128xf32, #tpu.memory_space<vmem>>, vector<1x1x128xf32>
    %46 = vector.shape_cast %45 : vector<1x1x128xf32> to vector<1x128xf32>
    %c0_31 = arith.constant 0 : index
    %c0_32 = arith.constant 0 : index
    %c0_33 = arith.constant 0 : index
    %47 = vector.load %arg12[%c0_31, %c0_32, %c0_33] : memref<1x128x128xbf16, #tpu.memory_space<vmem>>, vector<1x128x128xbf16>
    %48 = vector.shape_cast %47 : vector<1x128x128xbf16> to vector<128x128xbf16>
    %c0_34 = arith.constant 0 : index
    %c0_35 = arith.constant 0 : index
    %c0_36 = arith.constant 0 : index
    %49 = vector.load %arg13[%c0_34, %c0_35, %c0_36] : memref<1x1x128xf32, #tpu.memory_space<vmem>>, vector<1x1x128xf32>
    %50 = vector.shape_cast %49 : vector<1x1x128xf32> to vector<1x128xf32>
    %c0_37 = arith.constant 0 : index
    %c0_38 = arith.constant 0 : index
    %c0_39 = arith.constant 0 : index
    %51 = vector.load %arg14[%c0_37, %c0_38, %c0_39] : memref<1x128x128xbf16, #tpu.memory_space<vmem>>, vector<1x128x128xbf16>
    %52 = vector.shape_cast %51 : vector<1x128x128xbf16> to vector<128x128xbf16>
    %c0_40 = arith.constant 0 : index
    %c0_41 = arith.constant 0 : index
    %c0_42 = arith.constant 0 : index
    %53 = vector.load %arg15[%c0_40, %c0_41, %c0_42] : memref<1x1x128xf32, #tpu.memory_space<vmem>>, vector<1x1x128xf32>
    %54 = vector.shape_cast %53 : vector<1x1x128xf32> to vector<1x128xf32>
    %cst_43 = arith.constant dense<0.000000e+00> : vector<16x128xf32>
    %55 = tpu.matmul %38, %40, %cst_43 {dimension_numbers = #tpu.dot_dimension_numbers<[1], [0], [0], [1], [0, 0, 1, 1], [], []>} : vector<16x128xbf16>, vector<128x128xbf16>, vector<16x128xf32> -> vector<16x128xf32>
    %56 = vector.broadcast %42 : vector<1x128xf32> to vector<16x128xf32>
    %57 = arith.addf %55, %56 : vector<16x128xf32>
    %cst_44 = arith.constant dense<0.000000e+00> : vector<16x128xf32>
    %58 = tpu.matmul %38, %44, %cst_44 {dimension_numbers = #tpu.dot_dimension_numbers<[1], [0], [0], [1], [0, 0, 1, 1], [], []>} : vector<16x128xbf16>, vector<128x128xbf16>, vector<16x128xf32> -> vector<16x128xf32>
    %59 = vector.broadcast %46 : vector<1x128xf32> to vector<16x128xf32>
    %60 = arith.addf %58, %59 : vector<16x128xf32>
    %cst_45 = arith.constant dense<0.000000e+00> : vector<16x128xf32>
    %61 = tpu.matmul %38, %48, %cst_45 {dimension_numbers = #tpu.dot_dimension_numbers<[1], [0], [0], [1], [0, 0, 1, 1], [], []>} : vector<16x128xbf16>, vector<128x128xbf16>, vector<16x128xf32> -> vector<16x128xf32>
    %62 = vector.broadcast %50 : vector<1x128xf32> to vector<16x128xf32>
    %63 = arith.addf %61, %62 : vector<16x128xf32>
    %64 = arith.truncf %57 : vector<16x128xf32> to vector<16x128xbf16>
    %65 = vector.shape_cast %64 : vector<16x128xbf16> to vector<2x8x128xbf16>
    %66 = arith.truncf %60 : vector<16x128xf32> to vector<16x128xbf16>
    %67 = vector.shape_cast %66 : vector<16x128xbf16> to vector<2x8x128xbf16>
    %68 = arith.truncf %63 : vector<16x128xf32> to vector<16x128xbf16>
    %69 = vector.shape_cast %68 : vector<16x128xbf16> to vector<2x8x128xbf16>
    %70 = vector.extract_strided_slice %65 {offsets = [0, 0, 0], sizes = [2, 8, 32], strides = [1, 1, 1]} : vector<2x8x128xbf16> to vector<2x8x32xbf16>
    %71 = vector.extract_strided_slice %67 {offsets = [0, 0, 0], sizes = [2, 8, 32], strides = [1, 1, 1]} : vector<2x8x128xbf16> to vector<2x8x32xbf16>
    "tpu.trace_start"() <{level = 10 : i32, message = "bqd,bkd->bqk"}> : () -> ()
    %cst_46 = arith.constant dense<0.000000e+00> : vector<2x8x8xf32>
    %72 = tpu.matmul %70, %71, %cst_46 {dimension_numbers = #tpu.dot_dimension_numbers<[2], [2], [1], [1], [0, 0, 0, 1, 1, 1], [0], [0]>} : vector<2x8x32xbf16>, vector<2x8x32xbf16>, vector<2x8x8xf32> -> vector<2x8x8xf32>
    "tpu.trace_stop"() : () -> ()
    %73 = arith.addf %72, %9 : vector<2x8x8xf32>
    %cst_47 = arith.constant dense<0xFF800000> : vector<2x8xf32>
    %74 = vector.multi_reduction <maximumf>, %73, %cst_47 [2] : vector<2x8x8xf32> to vector<2x8xf32>
    %75 = vector.shape_cast %74 : vector<2x8xf32> to vector<2x8x1xf32>
    %76 = vector.broadcast %75 : vector<2x8x1xf32> to vector<2x8x8xf32>
    %77 = arith.subf %73, %76 : vector<2x8x8xf32>
    %78 = math.exp %77 : vector<2x8x8xf32>
    %cst_48 = arith.constant dense<0.000000e+00> : vector<2x8xf32>
    %79 = vector.multi_reduction <add>, %78, %cst_48 [2] : vector<2x8x8xf32> to vector<2x8xf32>
    %80 = vector.shape_cast %79 : vector<2x8xf32> to vector<2x8x1xf32>
    %81 = tpu.reciprocal %80 {approx = true} : vector<2x8x1xf32> -> vector<2x8x1xf32>
    %82 = vector.broadcast %81 : vector<2x8x1xf32> to vector<2x8x8xf32>
    %83 = arith.mulf %78, %82 : vector<2x8x8xf32>
    %84 = arith.truncf %83 : vector<2x8x8xf32> to vector<2x8x8xbf16>
    %85 = vector.extract_strided_slice %69 {offsets = [0, 0, 0], sizes = [2, 8, 32], strides = [1, 1, 1]} : vector<2x8x128xbf16> to vector<2x8x32xbf16>
    "tpu.trace_start"() <{level = 10 : i32, message = "bqk,bkd->bqd"}> : () -> ()
    %cst_49 = arith.constant dense<0.000000e+00> : vector<2x8x32xf32>
    %86 = tpu.matmul %84, %85, %cst_49 {dimension_numbers = #tpu.dot_dimension_numbers<[2], [1], [1], [2], [0, 0, 0, 1, 1, 2], [0], [0]>} : vector<2x8x8xbf16>, vector<2x8x32xbf16>, vector<2x8x32xf32> -> vector<2x8x32xf32>
    "tpu.trace_stop"() : () -> ()
    %87 = vector.shape_cast %86 : vector<2x8x32xf32> to vector<16x32xf32>
    %88 = arith.truncf %87 : vector<16x32xf32> to vector<16x32xbf16>
    %89 = vector.extract_strided_slice %52 {offsets = [0, 0], sizes = [32, 128], strides = [1, 1]} : vector<128x128xbf16> to vector<32x128xbf16>
    %cst_50 = arith.constant dense<0.000000e+00> : vector<16x128xf32>
    %90 = tpu.matmul %88, %89, %cst_50 {dimension_numbers = #tpu.dot_dimension_numbers<[1], [0], [0], [1], [0, 0, 1, 1], [], []>} : vector<16x32xbf16>, vector<32x128xbf16>, vector<16x128xf32> -> vector<16x128xf32>
    %91 = vector.extract_strided_slice %65 {offsets = [0, 0, 32], sizes = [2, 8, 32], strides = [1, 1, 1]} : vector<2x8x128xbf16> to vector<2x8x32xbf16>
    %92 = vector.extract_strided_slice %67 {offsets = [0, 0, 32], sizes = [2, 8, 32], strides = [1, 1, 1]} : vector<2x8x128xbf16> to vector<2x8x32xbf16>
    "tpu.trace_start"() <{level = 10 : i32, message = "bqd,bkd->bqk"}> : () -> ()
    %cst_51 = arith.constant dense<0.000000e+00> : vector<2x8x8xf32>
    %93 = tpu.matmul %91, %92, %cst_51 {dimension_numbers = #tpu.dot_dimension_numbers<[2], [2], [1], [1], [0, 0, 0, 1, 1, 1], [0], [0]>} : vector<2x8x32xbf16>, vector<2x8x32xbf16>, vector<2x8x8xf32> -> vector<2x8x8xf32>
    "tpu.trace_stop"() : () -> ()
    %94 = arith.addf %93, %9 : vector<2x8x8xf32>
    %cst_52 = arith.constant dense<0xFF800000> : vector<2x8xf32>
    %95 = vector.multi_reduction <maximumf>, %94, %cst_52 [2] : vector<2x8x8xf32> to vector<2x8xf32>
    %96 = vector.shape_cast %95 : vector<2x8xf32> to vector<2x8x1xf32>
    %97 = vector.broadcast %96 : vector<2x8x1xf32> to vector<2x8x8xf32>
    %98 = arith.subf %94, %97 : vector<2x8x8xf32>
    %99 = math.exp %98 : vector<2x8x8xf32>
    %cst_53 = arith.constant dense<0.000000e+00> : vector<2x8xf32>
    %100 = vector.multi_reduction <add>, %99, %cst_53 [2] : vector<2x8x8xf32> to vector<2x8xf32>
    %101 = vector.shape_cast %100 : vector<2x8xf32> to vector<2x8x1xf32>
    %102 = tpu.reciprocal %101 {approx = true} : vector<2x8x1xf32> -> vector<2x8x1xf32>
    %103 = vector.broadcast %102 : vector<2x8x1xf32> to vector<2x8x8xf32>
    %104 = arith.mulf %99, %103 : vector<2x8x8xf32>
    %105 = arith.truncf %104 : vector<2x8x8xf32> to vector<2x8x8xbf16>
    %106 = vector.extract_strided_slice %69 {offsets = [0, 0, 32], sizes = [2, 8, 32], strides = [1, 1, 1]} : vector<2x8x128xbf16> to vector<2x8x32xbf16>
    "tpu.trace_start"() <{level = 10 : i32, message = "bqk,bkd->bqd"}> : () -> ()
    %cst_54 = arith.constant dense<0.000000e+00> : vector<2x8x32xf32>
    %107 = tpu.matmul %105, %106, %cst_54 {dimension_numbers = #tpu.dot_dimension_numbers<[2], [1], [1], [2], [0, 0, 0, 1, 1, 2], [0], [0]>} : vector<2x8x8xbf16>, vector<2x8x32xbf16>, vector<2x8x32xf32> -> vector<2x8x32xf32>
    "tpu.trace_stop"() : () -> ()
    %108 = vector.shape_cast %107 : vector<2x8x32xf32> to vector<16x32xf32>
    %109 = arith.truncf %108 : vector<16x32xf32> to vector<16x32xbf16>
    %110 = vector.extract_strided_slice %52 {offsets = [32, 0], sizes = [32, 128], strides = [1, 1]} : vector<128x128xbf16> to vector<32x128xbf16>
    %cst_55 = arith.constant dense<0.000000e+00> : vector<16x128xf32>
    %111 = tpu.matmul %109, %110, %cst_55 {dimension_numbers = #tpu.dot_dimension_numbers<[1], [0], [0], [1], [0, 0, 1, 1], [], []>} : vector<16x32xbf16>, vector<32x128xbf16>, vector<16x128xf32> -> vector<16x128xf32>
    %112 = arith.addf %90, %111 : vector<16x128xf32>
    %113 = vector.extract_strided_slice %65 {offsets = [0, 0, 64], sizes = [2, 8, 32], strides = [1, 1, 1]} : vector<2x8x128xbf16> to vector<2x8x32xbf16>
    %114 = vector.extract_strided_slice %67 {offsets = [0, 0, 64], sizes = [2, 8, 32], strides = [1, 1, 1]} : vector<2x8x128xbf16> to vector<2x8x32xbf16>
    "tpu.trace_start"() <{level = 10 : i32, message = "bqd,bkd->bqk"}> : () -> ()
    %cst_56 = arith.constant dense<0.000000e+00> : vector<2x8x8xf32>
    %115 = tpu.matmul %113, %114, %cst_56 {dimension_numbers = #tpu.dot_dimension_numbers<[2], [2], [1], [1], [0, 0, 0, 1, 1, 1], [0], [0]>} : vector<2x8x32xbf16>, vector<2x8x32xbf16>, vector<2x8x8xf32> -> vector<2x8x8xf32>
    "tpu.trace_stop"() : () -> ()
    %116 = arith.addf %115, %9 : vector<2x8x8xf32>
    %cst_57 = arith.constant dense<0xFF800000> : vector<2x8xf32>
    %117 = vector.multi_reduction <maximumf>, %116, %cst_57 [2] : vector<2x8x8xf32> to vector<2x8xf32>
    %118 = vector.shape_cast %117 : vector<2x8xf32> to vector<2x8x1xf32>
    %119 = vector.broadcast %118 : vector<2x8x1xf32> to vector<2x8x8xf32>
    %120 = arith.subf %116, %119 : vector<2x8x8xf32>
    %121 = math.exp %120 : vector<2x8x8xf32>
    %cst_58 = arith.constant dense<0.000000e+00> : vector<2x8xf32>
    %122 = vector.multi_reduction <add>, %121, %cst_58 [2] : vector<2x8x8xf32> to vector<2x8xf32>
    %123 = vector.shape_cast %122 : vector<2x8xf32> to vector<2x8x1xf32>
    %124 = tpu.reciprocal %123 {approx = true} : vector<2x8x1xf32> -> vector<2x8x1xf32>
    %125 = vector.broadcast %124 : vector<2x8x1xf32> to vector<2x8x8xf32>
    %126 = arith.mulf %121, %125 : vector<2x8x8xf32>
    %127 = arith.truncf %126 : vector<2x8x8xf32> to vector<2x8x8xbf16>
    %128 = vector.extract_strided_slice %69 {offsets = [0, 0, 64], sizes = [2, 8, 32], strides = [1, 1, 1]} : vector<2x8x128xbf16> to vector<2x8x32xbf16>
    "tpu.trace_start"() <{level = 10 : i32, message = "bqk,bkd->bqd"}> : () -> ()
    %cst_59 = arith.constant dense<0.000000e+00> : vector<2x8x32xf32>
    %129 = tpu.matmul %127, %128, %cst_59 {dimension_numbers = #tpu.dot_dimension_numbers<[2], [1], [1], [2], [0, 0, 0, 1, 1, 2], [0], [0]>} : vector<2x8x8xbf16>, vector<2x8x32xbf16>, vector<2x8x32xf32> -> vector<2x8x32xf32>
    "tpu.trace_stop"() : () -> ()
    %130 = vector.shape_cast %129 : vector<2x8x32xf32> to vector<16x32xf32>
    %131 = arith.truncf %130 : vector<16x32xf32> to vector<16x32xbf16>
    %132 = vector.extract_strided_slice %52 {offsets = [64, 0], sizes = [32, 128], strides = [1, 1]} : vector<128x128xbf16> to vector<32x128xbf16>
    %cst_60 = arith.constant dense<0.000000e+00> : vector<16x128xf32>
    %133 = tpu.matmul %131, %132, %cst_60 {dimension_numbers = #tpu.dot_dimension_numbers<[1], [0], [0], [1], [0, 0, 1, 1], [], []>} : vector<16x32xbf16>, vector<32x128xbf16>, vector<16x128xf32> -> vector<16x128xf32>
    %134 = arith.addf %112, %133 : vector<16x128xf32>
    %135 = vector.extract_strided_slice %65 {offsets = [0, 0, 96], sizes = [2, 8, 32], strides = [1, 1, 1]} : vector<2x8x128xbf16> to vector<2x8x32xbf16>
    %136 = vector.extract_strided_slice %67 {offsets = [0, 0, 96], sizes = [2, 8, 32], strides = [1, 1, 1]} : vector<2x8x128xbf16> to vector<2x8x32xbf16>
    "tpu.trace_start"() <{level = 10 : i32, message = "bqd,bkd->bqk"}> : () -> ()
    %cst_61 = arith.constant dense<0.000000e+00> : vector<2x8x8xf32>
    %137 = tpu.matmul %135, %136, %cst_61 {dimension_numbers = #tpu.dot_dimension_numbers<[2], [2], [1], [1], [0, 0, 0, 1, 1, 1], [0], [0]>} : vector<2x8x32xbf16>, vector<2x8x32xbf16>, vector<2x8x8xf32> -> vector<2x8x8xf32>
    "tpu.trace_stop"() : () -> ()
    %138 = arith.addf %137, %9 : vector<2x8x8xf32>
    %cst_62 = arith.constant dense<0xFF800000> : vector<2x8xf32>
    %139 = vector.multi_reduction <maximumf>, %138, %cst_62 [2] : vector<2x8x8xf32> to vector<2x8xf32>
    %140 = vector.shape_cast %139 : vector<2x8xf32> to vector<2x8x1xf32>
    %141 = vector.broadcast %140 : vector<2x8x1xf32> to vector<2x8x8xf32>
    %142 = arith.subf %138, %141 : vector<2x8x8xf32>
    %143 = math.exp %142 : vector<2x8x8xf32>
    %cst_63 = arith.constant dense<0.000000e+00> : vector<2x8xf32>
    %144 = vector.multi_reduction <add>, %143, %cst_63 [2] : vector<2x8x8xf32> to vector<2x8xf32>
    %145 = vector.shape_cast %144 : vector<2x8xf32> to vector<2x8x1xf32>
    %146 = tpu.reciprocal %145 {approx = true} : vector<2x8x1xf32> -> vector<2x8x1xf32>
    %147 = vector.broadcast %146 : vector<2x8x1xf32> to vector<2x8x8xf32>
    %148 = arith.mulf %143, %147 : vector<2x8x8xf32>
    %149 = arith.truncf %148 : vector<2x8x8xf32> to vector<2x8x8xbf16>
    %150 = vector.extract_strided_slice %69 {offsets = [0, 0, 96], sizes = [2, 8, 32], strides = [1, 1, 1]} : vector<2x8x128xbf16> to vector<2x8x32xbf16>
    "tpu.trace_start"() <{level = 10 : i32, message = "bqk,bkd->bqd"}> : () -> ()
    %cst_64 = arith.constant dense<0.000000e+00> : vector<2x8x32xf32>
    %151 = tpu.matmul %149, %150, %cst_64 {dimension_numbers = #tpu.dot_dimension_numbers<[2], [1], [1], [2], [0, 0, 0, 1, 1, 2], [0], [0]>} : vector<2x8x8xbf16>, vector<2x8x32xbf16>, vector<2x8x32xf32> -> vector<2x8x32xf32>
    "tpu.trace_stop"() : () -> ()
    %152 = vector.shape_cast %151 : vector<2x8x32xf32> to vector<16x32xf32>
    %153 = arith.truncf %152 : vector<16x32xf32> to vector<16x32xbf16>
    %154 = vector.extract_strided_slice %52 {offsets = [96, 0], sizes = [32, 128], strides = [1, 1]} : vector<128x128xbf16> to vector<32x128xbf16>
    %cst_65 = arith.constant dense<0.000000e+00> : vector<16x128xf32>
    %155 = tpu.matmul %153, %154, %cst_65 {dimension_numbers = #tpu.dot_dimension_numbers<[1], [0], [0], [1], [0, 0, 1, 1], [], []>} : vector<16x32xbf16>, vector<32x128xbf16>, vector<16x128xf32> -> vector<16x128xf32>
    %156 = arith.addf %134, %155 : vector<16x128xf32>
    %157 = vector.broadcast %54 : vector<1x128xf32> to vector<16x128xf32>
    %158 = arith.addf %156, %157 : vector<16x128xf32>
    %159 = arith.addf %3, %158 : vector<16x128xf32>
    %c0_66 = arith.constant 0 : index
    %c0_67 = arith.constant 0 : index
    %c0_68 = arith.constant 0 : index
    %160 = vector.load %arg16[%c0_66, %c0_67, %c0_68] : memref<1x1x128xf32, #tpu.memory_space<vmem>>, vector<1x1x128xf32>
    %161 = vector.shape_cast %160 : vector<1x1x128xf32> to vector<1x128xf32>
    %c0_69 = arith.constant 0 : index
    %c0_70 = arith.constant 0 : index
    %c0_71 = arith.constant 0 : index
    %162 = vector.load %arg17[%c0_69, %c0_70, %c0_71] : memref<1x1x128xf32, #tpu.memory_space<vmem>>, vector<1x1x128xf32>
    %163 = vector.shape_cast %162 : vector<1x1x128xf32> to vector<1x128xf32>
    %cst_72 = arith.constant dense<0.000000e+00> : vector<16xf32>
    %164 = vector.multi_reduction <add>, %159, %cst_72 [1] : vector<16x128xf32> to vector<16xf32>
    %165 = vector.shape_cast %164 : vector<16xf32> to vector<16x1xf32>
    %cst_73 = arith.constant 1.280000e+02 : f32
    %166 = vector.broadcast %cst_73 : f32 to vector<16x1xf32>
    %167 = arith.divf %165, %166 : vector<16x1xf32>
    %168 = vector.broadcast %167 : vector<16x1xf32> to vector<16x128xf32>
    %169 = arith.subf %159, %168 : vector<16x128xf32>
    %170 = arith.mulf %169, %169 : vector<16x128xf32>
    %cst_74 = arith.constant dense<0.000000e+00> : vector<16xf32>
    %171 = vector.multi_reduction <add>, %170, %cst_74 [1] : vector<16x128xf32> to vector<16xf32>
    %172 = vector.shape_cast %171 : vector<16xf32> to vector<16x1xf32>
    %cst_75 = arith.constant 0.00787401571 : f32
    %173 = vector.broadcast %cst_75 : f32 to vector<16x1xf32>
    %174 = arith.mulf %172, %173 : vector<16x1xf32>
    %175 = math.sqrt %174 : vector<16x1xf32>
    %cst_76 = arith.constant 9.99999997E-7 : f32
    %176 = vector.broadcast %cst_76 : f32 to vector<16x1xf32>
    %177 = arith.addf %175, %176 : vector<16x1xf32>
    %178 = tpu.reciprocal %177 : vector<16x1xf32> -> vector<16x1xf32>
    %179 = vector.broadcast %178 : vector<16x1xf32> to vector<16x128xf32>
    %180 = arith.mulf %169, %179 : vector<16x128xf32>
    %181 = vector.broadcast %161 : vector<1x128xf32> to vector<16x128xf32>
    %182 = arith.mulf %181, %180 : vector<16x128xf32>
    %183 = vector.broadcast %163 : vector<1x128xf32> to vector<16x128xf32>
    %184 = arith.addf %182, %183 : vector<16x128xf32>
    %185 = arith.truncf %184 : vector<16x128xf32> to vector<16x128xbf16>
    %c0_77 = arith.constant 0 : index
    %c0_78 = arith.constant 0 : index
    %c0_79 = arith.constant 0 : index
    %186 = vector.load %arg18[%c0_77, %c0_78, %c0_79] : memref<1x128x128xbf16, #tpu.memory_space<vmem>>, vector<1x128x128xbf16>
    %187 = vector.shape_cast %186 : vector<1x128x128xbf16> to vector<128x128xbf16>
    %c0_80 = arith.constant 0 : index
    %c0_81 = arith.constant 0 : index
    %c0_82 = arith.constant 0 : index
    %188 = vector.load %arg19[%c0_80, %c0_81, %c0_82] : memref<1x1x128xf32, #tpu.memory_space<vmem>>, vector<1x1x128xf32>
    %189 = vector.shape_cast %188 : vector<1x1x128xf32> to vector<1x128xf32>
    %c0_83 = arith.constant 0 : index
    %c0_84 = arith.constant 0 : index
    %c0_85 = arith.constant 0 : index
    %190 = vector.load %arg20[%c0_83, %c0_84, %c0_85] : memref<1x128x128xbf16, #tpu.memory_space<vmem>>, vector<1x128x128xbf16>
    %191 = vector.shape_cast %190 : vector<1x128x128xbf16> to vector<128x128xbf16>
    %c0_86 = arith.constant 0 : index
    %c0_87 = arith.constant 0 : index
    %c0_88 = arith.constant 0 : index
    %192 = vector.load %arg21[%c0_86, %c0_87, %c0_88] : memref<1x1x128xf32, #tpu.memory_space<vmem>>, vector<1x1x128xf32>
    %193 = vector.shape_cast %192 : vector<1x1x128xf32> to vector<1x128xf32>
    %c0_89 = arith.constant 0 : index
    %c0_90 = arith.constant 0 : index
    %c0_91 = arith.constant 0 : index
    %194 = vector.load %arg22[%c0_89, %c0_90, %c0_91] : memref<1x128x128xbf16, #tpu.memory_space<vmem>>, vector<1x128x128xbf16>
    %195 = vector.shape_cast %194 : vector<1x128x128xbf16> to vector<128x128xbf16>
    %c0_92 = arith.constant 0 : index
    %c0_93 = arith.constant 0 : index
    %c0_94 = arith.constant 0 : index
    %196 = vector.load %arg23[%c0_92, %c0_93, %c0_94] : memref<1x1x128xf32, #tpu.memory_space<vmem>>, vector<1x1x128xf32>
    %197 = vector.shape_cast %196 : vector<1x1x128xf32> to vector<1x128xf32>
    %c0_95 = arith.constant 0 : index
    %c0_96 = arith.constant 0 : index
    %c0_97 = arith.constant 0 : index
    %198 = vector.load %arg24[%c0_95, %c0_96, %c0_97] : memref<1x128x128xbf16, #tpu.memory_space<vmem>>, vector<1x128x128xbf16>
    %199 = vector.shape_cast %198 : vector<1x128x128xbf16> to vector<128x128xbf16>
    %c0_98 = arith.constant 0 : index
    %c0_99 = arith.constant 0 : index
    %c0_100 = arith.constant 0 : index
    %200 = vector.load %arg25[%c0_98, %c0_99, %c0_100] : memref<1x1x128xf32, #tpu.memory_space<vmem>>, vector<1x1x128xf32>
    %201 = vector.shape_cast %200 : vector<1x1x128xf32> to vector<1x128xf32>
    %cst_101 = arith.constant dense<0.000000e+00> : vector<16x128xf32>
    %202 = tpu.matmul %185, %187, %cst_101 {dimension_numbers = #tpu.dot_dimension_numbers<[1], [0], [0], [1], [0, 0, 1, 1], [], []>} : vector<16x128xbf16>, vector<128x128xbf16>, vector<16x128xf32> -> vector<16x128xf32>
    %203 = vector.broadcast %189 : vector<1x128xf32> to vector<16x128xf32>
    %204 = arith.addf %202, %203 : vector<16x128xf32>
    %cst_102 = arith.constant dense<0.000000e+00> : vector<16x128xf32>
    %205 = tpu.matmul %6, %191, %cst_102 {dimension_numbers = #tpu.dot_dimension_numbers<[1], [0], [0], [1], [0, 0, 1, 1], [], []>} : vector<16x128xbf16>, vector<128x128xbf16>, vector<16x128xf32> -> vector<16x128xf32>
    %206 = vector.broadcast %193 : vector<1x128xf32> to vector<16x128xf32>
    %207 = arith.addf %205, %206 : vector<16x128xf32>
    %cst_103 = arith.constant dense<0.000000e+00> : vector<16x128xf32>
    %208 = tpu.matmul %6, %195, %cst_103 {dimension_numbers = #tpu.dot_dimension_numbers<[1], [0], [0], [1], [0, 0, 1, 1], [], []>} : vector<16x128xbf16>, vector<128x128xbf16>, vector<16x128xf32> -> vector<16x128xf32>
    %209 = vector.broadcast %197 : vector<1x128xf32> to vector<16x128xf32>
    %210 = arith.addf %208, %209 : vector<16x128xf32>
    %211 = arith.truncf %204 : vector<16x128xf32> to vector<16x128xbf16>
    %212 = vector.shape_cast %211 : vector<16x128xbf16> to vector<2x8x128xbf16>
    %213 = arith.truncf %207 : vector<16x128xf32> to vector<16x128xbf16>
    %214 = vector.shape_cast %213 : vector<16x128xbf16> to vector<2x8x128xbf16>
    %215 = arith.truncf %210 : vector<16x128xf32> to vector<16x128xbf16>
    %216 = vector.shape_cast %215 : vector<16x128xbf16> to vector<2x8x128xbf16>
    %217 = vector.extract_strided_slice %212 {offsets = [0, 0, 0], sizes = [2, 8, 32], strides = [1, 1, 1]} : vector<2x8x128xbf16> to vector<2x8x32xbf16>
    %218 = vector.extract_strided_slice %214 {offsets = [0, 0, 0], sizes = [2, 8, 32], strides = [1, 1, 1]} : vector<2x8x128xbf16> to vector<2x8x32xbf16>
    "tpu.trace_start"() <{level = 10 : i32, message = "bqd,bkd->bqk"}> : () -> ()
    %cst_104 = arith.constant dense<0.000000e+00> : vector<2x8x8xf32>
    %219 = tpu.matmul %217, %218, %cst_104 {dimension_numbers = #tpu.dot_dimension_numbers<[2], [2], [1], [1], [0, 0, 0, 1, 1, 1], [0], [0]>} : vector<2x8x32xbf16>, vector<2x8x32xbf16>, vector<2x8x8xf32> -> vector<2x8x8xf32>
    "tpu.trace_stop"() : () -> ()
    %220 = arith.addf %219, %12 : vector<2x8x8xf32>
    %cst_105 = arith.constant dense<0xFF800000> : vector<2x8xf32>
    %221 = vector.multi_reduction <maximumf>, %220, %cst_105 [2] : vector<2x8x8xf32> to vector<2x8xf32>
    %222 = vector.shape_cast %221 : vector<2x8xf32> to vector<2x8x1xf32>
    %223 = vector.broadcast %222 : vector<2x8x1xf32> to vector<2x8x8xf32>
    %224 = arith.subf %220, %223 : vector<2x8x8xf32>
    %225 = math.exp %224 : vector<2x8x8xf32>
    %cst_106 = arith.constant dense<0.000000e+00> : vector<2x8xf32>
    %226 = vector.multi_reduction <add>, %225, %cst_106 [2] : vector<2x8x8xf32> to vector<2x8xf32>
    %227 = vector.shape_cast %226 : vector<2x8xf32> to vector<2x8x1xf32>
    %228 = tpu.reciprocal %227 {approx = true} : vector<2x8x1xf32> -> vector<2x8x1xf32>
    %229 = vector.broadcast %228 : vector<2x8x1xf32> to vector<2x8x8xf32>
    %230 = arith.mulf %225, %229 : vector<2x8x8xf32>
    %231 = arith.truncf %230 : vector<2x8x8xf32> to vector<2x8x8xbf16>
    %232 = vector.extract_strided_slice %216 {offsets = [0, 0, 0], sizes = [2, 8, 32], strides = [1, 1, 1]} : vector<2x8x128xbf16> to vector<2x8x32xbf16>
    "tpu.trace_start"() <{level = 10 : i32, message = "bqk,bkd->bqd"}> : () -> ()
    %cst_107 = arith.constant dense<0.000000e+00> : vector<2x8x32xf32>
    %233 = tpu.matmul %231, %232, %cst_107 {dimension_numbers = #tpu.dot_dimension_numbers<[2], [1], [1], [2], [0, 0, 0, 1, 1, 2], [0], [0]>} : vector<2x8x8xbf16>, vector<2x8x32xbf16>, vector<2x8x32xf32> -> vector<2x8x32xf32>
    "tpu.trace_stop"() : () -> ()
    %234 = vector.shape_cast %233 : vector<2x8x32xf32> to vector<16x32xf32>
    %235 = arith.truncf %234 : vector<16x32xf32> to vector<16x32xbf16>
    %236 = vector.extract_strided_slice %199 {offsets = [0, 0], sizes = [32, 128], strides = [1, 1]} : vector<128x128xbf16> to vector<32x128xbf16>
    %cst_108 = arith.constant dense<0.000000e+00> : vector<16x128xf32>
    %237 = tpu.matmul %235, %236, %cst_108 {dimension_numbers = #tpu.dot_dimension_numbers<[1], [0], [0], [1], [0, 0, 1, 1], [], []>} : vector<16x32xbf16>, vector<32x128xbf16>, vector<16x128xf32> -> vector<16x128xf32>
    %238 = vector.extract_strided_slice %212 {offsets = [0, 0, 32], sizes = [2, 8, 32], strides = [1, 1, 1]} : vector<2x8x128xbf16> to vector<2x8x32xbf16>
    %239 = vector.extract_strided_slice %214 {offsets = [0, 0, 32], sizes = [2, 8, 32], strides = [1, 1, 1]} : vector<2x8x128xbf16> to vector<2x8x32xbf16>
    "tpu.trace_start"() <{level = 10 : i32, message = "bqd,bkd->bqk"}> : () -> ()
    %cst_109 = arith.constant dense<0.000000e+00> : vector<2x8x8xf32>
    %240 = tpu.matmul %238, %239, %cst_109 {dimension_numbers = #tpu.dot_dimension_numbers<[2], [2], [1], [1], [0, 0, 0, 1, 1, 1], [0], [0]>} : vector<2x8x32xbf16>, vector<2x8x32xbf16>, vector<2x8x8xf32> -> vector<2x8x8xf32>
    "tpu.trace_stop"() : () -> ()
    %241 = arith.addf %240, %12 : vector<2x8x8xf32>
    %cst_110 = arith.constant dense<0xFF800000> : vector<2x8xf32>
    %242 = vector.multi_reduction <maximumf>, %241, %cst_110 [2] : vector<2x8x8xf32> to vector<2x8xf32>
    %243 = vector.shape_cast %242 : vector<2x8xf32> to vector<2x8x1xf32>
    %244 = vector.broadcast %243 : vector<2x8x1xf32> to vector<2x8x8xf32>
    %245 = arith.subf %241, %244 : vector<2x8x8xf32>
    %246 = math.exp %245 : vector<2x8x8xf32>
    %cst_111 = arith.constant dense<0.000000e+00> : vector<2x8xf32>
    %247 = vector.multi_reduction <add>, %246, %cst_111 [2] : vector<2x8x8xf32> to vector<2x8xf32>
    %248 = vector.shape_cast %247 : vector<2x8xf32> to vector<2x8x1xf32>
    %249 = tpu.reciprocal %248 {approx = true} : vector<2x8x1xf32> -> vector<2x8x1xf32>
    %250 = vector.broadcast %249 : vector<2x8x1xf32> to vector<2x8x8xf32>
    %251 = arith.mulf %246, %250 : vector<2x8x8xf32>
    %252 = arith.truncf %251 : vector<2x8x8xf32> to vector<2x8x8xbf16>
    %253 = vector.extract_strided_slice %216 {offsets = [0, 0, 32], sizes = [2, 8, 32], strides = [1, 1, 1]} : vector<2x8x128xbf16> to vector<2x8x32xbf16>
    "tpu.trace_start"() <{level = 10 : i32, message = "bqk,bkd->bqd"}> : () -> ()
    %cst_112 = arith.constant dense<0.000000e+00> : vector<2x8x32xf32>
    %254 = tpu.matmul %252, %253, %cst_112 {dimension_numbers = #tpu.dot_dimension_numbers<[2], [1], [1], [2], [0, 0, 0, 1, 1, 2], [0], [0]>} : vector<2x8x8xbf16>, vector<2x8x32xbf16>, vector<2x8x32xf32> -> vector<2x8x32xf32>
    "tpu.trace_stop"() : () -> ()
    %255 = vector.shape_cast %254 : vector<2x8x32xf32> to vector<16x32xf32>
    %256 = arith.truncf %255 : vector<16x32xf32> to vector<16x32xbf16>
    %257 = vector.extract_strided_slice %199 {offsets = [32, 0], sizes = [32, 128], strides = [1, 1]} : vector<128x128xbf16> to vector<32x128xbf16>
    %cst_113 = arith.constant dense<0.000000e+00> : vector<16x128xf32>
    %258 = tpu.matmul %256, %257, %cst_113 {dimension_numbers = #tpu.dot_dimension_numbers<[1], [0], [0], [1], [0, 0, 1, 1], [], []>} : vector<16x32xbf16>, vector<32x128xbf16>, vector<16x128xf32> -> vector<16x128xf32>
    %259 = arith.addf %237, %258 : vector<16x128xf32>
    %260 = vector.extract_strided_slice %212 {offsets = [0, 0, 64], sizes = [2, 8, 32], strides = [1, 1, 1]} : vector<2x8x128xbf16> to vector<2x8x32xbf16>
    %261 = vector.extract_strided_slice %214 {offsets = [0, 0, 64], sizes = [2, 8, 32], strides = [1, 1, 1]} : vector<2x8x128xbf16> to vector<2x8x32xbf16>
    "tpu.trace_start"() <{level = 10 : i32, message = "bqd,bkd->bqk"}> : () -> ()
    %cst_114 = arith.constant dense<0.000000e+00> : vector<2x8x8xf32>
    %262 = tpu.matmul %260, %261, %cst_114 {dimension_numbers = #tpu.dot_dimension_numbers<[2], [2], [1], [1], [0, 0, 0, 1, 1, 1], [0], [0]>} : vector<2x8x32xbf16>, vector<2x8x32xbf16>, vector<2x8x8xf32> -> vector<2x8x8xf32>
    "tpu.trace_stop"() : () -> ()
    %263 = arith.addf %262, %12 : vector<2x8x8xf32>
    %cst_115 = arith.constant dense<0xFF800000> : vector<2x8xf32>
    %264 = vector.multi_reduction <maximumf>, %263, %cst_115 [2] : vector<2x8x8xf32> to vector<2x8xf32>
    %265 = vector.shape_cast %264 : vector<2x8xf32> to vector<2x8x1xf32>
    %266 = vector.broadcast %265 : vector<2x8x1xf32> to vector<2x8x8xf32>
    %267 = arith.subf %263, %266 : vector<2x8x8xf32>
    %268 = math.exp %267 : vector<2x8x8xf32>
    %cst_116 = arith.constant dense<0.000000e+00> : vector<2x8xf32>
    %269 = vector.multi_reduction <add>, %268, %cst_116 [2] : vector<2x8x8xf32> to vector<2x8xf32>
    %270 = vector.shape_cast %269 : vector<2x8xf32> to vector<2x8x1xf32>
    %271 = tpu.reciprocal %270 {approx = true} : vector<2x8x1xf32> -> vector<2x8x1xf32>
    %272 = vector.broadcast %271 : vector<2x8x1xf32> to vector<2x8x8xf32>
    %273 = arith.mulf %268, %272 : vector<2x8x8xf32>
    %274 = arith.truncf %273 : vector<2x8x8xf32> to vector<2x8x8xbf16>
    %275 = vector.extract_strided_slice %216 {offsets = [0, 0, 64], sizes = [2, 8, 32], strides = [1, 1, 1]} : vector<2x8x128xbf16> to vector<2x8x32xbf16>
    "tpu.trace_start"() <{level = 10 : i32, message = "bqk,bkd->bqd"}> : () -> ()
    %cst_117 = arith.constant dense<0.000000e+00> : vector<2x8x32xf32>
    %276 = tpu.matmul %274, %275, %cst_117 {dimension_numbers = #tpu.dot_dimension_numbers<[2], [1], [1], [2], [0, 0, 0, 1, 1, 2], [0], [0]>} : vector<2x8x8xbf16>, vector<2x8x32xbf16>, vector<2x8x32xf32> -> vector<2x8x32xf32>
    "tpu.trace_stop"() : () -> ()
    %277 = vector.shape_cast %276 : vector<2x8x32xf32> to vector<16x32xf32>
    %278 = arith.truncf %277 : vector<16x32xf32> to vector<16x32xbf16>
    %279 = vector.extract_strided_slice %199 {offsets = [64, 0], sizes = [32, 128], strides = [1, 1]} : vector<128x128xbf16> to vector<32x128xbf16>
    %cst_118 = arith.constant dense<0.000000e+00> : vector<16x128xf32>
    %280 = tpu.matmul %278, %279, %cst_118 {dimension_numbers = #tpu.dot_dimension_numbers<[1], [0], [0], [1], [0, 0, 1, 1], [], []>} : vector<16x32xbf16>, vector<32x128xbf16>, vector<16x128xf32> -> vector<16x128xf32>
    %281 = arith.addf %259, %280 : vector<16x128xf32>
    %282 = vector.extract_strided_slice %212 {offsets = [0, 0, 96], sizes = [2, 8, 32], strides = [1, 1, 1]} : vector<2x8x128xbf16> to vector<2x8x32xbf16>
    %283 = vector.extract_strided_slice %214 {offsets = [0, 0, 96], sizes = [2, 8, 32], strides = [1, 1, 1]} : vector<2x8x128xbf16> to vector<2x8x32xbf16>
    "tpu.trace_start"() <{level = 10 : i32, message = "bqd,bkd->bqk"}> : () -> ()
    %cst_119 = arith.constant dense<0.000000e+00> : vector<2x8x8xf32>
    %284 = tpu.matmul %282, %283, %cst_119 {dimension_numbers = #tpu.dot_dimension_numbers<[2], [2], [1], [1], [0, 0, 0, 1, 1, 1], [0], [0]>} : vector<2x8x32xbf16>, vector<2x8x32xbf16>, vector<2x8x8xf32> -> vector<2x8x8xf32>
    "tpu.trace_stop"() : () -> ()
    %285 = arith.addf %284, %12 : vector<2x8x8xf32>
    %cst_120 = arith.constant dense<0xFF800000> : vector<2x8xf32>
    %286 = vector.multi_reduction <maximumf>, %285, %cst_120 [2] : vector<2x8x8xf32> to vector<2x8xf32>
    %287 = vector.shape_cast %286 : vector<2x8xf32> to vector<2x8x1xf32>
    %288 = vector.broadcast %287 : vector<2x8x1xf32> to vector<2x8x8xf32>
    %289 = arith.subf %285, %288 : vector<2x8x8xf32>
    %290 = math.exp %289 : vector<2x8x8xf32>
    %cst_121 = arith.constant dense<0.000000e+00> : vector<2x8xf32>
    %291 = vector.multi_reduction <add>, %290, %cst_121 [2] : vector<2x8x8xf32> to vector<2x8xf32>
    %292 = vector.shape_cast %291 : vector<2x8xf32> to vector<2x8x1xf32>
    %293 = tpu.reciprocal %292 {approx = true} : vector<2x8x1xf32> -> vector<2x8x1xf32>
    %294 = vector.broadcast %293 : vector<2x8x1xf32> to vector<2x8x8xf32>
    %295 = arith.mulf %290, %294 : vector<2x8x8xf32>
    %296 = arith.truncf %295 : vector<2x8x8xf32> to vector<2x8x8xbf16>
    %297 = vector.extract_strided_slice %216 {offsets = [0, 0, 96], sizes = [2, 8, 32], strides = [1, 1, 1]} : vector<2x8x128xbf16> to vector<2x8x32xbf16>
    "tpu.trace_start"() <{level = 10 : i32, message = "bqk,bkd->bqd"}> : () -> ()
    %cst_122 = arith.constant dense<0.000000e+00> : vector<2x8x32xf32>
    %298 = tpu.matmul %296, %297, %cst_122 {dimension_numbers = #tpu.dot_dimension_numbers<[2], [1], [1], [2], [0, 0, 0, 1, 1, 2], [0], [0]>} : vector<2x8x8xbf16>, vector<2x8x32xbf16>, vector<2x8x32xf32> -> vector<2x8x32xf32>
    "tpu.trace_stop"() : () -> ()
    %299 = vector.shape_cast %298 : vector<2x8x32xf32> to vector<16x32xf32>
    %300 = arith.truncf %299 : vector<16x32xf32> to vector<16x32xbf16>
    %301 = vector.extract_strided_slice %199 {offsets = [96, 0], sizes = [32, 128], strides = [1, 1]} : vector<128x128xbf16> to vector<32x128xbf16>
    %cst_123 = arith.constant dense<0.000000e+00> : vector<16x128xf32>
    %302 = tpu.matmul %300, %301, %cst_123 {dimension_numbers = #tpu.dot_dimension_numbers<[1], [0], [0], [1], [0, 0, 1, 1], [], []>} : vector<16x32xbf16>, vector<32x128xbf16>, vector<16x128xf32> -> vector<16x128xf32>
    %303 = arith.addf %281, %302 : vector<16x128xf32>
    %304 = vector.broadcast %201 : vector<1x128xf32> to vector<16x128xf32>
    %305 = arith.addf %303, %304 : vector<16x128xf32>
    %306 = arith.addf %159, %305 : vector<16x128xf32>
    %c0_124 = arith.constant 0 : index
    %c0_125 = arith.constant 0 : index
    %c0_126 = arith.constant 0 : index
    %307 = vector.load %arg26[%c0_124, %c0_125, %c0_126] : memref<1x1x128xf32, #tpu.memory_space<vmem>>, vector<1x1x128xf32>
    %308 = vector.shape_cast %307 : vector<1x1x128xf32> to vector<1x128xf32>
    %c0_127 = arith.constant 0 : index
    %c0_128 = arith.constant 0 : index
    %c0_129 = arith.constant 0 : index
    %309 = vector.load %arg27[%c0_127, %c0_128, %c0_129] : memref<1x1x128xf32, #tpu.memory_space<vmem>>, vector<1x1x128xf32>
    %310 = vector.shape_cast %309 : vector<1x1x128xf32> to vector<1x128xf32>
    %cst_130 = arith.constant dense<0.000000e+00> : vector<16xf32>
    %311 = vector.multi_reduction <add>, %306, %cst_130 [1] : vector<16x128xf32> to vector<16xf32>
    %312 = vector.shape_cast %311 : vector<16xf32> to vector<16x1xf32>
    %cst_131 = arith.constant 1.280000e+02 : f32
    %313 = vector.broadcast %cst_131 : f32 to vector<16x1xf32>
    %314 = arith.divf %312, %313 : vector<16x1xf32>
    %315 = vector.broadcast %314 : vector<16x1xf32> to vector<16x128xf32>
    %316 = arith.subf %306, %315 : vector<16x128xf32>
    %317 = arith.mulf %316, %316 : vector<16x128xf32>
    %cst_132 = arith.constant dense<0.000000e+00> : vector<16xf32>
    %318 = vector.multi_reduction <add>, %317, %cst_132 [1] : vector<16x128xf32> to vector<16xf32>
    %319 = vector.shape_cast %318 : vector<16xf32> to vector<16x1xf32>
    %cst_133 = arith.constant 0.00787401571 : f32
    %320 = vector.broadcast %cst_133 : f32 to vector<16x1xf32>
    %321 = arith.mulf %319, %320 : vector<16x1xf32>
    %322 = math.sqrt %321 : vector<16x1xf32>
    %cst_134 = arith.constant 9.99999997E-7 : f32
    %323 = vector.broadcast %cst_134 : f32 to vector<16x1xf32>
    %324 = arith.addf %322, %323 : vector<16x1xf32>
    %325 = tpu.reciprocal %324 : vector<16x1xf32> -> vector<16x1xf32>
    %326 = vector.broadcast %325 : vector<16x1xf32> to vector<16x128xf32>
    %327 = arith.mulf %316, %326 : vector<16x128xf32>
    %328 = vector.broadcast %308 : vector<1x128xf32> to vector<16x128xf32>
    %329 = arith.mulf %328, %327 : vector<16x128xf32>
    %330 = vector.broadcast %310 : vector<1x128xf32> to vector<16x128xf32>
    %331 = arith.addf %329, %330 : vector<16x128xf32>
    %332 = arith.truncf %331 : vector<16x128xf32> to vector<16x128xbf16>
    %c0_135 = arith.constant 0 : index
    %c0_136 = arith.constant 0 : index
    %c0_137 = arith.constant 0 : index
    %333 = vector.load %arg28[%c0_135, %c0_136, %c0_137] : memref<1x128x512xbf16, #tpu.memory_space<vmem>>, vector<1x128x512xbf16>
    %334 = vector.shape_cast %333 : vector<1x128x512xbf16> to vector<128x512xbf16>
    %cst_138 = arith.constant dense<0.000000e+00> : vector<16x512xf32>
    %335 = tpu.matmul %332, %334, %cst_138 {dimension_numbers = #tpu.dot_dimension_numbers<[1], [0], [0], [1], [0, 0, 1, 1], [], []>} : vector<16x128xbf16>, vector<128x512xbf16>, vector<16x512xf32> -> vector<16x512xf32>
    %c0_139 = arith.constant 0 : index
    %c0_140 = arith.constant 0 : index
    %c0_141 = arith.constant 0 : index
    %336 = vector.load %arg29[%c0_139, %c0_140, %c0_141] : memref<1x1x512xf32, #tpu.memory_space<vmem>>, vector<1x1x512xf32>
    %337 = vector.shape_cast %336 : vector<1x1x512xf32> to vector<1x512xf32>
    %338 = vector.broadcast %337 : vector<1x512xf32> to vector<16x512xf32>
    %339 = arith.addf %335, %338 : vector<16x512xf32>
    %cst_142 = arith.constant 0.000000e+00 : f32
    %340 = vector.broadcast %cst_142 : f32 to vector<16x512xf32>
    %341 = arith.maximumf %339, %340 : vector<16x512xf32>
    %342 = arith.truncf %341 : vector<16x512xf32> to vector<16x512xbf16>
    %c0_143 = arith.constant 0 : index
    %c0_144 = arith.constant 0 : index
    %c0_145 = arith.constant 0 : index
    %343 = vector.load %arg30[%c0_143, %c0_144, %c0_145] : memref<1x512x128xbf16, #tpu.memory_space<vmem>>, vector<1x512x128xbf16>
    %344 = vector.shape_cast %343 : vector<1x512x128xbf16> to vector<512x128xbf16>
    %cst_146 = arith.constant dense<0.000000e+00> : vector<16x128xf32>
    %345 = tpu.matmul %342, %344, %cst_146 {dimension_numbers = #tpu.dot_dimension_numbers<[1], [0], [0], [1], [0, 0, 1, 1], [], []>} : vector<16x512xbf16>, vector<512x128xbf16>, vector<16x128xf32> -> vector<16x128xf32>
    %346 = arith.addf %306, %345 : vector<16x128xf32>
    %c0_147 = arith.constant 0 : index
    %c0_148 = arith.constant 0 : index
    %c0_149 = arith.constant 0 : index
    %347 = vector.load %arg31[%c0_147, %c0_148, %c0_149] : memref<1x1x128xf32, #tpu.memory_space<vmem>>, vector<1x1x128xf32>
    %348 = vector.shape_cast %347 : vector<1x1x128xf32> to vector<1x128xf32>
    %349 = vector.broadcast %348 : vector<1x128xf32> to vector<16x128xf32>
    %350 = arith.addf %346, %349 : vector<16x128xf32>
    %c0_150 = arith.constant 0 : index
    %c0_151 = arith.constant 0 : index
    %351 = vector.load %arg35[%c0_150, %c0_151] : memref<16x128xf32, #tpu.memory_space<vmem>>, vector<16x128xf32>
    tpu.vector_store %arg35[%c0_150, %c0_151], %350 {strides = array<i32>} : memref<16x128xf32, #tpu.memory_space<vmem>>, vector<16x128xf32>,
    %c1_i32 = arith.constant 1 : i32
    %352 = arith.cmpi eq, %arg1, %c1_i32 : i32
    %353 = arith.extui %352 : i1 to i32
    %c0_i32_152 = arith.constant 0 : i32
    %354 = arith.cmpi ne, %353, %c0_i32_152 : i32
    scf.if %354 {
      %c0_153 = arith.constant 0 : index
      %c0_154 = arith.constant 0 : index
      %355 = vector.load %arg32[%c0_153, %c0_154] : memref<1x128xf32, #tpu.memory_space<vmem>>, vector<1x128xf32>
      %c0_155 = arith.constant 0 : index
      %c0_156 = arith.constant 0 : index
      %356 = vector.load %arg33[%c0_155, %c0_156] : memref<1x128xf32, #tpu.memory_space<vmem>>, vector<1x128xf32>
      %cst_157 = arith.constant dense<0.000000e+00> : vector<16xf32>
      %357 = vector.multi_reduction <add>, %350, %cst_157 [1] : vector<16x128xf32> to vector<16xf32>
      %358 = vector.shape_cast %357 : vector<16xf32> to vector<16x1xf32>
      %cst_158 = arith.constant 1.280000e+02 : f32
      %359 = vector.broadcast %cst_158 : f32 to vector<16x1xf32>
      %360 = arith.divf %358, %359 : vector<16x1xf32>
      %361 = vector.broadcast %360 : vector<16x1xf32> to vector<16x128xf32>
      %362 = arith.subf %350, %361 : vector<16x128xf32>
      %363 = arith.mulf %362, %362 : vector<16x128xf32>
      %cst_159 = arith.constant dense<0.000000e+00> : vector<16xf32>
      %364 = vector.multi_reduction <add>, %363, %cst_159 [1] : vector<16x128xf32> to vector<16xf32>
      %365 = vector.shape_cast %364 : vector<16xf32> to vector<16x1xf32>
      %cst_160 = arith.constant 0.00787401571 : f32
      %366 = vector.broadcast %cst_160 : f32 to vector<16x1xf32>
      %367 = arith.mulf %365, %366 : vector<16x1xf32>
      %368 = math.sqrt %367 : vector<16x1xf32>
      %cst_161 = arith.constant 9.99999997E-7 : f32
      %369 = vector.broadcast %cst_161 : f32 to vector<16x1xf32>
      %370 = arith.addf %368, %369 : vector<16x1xf32>
      %371 = tpu.reciprocal %370 : vector<16x1xf32> -> vector<16x1xf32>
      %372 = vector.broadcast %371 : vector<16x1xf32> to vector<16x128xf32>
      %373 = arith.mulf %362, %372 : vector<16x128xf32>
      %374 = vector.broadcast %355 : vector<1x128xf32> to vector<16x128xf32>
      %375 = arith.mulf %374, %373 : vector<16x128xf32>
      %376 = vector.broadcast %356 : vector<1x128xf32> to vector<16x128xf32>
      %377 = arith.addf %375, %376 : vector<16x128xf32>
      %378 = vector.shape_cast %377 : vector<16x128xf32> to vector<2x8x128xf32>
      %c0_162 = arith.constant 0 : index
      %c0_163 = arith.constant 0 : index
      %c0_164 = arith.constant 0 : index
      %379 = vector.load %arg34[%c0_162, %c0_163, %c0_164] : memref<2x8x128xf32, #tpu.memory_space<vmem>>, vector<2x8x128xf32>
      tpu.vector_store %arg34[%c0_162, %c0_163, %c0_164], %378 {strides = array<i32>} : memref<2x8x128xf32, #tpu.memory_space<vmem>>, vector<2x8x128xf32>,
    } else {
    }
    return
  }
  func.func @transform_0(%arg0: i32, %arg1: i32) -> (i32, i32, i32) {
    %c0_i32 = arith.constant 0 : i32
    %c0_i32_0 = arith.constant 0 : i32
    %c0_i32_1 = arith.constant 0 : i32
    return %arg0, %c0_i32, %c0_i32_0 : i32, i32, i32
  }
  func.func @transform_1(%arg0: i32, %arg1: i32) -> (i32, i32, i32) {
    %c0_i32 = arith.constant 0 : i32
    %c0_i32_0 = arith.constant 0 : i32
    %c0_i32_1 = arith.constant 0 : i32
    return %arg0, %c0_i32, %c0_i32_0 : i32, i32, i32
  }
  func.func @transform_2(%arg0: i32, %arg1: i32) -> (i32, i32) {
    %c0_i32 = arith.constant 0 : i32
    %c0_i32_0 = arith.constant 0 : i32
    %c0_i32_1 = arith.constant 0 : i32
    return %c0_i32, %c0_i32_0 : i32, i32
  }
  func.func @transform_3(%arg0: i32, %arg1: i32) -> (i32, i32) {
    %c0_i32 = arith.constant 0 : i32
    %c0_i32_0 = arith.constant 0 : i32
    %c0_i32_1 = arith.constant 0 : i32
    return %c0_i32, %c0_i32_0 : i32, i32
  }
  func.func @transform_4(%arg0: i32, %arg1: i32) -> (i32, i32, i32) {
    %c0_i32 = arith.constant 0 : i32
    %c0_i32_0 = arith.constant 0 : i32
    %c0_i32_1 = arith.constant 0 : i32
    return %arg1, %c0_i32, %c0_i32_0 : i32, i32, i32
  }
  func.func @transform_5(%arg0: i32, %arg1: i32) -> (i32, i32, i32) {
    %c0_i32 = arith.constant 0 : i32
    %c0_i32_0 = arith.constant 0 : i32
    %c0_i32_1 = arith.constant 0 : i32
    return %arg1, %c0_i32, %c0_i32_0 : i32, i32, i32
  }
  func.func @transform_6(%arg0: i32, %arg1: i32) -> (i32, i32, i32) {
    %c0_i32 = arith.constant 0 : i32
    %c0_i32_0 = arith.constant 0 : i32
    %c0_i32_1 = arith.constant 0 : i32
    return %arg1, %c0_i32, %c0_i32_0 : i32, i32, i32
  }
  func.func @transform_7(%arg0: i32, %arg1: i32) -> (i32, i32, i32) {
    %c0_i32 = arith.constant 0 : i32
    %c0_i32_0 = arith.constant 0 : i32
    %c0_i32_1 = arith.constant 0 : i32
    return %arg1, %c0_i32, %c0_i32_0 : i32, i32, i32
  }
  func.func @transform_8(%arg0: i32, %arg1: i32) -> (i32, i32, i32) {
    %c0_i32 = arith.constant 0 : i32
    %c0_i32_0 = arith.constant 0 : i32
    %c0_i32_1 = arith.constant 0 : i32
    return %arg1, %c0_i32, %c0_i32_0 : i32, i32, i32
  }
  func.func @transform_9(%arg0: i32, %arg1: i32) -> (i32, i32, i32) {
    %c0_i32 = arith.constant 0 : i32
    %c0_i32_0 = arith.constant 0 : i32
    %c0_i32_1 = arith.constant 0 : i32
    return %arg1, %c0_i32, %c0_i32_0 : i32, i32, i32
  }
  func.func @transform_10(%arg0: i32, %arg1: i32) -> (i32, i32, i32) {
    %c0_i32 = arith.constant 0 : i32
    %c0_i32_0 = arith.constant 0 : i32
    %c0_i32_1 = arith.constant 0 : i32
    return %arg1, %c0_i32, %c0_i32_0 : i32, i32, i32
  }
  func.func @transform_11(%arg0: i32, %arg1: i32) -> (i32, i32, i32) {
    %c0_i32 = arith.constant 0 : i32
    %c0_i32_0 = arith.constant 0 : i32
    %c0_i32_1 = arith.constant 0 : i32
    return %arg1, %c0_i32, %c0_i32_0 : i32, i32, i32
  }
  func.func @transform_12(%arg0: i32, %arg1: i32) -> (i32, i32, i32) {
    %c0_i32 = arith.constant 0 : i32
    %c0_i32_0 = arith.constant 0 : i32
    %c0_i32_1 = arith.constant 0 : i32
    return %arg1, %c0_i32, %c0_i32_0 : i32, i32, i32
  }
  func.func @transform_13(%arg0: i32, %arg1: i32) -> (i32, i32, i32) {
    %c0_i32 = arith.constant 0 : i32
    %c0_i32_0 = arith.constant 0 : i32
    %c0_i32_1 = arith.constant 0 : i32
    return %arg1, %c0_i32, %c0_i32_0 : i32, i32, i32
  }
  func.func @transform_14(%arg0: i32, %arg1: i32) -> (i32, i32, i32) {
    %c0_i32 = arith.constant 0 : i32
    %c0_i32_0 = arith.constant 0 : i32
    %c0_i32_1 = arith.constant 0 : i32
    return %arg1, %c0_i32, %c0_i32_0 : i32, i32, i32
  }
  func.func @transform_15(%arg0: i32, %arg1: i32) -> (i32, i32, i32) {
    %c0_i32 = arith.constant 0 : i32
    %c0_i32_0 = arith.constant 0 : i32
    %c0_i32_1 = arith.constant 0 : i32
    return %arg1, %c0_i32, %c0_i32_0 : i32, i32, i32
  }
  func.func @transform_16(%arg0: i32, %arg1: i32) -> (i32, i32, i32) {
    %c0_i32 = arith.constant 0 : i32
    %c0_i32_0 = arith.constant 0 : i32
    %c0_i32_1 = arith.constant 0 : i32
    return %arg1, %c0_i32, %c0_i32_0 : i32, i32, i32
  }
  func.func @transform_17(%arg0: i32, %arg1: i32) -> (i32, i32, i32) {
    %c0_i32 = arith.constant 0 : i32
    %c0_i32_0 = arith.constant 0 : i32
    %c0_i32_1 = arith.constant 0 : i32
    return %arg1, %c0_i32, %c0_i32_0 : i32, i32, i32
  }
  func.func @transform_18(%arg0: i32, %arg1: i32) -> (i32, i32, i32) {
    %c0_i32 = arith.constant 0 : i32
    %c0_i32_0 = arith.constant 0 : i32
    %c0_i32_1 = arith.constant 0 : i32
    return %arg1, %c0_i32, %c0_i32_0 : i32, i32, i32
  }
  func.func @transform_19(%arg0: i32, %arg1: i32) -> (i32, i32, i32) {
    %c0_i32 = arith.constant 0 : i32
    %c0_i32_0 = arith.constant 0 : i32
    %c0_i32_1 = arith.constant 0 : i32
    return %arg1, %c0_i32, %c0_i32_0 : i32, i32, i32
  }
  func.func @transform_20(%arg0: i32, %arg1: i32) -> (i32, i32, i32) {
    %c0_i32 = arith.constant 0 : i32
    %c0_i32_0 = arith.constant 0 : i32
    %c0_i32_1 = arith.constant 0 : i32
    return %arg1, %c0_i32, %c0_i32_0 : i32, i32, i32
  }
  func.func @transform_21(%arg0: i32, %arg1: i32) -> (i32, i32, i32) {
    %c0_i32 = arith.constant 0 : i32
    %c0_i32_0 = arith.constant 0 : i32
    %c0_i32_1 = arith.constant 0 : i32
    return %arg1, %c0_i32, %c0_i32_0 : i32, i32, i32
  }
  func.func @transform_22(%arg0: i32, %arg1: i32) -> (i32, i32, i32) {
    %c0_i32 = arith.constant 0 : i32
    %c0_i32_0 = arith.constant 0 : i32
    %c0_i32_1 = arith.constant 0 : i32
    return %arg1, %c0_i32, %c0_i32_0 : i32, i32, i32
  }
  func.func @transform_23(%arg0: i32, %arg1: i32) -> (i32, i32, i32) {
    %c0_i32 = arith.constant 0 : i32
    %c0_i32_0 = arith.constant 0 : i32
    %c0_i32_1 = arith.constant 0 : i32
    return %arg1, %c0_i32, %c0_i32_0 : i32, i32, i32
  }
  func.func @transform_24(%arg0: i32, %arg1: i32) -> (i32, i32, i32) {
    %c0_i32 = arith.constant 0 : i32
    %c0_i32_0 = arith.constant 0 : i32
    %c0_i32_1 = arith.constant 0 : i32
    return %arg1, %c0_i32, %c0_i32_0 : i32, i32, i32
  }
  func.func @transform_25(%arg0: i32, %arg1: i32) -> (i32, i32, i32) {
    %c0_i32 = arith.constant 0 : i32
    %c0_i32_0 = arith.constant 0 : i32
    %c0_i32_1 = arith.constant 0 : i32
    return %arg1, %c0_i32, %c0_i32_0 : i32, i32, i32
  }
  func.func @transform_26(%arg0: i32, %arg1: i32) -> (i32, i32, i32) {
    %c0_i32 = arith.constant 0 : i32
    %c0_i32_0 = arith.constant 0 : i32
    %c0_i32_1 = arith.constant 0 : i32
    return %arg1, %c0_i32, %c0_i32_0 : i32, i32, i32
  }
  func.func @transform_27(%arg0: i32, %arg1: i32) -> (i32, i32, i32) {
    %c0_i32 = arith.constant 0 : i32
    %c0_i32_0 = arith.constant 0 : i32
    %c0_i32_1 = arith.constant 0 : i32
    return %arg1, %c0_i32, %c0_i32_0 : i32, i32, i32
  }
  func.func @transform_28(%arg0: i32, %arg1: i32) -> (i32, i32, i32) {
    %c0_i32 = arith.constant 0 : i32
    %c0_i32_0 = arith.constant 0 : i32
    %c0_i32_1 = arith.constant 0 : i32
    return %arg1, %c0_i32, %c0_i32_0 : i32, i32, i32
  }
  func.func @transform_29(%arg0: i32, %arg1: i32) -> (i32, i32, i32) {
    %c0_i32 = arith.constant 0 : i32
    %c0_i32_0 = arith.constant 0 : i32
    %c0_i32_1 = arith.constant 0 : i32
    return %arg1, %c0_i32, %c0_i32_0 : i32, i32, i32
  }
  func.func @transform_30(%arg0: i32, %arg1: i32) -> (i32, i32) {
    %c0_i32 = arith.constant 0 : i32
    %c0_i32_0 = arith.constant 0 : i32
    %c0_i32_1 = arith.constant 0 : i32
    return %c0_i32, %c0_i32_0 : i32, i32
  }
  func.func @transform_31(%arg0: i32, %arg1: i32) -> (i32, i32) {
    %c0_i32 = arith.constant 0 : i32
    %c0_i32_0 = arith.constant 0 : i32
    %c0_i32_1 = arith.constant 0 : i32
    return %c0_i32, %c0_i32_0 : i32, i32
  }
  func.func @transform_32(%arg0: i32, %arg1: i32) -> (i32, i32, i32) {
    %c0_i32 = arith.constant 0 : i32
    %c0_i32_0 = arith.constant 0 : i32
    %c0_i32_1 = arith.constant 0 : i32
    return %arg0, %c0_i32, %c0_i32_0 : i32, i32, i32
  }
}

</mosaic_0001>

<llo_original>
// kernel: tpu_custom_call.1
$region0: #{tpu_custom_call.1}
  #allocation0 [shape = 'u32[]', space=smem, size = 0x4, offset = 0x4, fixed_abs, tag = 'smem constant byte address 0x4 - core index']
  #allocation1 [shape = 'u32[144,128]{1,0:T(1,128)}', space=vmem, size = 0x12000, scoped, tag = 'internal scratch']
  #allocation2 [shape = 'f32[16,128]{1,0:T(8,128)}', space=vmem, size = 0x2000, scoped, tag = 'scratch operand']
  %s0 = inlined_call_operand.smem [shape: u32[33], index: -1, kind: input, shape index: {}]
  %s1 = sld [smem:[%s0]]
  %s2 = scalar_lea.smem %s0, 1
  %s3 = sld [smem:[%s2]]
  %s4 = scalar_lea.smem %s0, 2
  %s5 = sld [smem:[%s4]]
  %s6 = scalar_lea.smem %s0, 3
  %s7 = sld [smem:[%s6]]
  %s8 = scalar_lea.smem %s0, 4
  %s9 = sld [smem:[%s8]]
  %s10 = scalar_lea.smem %s0, 5
  %s11 = sld [smem:[%s10]]
  %s12 = scalar_lea.smem %s0, 6
  %s13 = sld [smem:[%s12]]
  %s14 = scalar_lea.smem %s0, 7
  %s15 = sld [smem:[%s14]]
  %s16 = scalar_lea.smem %s0, 8
  %s17 = sld [smem:[%s16]]
  %s18 = scalar_lea.smem %s0, 9
  %s19 = sld [smem:[%s18]]
  %s20 = scalar_lea.smem %s0, 10
  %s21 = sld [smem:[%s20]]
  %s22 = scalar_lea.smem %s0, 11
  %s23 = sld [smem:[%s22]]
  %s24 = scalar_lea.smem %s0, 12
  %s25 = sld [smem:[%s24]]
  %s26 = scalar_lea.smem %s0, 13
  %s27 = sld [smem:[%s26]]
  %s28 = scalar_lea.smem %s0, 14
  %s29 = sld [smem:[%s28]]
  %s30 = scalar_lea.smem %s0, 15
  %s31 = sld [smem:[%s30]]
  %s32 = scalar_lea.smem %s0, 16
  %s33 = sld [smem:[%s32]]
  %s34 = scalar_lea.smem %s0, 17
  %s35 = sld [smem:[%s34]]
  %s36 = scalar_lea.smem %s0, 18
  %s37 = sld [smem:[%s36]]
  %s38 = scalar_lea.smem %s0, 19
  %s39 = sld [smem:[%s38]]
  %s40 = scalar_lea.smem %s0, 20
  %s41 = sld [smem:[%s40]]
  %s42 = scalar_lea.smem %s0, 21
  %s43 = sld [smem:[%s42]]
  %s44 = scalar_lea.smem %s0, 22
  %s45 = sld [smem:[%s44]]
  %s46 = scalar_lea.smem %s0, 23
  %s47 = sld [smem:[%s46]]
  %s48 = scalar_lea.smem %s0, 24
  %s49 = sld [smem:[%s48]]
  %s50 = scalar_lea.smem %s0, 25
  %s51 = sld [smem:[%s50]]
  %s52 = scalar_lea.smem %s0, 26
  %s53 = sld [smem:[%s52]]
  %s54 = scalar_lea.smem %s0, 27
  %s55 = sld [smem:[%s54]]
  %s56 = scalar_lea.smem %s0, 28
  %s57 = sld [smem:[%s56]]
  %s58 = scalar_lea.smem %s0, 29
  %s59 = sld [smem:[%s58]]
  %s60 = scalar_lea.smem %s0, 30
  %s61 = sld [smem:[%s60]]
  %s62 = scalar_lea.smem %s0, 31
  %s63 = sld [smem:[%s62]]
  %s64 = scalar_lea.smem %s0, 32
  %s65 = sld [smem:[%s64]]
  %s66 = sld [smem:[#allocation0]]
  $region225: #{tpu_custom_call.1} parent=0
    _
  %s68 = ssub.s32 1, %s66
  %s69 = scalar_select 0, %s68, %s66
  $region1: #{tpu_custom_call.1} parent=0
    #allocation3 [shape = 'u8[8192]{0}', space=vmem, size = 0x2000, scoped, tag = 'input window, operand 0, single buffered']
    #allocation4 [shape = 's32[2]{0}', space=sflag, size = 0x8, scoped, tag = 'scoped memory for tpu_custom_call.1']
    #allocation5 [shape = 's32[2]{0}', space=sflag, size = 0x8, scoped, tag = 'scoped memory for tpu_custom_call.1']
    #allocation6 [shape = 'u8[8192]{0}', space=vmem, size = 0x2000, scoped, tag = 'input window, operand 1, single buffered']
    #allocation7 [shape = 's32[1]{0}', space=sflag, size = 0x4, scoped, tag = 'scoped memory for tpu_custom_call.1']
    #allocation8 [shape = 'u8[4096]{0}', space=vmem, size = 0x1000, scoped, tag = 'input window, operand 2, single buffered']
    #allocation9 [shape = 'u8[1024]{0}', space=vmem, size = 0x400, scoped, tag = 'input window, operand 5']
    #allocation10 [shape = 's32[2]{0}', space=sflag, size = 0x8, scoped, tag = 'scoped memory for tpu_custom_call.1']
    #allocation11 [shape = 'u8[65536]{0}', space=vmem, size = 0x10000, scoped, tag = 'input window, operand 6']
    #allocation12 [shape = 'u8[65536]{0}', space=vmem, size = 0x10000, scoped, tag = 'input window, operand 8']
    #allocation13 [shape = 's32[2]{0}', space=sflag, size = 0x8, scoped, tag = 'scoped memory for tpu_custom_call.1']
    #allocation14 [shape = 'u8[65536]{0}', space=vmem, size = 0x10000, scoped, tag = 'input window, operand 10']
    #allocation15 [shape = 'u8[65536]{0}', space=vmem, size = 0x10000, scoped, tag = 'input window, operand 12']
    #allocation16 [shape = 's32[2]{0}', space=sflag, size = 0x8, scoped, tag = 'scoped memory for tpu_custom_call.1']
    #allocation17 [shape = 'u8[65536]{0}', space=vmem, size = 0x10000, scoped, tag = 'input window, operand 16']
    #allocation18 [shape = 'u8[65536]{0}', space=vmem, size = 0x10000, scoped, tag = 'input window, operand 18']
    #allocation19 [shape = 's32[2]{0}', space=sflag, size = 0x8, scoped, tag = 'scoped memory for tpu_custom_call.1']
    #allocation20 [shape = 'u8[65536]{0}', space=vmem, size = 0x10000, scoped, tag = 'input window, operand 20']
    #allocation21 [shape = 'u8[65536]{0}', space=vmem, size = 0x10000, scoped, tag = 'input window, operand 22']
    #allocation22 [shape = 's32[2]{0}', space=sflag, size = 0x8, scoped, tag = 'scoped memory for tpu_custom_call.1']
    #allocation23 [shape = 'u8[262144]{0}', space=vmem, size = 0x40000, scoped, tag = 'input window, operand 26']
    #allocation24 [shape = 'u8[262144]{0}', space=vmem, size = 0x40000, scoped, tag = 'input window, operand 28']
    #allocation25 [shape = 's32[2]{0}', space=sflag, size = 0x8, scoped, tag = 'scoped memory for tpu_custom_call.1']
    #allocation26 [shape = 'u8[8192]{0}', space=vmem, size = 0x2000, scoped, tag = 'output window, operand 0, single buffered']
    %70 = vsyncpa [#allocation4], 0
    %71 = vsyncpa [#allocation7], 0
    %72 = vsyncpa [#allocation10], 0
    %s73 = scalar_lea.sflag [#allocation10], 1
    %74 = vsyncpa %s73, 0
    %75 = vsyncpa [#allocation13], 0
    %s76 = scalar_lea.sflag [#allocation13], 1
    %77 = vsyncpa %s76, 0
    %78 = vsyncpa [#allocation16], 0
    %s79 = scalar_lea.sflag [#allocation16], 1
    %80 = vsyncpa %s79, 0
    %81 = vsyncpa [#allocation19], 0
    %s82 = scalar_lea.sflag [#allocation19], 1
    %83 = vsyncpa %s82, 0
    %84 = vsyncpa [#allocation22], 0
    %s85 = scalar_lea.sflag [#allocation22], 1
    %86 = vsyncpa %s85, 0
    %87 = vsyncpa [#allocation25], 0
    %s88 = scalar_lea.sflag [#allocation25], 1
    %89 = vsyncpa %s88, 0
    %90 = vsyncpa [#allocation5], 0
    loop: start=0, step=1, limit=4
    $region2: #{tpu_custom_call.1} parent=1 // loop_pre_header
      _
    $region3: #{tpu_custom_call.1} parent=1 // loop_header
      %s92 = sphi 0, %s96
      %p93 = scmp.ge.s32.totalorder %s92, 4
      %s99 = sphi 0, %s111
      %s100 = sphi 0, %s107
      %s101 = sphi 0, %s99
      %s102 = sphi 0, %s100
      %s103 = sphi 0, %s101
      %s104 = sphi 0, %s102
      %s114 = sphi 0, %s116
      %s117 = sphi 0, %s114
      %s118 = sphi 0, %s117
      %s134 = sphi 0, %s118
      %s140 = sphi 0, %s142
      %s143 = sphi 0, %s140
      %s144 = sphi 0, %s143
      %s160 = sphi 0, %s144
      %s164 = sphi 0, %s164
      %s166 = sphi 0, %s164
      %s167 = sphi 0, %s166
      %s181 = sphi 0, %s167
      %s185 = sphi 0, %s185
      %s187 = sphi 0, %s185
      %s188 = sphi 0, %s187
      %s202 = sphi 0, %s188
      %s208 = sphi 0, %s210
      %s211 = sphi 0, %s208
      %s212 = sphi 0, %s211
      %s228 = sphi 0, %s212
      %s234 = sphi 0, %s236
      %s237 = sphi 0, %s234
      %s238 = sphi 0, %s237
      %s254 = sphi 0, %s238
      %s260 = sphi 0, %s262
      %s263 = sphi 0, %s260
      %s264 = sphi 0, %s263
      %s280 = sphi 0, %s264
      %s286 = sphi 0, %s288
      %s289 = sphi 0, %s286
      %s290 = sphi 0, %s289
      %s306 = sphi 0, %s290
      %s312 = sphi 0, %s314
      %s315 = sphi 0, %s312
      %s316 = sphi 0, %s315
      %s332 = sphi 0, %s316
      %s338 = sphi 0, %s340
      %s341 = sphi 0, %s338
      %s342 = sphi 0, %s341
      %s358 = sphi 0, %s342
      %s364 = sphi 0, %s366
      %s367 = sphi 0, %s364
      %s368 = sphi 0, %s367
      %s384 = sphi 0, %s368
      %s390 = sphi 0, %s392
      %s393 = sphi 0, %s390
      %s394 = sphi 0, %s393
      %s410 = sphi 0, %s394
      %s416 = sphi 0, %s418
      %s419 = sphi 0, %s416
      %s420 = sphi 0, %s419
      %s436 = sphi 0, %s420
      %s442 = sphi 0, %s444
      %s445 = sphi 0, %s442
      %s446 = sphi 0, %s445
      %s462 = sphi 0, %s446
      %s468 = sphi 0, %s470
      %s471 = sphi 0, %s468
      %s472 = sphi 0, %s471
      %s488 = sphi 0, %s472
      %s494 = sphi 0, %s496
      %s497 = sphi 0, %s494
      %s498 = sphi 0, %s497
      %s514 = sphi 0, %s498
      %s520 = sphi 0, %s522
      %s523 = sphi 0, %s520
      %s524 = sphi 0, %s523
      %s540 = sphi 0, %s524
      %s546 = sphi 0, %s548
      %s549 = sphi 0, %s546
      %s550 = sphi 0, %s549
      %s566 = sphi 0, %s550
      %s572 = sphi 0, %s574
      %s575 = sphi 0, %s572
      %s576 = sphi 0, %s575
      %s592 = sphi 0, %s576
      %s598 = sphi 0, %s600
      %s601 = sphi 0, %s598
      %s602 = sphi 0, %s601
      %s618 = sphi 0, %s602
      %s624 = sphi 0, %s626
      %s627 = sphi 0, %s624
      %s628 = sphi 0, %s627
      %s644 = sphi 0, %s628
      %s650 = sphi 0, %s652
      %s653 = sphi 0, %s650
      %s654 = sphi 0, %s653
      %s670 = sphi 0, %s654
      %s676 = sphi 0, %s678
      %s679 = sphi 0, %s676
      %s680 = sphi 0, %s679
      %s696 = sphi 0, %s680
      %s702 = sphi 0, %s704
      %s705 = sphi 0, %s702
      %s706 = sphi 0, %s705
      %s722 = sphi 0, %s706
      %s728 = sphi 0, %s730
      %s731 = sphi 0, %s728
      %s732 = sphi 0, %s731
      %s748 = sphi 0, %s732
      %s754 = sphi 0, %s756
      %s757 = sphi 0, %s754
      %s758 = sphi 0, %s757
      %s774 = sphi 0, %s758
      %s780 = sphi 0, %s782
      %s783 = sphi 0, %s780
      %s784 = sphi 0, %s783
      %s800 = sphi 0, %s784
      %s806 = sphi 0, %s808
      %s809 = sphi 0, %s806
      %s810 = sphi 0, %s809
      %s826 = sphi 0, %s810
      %s832 = sphi 0, %s834
      %s835 = sphi 0, %s832
      %s836 = sphi 0, %s835
      %s852 = sphi 0, %s836
      %s858 = sphi 0, %s860
      %s861 = sphi 0, %s858
      %s862 = sphi 0, %s861
      %s878 = sphi 0, %s862
      %s882 = sphi 0, %s882
      %s884 = sphi 0, %s882
      %s885 = sphi 0, %s884
      %s899 = sphi 0, %s885
      %s903 = sphi 0, %s903
      %s905 = sphi 0, %s903
      %s906 = sphi 0, %s905
      %s920 = sphi 0, %s906
      %s926 = sphi 0, %s928
      %s929 = sphi 0, %s926
      %s930 = sphi 0, %s929
      %s946 = sphi 0, %s930
    $region4: #{tpu_custom_call.1} parent=1 // loop_header_branch
      %95 = sbr.rel (%p93) target = $region8
    $region5: #{tpu_custom_call.1} parent=1 // loop_body
      %s97 = ssub.s32 %s92, 1
      %s98 = ssub.s32 %s92, 2
      %s105 = sadd.s32 1, %s100
      %p106 = scmp.ge.s32.totalorder %s105, 2
      %s107 = scalar_select %p106, 0, %s105
      %s108 = sadd.s32 1, %s99
      %s109 = scalar_select %p106, %s108, %s99
      %p110 = scmp.ge.s32.totalorder %s109, 1
      %s111 = scalar_select %p110, 0, %s109
      %s112 = ssub.s32 %s99, %s111
      %p113 = scmp.eq.s32.totalorder %s112, 0
      %s115 = sadd.s32 %s114, 1
      %s116 = scalar_select %p113, %s114, %s115
      %p119 = pneg %p113
      %p120 = scmp.eq.s32.totalorder %s92, 1
      %p121 = por %p119, %p120
      %p122 = scmp.ne.s32.totalorder %s114, %s117
      %p123 = scmp.eq.s32.totalorder %s92, 0
      %p124 = por %p122, %p123
      %p125 = scmp.ne.s32.totalorder %s114, %s117
      %p126 = scmp.eq.s32.totalorder %s97, 1
      %p127 = por %p125, %p126
      %p128 = scmp.ne.s32.totalorder %s117, %s118
      %p129 = scmp.eq.s32.totalorder %s97, 0
      %p130 = por %p128, %p129
      %p131 = scmp.ne.s32.totalorder %s117, %s118
      %p132 = scmp.eq.s32.totalorder %s98, 1
      %p133 = por %p131, %p132
      %p135 = scmp.ne.s32.totalorder %s118, %s134
      %p136 = scmp.eq.s32.totalorder %s98, 0
      %p137 = por %p135, %p136
      %s138 = ssub.s32 %s99, %s111
      %p139 = scmp.eq.s32.totalorder %s138, 0
      %s141 = sadd.s32 %s140, 1
      %s142 = scalar_select %p139, %s140, %s141
      %p145 = pneg %p139
      %p146 = scmp.eq.s32.totalorder %s92, 1
      %p147 = por %p145, %p146
      %p148 = scmp.ne.s32.totalorder %s140, %s143
      %p149 = scmp.eq.s32.totalorder %s92, 0
      %p150 = por %p148, %p149
      %p151 = scmp.ne.s32.totalorder %s140, %s143
      %p152 = scmp.eq.s32.totalorder %s97, 1
      %p153 = por %p151, %p152
      %p154 = scmp.ne.s32.totalorder %s143, %s144
      %p155 = scmp.eq.s32.totalorder %s97, 0
      %p156 = por %p154, %p155
      %p157 = scmp.ne.s32.totalorder %s143, %s144
      %p158 = scmp.eq.s32.totalorder %s98, 1
      %p159 = por %p157, %p158
      %p161 = scmp.ne.s32.totalorder %s144, %s160
      %p162 = scmp.eq.s32.totalorder %s98, 0
      %p163 = por %p161, %p162
      %s165 = sadd.s32 %s164, 1
      %p168 = scmp.eq.s32.totalorder %s92, 1
      %p169 = scmp.ne.s32.totalorder %s164, %s166
      %p170 = scmp.eq.s32.totalorder %s92, 0
      %p171 = por %p169, %p170
      %p172 = scmp.ne.s32.totalorder %s164, %s166
      %p173 = scmp.eq.s32.totalorder %s97, 1
      %p174 = por %p172, %p173
      %p175 = scmp.ne.s32.totalorder %s166, %s167
      %p176 = scmp.eq.s32.totalorder %s97, 0
      %p177 = por %p175, %p176
      %p178 = scmp.ne.s32.totalorder %s166, %s167
      %p179 = scmp.eq.s32.totalorder %s98, 1
      %p180 = por %p178, %p179
      %p182 = scmp.ne.s32.totalorder %s167, %s181
      %p183 = scmp.eq.s32.totalorder %s98, 0
      %p184 = por %p182, %p183
      %s186 = sadd.s32 %s185, 1
      %p189 = scmp.eq.s32.totalorder %s92, 1
      %p190 = scmp.ne.s32.totalorder %s185, %s187
      %p191 = scmp.eq.s32.totalorder %s92, 0
      %p192 = por %p190, %p191
      %p193 = scmp.ne.s32.totalorder %s185, %s187
      %p194 = scmp.eq.s32.totalorder %s97, 1
      %p195 = por %p193, %p194
      %p196 = scmp.ne.s32.totalorder %s187, %s188
      %p197 = scmp.eq.s32.totalorder %s97, 0
      %p198 = por %p196, %p197
      %p199 = scmp.ne.s32.totalorder %s187, %s188
      %p200 = scmp.eq.s32.totalorder %s98, 1
      %p201 = por %p199, %p200
      %p203 = scmp.ne.s32.totalorder %s188, %s202
      %p204 = scmp.eq.s32.totalorder %s98, 0
      %p205 = por %p203, %p204
      %s206 = ssub.s32 %s100, %s107
      %p207 = scmp.eq.s32.totalorder %s206, 0
      %s209 = sadd.s32 %s208, 1
      %s210 = scalar_select %p207, %s208, %s209
      %p213 = pneg %p207
      %p214 = scmp.eq.s32.totalorder %s92, 1
      %p215 = por %p213, %p214
      %p216 = scmp.ne.s32.totalorder %s208, %s211
      %p217 = scmp.eq.s32.totalorder %s92, 0
      %p218 = por %p216, %p217
      %p219 = scmp.ne.s32.totalorder %s208, %s211
      %p220 = scmp.eq.s32.totalorder %s97, 1
      %p221 = por %p219, %p220
      %p222 = scmp.ne.s32.totalorder %s211, %s212
      %p223 = scmp.eq.s32.totalorder %s97, 0
      %p224 = por %p222, %p223
      %p225 = scmp.ne.s32.totalorder %s211, %s212
      %p226 = scmp.eq.s32.totalorder %s98, 1
      %p227 = por %p225, %p226
      %p229 = scmp.ne.s32.totalorder %s212, %s228
      %p230 = scmp.eq.s32.totalorder %s98, 0
      %p231 = por %p229, %p230
      %s232 = ssub.s32 %s100, %s107
      %p233 = scmp.eq.s32.totalorder %s232, 0
      %s235 = sadd.s32 %s234, 1
      %s236 = scalar_select %p233, %s234, %s235
      %p239 = pneg %p233
      %p240 = scmp.eq.s32.totalorder %s92, 1
      %p241 = por %p239, %p240
      %p242 = scmp.ne.s32.totalorder %s234, %s237
      %p243 = scmp.eq.s32.totalorder %s92, 0
      %p244 = por %p242, %p243
      %p245 = scmp.ne.s32.totalorder %s234, %s237
      %p246 = scmp.eq.s32.totalorder %s97, 1
      %p247 = por %p245, %p246
      %p248 = scmp.ne.s32.totalorder %s237, %s238
      %p249 = scmp.eq.s32.totalorder %s97, 0
      %p250 = por %p248, %p249
      %p251 = scmp.ne.s32.totalorder %s237, %s238
      %p252 = scmp.eq.s32.totalorder %s98, 1
      %p253 = por %p251, %p252
      %p255 = scmp.ne.s32.totalorder %s238, %s254
      %p256 = scmp.eq.s32.totalorder %s98, 0
      %p257 = por %p255, %p256
      %s258 = ssub.s32 %s100, %s107
      %p259 = scmp.eq.s32.totalorder %s258, 0
      %s261 = sadd.s32 %s260, 1
      %s262 = scalar_select %p259, %s260, %s261
      %p265 = pneg %p259
      %p266 = scmp.eq.s32.totalorder %s92, 1
      %p267 = por %p265, %p266
      %p268 = scmp.ne.s32.totalorder %s260, %s263
      %p269 = scmp.eq.s32.totalorder %s92, 0
      %p270 = por %p268, %p269
      %p271 = scmp.ne.s32.totalorder %s260, %s263
      %p272 = scmp.eq.s32.totalorder %s97, 1
      %p273 = por %p271, %p272
      %p274 = scmp.ne.s32.totalorder %s263, %s264
      %p275 = scmp.eq.s32.totalorder %s97, 0
      %p276 = por %p274, %p275
      %p277 = scmp.ne.s32.totalorder %s263, %s264
      %p278 = scmp.eq.s32.totalorder %s98, 1
      %p279 = por %p277, %p278
      %p281 = scmp.ne.s32.totalorder %s264, %s280
      %p282 = scmp.eq.s32.totalorder %s98, 0
      %p283 = por %p281, %p282
      %s284 = ssub.s32 %s100, %s107
      %p285 = scmp.eq.s32.totalorder %s284, 0
      %s287 = sadd.s32 %s286, 1
      %s288 = scalar_select %p285, %s286, %s287
      %p291 = pneg %p285
      %p292 = scmp.eq.s32.totalorder %s92, 1
      %p293 = por %p291, %p292
      %p294 = scmp.ne.s32.totalorder %s286, %s289
      %p295 = scmp.eq.s32.totalorder %s92, 0
      %p296 = por %p294, %p295
      %p297 = scmp.ne.s32.totalorder %s286, %s289
      %p298 = scmp.eq.s32.totalorder %s97, 1
      %p299 = por %p297, %p298
      %p300 = scmp.ne.s32.totalorder %s289, %s290
      %p301 = scmp.eq.s32.totalorder %s97, 0
      %p302 = por %p300, %p301
      %p303 = scmp.ne.s32.totalorder %s289, %s290
      %p304 = scmp.eq.s32.totalorder %s98, 1
      %p305 = por %p303, %p304
      %p307 = scmp.ne.s32.totalorder %s290, %s306
      %p308 = scmp.eq.s32.totalorder %s98, 0
      %p309 = por %p307, %p308
      %s310 = ssub.s32 %s100, %s107
      %p311 = scmp.eq.s32.totalorder %s310, 0
      %s313 = sadd.s32 %s312, 1
      %s314 = scalar_select %p311, %s312, %s313
      %p317 = pneg %p311
      %p318 = scmp.eq.s32.totalorder %s92, 1
      %p319 = por %p317, %p318
      %p320 = scmp.ne.s32.totalorder %s312, %s315
      %p321 = scmp.eq.s32.totalorder %s92, 0
      %p322 = por %p320, %p321
      %p323 = scmp.ne.s32.totalorder %s312, %s315
      %p324 = scmp.eq.s32.totalorder %s97, 1
      %p325 = por %p323, %p324
      %p326 = scmp.ne.s32.totalorder %s315, %s316
      %p327 = scmp.eq.s32.totalorder %s97, 0
      %p328 = por %p326, %p327
      %p329 = scmp.ne.s32.totalorder %s315, %s316
      %p330 = scmp.eq.s32.totalorder %s98, 1
      %p331 = por %p329, %p330
      %p333 = scmp.ne.s32.totalorder %s316, %s332
      %p334 = scmp.eq.s32.totalorder %s98, 0
      %p335 = por %p333, %p334
      %s336 = ssub.s32 %s100, %s107
      %p337 = scmp.eq.s32.totalorder %s336, 0
      %s339 = sadd.s32 %s338, 1
      %s340 = scalar_select %p337, %s338, %s339
      %p343 = pneg %p337
      %p344 = scmp.eq.s32.totalorder %s92, 1
      %p345 = por %p343, %p344
      %p346 = scmp.ne.s32.totalorder %s338, %s341
      %p347 = scmp.eq.s32.totalorder %s92, 0
      %p348 = por %p346, %p347
      %p349 = scmp.ne.s32.totalorder %s338, %s341
      %p350 = scmp.eq.s32.totalorder %s97, 1
      %p351 = por %p349, %p350
      %p352 = scmp.ne.s32.totalorder %s341, %s342
      %p353 = scmp.eq.s32.totalorder %s97, 0
      %p354 = por %p352, %p353
      %p355 = scmp.ne.s32.totalorder %s341, %s342
      %p356 = scmp.eq.s32.totalorder %s98, 1
      %p357 = por %p355, %p356
      %p359 = scmp.ne.s32.totalorder %s342, %s358
      %p360 = scmp.eq.s32.totalorder %s98, 0
      %p361 = por %p359, %p360
      %s362 = ssub.s32 %s100, %s107
      %p363 = scmp.eq.s32.totalorder %s362, 0
      %s365 = sadd.s32 %s364, 1
      %s366 = scalar_select %p363, %s364, %s365
      %p369 = pneg %p363
      %p370 = scmp.eq.s32.totalorder %s92, 1
      %p371 = por %p369, %p370
      %p372 = scmp.ne.s32.totalorder %s364, %s367
      %p373 = scmp.eq.s32.totalorder %s92, 0
      %p374 = por %p372, %p373
      %p375 = scmp.ne.s32.totalorder %s364, %s367
      %p376 = scmp.eq.s32.totalorder %s97, 1
      %p377 = por %p375, %p376
      %p378 = scmp.ne.s32.totalorder %s367, %s368
      %p379 = scmp.eq.s32.totalorder %s97, 0
      %p380 = por %p378, %p379
      %p381 = scmp.ne.s32.totalorder %s367, %s368
      %p382 = scmp.eq.s32.totalorder %s98, 1
      %p383 = por %p381, %p382
      %p385 = scmp.ne.s32.totalorder %s368, %s384
      %p386 = scmp.eq.s32.totalorder %s98, 0
      %p387 = por %p385, %p386
      %s388 = ssub.s32 %s100, %s107
      %p389 = scmp.eq.s32.totalorder %s388, 0
      %s391 = sadd.s32 %s390, 1
      %s392 = scalar_select %p389, %s390, %s391
      %p395 = pneg %p389
      %p396 = scmp.eq.s32.totalorder %s92, 1
      %p397 = por %p395, %p396
      %p398 = scmp.ne.s32.totalorder %s390, %s393
      %p399 = scmp.eq.s32.totalorder %s92, 0
      %p400 = por %p398, %p399
      %p401 = scmp.ne.s32.totalorder %s390, %s393
      %p402 = scmp.eq.s32.totalorder %s97, 1
      %p403 = por %p401, %p402
      %p404 = scmp.ne.s32.totalorder %s393, %s394
      %p405 = scmp.eq.s32.totalorder %s97, 0
      %p406 = por %p404, %p405
      %p407 = scmp.ne.s32.totalorder %s393, %s394
      %p408 = scmp.eq.s32.totalorder %s98, 1
      %p409 = por %p407, %p408
      %p411 = scmp.ne.s32.totalorder %s394, %s410
      %p412 = scmp.eq.s32.totalorder %s98, 0
      %p413 = por %p411, %p412
      %s414 = ssub.s32 %s100, %s107
      %p415 = scmp.eq.s32.totalorder %s414, 0
      %s417 = sadd.s32 %s416, 1
      %s418 = scalar_select %p415, %s416, %s417
      %p421 = pneg %p415
      %p422 = scmp.eq.s32.totalorder %s92, 1
      %p423 = por %p421, %p422
      %p424 = scmp.ne.s32.totalorder %s416, %s419
      %p425 = scmp.eq.s32.totalorder %s92, 0
      %p426 = por %p424, %p425
      %p427 = scmp.ne.s32.totalorder %s416, %s419
      %p428 = scmp.eq.s32.totalorder %s97, 1
      %p429 = por %p427, %p428
      %p430 = scmp.ne.s32.totalorder %s419, %s420
      %p431 = scmp.eq.s32.totalorder %s97, 0
      %p432 = por %p430, %p431
      %p433 = scmp.ne.s32.totalorder %s419, %s420
      %p434 = scmp.eq.s32.totalorder %s98, 1
      %p435 = por %p433, %p434
      %p437 = scmp.ne.s32.totalorder %s420, %s436
      %p438 = scmp.eq.s32.totalorder %s98, 0
      %p439 = por %p437, %p438
      %s440 = ssub.s32 %s100, %s107
      %p441 = scmp.eq.s32.totalorder %s440, 0
      %s443 = sadd.s32 %s442, 1
      %s444 = scalar_select %p441, %s442, %s443
      %p447 = pneg %p441
      %p448 = scmp.eq.s32.totalorder %s92, 1
      %p449 = por %p447, %p448
      %p450 = scmp.ne.s32.totalorder %s442, %s445
      %p451 = scmp.eq.s32.totalorder %s92, 0
      %p452 = por %p450, %p451
      %p453 = scmp.ne.s32.totalorder %s442, %s445
      %p454 = scmp.eq.s32.totalorder %s97, 1
      %p455 = por %p453, %p454
      %p456 = scmp.ne.s32.totalorder %s445, %s446
      %p457 = scmp.eq.s32.totalorder %s97, 0
      %p458 = por %p456, %p457
      %p459 = scmp.ne.s32.totalorder %s445, %s446
      %p460 = scmp.eq.s32.totalorder %s98, 1
      %p461 = por %p459, %p460
      %p463 = scmp.ne.s32.totalorder %s446, %s462
      %p464 = scmp.eq.s32.totalorder %s98, 0
      %p465 = por %p463, %p464
      %s466 = ssub.s32 %s100, %s107
      %p467 = scmp.eq.s32.totalorder %s466, 0
      %s469 = sadd.s32 %s468, 1
      %s470 = scalar_select %p467, %s468, %s469
      %p473 = pneg %p467
      %p474 = scmp.eq.s32.totalorder %s92, 1
      %p475 = por %p473, %p474
      %p476 = scmp.ne.s32.totalorder %s468, %s471
      %p477 = scmp.eq.s32.totalorder %s92, 0
      %p478 = por %p476, %p477
      %p479 = scmp.ne.s32.totalorder %s468, %s471
      %p480 = scmp.eq.s32.totalorder %s97, 1
      %p481 = por %p479, %p480
      %p482 = scmp.ne.s32.totalorder %s471, %s472
      %p483 = scmp.eq.s32.totalorder %s97, 0
      %p484 = por %p482, %p483
      %p485 = scmp.ne.s32.totalorder %s471, %s472
      %p486 = scmp.eq.s32.totalorder %s98, 1
      %p487 = por %p485, %p486
      %p489 = scmp.ne.s32.totalorder %s472, %s488
      %p490 = scmp.eq.s32.totalorder %s98, 0
      %p491 = por %p489, %p490
      %s492 = ssub.s32 %s100, %s107
      %p493 = scmp.eq.s32.totalorder %s492, 0
      %s495 = sadd.s32 %s494, 1
      %s496 = scalar_select %p493, %s494, %s495
      %p499 = pneg %p493
      %p500 = scmp.eq.s32.totalorder %s92, 1
      %p501 = por %p499, %p500
      %p502 = scmp.ne.s32.totalorder %s494, %s497
      %p503 = scmp.eq.s32.totalorder %s92, 0
      %p504 = por %p502, %p503
      %p505 = scmp.ne.s32.totalorder %s494, %s497
      %p506 = scmp.eq.s32.totalorder %s97, 1
      %p507 = por %p505, %p506
      %p508 = scmp.ne.s32.totalorder %s497, %s498
      %p509 = scmp.eq.s32.totalorder %s97, 0
      %p510 = por %p508, %p509
      %p511 = scmp.ne.s32.totalorder %s497, %s498
      %p512 = scmp.eq.s32.totalorder %s98, 1
      %p513 = por %p511, %p512
      %p515 = scmp.ne.s32.totalorder %s498, %s514
      %p516 = scmp.eq.s32.totalorder %s98, 0
      %p517 = por %p515, %p516
      %s518 = ssub.s32 %s100, %s107
      %p519 = scmp.eq.s32.totalorder %s518, 0
      %s521 = sadd.s32 %s520, 1
      %s522 = scalar_select %p519, %s520, %s521
      %p525 = pneg %p519
      %p526 = scmp.eq.s32.totalorder %s92, 1
      %p527 = por %p525, %p526
      %p528 = scmp.ne.s32.totalorder %s520, %s523
      %p529 = scmp.eq.s32.totalorder %s92, 0
      %p530 = por %p528, %p529
      %p531 = scmp.ne.s32.totalorder %s520, %s523
      %p532 = scmp.eq.s32.totalorder %s97, 1
      %p533 = por %p531, %p532
      %p534 = scmp.ne.s32.totalorder %s523, %s524
      %p535 = scmp.eq.s32.totalorder %s97, 0
      %p536 = por %p534, %p535
      %p537 = scmp.ne.s32.totalorder %s523, %s524
      %p538 = scmp.eq.s32.totalorder %s98, 1
      %p539 = por %p537, %p538
      %p541 = scmp.ne.s32.totalorder %s524, %s540
      %p542 = scmp.eq.s32.totalorder %s98, 0
      %p543 = por %p541, %p542
      %s544 = ssub.s32 %s100, %s107
      %p545 = scmp.eq.s32.totalorder %s544, 0
      %s547 = sadd.s32 %s546, 1
      %s548 = scalar_select %p545, %s546, %s547
      %p551 = pneg %p545
      %p552 = scmp.eq.s32.totalorder %s92, 1
      %p553 = por %p551, %p552
      %p554 = scmp.ne.s32.totalorder %s546, %s549
      %p555 = scmp.eq.s32.totalorder %s92, 0
      %p556 = por %p554, %p555
      %p557 = scmp.ne.s32.totalorder %s546, %s549
      %p558 = scmp.eq.s32.totalorder %s97, 1
      %p559 = por %p557, %p558
      %p560 = scmp.ne.s32.totalorder %s549, %s550
      %p561 = scmp.eq.s32.totalorder %s97, 0
      %p562 = por %p560, %p561
      %p563 = scmp.ne.s32.totalorder %s549, %s550
      %p564 = scmp.eq.s32.totalorder %s98, 1
      %p565 = por %p563, %p564
      %p567 = scmp.ne.s32.totalorder %s550, %s566
      %p568 = scmp.eq.s32.totalorder %s98, 0
      %p569 = por %p567, %p568
      %s570 = ssub.s32 %s100, %s107
      %p571 = scmp.eq.s32.totalorder %s570, 0
      %s573 = sadd.s32 %s572, 1
      %s574 = scalar_select %p571, %s572, %s573
      %p577 = pneg %p571
      %p578 = scmp.eq.s32.totalorder %s92, 1
      %p579 = por %p577, %p578
      %p580 = scmp.ne.s32.totalorder %s572, %s575
      %p581 = scmp.eq.s32.totalorder %s92, 0
      %p582 = por %p580, %p581
      %p583 = scmp.ne.s32.totalorder %s572, %s575
      %p584 = scmp.eq.s32.totalorder %s97, 1
      %p585 = por %p583, %p584
      %p586 = scmp.ne.s32.totalorder %s575, %s576
      %p587 = scmp.eq.s32.totalorder %s97, 0
      %p588 = por %p586, %p587
      %p589 = scmp.ne.s32.totalorder %s575, %s576
      %p590 = scmp.eq.s32.totalorder %s98, 1
      %p591 = por %p589, %p590
      %p593 = scmp.ne.s32.totalorder %s576, %s592
      %p594 = scmp.eq.s32.totalorder %s98, 0
      %p595 = por %p593, %p594
      %s596 = ssub.s32 %s100, %s107
      %p597 = scmp.eq.s32.totalorder %s596, 0
      %s599 = sadd.s32 %s598, 1
      %s600 = scalar_select %p597, %s598, %s599
      %p603 = pneg %p597
      %p604 = scmp.eq.s32.totalorder %s92, 1
      %p605 = por %p603, %p604
      %p606 = scmp.ne.s32.totalorder %s598, %s601
      %p607 = scmp.eq.s32.totalorder %s92, 0
      %p608 = por %p606, %p607
      %p609 = scmp.ne.s32.totalorder %s598, %s601
      %p610 = scmp.eq.s32.totalorder %s97, 1
      %p611 = por %p609, %p610
      %p612 = scmp.ne.s32.totalorder %s601, %s602
      %p613 = scmp.eq.s32.totalorder %s97, 0
      %p614 = por %p612, %p613
      %p615 = scmp.ne.s32.totalorder %s601, %s602
      %p616 = scmp.eq.s32.totalorder %s98, 1
      %p617 = por %p615, %p616
      %p619 = scmp.ne.s32.totalorder %s602, %s618
      %p620 = scmp.eq.s32.totalorder %s98, 0
      %p621 = por %p619, %p620
      %s622 = ssub.s32 %s100, %s107
      %p623 = scmp.eq.s32.totalorder %s622, 0
      %s625 = sadd.s32 %s624, 1
      %s626 = scalar_select %p623, %s624, %s625
      %p629 = pneg %p623
      %p630 = scmp.eq.s32.totalorder %s92, 1
      %p631 = por %p629, %p630
      %p632 = scmp.ne.s32.totalorder %s624, %s627
      %p633 = scmp.eq.s32.totalorder %s92, 0
      %p634 = por %p632, %p633
      %p635 = scmp.ne.s32.totalorder %s624, %s627
      %p636 = scmp.eq.s32.totalorder %s97, 1
      %p637 = por %p635, %p636
      %p638 = scmp.ne.s32.totalorder %s627, %s628
      %p639 = scmp.eq.s32.totalorder %s97, 0
      %p640 = por %p638, %p639
      %p641 = scmp.ne.s32.totalorder %s627, %s628
      %p642 = scmp.eq.s32.totalorder %s98, 1
      %p643 = por %p641, %p642
      %p645 = scmp.ne.s32.totalorder %s628, %s644
      %p646 = scmp.eq.s32.totalorder %s98, 0
      %p647 = por %p645, %p646
      %s648 = ssub.s32 %s100, %s107
      %p649 = scmp.eq.s32.totalorder %s648, 0
      %s651 = sadd.s32 %s650, 1
      %s652 = scalar_select %p649, %s650, %s651
      %p655 = pneg %p649
      %p656 = scmp.eq.s32.totalorder %s92, 1
      %p657 = por %p655, %p656
      %p658 = scmp.ne.s32.totalorder %s650, %s653
      %p659 = scmp.eq.s32.totalorder %s92, 0
      %p660 = por %p658, %p659
      %p661 = scmp.ne.s32.totalorder %s650, %s653
      %p662 = scmp.eq.s32.totalorder %s97, 1
      %p663 = por %p661, %p662
      %p664 = scmp.ne.s32.totalorder %s653, %s654
      %p665 = scmp.eq.s32.totalorder %s97, 0
      %p666 = por %p664, %p665
      %p667 = scmp.ne.s32.totalorder %s653, %s654
      %p668 = scmp.eq.s32.totalorder %s98, 1
      %p669 = por %p667, %p668
      %p671 = scmp.ne.s32.totalorder %s654, %s670
      %p672 = scmp.eq.s32.totalorder %s98, 0
      %p673 = por %p671, %p672
      %s674 = ssub.s32 %s100, %s107
      %p675 = scmp.eq.s32.totalorder %s674, 0
      %s677 = sadd.s32 %s676, 1
      %s678 = scalar_select %p675, %s676, %s677
      %p681 = pneg %p675
      %p682 = scmp.eq.s32.totalorder %s92, 1
      %p683 = por %p681, %p682
      %p684 = scmp.ne.s32.totalorder %s676, %s679
      %p685 = scmp.eq.s32.totalorder %s92, 0
      %p686 = por %p684, %p685
      %p687 = scmp.ne.s32.totalorder %s676, %s679
      %p688 = scmp.eq.s32.totalorder %s97, 1
      %p689 = por %p687, %p688
      %p690 = scmp.ne.s32.totalorder %s679, %s680
      %p691 = scmp.eq.s32.totalorder %s97, 0
      %p692 = por %p690, %p691
      %p693 = scmp.ne.s32.totalorder %s679, %s680
      %p694 = scmp.eq.s32.totalorder %s98, 1
      %p695 = por %p693, %p694
      %p697 = scmp.ne.s32.totalorder %s680, %s696
      %p698 = scmp.eq.s32.totalorder %s98, 0
      %p699 = por %p697, %p698
      %s700 = ssub.s32 %s100, %s107
      %p701 = scmp.eq.s32.totalorder %s700, 0
      %s703 = sadd.s32 %s702, 1
      %s704 = scalar_select %p701, %s702, %s703
      %p707 = pneg %p701
      %p708 = scmp.eq.s32.totalorder %s92, 1
      %p709 = por %p707, %p708
      %p710 = scmp.ne.s32.totalorder %s702, %s705
      %p711 = scmp.eq.s32.totalorder %s92, 0
      %p712 = por %p710, %p711
      %p713 = scmp.ne.s32.totalorder %s702, %s705
      %p714 = scmp.eq.s32.totalorder %s97, 1
      %p715 = por %p713, %p714
      %p716 = scmp.ne.s32.totalorder %s705, %s706
      %p717 = scmp.eq.s32.totalorder %s97, 0
      %p718 = por %p716, %p717
      %p719 = scmp.ne.s32.totalorder %s705, %s706
      %p720 = scmp.eq.s32.totalorder %s98, 1
      %p721 = por %p719, %p720
      %p723 = scmp.ne.s32.totalorder %s706, %s722
      %p724 = scmp.eq.s32.totalorder %s98, 0
      %p725 = por %p723, %p724
      %s726 = ssub.s32 %s100, %s107
      %p727 = scmp.eq.s32.totalorder %s726, 0
      %s729 = sadd.s32 %s728, 1
      %s730 = scalar_select %p727, %s728, %s729
      %p733 = pneg %p727
      %p734 = scmp.eq.s32.totalorder %s92, 1
      %p735 = por %p733, %p734
      %p736 = scmp.ne.s32.totalorder %s728, %s731
      %p737 = scmp.eq.s32.totalorder %s92, 0
      %p738 = por %p736, %p737
      %p739 = scmp.ne.s32.totalorder %s728, %s731
      %p740 = scmp.eq.s32.totalorder %s97, 1
      %p741 = por %p739, %p740
      %p742 = scmp.ne.s32.totalorder %s731, %s732
      %p743 = scmp.eq.s32.totalorder %s97, 0
      %p744 = por %p742, %p743
      %p745 = scmp.ne.s32.totalorder %s731, %s732
      %p746 = scmp.eq.s32.totalorder %s98, 1
      %p747 = por %p745, %p746
      %p749 = scmp.ne.s32.totalorder %s732, %s748
      %p750 = scmp.eq.s32.totalorder %s98, 0
      %p751 = por %p749, %p750
      %s752 = ssub.s32 %s100, %s107
      %p753 = scmp.eq.s32.totalorder %s752, 0
      %s755 = sadd.s32 %s754, 1
      %s756 = scalar_select %p753, %s754, %s755
      %p759 = pneg %p753
      %p760 = scmp.eq.s32.totalorder %s92, 1
      %p761 = por %p759, %p760
      %p762 = scmp.ne.s32.totalorder %s754, %s757
      %p763 = scmp.eq.s32.totalorder %s92, 0
      %p764 = por %p762, %p763
      %p765 = scmp.ne.s32.totalorder %s754, %s757
      %p766 = scmp.eq.s32.totalorder %s97, 1
      %p767 = por %p765, %p766
      %p768 = scmp.ne.s32.totalorder %s757, %s758
      %p769 = scmp.eq.s32.totalorder %s97, 0
      %p770 = por %p768, %p769
      %p771 = scmp.ne.s32.totalorder %s757, %s758
      %p772 = scmp.eq.s32.totalorder %s98, 1
      %p773 = por %p771, %p772
      %p775 = scmp.ne.s32.totalorder %s758, %s774
      %p776 = scmp.eq.s32.totalorder %s98, 0
      %p777 = por %p775, %p776
      %s778 = ssub.s32 %s100, %s107
      %p779 = scmp.eq.s32.totalorder %s778, 0
      %s781 = sadd.s32 %s780, 1
      %s782 = scalar_select %p779, %s780, %s781
      %p785 = pneg %p779
      %p786 = scmp.eq.s32.totalorder %s92, 1
      %p787 = por %p785, %p786
      %p788 = scmp.ne.s32.totalorder %s780, %s783
      %p789 = scmp.eq.s32.totalorder %s92, 0
      %p790 = por %p788, %p789
      %p791 = scmp.ne.s32.totalorder %s780, %s783
      %p792 = scmp.eq.s32.totalorder %s97, 1
      %p793 = por %p791, %p792
      %p794 = scmp.ne.s32.totalorder %s783, %s784
      %p795 = scmp.eq.s32.totalorder %s97, 0
      %p796 = por %p794, %p795
      %p797 = scmp.ne.s32.totalorder %s783, %s784
      %p798 = scmp.eq.s32.totalorder %s98, 1
      %p799 = por %p797, %p798
      %p801 = scmp.ne.s32.totalorder %s784, %s800
      %p802 = scmp.eq.s32.totalorder %s98, 0
      %p803 = por %p801, %p802
      %s804 = ssub.s32 %s100, %s107
      %p805 = scmp.eq.s32.totalorder %s804, 0
      %s807 = sadd.s32 %s806, 1
      %s808 = scalar_select %p805, %s806, %s807
      %p811 = pneg %p805
      %p812 = scmp.eq.s32.totalorder %s92, 1
      %p813 = por %p811, %p812
      %p814 = scmp.ne.s32.totalorder %s806, %s809
      %p815 = scmp.eq.s32.totalorder %s92, 0
      %p816 = por %p814, %p815
      %p817 = scmp.ne.s32.totalorder %s806, %s809
      %p818 = scmp.eq.s32.totalorder %s97, 1
      %p819 = por %p817, %p818
      %p820 = scmp.ne.s32.totalorder %s809, %s810
      %p821 = scmp.eq.s32.totalorder %s97, 0
      %p822 = por %p820, %p821
      %p823 = scmp.ne.s32.totalorder %s809, %s810
      %p824 = scmp.eq.s32.totalorder %s98, 1
      %p825 = por %p823, %p824
      %p827 = scmp.ne.s32.totalorder %s810, %s826
      %p828 = scmp.eq.s32.totalorder %s98, 0
      %p829 = por %p827, %p828
      %s830 = ssub.s32 %s100, %s107
      %p831 = scmp.eq.s32.totalorder %s830, 0
      %s833 = sadd.s32 %s832, 1
      %s834 = scalar_select %p831, %s832, %s833
      %p837 = pneg %p831
      %p838 = scmp.eq.s32.totalorder %s92, 1
      %p839 = por %p837, %p838
      %p840 = scmp.ne.s32.totalorder %s832, %s835
      %p841 = scmp.eq.s32.totalorder %s92, 0
      %p842 = por %p840, %p841
      %p843 = scmp.ne.s32.totalorder %s832, %s835
      %p844 = scmp.eq.s32.totalorder %s97, 1
      %p845 = por %p843, %p844
      %p846 = scmp.ne.s32.totalorder %s835, %s836
      %p847 = scmp.eq.s32.totalorder %s97, 0
      %p848 = por %p846, %p847
      %p849 = scmp.ne.s32.totalorder %s835, %s836
      %p850 = scmp.eq.s32.totalorder %s98, 1
      %p851 = por %p849, %p850
      %p853 = scmp.ne.s32.totalorder %s836, %s852
      %p854 = scmp.eq.s32.totalorder %s98, 0
      %p855 = por %p853, %p854
      %s856 = ssub.s32 %s100, %s107
      %p857 = scmp.eq.s32.totalorder %s856, 0
      %s859 = sadd.s32 %s858, 1
      %s860 = scalar_select %p857, %s858, %s859
      %p863 = pneg %p857
      %p864 = scmp.eq.s32.totalorder %s92, 1
      %p865 = por %p863, %p864
      %p866 = scmp.ne.s32.totalorder %s858, %s861
      %p867 = scmp.eq.s32.totalorder %s92, 0
      %p868 = por %p866, %p867
      %p869 = scmp.ne.s32.totalorder %s858, %s861
      %p870 = scmp.eq.s32.totalorder %s97, 1
      %p871 = por %p869, %p870
      %p872 = scmp.ne.s32.totalorder %s861, %s862
      %p873 = scmp.eq.s32.totalorder %s97, 0
      %p874 = por %p872, %p873
      %p875 = scmp.ne.s32.totalorder %s861, %s862
      %p876 = scmp.eq.s32.totalorder %s98, 1
      %p877 = por %p875, %p876
      %p879 = scmp.ne.s32.totalorder %s862, %s878
      %p880 = scmp.eq.s32.totalorder %s98, 0
      %p881 = por %p879, %p880
      %s883 = sadd.s32 %s882, 1
      %p886 = scmp.eq.s32.totalorder %s92, 1
      %p887 = scmp.ne.s32.totalorder %s882, %s884
      %p888 = scmp.eq.s32.totalorder %s92, 0
      %p889 = por %p887, %p888
      %p890 = scmp.ne.s32.totalorder %s882, %s884
      %p891 = scmp.eq.s32.totalorder %s97, 1
      %p892 = por %p890, %p891
      %p893 = scmp.ne.s32.totalorder %s884, %s885
      %p894 = scmp.eq.s32.totalorder %s97, 0
      %p895 = por %p893, %p894
      %p896 = scmp.ne.s32.totalorder %s884, %s885
      %p897 = scmp.eq.s32.totalorder %s98, 1
      %p898 = por %p896, %p897
      %p900 = scmp.ne.s32.totalorder %s885, %s899
      %p901 = scmp.eq.s32.totalorder %s98, 0
      %p902 = por %p900, %p901
      %s904 = sadd.s32 %s903, 1
      %p907 = scmp.eq.s32.totalorder %s92, 1
      %p908 = scmp.ne.s32.totalorder %s903, %s905
      %p909 = scmp.eq.s32.totalorder %s92, 0
      %p910 = por %p908, %p909
      %p911 = scmp.ne.s32.totalorder %s903, %s905
      %p912 = scmp.eq.s32.totalorder %s97, 1
      %p913 = por %p911, %p912
      %p914 = scmp.ne.s32.totalorder %s905, %s906
      %p915 = scmp.eq.s32.totalorder %s97, 0
      %p916 = por %p914, %p915
      %p917 = scmp.ne.s32.totalorder %s905, %s906
      %p918 = scmp.eq.s32.totalorder %s98, 1
      %p919 = por %p917, %p918
      %p921 = scmp.ne.s32.totalorder %s906, %s920
      %p922 = scmp.eq.s32.totalorder %s98, 0
      %p923 = por %p921, %p922
      %s924 = ssub.s32 %s99, %s111
      %p925 = scmp.eq.s32.totalorder %s924, 0
      %s927 = sadd.s32 %s926, 1
      %s928 = scalar_select %p925, %s926, %s927
      %p931 = pneg %p925
      %p932 = scmp.eq.s32.totalorder %s92, 1
      %p933 = por %p931, %p932
      %p934 = scmp.ne.s32.totalorder %s926, %s929
      %p935 = scmp.eq.s32.totalorder %s92, 0
      %p936 = por %p934, %p935
      %p937 = scmp.ne.s32.totalorder %s926, %s929
      %p938 = scmp.eq.s32.totalorder %s97, 1
      %p939 = por %p937, %p938
      %p940 = scmp.ne.s32.totalorder %s929, %s930
      %p941 = scmp.eq.s32.totalorder %s97, 0
      %p942 = por %p940, %p941
      %p943 = scmp.ne.s32.totalorder %s929, %s930
      %p944 = scmp.eq.s32.totalorder %s98, 1
      %p945 = por %p943, %p944
      %p947 = scmp.ne.s32.totalorder %s930, %s946
      %p948 = scmp.eq.s32.totalorder %s98, 0
      %p949 = por %p947, %p948
      %p950 = scmp.le.s32.totalorder 1, %s92
      %p951 = scmp.lt.s32.totalorder %s92, 3
      %p952 = pnand %p950, %p951
      %p953 = pneg %p952
      // Predicated region
      $region9: #{tpu_custom_call.1} parent=5 // pred_check
        _
      $region10: #{tpu_custom_call.1} parent=5 // pred_check_branch
        %955 = sbr.rel (%p952) target = $region12
      $region11: #{tpu_custom_call.1} parent=5 // pred_region
        %s956 = ssub.s32 %s92, 1
        // Predicated region
        $region13: #{tpu_custom_call.1} parent=11 // pred_check
          %p957 = pneg %p130
        $region14: #{tpu_custom_call.1} parent=11 // pred_check_branch
          %959 = sbr.rel (%p957) target = $region16
        $region15: #{tpu_custom_call.1} parent=11 // pred_region
          %s960 = smul.u32 2, %s101
          %s962 = ssub.s32 256, 256
          %963 = vsyncadd [#allocation4], %s962
          %s964 = smul.addr %s960, 128
          %s965 = scalar_lea.hbm %s1, %s964
          %s966 = sshll.u32 [#allocation3], 4
          %s967 = int_to_ptr.vmem [resolvable:$true] %s966
          %972 = dma.hbm_to_vmem [thread:$0]  %s965, 256, %s967, [#allocation4], 128, 128, 8
        $region16: #{tpu_custom_call.1} parent=11 // pred_fallthru
          _
        // Predicated region
        $region17: #{tpu_custom_call.1} parent=11 // pred_check
          %p973 = pneg %p156
        $region18: #{tpu_custom_call.1} parent=11 // pred_check_branch
          %975 = sbr.rel (%p973) target = $region20
        $region19: #{tpu_custom_call.1} parent=11 // pred_region
          %s976 = smul.u32 2, %s101
          %s978 = ssub.s32 256, 256
          %979 = vsyncadd [#allocation7], %s978
          %s980 = smul.addr %s976, 128
          %s981 = scalar_lea.hbm %s3, %s980
          %s982 = sshll.u32 [#allocation6], 4
          %s983 = int_to_ptr.vmem [resolvable:$true] %s982
          %988 = dma.hbm_to_vmem [thread:$0]  %s981, 256, %s983, [#allocation7], 128, 128, 8
        $region20: #{tpu_custom_call.1} parent=11 // pred_fallthru
          _
        // Predicated region
        $region21: #{tpu_custom_call.1} parent=11 // pred_check
          %p989 = pneg %p177
        $region22: #{tpu_custom_call.1} parent=11 // pred_check_branch
          %991 = sbr.rel (%p989) target = $region24
        $region23: #{tpu_custom_call.1} parent=11 // pred_region
          %s993 = ssub.s32 128, 128
          %994 = vsyncadd [#allocation7], %s993
          %s996 = sshll.u32 [#allocation8], 4
          %s997 = int_to_ptr.vmem [resolvable:$true] %s996
          %999 = dma.hbm_to_vmem [thread:$0]  %s5, 128, %s997, [#allocation7]
        $region24: #{tpu_custom_call.1} parent=11 // pred_fallthru
          _
        // Predicated region
        $region25: #{tpu_custom_call.1} parent=11 // pred_check
          %p1000 = pneg %p198
        $region26: #{tpu_custom_call.1} parent=11 // pred_check_branch
          %1002 = sbr.rel (%p1000) target = $region28
        $region27: #{tpu_custom_call.1} parent=11 // pred_region
          _
        $region28: #{tpu_custom_call.1} parent=11 // pred_fallthru
          _
        // Predicated region
        $region29: #{tpu_custom_call.1} parent=11 // pred_check
          %p1003 = pneg %p895
        $region30: #{tpu_custom_call.1} parent=11 // pred_check_branch
          %1005 = sbr.rel (%p1003) target = $region32
        $region31: #{tpu_custom_call.1} parent=11 // pred_region
          _
        $region32: #{tpu_custom_call.1} parent=11 // pred_fallthru
          _
        // Predicated region
        $region33: #{tpu_custom_call.1} parent=11 // pred_check
          %p1006 = pneg %p916
        $region34: #{tpu_custom_call.1} parent=11 // pred_check_branch
          %1008 = sbr.rel (%p1006) target = $region36
        $region35: #{tpu_custom_call.1} parent=11 // pred_region
          _
        $region36: #{tpu_custom_call.1} parent=11 // pred_fallthru
          _
      $region12: #{tpu_custom_call.1} parent=5 // pred_fallthru
        _
      %p1009 = scmp.lt.s32.totalorder %s92, 2
      // Predicated region
      $region37: #{tpu_custom_call.1} parent=5 // pred_check
        %p1010 = pneg %p1009
      $region38: #{tpu_custom_call.1} parent=5 // pred_check_branch
        %1012 = sbr.rel (%p1010) target = $region40
      $region39: #{tpu_custom_call.1} parent=5 // pred_region
        // Predicated region
        $region41: #{tpu_custom_call.1} parent=39 // pred_check
          %p1013 = pneg %p218
        $region42: #{tpu_custom_call.1} parent=39 // pred_check_branch
          %1015 = sbr.rel (%p1013) target = $region44
        $region43: #{tpu_custom_call.1} parent=39 // pred_region
          %p1016 = scmp.lt.s32.totalorder %s100, 1
          %s1017 = scalar_select %p1016, %s100, 1
          %s1018 = scalar_lea.vmem %s9, %s1017
        $region44: #{tpu_custom_call.1} parent=39 // pred_fallthru
          _
        // Predicated region
        $region45: #{tpu_custom_call.1} parent=39 // pred_check
          %p1019 = pneg %p244
        $region46: #{tpu_custom_call.1} parent=39 // pred_check_branch
          %1021 = sbr.rel (%p1019) target = $region48
        $region47: #{tpu_custom_call.1} parent=39 // pred_region
          %s1022 = sand.u32 %s92, 1
          %s1023 = scalar_lea.sflag [#allocation10], %s1022
          %s1024 = sand.u32 %s234, 1
          %s1025 = scalar_lea.vmem [#allocation9], %s1024
          %s1027 = ssub.s32 16, 16
          %1028 = vsyncadd %s1023, %s1027
          %s1029 = smul.addr %s100, 16
          %s1030 = scalar_lea.hbm %s11, %s1029
          %s1032 = sshll.u32 %s1025, 4
          %s1033 = int_to_ptr.vmem [resolvable:$true] %s1032
          %1035 = dma.hbm_to_vmem [thread:$0]  %s1030, 16, %s1033, %s1023
        $region48: #{tpu_custom_call.1} parent=39 // pred_fallthru
          _
        // Predicated region
        $region49: #{tpu_custom_call.1} parent=39 // pred_check
          %p1036 = pneg %p270
        $region50: #{tpu_custom_call.1} parent=39 // pred_check_branch
          %1038 = sbr.rel (%p1036) target = $region52
        $region51: #{tpu_custom_call.1} parent=39 // pred_region
          %s1039 = sand.u32 %s92, 1
          %s1040 = scalar_lea.sflag [#allocation10], %s1039
          %s1041 = sand.u32 %s260, 1
          %s1042 = smul.addr %s1041, 64
          %s1043 = scalar_lea.vmem [#allocation11], %s1042
          %s1045 = ssub.s32 1024, 1024
          %1046 = vsyncadd %s1040, %s1045
          %s1047 = smul.addr %s100, 16
          %s1048 = smul.addr %s1047, 64
          %s1049 = scalar_lea.hbm %s13, %s1048
          %s1050 = sshll.u32 %s1043, 4
          %s1051 = int_to_ptr.vmem [resolvable:$true] %s1050
          %1056 = dma.hbm_to_vmem [thread:$0]  %s1049, 1024, %s1051, %s1040, 64, 64, 4
        $region52: #{tpu_custom_call.1} parent=39 // pred_fallthru
          _
        // Predicated region
        $region53: #{tpu_custom_call.1} parent=39 // pred_check
          %p1057 = pneg %p296
        $region54: #{tpu_custom_call.1} parent=39 // pred_check_branch
          %1059 = sbr.rel (%p1057) target = $region56
        $region55: #{tpu_custom_call.1} parent=39 // pred_region
          %p1060 = scmp.lt.s32.totalorder %s100, 1
          %s1061 = scalar_select %p1060, %s100, 1
          %s1062 = scalar_lea.vmem %s15, %s1061
        $region56: #{tpu_custom_call.1} parent=39 // pred_fallthru
          _
        // Predicated region
        $region57: #{tpu_custom_call.1} parent=39 // pred_check
          %p1063 = pneg %p322
        $region58: #{tpu_custom_call.1} parent=39 // pred_check_branch
          %1065 = sbr.rel (%p1063) target = $region60
        $region59: #{tpu_custom_call.1} parent=39 // pred_region
          %s1066 = sand.u32 %s92, 1
          %s1067 = scalar_lea.sflag [#allocation13], %s1066
          %s1068 = sand.u32 %s312, 1
          %s1069 = smul.addr %s1068, 64
          %s1070 = scalar_lea.vmem [#allocation12], %s1069
          %s1072 = ssub.s32 1024, 1024
          %1073 = vsyncadd %s1067, %s1072
          %s1074 = smul.addr %s100, 16
          %s1075 = smul.addr %s1074, 64
          %s1076 = scalar_lea.hbm %s17, %s1075
          %s1077 = sshll.u32 %s1070, 4
          %s1078 = int_to_ptr.vmem [resolvable:$true] %s1077
          %1083 = dma.hbm_to_vmem [thread:$0]  %s1076, 1024, %s1078, %s1067, 64, 64, 4
        $region60: #{tpu_custom_call.1} parent=39 // pred_fallthru
          _
        // Predicated region
        $region61: #{tpu_custom_call.1} parent=39 // pred_check
          %p1084 = pneg %p348
        $region62: #{tpu_custom_call.1} parent=39 // pred_check_branch
          %1086 = sbr.rel (%p1084) target = $region64
        $region63: #{tpu_custom_call.1} parent=39 // pred_region
          %p1087 = scmp.lt.s32.totalorder %s100, 1
          %s1088 = scalar_select %p1087, %s100, 1
          %s1089 = scalar_lea.vmem %s19, %s1088
        $region64: #{tpu_custom_call.1} parent=39 // pred_fallthru
          _
        // Predicated region
        $region65: #{tpu_custom_call.1} parent=39 // pred_check
          %p1090 = pneg %p374
        $region66: #{tpu_custom_call.1} parent=39 // pred_check_branch
          %1092 = sbr.rel (%p1090) target = $region68
        $region67: #{tpu_custom_call.1} parent=39 // pred_region
          %s1093 = sand.u32 %s92, 1
          %s1094 = scalar_lea.sflag [#allocation13], %s1093
          %s1095 = sand.u32 %s364, 1
          %s1096 = smul.addr %s1095, 64
          %s1097 = scalar_lea.vmem [#allocation14], %s1096
          %s1099 = ssub.s32 1024, 1024
          %1100 = vsyncadd %s1094, %s1099
          %s1101 = smul.addr %s100, 16
          %s1102 = smul.addr %s1101, 64
          %s1103 = scalar_lea.hbm %s21, %s1102
          %s1104 = sshll.u32 %s1097, 4
          %s1105 = int_to_ptr.vmem [resolvable:$true] %s1104
          %1110 = dma.hbm_to_vmem [thread:$0]  %s1103, 1024, %s1105, %s1094, 64, 64, 4
        $region68: #{tpu_custom_call.1} parent=39 // pred_fallthru
          _
        // Predicated region
        $region69: #{tpu_custom_call.1} parent=39 // pred_check
          %p1111 = pneg %p400
        $region70: #{tpu_custom_call.1} parent=39 // pred_check_branch
          %1113 = sbr.rel (%p1111) target = $region72
        $region71: #{tpu_custom_call.1} parent=39 // pred_region
          %p1114 = scmp.lt.s32.totalorder %s100, 1
          %s1115 = scalar_select %p1114, %s100, 1
          %s1116 = scalar_lea.vmem %s23, %s1115
        $region72: #{tpu_custom_call.1} parent=39 // pred_fallthru
          _
        // Predicated region
        $region73: #{tpu_custom_call.1} parent=39 // pred_check
          %p1117 = pneg %p426
        $region74: #{tpu_custom_call.1} parent=39 // pred_check_branch
          %1119 = sbr.rel (%p1117) target = $region76
        $region75: #{tpu_custom_call.1} parent=39 // pred_region
          %s1120 = sand.u32 %s92, 1
          %s1121 = scalar_lea.sflag [#allocation16], %s1120
          %s1122 = sand.u32 %s416, 1
          %s1123 = smul.addr %s1122, 64
          %s1124 = scalar_lea.vmem [#allocation15], %s1123
          %s1126 = ssub.s32 1024, 1024
          %1127 = vsyncadd %s1121, %s1126
          %s1128 = smul.addr %s100, 16
          %s1129 = smul.addr %s1128, 64
          %s1130 = scalar_lea.hbm %s25, %s1129
          %s1131 = sshll.u32 %s1124, 4
          %s1132 = int_to_ptr.vmem [resolvable:$true] %s1131
          %1137 = dma.hbm_to_vmem [thread:$0]  %s1130, 1024, %s1132, %s1121, 64, 64, 4
        $region76: #{tpu_custom_call.1} parent=39 // pred_fallthru
          _
        // Predicated region
        $region77: #{tpu_custom_call.1} parent=39 // pred_check
          %p1138 = pneg %p452
        $region78: #{tpu_custom_call.1} parent=39 // pred_check_branch
          %1140 = sbr.rel (%p1138) target = $region80
        $region79: #{tpu_custom_call.1} parent=39 // pred_region
          %p1141 = scmp.lt.s32.totalorder %s100, 1
          %s1142 = scalar_select %p1141, %s100, 1
          %s1143 = scalar_lea.vmem %s27, %s1142
        $region80: #{tpu_custom_call.1} parent=39 // pred_fallthru
          _
        // Predicated region
        $region81: #{tpu_custom_call.1} parent=39 // pred_check
          %p1144 = pneg %p478
        $region82: #{tpu_custom_call.1} parent=39 // pred_check_branch
          %1146 = sbr.rel (%p1144) target = $region84
        $region83: #{tpu_custom_call.1} parent=39 // pred_region
          %p1147 = scmp.lt.s32.totalorder %s100, 1
          %s1148 = scalar_select %p1147, %s100, 1
          %s1149 = scalar_lea.vmem %s29, %s1148
        $region84: #{tpu_custom_call.1} parent=39 // pred_fallthru
          _
        // Predicated region
        $region85: #{tpu_custom_call.1} parent=39 // pred_check
          %p1150 = pneg %p504
        $region86: #{tpu_custom_call.1} parent=39 // pred_check_branch
          %1152 = sbr.rel (%p1150) target = $region88
        $region87: #{tpu_custom_call.1} parent=39 // pred_region
          %p1153 = scmp.lt.s32.totalorder %s100, 1
          %s1154 = scalar_select %p1153, %s100, 1
          %s1155 = scalar_lea.vmem %s31, %s1154
        $region88: #{tpu_custom_call.1} parent=39 // pred_fallthru
          _
        // Predicated region
        $region89: #{tpu_custom_call.1} parent=39 // pred_check
          %p1156 = pneg %p530
        $region90: #{tpu_custom_call.1} parent=39 // pred_check_branch
          %1158 = sbr.rel (%p1156) target = $region92
        $region91: #{tpu_custom_call.1} parent=39 // pred_region
          %s1159 = sand.u32 %s92, 1
          %s1160 = scalar_lea.sflag [#allocation16], %s1159
          %s1161 = sand.u32 %s520, 1
          %s1162 = smul.addr %s1161, 64
          %s1163 = scalar_lea.vmem [#allocation17], %s1162
          %s1165 = ssub.s32 1024, 1024
          %1166 = vsyncadd %s1160, %s1165
          %s1167 = smul.addr %s100, 16
          %s1168 = smul.addr %s1167, 64
          %s1169 = scalar_lea.hbm %s33, %s1168
          %s1170 = sshll.u32 %s1163, 4
          %s1171 = int_to_ptr.vmem [resolvable:$true] %s1170
          %1176 = dma.hbm_to_vmem [thread:$0]  %s1169, 1024, %s1171, %s1160, 64, 64, 4
        $region92: #{tpu_custom_call.1} parent=39 // pred_fallthru
          _
        // Predicated region
        $region93: #{tpu_custom_call.1} parent=39 // pred_check
          %p1177 = pneg %p556
        $region94: #{tpu_custom_call.1} parent=39 // pred_check_branch
          %1179 = sbr.rel (%p1177) target = $region96
        $region95: #{tpu_custom_call.1} parent=39 // pred_region
          %p1180 = scmp.lt.s32.totalorder %s100, 1
          %s1181 = scalar_select %p1180, %s100, 1
          %s1182 = scalar_lea.vmem %s35, %s1181
        $region96: #{tpu_custom_call.1} parent=39 // pred_fallthru
          _
        // Predicated region
        $region97: #{tpu_custom_call.1} parent=39 // pred_check
          %p1183 = pneg %p582
        $region98: #{tpu_custom_call.1} parent=39 // pred_check_branch
          %1185 = sbr.rel (%p1183) target = $region100
        $region99: #{tpu_custom_call.1} parent=39 // pred_region
          %s1186 = sand.u32 %s92, 1
          %s1187 = scalar_lea.sflag [#allocation19], %s1186
          %s1188 = sand.u32 %s572, 1
          %s1189 = smul.addr %s1188, 64
          %s1190 = scalar_lea.vmem [#allocation18], %s1189
          %s1192 = ssub.s32 1024, 1024
          %1193 = vsyncadd %s1187, %s1192
          %s1194 = smul.addr %s100, 16
          %s1195 = smul.addr %s1194, 64
          %s1196 = scalar_lea.hbm %s37, %s1195
          %s1197 = sshll.u32 %s1190, 4
          %s1198 = int_to_ptr.vmem [resolvable:$true] %s1197
          %1203 = dma.hbm_to_vmem [thread:$0]  %s1196, 1024, %s1198, %s1187, 64, 64, 4
        $region100: #{tpu_custom_call.1} parent=39 // pred_fallthru
          _
        // Predicated region
        $region101: #{tpu_custom_call.1} parent=39 // pred_check
          %p1204 = pneg %p608
        $region102: #{tpu_custom_call.1} parent=39 // pred_check_branch
          %1206 = sbr.rel (%p1204) target = $region104
        $region103: #{tpu_custom_call.1} parent=39 // pred_region
          %p1207 = scmp.lt.s32.totalorder %s100, 1
          %s1208 = scalar_select %p1207, %s100, 1
          %s1209 = scalar_lea.vmem %s39, %s1208
        $region104: #{tpu_custom_call.1} parent=39 // pred_fallthru
          _
        // Predicated region
        $region105: #{tpu_custom_call.1} parent=39 // pred_check
          %p1210 = pneg %p634
        $region106: #{tpu_custom_call.1} parent=39 // pred_check_branch
          %1212 = sbr.rel (%p1210) target = $region108
        $region107: #{tpu_custom_call.1} parent=39 // pred_region
          %s1213 = sand.u32 %s92, 1
          %s1214 = scalar_lea.sflag [#allocation19], %s1213
          %s1215 = sand.u32 %s624, 1
          %s1216 = smul.addr %s1215, 64
          %s1217 = scalar_lea.vmem [#allocation20], %s1216
          %s1219 = ssub.s32 1024, 1024
          %1220 = vsyncadd %s1214, %s1219
          %s1221 = smul.addr %s100, 16
          %s1222 = smul.addr %s1221, 64
          %s1223 = scalar_lea.hbm %s41, %s1222
          %s1224 = sshll.u32 %s1217, 4
          %s1225 = int_to_ptr.vmem [resolvable:$true] %s1224
          %1230 = dma.hbm_to_vmem [thread:$0]  %s1223, 1024, %s1225, %s1214, 64, 64, 4
        $region108: #{tpu_custom_call.1} parent=39 // pred_fallthru
          _
        // Predicated region
        $region109: #{tpu_custom_call.1} parent=39 // pred_check
          %p1231 = pneg %p660
        $region110: #{tpu_custom_call.1} parent=39 // pred_check_branch
          %1233 = sbr.rel (%p1231) target = $region112
        $region111: #{tpu_custom_call.1} parent=39 // pred_region
          %p1234 = scmp.lt.s32.totalorder %s100, 1
          %s1235 = scalar_select %p1234, %s100, 1
          %s1236 = scalar_lea.vmem %s43, %s1235
        $region112: #{tpu_custom_call.1} parent=39 // pred_fallthru
          _
        // Predicated region
        $region113: #{tpu_custom_call.1} parent=39 // pred_check
          %p1237 = pneg %p686
        $region114: #{tpu_custom_call.1} parent=39 // pred_check_branch
          %1239 = sbr.rel (%p1237) target = $region116
        $region115: #{tpu_custom_call.1} parent=39 // pred_region
          %s1240 = sand.u32 %s92, 1
          %s1241 = scalar_lea.sflag [#allocation22], %s1240
          %s1242 = sand.u32 %s676, 1
          %s1243 = smul.addr %s1242, 64
          %s1244 = scalar_lea.vmem [#allocation21], %s1243
          %s1246 = ssub.s32 1024, 1024
          %1247 = vsyncadd %s1241, %s1246
          %s1248 = smul.addr %s100, 16
          %s1249 = smul.addr %s1248, 64
          %s1250 = scalar_lea.hbm %s45, %s1249
          %s1251 = sshll.u32 %s1244, 4
          %s1252 = int_to_ptr.vmem [resolvable:$true] %s1251
          %1257 = dma.hbm_to_vmem [thread:$0]  %s1250, 1024, %s1252, %s1241, 64, 64, 4
        $region116: #{tpu_custom_call.1} parent=39 // pred_fallthru
          _
        // Predicated region
        $region117: #{tpu_custom_call.1} parent=39 // pred_check
          %p1258 = pneg %p712
        $region118: #{tpu_custom_call.1} parent=39 // pred_check_branch
          %1260 = sbr.rel (%p1258) target = $region120
        $region119: #{tpu_custom_call.1} parent=39 // pred_region
          %p1261 = scmp.lt.s32.totalorder %s100, 1
          %s1262 = scalar_select %p1261, %s100, 1
          %s1263 = scalar_lea.vmem %s47, %s1262
        $region120: #{tpu_custom_call.1} parent=39 // pred_fallthru
          _
        // Predicated region
        $region121: #{tpu_custom_call.1} parent=39 // pred_check
          %p1264 = pneg %p738
        $region122: #{tpu_custom_call.1} parent=39 // pred_check_branch
          %1266 = sbr.rel (%p1264) target = $region124
        $region123: #{tpu_custom_call.1} parent=39 // pred_region
          %p1267 = scmp.lt.s32.totalorder %s100, 1
          %s1268 = scalar_select %p1267, %s100, 1
          %s1269 = scalar_lea.vmem %s49, %s1268
        $region124: #{tpu_custom_call.1} parent=39 // pred_fallthru
          _
        // Predicated region
        $region125: #{tpu_custom_call.1} parent=39 // pred_check
          %p1270 = pneg %p764
        $region126: #{tpu_custom_call.1} parent=39 // pred_check_branch
          %1272 = sbr.rel (%p1270) target = $region128
        $region127: #{tpu_custom_call.1} parent=39 // pred_region
          %p1273 = scmp.lt.s32.totalorder %s100, 1
          %s1274 = scalar_select %p1273, %s100, 1
          %s1275 = scalar_lea.vmem %s51, %s1274
        $region128: #{tpu_custom_call.1} parent=39 // pred_fallthru
          _
        // Predicated region
        $region129: #{tpu_custom_call.1} parent=39 // pred_check
          %p1276 = pneg %p790
        $region130: #{tpu_custom_call.1} parent=39 // pred_check_branch
          %1278 = sbr.rel (%p1276) target = $region132
        $region131: #{tpu_custom_call.1} parent=39 // pred_region
          %s1279 = sand.u32 %s92, 1
          %s1280 = scalar_lea.sflag [#allocation22], %s1279
          %s1281 = sand.u32 %s780, 1
          %s1282 = smul.addr %s1281, 256
          %s1283 = scalar_lea.vmem [#allocation23], %s1282
          %s1285 = ssub.s32 4096, 4096
          %1286 = vsyncadd %s1280, %s1285
          %s1287 = smul.addr %s100, 64
          %s1288 = smul.addr %s1287, 64
          %s1289 = scalar_lea.hbm %s53, %s1288
          %s1290 = sshll.u32 %s1283, 4
          %s1291 = int_to_ptr.vmem [resolvable:$true] %s1290
          %1296 = dma.hbm_to_vmem [thread:$0]  %s1289, 4096, %s1291, %s1280, 256, 256, 16
        $region132: #{tpu_custom_call.1} parent=39 // pred_fallthru
          _
        // Predicated region
        $region133: #{tpu_custom_call.1} parent=39 // pred_check
          %p1297 = pneg %p816
        $region134: #{tpu_custom_call.1} parent=39 // pred_check_branch
          %1299 = sbr.rel (%p1297) target = $region136
        $region135: #{tpu_custom_call.1} parent=39 // pred_region
          %p1300 = scmp.lt.s32.totalorder %s100, 1
          %s1301 = scalar_select %p1300, %s100, 1
          %s1302 = smul.addr %s1301, 4
          %s1303 = scalar_lea.vmem %s55, %s1302
        $region136: #{tpu_custom_call.1} parent=39 // pred_fallthru
          _
        // Predicated region
        $region137: #{tpu_custom_call.1} parent=39 // pred_check
          %p1304 = pneg %p842
        $region138: #{tpu_custom_call.1} parent=39 // pred_check_branch
          %1306 = sbr.rel (%p1304) target = $region140
        $region139: #{tpu_custom_call.1} parent=39 // pred_region
          %s1307 = sand.u32 %s832, 1
          %s1308 = scalar_lea.sflag [#allocation25], %s1307
          %s1309 = sand.u32 %s832, 1
          %s1310 = smul.addr %s1309, 256
          %s1311 = scalar_lea.vmem [#allocation24], %s1310
          %s1313 = ssub.s32 4096, 4096
          %1314 = vsyncadd %s1308, %s1313
          %s1315 = smul.addr %s100, 64
          %s1316 = smul.addr %s1315, 64
          %s1317 = scalar_lea.hbm %s57, %s1316
          %s1318 = sshll.u32 %s1311, 4
          %s1319 = int_to_ptr.vmem [resolvable:$true] %s1318
          %1324 = dma.hbm_to_vmem [thread:$0]  %s1317, 4096, %s1319, %s1308, 64, 64, 4
        $region140: #{tpu_custom_call.1} parent=39 // pred_fallthru
          _
        // Predicated region
        $region141: #{tpu_custom_call.1} parent=39 // pred_check
          %p1325 = pneg %p868
        $region142: #{tpu_custom_call.1} parent=39 // pred_check_branch
          %1327 = sbr.rel (%p1325) target = $region144
        $region143: #{tpu_custom_call.1} parent=39 // pred_region
          %p1328 = scmp.lt.s32.totalorder %s100, 1
          %s1329 = scalar_select %p1328, %s100, 1
          %s1330 = scalar_lea.vmem %s59, %s1329
        $region144: #{tpu_custom_call.1} parent=39 // pred_fallthru
          _
      $region40: #{tpu_custom_call.1} parent=5 // pred_fallthru
        _
      %p1331 = scmp.le.s32.totalorder 1, %s92
      %p1332 = scmp.lt.s32.totalorder %s92, 3
      %p1333 = pnand %p1331, %p1332
      %p1334 = pneg %p1333
      // Predicated region
      $region145: #{tpu_custom_call.1} parent=5 // pred_check
        _
      $region146: #{tpu_custom_call.1} parent=5 // pred_check_branch
        %1336 = sbr.rel (%p1333) target = $region148
      $region147: #{tpu_custom_call.1} parent=5 // pred_region
        %s1337 = ssub.s32 %s92, 1
        // Predicated region
        $region149: #{tpu_custom_call.1} parent=147 // pred_check
          %p1338 = pneg %p130
        $region150: #{tpu_custom_call.1} parent=147 // pred_check_branch
          %1340 = sbr.rel (%p1338) target = $region152
        $region151: #{tpu_custom_call.1} parent=147 // pred_region
          %1341 = dma.done [#allocation4], 256
        $region152: #{tpu_custom_call.1} parent=147 // pred_fallthru
          _
        // Predicated region
        $region153: #{tpu_custom_call.1} parent=147 // pred_check
          %p1342 = pneg %p156
        $region154: #{tpu_custom_call.1} parent=147 // pred_check_branch
          %1344 = sbr.rel (%p1342) target = $region156
        $region155: #{tpu_custom_call.1} parent=147 // pred_region
          %1345 = dma.done [#allocation7], 256
        $region156: #{tpu_custom_call.1} parent=147 // pred_fallthru
          _
        // Predicated region
        $region157: #{tpu_custom_call.1} parent=147 // pred_check
          %p1346 = pneg %p177
        $region158: #{tpu_custom_call.1} parent=147 // pred_check_branch
          %1348 = sbr.rel (%p1346) target = $region160
        $region159: #{tpu_custom_call.1} parent=147 // pred_region
          %1349 = dma.done [#allocation7], 128
        $region160: #{tpu_custom_call.1} parent=147 // pred_fallthru
          _
        %s1350 = sand.u32 %s97, 1
        %s1351 = scalar_lea.sflag [#allocation10], %s1350
        %s1352 = sand.u32 %s237, 1
        %s1353 = scalar_lea.vmem [#allocation9], %s1352
        // Predicated region
        $region161: #{tpu_custom_call.1} parent=147 // pred_check
          %p1354 = pneg %p250
        $region162: #{tpu_custom_call.1} parent=147 // pred_check_branch
          %1356 = sbr.rel (%p1354) target = $region164
        $region163: #{tpu_custom_call.1} parent=147 // pred_region
          %1357 = dma.done %s1351, 16
        $region164: #{tpu_custom_call.1} parent=147 // pred_fallthru
          _
        %s1358 = sand.u32 %s97, 1
        %s1359 = scalar_lea.sflag [#allocation10], %s1358
        %s1360 = sand.u32 %s263, 1
        %s1361 = smul.addr %s1360, 64
        %s1362 = scalar_lea.vmem [#allocation11], %s1361
        // Predicated region
        $region165: #{tpu_custom_call.1} parent=147 // pred_check
          %p1363 = pneg %p276
        $region166: #{tpu_custom_call.1} parent=147 // pred_check_branch
          %1365 = sbr.rel (%p1363) target = $region168
        $region167: #{tpu_custom_call.1} parent=147 // pred_region
          %1366 = dma.done %s1359, 1024
        $region168: #{tpu_custom_call.1} parent=147 // pred_fallthru
          _
        %s1367 = sand.u32 %s97, 1
        %s1368 = scalar_lea.sflag [#allocation13], %s1367
        %s1369 = sand.u32 %s315, 1
        %s1370 = smul.addr %s1369, 64
        %s1371 = scalar_lea.vmem [#allocation12], %s1370
        // Predicated region
        $region169: #{tpu_custom_call.1} parent=147 // pred_check
          %p1372 = pneg %p328
        $region170: #{tpu_custom_call.1} parent=147 // pred_check_branch
          %1374 = sbr.rel (%p1372) target = $region172
        $region171: #{tpu_custom_call.1} parent=147 // pred_region
          %1375 = dma.done %s1368, 1024
        $region172: #{tpu_custom_call.1} parent=147 // pred_fallthru
          _
        %s1376 = sand.u32 %s97, 1
        %s1377 = scalar_lea.sflag [#allocation13], %s1376
        %s1378 = sand.u32 %s367, 1
        %s1379 = smul.addr %s1378, 64
        %s1380 = scalar_lea.vmem [#allocation14], %s1379
        // Predicated region
        $region173: #{tpu_custom_call.1} parent=147 // pred_check
          %p1381 = pneg %p380
        $region174: #{tpu_custom_call.1} parent=147 // pred_check_branch
          %1383 = sbr.rel (%p1381) target = $region176
        $region175: #{tpu_custom_call.1} parent=147 // pred_region
          %1384 = dma.done %s1377, 1024
        $region176: #{tpu_custom_call.1} parent=147 // pred_fallthru
          _
        %s1385 = sand.u32 %s97, 1
        %s1386 = scalar_lea.sflag [#allocation16], %s1385
        %s1387 = sand.u32 %s419, 1
        %s1388 = smul.addr %s1387, 64
        %s1389 = scalar_lea.vmem [#allocation15], %s1388
        // Predicated region
        $region177: #{tpu_custom_call.1} parent=147 // pred_check
          %p1390 = pneg %p432
        $region178: #{tpu_custom_call.1} parent=147 // pred_check_branch
          %1392 = sbr.rel (%p1390) target = $region180
        $region179: #{tpu_custom_call.1} parent=147 // pred_region
          %1393 = dma.done %s1386, 1024
        $region180: #{tpu_custom_call.1} parent=147 // pred_fallthru
          _
        %s1394 = sand.u32 %s97, 1
        %s1395 = scalar_lea.sflag [#allocation16], %s1394
        %s1396 = sand.u32 %s523, 1
        %s1397 = smul.addr %s1396, 64
        %s1398 = scalar_lea.vmem [#allocation17], %s1397
        // Predicated region
        $region181: #{tpu_custom_call.1} parent=147 // pred_check
          %p1399 = pneg %p536
        $region182: #{tpu_custom_call.1} parent=147 // pred_check_branch
          %1401 = sbr.rel (%p1399) target = $region184
        $region183: #{tpu_custom_call.1} parent=147 // pred_region
          %1402 = dma.done %s1395, 1024
        $region184: #{tpu_custom_call.1} parent=147 // pred_fallthru
          _
        %s1403 = sand.u32 %s97, 1
        %s1404 = scalar_lea.sflag [#allocation19], %s1403
        %s1405 = sand.u32 %s575, 1
        %s1406 = smul.addr %s1405, 64
        %s1407 = scalar_lea.vmem [#allocation18], %s1406
        // Predicated region
        $region185: #{tpu_custom_call.1} parent=147 // pred_check
          %p1408 = pneg %p588
        $region186: #{tpu_custom_call.1} parent=147 // pred_check_branch
          %1410 = sbr.rel (%p1408) target = $region188
        $region187: #{tpu_custom_call.1} parent=147 // pred_region
          %1411 = dma.done %s1404, 1024
        $region188: #{tpu_custom_call.1} parent=147 // pred_fallthru
          _
        %s1412 = sand.u32 %s97, 1
        %s1413 = scalar_lea.sflag [#allocation19], %s1412
        %s1414 = sand.u32 %s627, 1
        %s1415 = smul.addr %s1414, 64
        %s1416 = scalar_lea.vmem [#allocation20], %s1415
        // Predicated region
        $region189: #{tpu_custom_call.1} parent=147 // pred_check
          %p1417 = pneg %p640
        $region190: #{tpu_custom_call.1} parent=147 // pred_check_branch
          %1419 = sbr.rel (%p1417) target = $region192
        $region191: #{tpu_custom_call.1} parent=147 // pred_region
          %1420 = dma.done %s1413, 1024
        $region192: #{tpu_custom_call.1} parent=147 // pred_fallthru
          _
        %s1421 = sand.u32 %s97, 1
        %s1422 = scalar_lea.sflag [#allocation22], %s1421
        %s1423 = sand.u32 %s679, 1
        %s1424 = smul.addr %s1423, 64
        %s1425 = scalar_lea.vmem [#allocation21], %s1424
        // Predicated region
        $region193: #{tpu_custom_call.1} parent=147 // pred_check
          %p1426 = pneg %p692
        $region194: #{tpu_custom_call.1} parent=147 // pred_check_branch
          %1428 = sbr.rel (%p1426) target = $region196
        $region195: #{tpu_custom_call.1} parent=147 // pred_region
          %1429 = dma.done %s1422, 1024
        $region196: #{tpu_custom_call.1} parent=147 // pred_fallthru
          _
        %s1430 = sand.u32 %s97, 1
        %s1431 = scalar_lea.sflag [#allocation22], %s1430
        %s1432 = sand.u32 %s783, 1
        %s1433 = smul.addr %s1432, 256
        %s1434 = scalar_lea.vmem [#allocation23], %s1433
        // Predicated region
        $region197: #{tpu_custom_call.1} parent=147 // pred_check
          %p1435 = pneg %p796
        $region198: #{tpu_custom_call.1} parent=147 // pred_check_branch
          %1437 = sbr.rel (%p1435) target = $region200
        $region199: #{tpu_custom_call.1} parent=147 // pred_region
          %1438 = dma.done %s1431, 4096
        $region200: #{tpu_custom_call.1} parent=147 // pred_fallthru
          _
        %s1439 = sand.u32 %s835, 1
        %s1440 = scalar_lea.sflag [#allocation25], %s1439
        %s1441 = sand.u32 %s835, 1
        %s1442 = smul.addr %s1441, 256
        %s1443 = scalar_lea.vmem [#allocation24], %s1442
        // Predicated region
        $region201: #{tpu_custom_call.1} parent=147 // pred_check
          %p1444 = pneg %p848
        $region202: #{tpu_custom_call.1} parent=147 // pred_check_branch
          %1446 = sbr.rel (%p1444) target = $region204
        $region203: #{tpu_custom_call.1} parent=147 // pred_region
          %1447 = dma.done %s1440, 4096
        $region204: #{tpu_custom_call.1} parent=147 // pred_fallthru
          _
        %p1448 = pneg %p130
        %p1449 = pneg %p127
        %p1450 = pneg %p156
        %p1451 = pneg %p153
        %p1452 = pneg %p177
        %p1453 = pneg %p174
        %p1454 = pneg %p198
        %p1455 = pneg %p195
        %p1456 = scmp.lt.s32.totalorder %s102, 1
        %s1457 = scalar_select %p1456, %s102, 1
        %s1458 = scalar_lea.vmem %s9, %s1457
        %p1459 = pneg %p224
        %p1460 = pneg %p221
        %s1461 = sand.u32 %s97, 1
        %s1462 = scalar_lea.sflag [#allocation10], %s1461
        %s1463 = sand.u32 %s237, 1
        %s1464 = scalar_lea.vmem [#allocation9], %s1463
        %p1465 = pneg %p250
        %p1466 = pneg %p247
        %s1467 = sand.u32 %s97, 1
        %s1468 = scalar_lea.sflag [#allocation10], %s1467
        %s1469 = sand.u32 %s263, 1
        %s1470 = smul.addr %s1469, 64
        %s1471 = scalar_lea.vmem [#allocation11], %s1470
        %p1472 = pneg %p276
        %p1473 = pneg %p273
        %p1474 = scmp.lt.s32.totalorder %s102, 1
        %s1475 = scalar_select %p1474, %s102, 1
        %s1476 = scalar_lea.vmem %s15, %s1475
        %p1477 = pneg %p302
        %p1478 = pneg %p299
        %s1479 = sand.u32 %s97, 1
        %s1480 = scalar_lea.sflag [#allocation13], %s1479
        %s1481 = sand.u32 %s315, 1
        %s1482 = smul.addr %s1481, 64
        %s1483 = scalar_lea.vmem [#allocation12], %s1482
        %p1484 = pneg %p328
        %p1485 = pneg %p325
        %p1486 = scmp.lt.s32.totalorder %s102, 1
        %s1487 = scalar_select %p1486, %s102, 1
        %s1488 = scalar_lea.vmem %s19, %s1487
        %p1489 = pneg %p354
        %p1490 = pneg %p351
        %s1491 = sand.u32 %s97, 1
        %s1492 = scalar_lea.sflag [#allocation13], %s1491
        %s1493 = sand.u32 %s367, 1
        %s1494 = smul.addr %s1493, 64
        %s1495 = scalar_lea.vmem [#allocation14], %s1494
        %p1496 = pneg %p380
        %p1497 = pneg %p377
        %p1498 = scmp.lt.s32.totalorder %s102, 1
        %s1499 = scalar_select %p1498, %s102, 1
        %s1500 = scalar_lea.vmem %s23, %s1499
        %p1501 = pneg %p406
        %p1502 = pneg %p403
        %s1503 = sand.u32 %s97, 1
        %s1504 = scalar_lea.sflag [#allocation16], %s1503
        %s1505 = sand.u32 %s419, 1
        %s1506 = smul.addr %s1505, 64
        %s1507 = scalar_lea.vmem [#allocation15], %s1506
        %p1508 = pneg %p432
        %p1509 = pneg %p429
        %p1510 = scmp.lt.s32.totalorder %s102, 1
        %s1511 = scalar_select %p1510, %s102, 1
        %s1512 = scalar_lea.vmem %s27, %s1511
        %p1513 = pneg %p458
        %p1514 = pneg %p455
        %p1515 = scmp.lt.s32.totalorder %s102, 1
        %s1516 = scalar_select %p1515, %s102, 1
        %s1517 = scalar_lea.vmem %s29, %s1516
        %p1518 = pneg %p484
        %p1519 = pneg %p481
        %p1520 = scmp.lt.s32.totalorder %s102, 1
        %s1521 = scalar_select %p1520, %s102, 1
        %s1522 = scalar_lea.vmem %s31, %s1521
        %p1523 = pneg %p510
        %p1524 = pneg %p507
        %s1525 = sand.u32 %s97, 1
        %s1526 = scalar_lea.sflag [#allocation16], %s1525
        %s1527 = sand.u32 %s523, 1
        %s1528 = smul.addr %s1527, 64
        %s1529 = scalar_lea.vmem [#allocation17], %s1528
        %p1530 = pneg %p536
        %p1531 = pneg %p533
        %p1532 = scmp.lt.s32.totalorder %s102, 1
        %s1533 = scalar_select %p1532, %s102, 1
        %s1534 = scalar_lea.vmem %s35, %s1533
        %p1535 = pneg %p562
        %p1536 = pneg %p559
        %s1537 = sand.u32 %s97, 1
        %s1538 = scalar_lea.sflag [#allocation19], %s1537
        %s1539 = sand.u32 %s575, 1
        %s1540 = smul.addr %s1539, 64
        %s1541 = scalar_lea.vmem [#allocation18], %s1540
        %p1542 = pneg %p588
        %p1543 = pneg %p585
        %p1544 = scmp.lt.s32.totalorder %s102, 1
        %s1545 = scalar_select %p1544, %s102, 1
        %s1546 = scalar_lea.vmem %s39, %s1545
        %p1547 = pneg %p614
        %p1548 = pneg %p611
        %s1549 = sand.u32 %s97, 1
        %s1550 = scalar_lea.sflag [#allocation19], %s1549
        %s1551 = sand.u32 %s627, 1
        %s1552 = smul.addr %s1551, 64
        %s1553 = scalar_lea.vmem [#allocation20], %s1552
        %p1554 = pneg %p640
        %p1555 = pneg %p637
        %p1556 = scmp.lt.s32.totalorder %s102, 1
        %s1557 = scalar_select %p1556, %s102, 1
        %s1558 = scalar_lea.vmem %s43, %s1557
        %p1559 = pneg %p666
        %p1560 = pneg %p663
        %s1561 = sand.u32 %s97, 1
        %s1562 = scalar_lea.sflag [#allocation22], %s1561
        %s1563 = sand.u32 %s679, 1
        %s1564 = smul.addr %s1563, 64
        %s1565 = scalar_lea.vmem [#allocation21], %s1564
        %p1566 = pneg %p692
        %p1567 = pneg %p689
        %p1568 = scmp.lt.s32.totalorder %s102, 1
        %s1569 = scalar_select %p1568, %s102, 1
        %s1570 = scalar_lea.vmem %s47, %s1569
        %p1571 = pneg %p718
        %p1572 = pneg %p715
        %p1573 = scmp.lt.s32.totalorder %s102, 1
        %s1574 = scalar_select %p1573, %s102, 1
        %s1575 = scalar_lea.vmem %s49, %s1574
        %p1576 = pneg %p744
        %p1577 = pneg %p741
        %p1578 = scmp.lt.s32.totalorder %s102, 1
        %s1579 = scalar_select %p1578, %s102, 1
        %s1580 = scalar_lea.vmem %s51, %s1579
        %p1581 = pneg %p770
        %p1582 = pneg %p767
        %s1583 = sand.u32 %s97, 1
        %s1584 = scalar_lea.sflag [#allocation22], %s1583
        %s1585 = sand.u32 %s783, 1
        %s1586 = smul.addr %s1585, 256
        %s1587 = scalar_lea.vmem [#allocation23], %s1586
        %p1588 = pneg %p796
        %p1589 = pneg %p793
        %p1590 = scmp.lt.s32.totalorder %s102, 1
        %s1591 = scalar_select %p1590, %s102, 1
        %s1592 = smul.addr %s1591, 4
        %s1593 = scalar_lea.vmem %s55, %s1592
        %p1594 = pneg %p822
        %p1595 = pneg %p819
        %s1596 = sand.u32 %s835, 1
        %s1597 = scalar_lea.sflag [#allocation25], %s1596
        %s1598 = sand.u32 %s835, 1
        %s1599 = smul.addr %s1598, 256
        %s1600 = scalar_lea.vmem [#allocation24], %s1599
        %p1601 = pneg %p848
        %p1602 = pneg %p845
        %p1603 = scmp.lt.s32.totalorder %s102, 1
        %s1604 = scalar_select %p1603, %s102, 1
        %s1605 = scalar_lea.vmem %s59, %s1604
        %p1606 = pneg %p874
        %p1607 = pneg %p871
        %p1608 = pneg %p895
        %p1609 = pneg %p892
        %p1610 = pneg %p916
        %p1611 = pneg %p913
        %p1612 = pneg %p942
        %p1613 = pneg %p939
        %s1614 = smul.u32 2, %s101
        %s1615 = smul.u32 2, %s101
        %p1616 = scmp.lt.s32.totalorder %s102, 1
        %s1617 = scalar_select %p1616, %s102, 1
        %s1618 = scalar_lea.vmem %s9, %s1617
        %p1619 = scmp.lt.s32.totalorder %s102, 1
        %s1620 = scalar_select %p1619, %s102, 1
        %s1621 = scalar_lea.vmem %s15, %s1620
        %p1622 = scmp.lt.s32.totalorder %s102, 1
        %s1623 = scalar_select %p1622, %s102, 1
        %s1624 = scalar_lea.vmem %s19, %s1623
        %p1625 = scmp.lt.s32.totalorder %s102, 1
        %s1626 = scalar_select %p1625, %s102, 1
        %s1627 = scalar_lea.vmem %s23, %s1626
        %p1628 = scmp.lt.s32.totalorder %s102, 1
        %s1629 = scalar_select %p1628, %s102, 1
        %s1630 = scalar_lea.vmem %s27, %s1629
        %p1631 = scmp.lt.s32.totalorder %s102, 1
        %s1632 = scalar_select %p1631, %s102, 1
        %s1633 = scalar_lea.vmem %s29, %s1632
        %p1634 = scmp.lt.s32.totalorder %s102, 1
        %s1635 = scalar_select %p1634, %s102, 1
        %s1636 = scalar_lea.vmem %s31, %s1635
        %p1637 = scmp.lt.s32.totalorder %s102, 1
        %s1638 = scalar_select %p1637, %s102, 1
        %s1639 = scalar_lea.vmem %s35, %s1638
        %p1640 = scmp.lt.s32.totalorder %s102, 1
        %s1641 = scalar_select %p1640, %s102, 1
        %s1642 = scalar_lea.vmem %s39, %s1641
        %p1643 = scmp.lt.s32.totalorder %s102, 1
        %s1644 = scalar_select %p1643, %s102, 1
        %s1645 = scalar_lea.vmem %s43, %s1644
        %p1646 = scmp.lt.s32.totalorder %s102, 1
        %s1647 = scalar_select %p1646, %s102, 1
        %s1648 = scalar_lea.vmem %s47, %s1647
        %p1649 = scmp.lt.s32.totalorder %s102, 1
        %s1650 = scalar_select %p1649, %s102, 1
        %s1651 = scalar_lea.vmem %s49, %s1650
        %p1652 = scmp.lt.s32.totalorder %s102, 1
        %s1653 = scalar_select %p1652, %s102, 1
        %s1654 = scalar_lea.vmem %s51, %s1653
        %p1655 = scmp.lt.s32.totalorder %s102, 1
        %s1656 = scalar_select %p1655, %s102, 1
        %s1657 = smul.addr %s1656, 4
        %s1658 = scalar_lea.vmem %s55, %s1657
        %p1659 = scmp.lt.s32.totalorder %s102, 1
        %s1660 = scalar_select %p1659, %s102, 1
        %s1661 = scalar_lea.vmem %s59, %s1660
        %s1662 = smul.u32 2, %s101
        %p1664 = scmp.eq.s32.totalorder %s102, 0
        // Predicated region
        $region205: #{tpu_custom_call.1} parent=147 // pred_check
          %p1665 = pneg %p1664
        $region206: #{tpu_custom_call.1} parent=147 // pred_check_branch
          %1667 = sbr.rel (%p1665) target = $region208
        $region207: #{tpu_custom_call.1} parent=147 // pred_region
          %v1668 = vld [vmem:[#allocation6] sm:$0xff]
          %v1669 = vld [vmem:[#allocation6 + $0x8] sm:$0xff]
          %1670 = vst [vmem:[#allocation2] sm:$0xff] %v1668
          %1671 = vst [vmem:[#allocation2 + $0x8] sm:$0xff] %v1669
        $region208: #{tpu_custom_call.1} parent=147 // pred_fallthru
          _
        %v1672 = vld [vmem:[#allocation2] sm:$0xff]
        %v1673 = vld [vmem:[#allocation2 + $0x8] sm:$0xff]
        %v1674 = vld [vmem:[#allocation3] sm:$0xff]
        %v1675 = vld [vmem:[#allocation3 + $0x8] sm:$0xff]
        %v1676 = vpack.c.bf16 %v1675, %v1674
        %v1677 = vld [vmem:[#allocation8] sm:$0xff]
        %v1678 = vld [vmem:[%s7] sm:$0xff]
        %v1679 = vld [vmem:[%s1618] sm:$0x1]
        %v1680 = vld [vmem:[%s1353] sm:$0x1]
        %1681 = vadd.xlane.f32.xlu0 %v1672
        %v1682 = vpop.xlane.xlu0 %1681
        %1683 = vadd.xlane.f32.xlu0 %v1673
        %v1684 = vpop.xlane.xlu0 %1683
        %v1685 = vrcp.pop 128.0
        %v1686 = vmul.f32 %v1682, %v1685
        %v1687 = vmul.f32 %v1684, %v1685
        %v1688 = vsub.f32 %v1672, %v1686
        %v1689 = vsub.f32 %v1673, %v1687
        %v1690 = vmul.f32 %v1688, %v1688
        %v1691 = vmul.f32 %v1689, %v1689
        %1692 = vadd.xlane.f32.xlu0 %v1690
        %v1693 = vpop.xlane.xlu0 %1692
        %1694 = vadd.xlane.f32.xlu0 %v1691
        %v1695 = vpop.xlane.xlu0 %1694
        %v1696 = vmul.f32 %v1693, 0.007874016
        %v1697 = vmul.f32 %v1695, 0.007874016
        %v1698 = vrsqrt.pop %v1696
        %v1699 = vmul.f32 %v1696, %v1698
        %vm1700 = vcmp.eq.f32.partialorder %v1696, inf
        %v1701 = vsel %vm1700, %v1696, %v1699
        %vm1702 = vcmp.eq.f32.partialorder %v1696, 0.0
        %v1703 = vand.u32 %v1696, 2147483648
        %v1704 = vsel %vm1702, %v1703, %v1701
        %v1705 = vrsqrt.pop %v1697
        %v1706 = vmul.f32 %v1697, %v1705
        %vm1707 = vcmp.eq.f32.partialorder %v1697, inf
        %v1708 = vsel %vm1707, %v1697, %v1706
        %vm1709 = vcmp.eq.f32.partialorder %v1697, 0.0
        %v1710 = vand.u32 %v1697, 2147483648
        %v1711 = vsel %vm1709, %v1710, %v1708
        %v1712 = vadd.f32 %v1704, 1e-06
        %v1713 = vadd.f32 %v1711, 1e-06
        %v1714 = vrcp.pop %v1712
        %v1715 = vrcp.pop %v1713
        %v1716 = vmul.f32 %v1688, %v1714
        %v1717 = vmul.f32 %v1689, %v1715
        %v1719 = vlaneseq
        %v1720 = vshrl.u32 %v1719, 7
        %v1721 = vsub.s32 0, %v1720
        %v1722 = vrot.slane %v1679, %v1721
        %v1724 = vmul.f32 %v1722, %v1716
        %v1725 = vmul.f32 %v1722, %v1717
        %v1727 = vlaneseq
        %v1728 = vshrl.u32 %v1727, 7
        %v1729 = vsub.s32 0, %v1728
        %v1730 = vrot.slane %v1680, %v1729
        %v1732 = vadd.f32 %v1724, %v1730
        %v1733 = vadd.f32 %v1725, %v1730
        %v1734 = vpack.c.bf16 %v1733, %v1732
        %v1735 = vld [vmem:[%s1362] sm:$0xf]
        %v1736 = vld [vmem:[%s1362 + $0x4] sm:$0xf]
        %v1737 = vld [vmem:[%s1362 + $0x8] sm:$0xf]
        %v1738 = vld [vmem:[%s1362 + $0xc] sm:$0xf]
        %v1739 = vld [vmem:[%s1362 + $0x10] sm:$0xf]
        %v1740 = vld [vmem:[%s1362 + $0x14] sm:$0xf]
        %v1741 = vld [vmem:[%s1362 + $0x18] sm:$0xf]
        %v1742 = vld [vmem:[%s1362 + $0x1c] sm:$0xf]
        %v1743 = vld [vmem:[%s1362 + $0x20] sm:$0xf]
        %v1744 = vld [vmem:[%s1362 + $0x24] sm:$0xf]
        %v1745 = vld [vmem:[%s1362 + $0x28] sm:$0xf]
        %v1746 = vld [vmem:[%s1362 + $0x2c] sm:$0xf]
        %v1747 = vld [vmem:[%s1362 + $0x30] sm:$0xf]
        %v1748 = vld [vmem:[%s1362 + $0x34] sm:$0xf]
        %v1749 = vld [vmem:[%s1362 + $0x38] sm:$0xf]
        %v1750 = vld [vmem:[%s1362 + $0x3c] sm:$0xf]
        %v1751 = vld [vmem:[%s1621] sm:$0x1]
        %v1752 = vld [vmem:[%s1371] sm:$0xf]
        %v1753 = vld [vmem:[%s1371 + $0x4] sm:$0xf]
        %v1754 = vld [vmem:[%s1371 + $0x8] sm:$0xf]
        %v1755 = vld [vmem:[%s1371 + $0xc] sm:$0xf]
        %v1756 = vld [vmem:[%s1371 + $0x10] sm:$0xf]
        %v1757 = vld [vmem:[%s1371 + $0x14] sm:$0xf]
        %v1758 = vld [vmem:[%s1371 + $0x18] sm:$0xf]
        %v1759 = vld [vmem:[%s1371 + $0x1c] sm:$0xf]
        %v1760 = vld [vmem:[%s1371 + $0x20] sm:$0xf]
        %v1761 = vld [vmem:[%s1371 + $0x24] sm:$0xf]
        %v1762 = vld [vmem:[%s1371 + $0x28] sm:$0xf]
        %v1763 = vld [vmem:[%s1371 + $0x2c] sm:$0xf]
        %v1764 = vld [vmem:[%s1371 + $0x30] sm:$0xf]
        %v1765 = vld [vmem:[%s1371 + $0x34] sm:$0xf]
        %v1766 = vld [vmem:[%s1371 + $0x38] sm:$0xf]
        %v1767 = vld [vmem:[%s1371 + $0x3c] sm:$0xf]
        %v1768 = vld [vmem:[%s1624] sm:$0x1]
        %v1769 = vld [vmem:[%s1380] sm:$0xf]
        %v1770 = vld [vmem:[%s1380 + $0x4] sm:$0xf]
        %v1771 = vld [vmem:[%s1380 + $0x8] sm:$0xf]
        %v1772 = vld [vmem:[%s1380 + $0xc] sm:$0xf]
        %v1773 = vld [vmem:[%s1380 + $0x10] sm:$0xf]
        %v1774 = vld [vmem:[%s1380 + $0x14] sm:$0xf]
        %v1775 = vld [vmem:[%s1380 + $0x18] sm:$0xf]
        %v1776 = vld [vmem:[%s1380 + $0x1c] sm:$0xf]
        %v1777 = vld [vmem:[%s1380 + $0x20] sm:$0xf]
        %v1778 = vld [vmem:[%s1380 + $0x24] sm:$0xf]
        %v1779 = vld [vmem:[%s1380 + $0x28] sm:$0xf]
        %v1780 = vld [vmem:[%s1380 + $0x2c] sm:$0xf]
        %v1781 = vld [vmem:[%s1380 + $0x30] sm:$0xf]
        %v1782 = vld [vmem:[%s1380 + $0x34] sm:$0xf]
        %v1783 = vld [vmem:[%s1380 + $0x38] sm:$0xf]
        %v1784 = vld [vmem:[%s1380 + $0x3c] sm:$0xf]
        %v1785 = vld [vmem:[%s1627] sm:$0x1]
        %v1786 = vld [vmem:[%s1389] sm:$0xf]
        %v1787 = vld [vmem:[%s1389 + $0x4] sm:$0xf]
        %v1788 = vld [vmem:[%s1389 + $0x8] sm:$0xf]
        %v1789 = vld [vmem:[%s1389 + $0xc] sm:$0xf]
        %v1790 = vld [vmem:[%s1389 + $0x10] sm:$0xf]
        %v1791 = vld [vmem:[%s1389 + $0x14] sm:$0xf]
        %v1792 = vld [vmem:[%s1389 + $0x18] sm:$0xf]
        %v1793 = vld [vmem:[%s1389 + $0x1c] sm:$0xf]
        %v1794 = vld [vmem:[%s1389 + $0x20] sm:$0xf]
        %v1795 = vld [vmem:[%s1389 + $0x24] sm:$0xf]
        %v1796 = vld [vmem:[%s1389 + $0x28] sm:$0xf]
        %v1797 = vld [vmem:[%s1389 + $0x2c] sm:$0xf]
        %v1798 = vld [vmem:[%s1389 + $0x30] sm:$0xf]
        %v1799 = vld [vmem:[%s1389 + $0x34] sm:$0xf]
        %v1800 = vld [vmem:[%s1389 + $0x38] sm:$0xf]
        %v1801 = vld [vmem:[%s1389 + $0x3c] sm:$0xf]
        %v1802 = vld [vmem:[%s1630] sm:$0x1]
        %v1804 = vlaneseq
        %v1805 = vshrl.u32 %v1804, 7
        %v1806 = vsub.s32 0, %v1805
        %v1807 = vrot.slane %v1751, %v1806
        %v1825 = vunpack.c.l.b16 %v1735
        %v1826 = vunpack.c.l.b16 %v1736
        %v1827 = vunpack.c.l.b16 %v1737
        %v1828 = vunpack.c.l.b16 %v1738
        %v1829 = vunpack.c.l.b16 %v1739
        %v1830 = vunpack.c.l.b16 %v1740
        %v1831 = vunpack.c.l.b16 %v1741
        %v1832 = vunpack.c.l.b16 %v1742
        %v1833 = vunpack.c.l.b16 %v1743
        %v1834 = vunpack.c.l.b16 %v1744
        %v1835 = vunpack.c.l.b16 %v1745
        %v1836 = vunpack.c.l.b16 %v1746
        %v1837 = vunpack.c.l.b16 %v1747
        %v1838 = vunpack.c.l.b16 %v1748
        %v1839 = vunpack.c.l.b16 %v1749
        %v1840 = vunpack.c.l.b16 %v1750
        %v1841 = vpack.c.b16 %v1826, %v1825
        %v1842 = vpack.c.b16 %v1828, %v1827
        %v1843 = vpack.c.b16 %v1830, %v1829
        %v1844 = vpack.c.b16 %v1832, %v1831
        %v1845 = vpack.c.b16 %v1834, %v1833
        %v1846 = vpack.c.b16 %v1836, %v1835
        %v1847 = vpack.c.b16 %v1838, %v1837
        %v1848 = vpack.c.b16 %v1840, %v1839
        %1857 = vmatprep.subr.bf16.mxu0 0
        %1858 = vmatpush1.bf16.msra.mxu0 %v1841
        %1859 = vmatprep.subr.bf16.mxu0 0
        %1860 = vmatpush1.bf16.msra.mxu0 %v1842
        %1861 = vmatprep.subr.bf16.mxu0 0
        %1862 = vmatpush1.bf16.msra.mxu0 %v1843
        %1863 = vmatprep.subr.bf16.mxu0 0
        %1864 = vmatpush1.bf16.msra.mxu0 %v1844
        %1865 = vmatprep.subr.bf16.mxu0 0
        %1866 = vmatpush1.bf16.msra.mxu0 %v1845
        %1867 = vmatprep.subr.bf16.mxu0 0
        %1868 = vmatpush1.bf16.msra.mxu0 %v1846
        %1869 = vmatprep.subr.bf16.mxu0 0
        %1870 = vmatpush1.bf16.msra.mxu0 %v1847
        %1871 = vmatprep.subr.bf16.mxu0 0
        %1872 = vmatpush1.bf16.msra.mxu0 %v1848
        %1873 = vmatprep.subr.bf16.mxu0 0
        %1874 = vmatpush1.bf16.msra.mxu0 0
        %1875 = vmatprep.subr.bf16.mxu0 0
        %1876 = vmatpush1.bf16.msra.mxu0 0
        %1877 = vmatprep.subr.bf16.mxu0 0
        %1878 = vmatpush1.bf16.msra.mxu0 0
        %1879 = vmatprep.subr.bf16.mxu0 0
        %1880 = vmatpush1.bf16.msra.mxu0 0
        %1881 = vmatprep.subr.bf16.mxu0 0
        %1882 = vmatpush1.bf16.msra.mxu0 0
        %1883 = vmatprep.subr.bf16.mxu0 0
        %1884 = vmatpush1.bf16.msra.mxu0 0
        %1885 = vmatprep.subr.bf16.mxu0 0
        %1886 = vmatpush1.bf16.msra.mxu0 0
        %1887 = vmatprep.subr.bf16.mxu0 0
        %1888 = vmatpush1.bf16.msra.mxu0 0
        %1889 = vmatprep.mubr.bf16.mxu0 0
        %1890 = vmatmul.mubr.bf16.gmra.mrb[0].mxu0 %v1734
        %v1891 = vpop.f32.mrb[0].mxu0
        %v1892 = vadd.f32 %v1807, %v1891
        %v1893 = vpop.f32.mrb[0].mxu0
        %v1894 = vpop.f32.mrb[0].mxu0
        %v1895 = vadd.f32 %v1807, %v1894
        %v1896 = vpop.f32.mrb[0].mxu0
        %1897 = vdwg.mxu0
        %v1899 = vlaneseq
        %v1900 = vshrl.u32 %v1899, 7
        %v1901 = vsub.s32 0, %v1900
        %v1902 = vrot.slane %v1768, %v1901
        %v1920 = vunpack.c.l.b16 %v1752
        %v1921 = vunpack.c.l.b16 %v1753
        %v1922 = vunpack.c.l.b16 %v1754
        %v1923 = vunpack.c.l.b16 %v1755
        %v1924 = vunpack.c.l.b16 %v1756
        %v1925 = vunpack.c.l.b16 %v1757
        %v1926 = vunpack.c.l.b16 %v1758
        %v1927 = vunpack.c.l.b16 %v1759
        %v1928 = vunpack.c.l.b16 %v1760
        %v1929 = vunpack.c.l.b16 %v1761
        %v1930 = vunpack.c.l.b16 %v1762
        %v1931 = vunpack.c.l.b16 %v1763
        %v1932 = vunpack.c.l.b16 %v1764
        %v1933 = vunpack.c.l.b16 %v1765
        %v1934 = vunpack.c.l.b16 %v1766
        %v1935 = vunpack.c.l.b16 %v1767
        %v1936 = vpack.c.b16 %v1921, %v1920
        %v1937 = vpack.c.b16 %v1923, %v1922
        %v1938 = vpack.c.b16 %v1925, %v1924
        %v1939 = vpack.c.b16 %v1927, %v1926
        %v1940 = vpack.c.b16 %v1929, %v1928
        %v1941 = vpack.c.b16 %v1931, %v1930
        %v1942 = vpack.c.b16 %v1933, %v1932
        %v1943 = vpack.c.b16 %v1935, %v1934
        %1952 = vmatprep.subr.bf16.mxu0 0
        %1953 = vmatpush1.bf16.msra.mxu0 %v1936
        %1954 = vmatprep.subr.bf16.mxu0 0
        %1955 = vmatpush1.bf16.msra.mxu0 %v1937
        %1956 = vmatprep.subr.bf16.mxu0 0
        %1957 = vmatpush1.bf16.msra.mxu0 %v1938
        %1958 = vmatprep.subr.bf16.mxu0 0
        %1959 = vmatpush1.bf16.msra.mxu0 %v1939
        %1960 = vmatprep.subr.bf16.mxu0 0
        %1961 = vmatpush1.bf16.msra.mxu0 %v1940
        %1962 = vmatprep.subr.bf16.mxu0 0
        %1963 = vmatpush1.bf16.msra.mxu0 %v1941
        %1964 = vmatprep.subr.bf16.mxu0 0
        %1965 = vmatpush1.bf16.msra.mxu0 %v1942
        %1966 = vmatprep.subr.bf16.mxu0 0
        %1967 = vmatpush1.bf16.msra.mxu0 %v1943
        %1968 = vmatprep.subr.bf16.mxu0 0
        %1969 = vmatpush1.bf16.msra.mxu0 0
        %1970 = vmatprep.subr.bf16.mxu0 0
        %1971 = vmatpush1.bf16.msra.mxu0 0
        %1972 = vmatprep.subr.bf16.mxu0 0
        %1973 = vmatpush1.bf16.msra.mxu0 0
        %1974 = vmatprep.subr.bf16.mxu0 0
        %1975 = vmatpush1.bf16.msra.mxu0 0
        %1976 = vmatprep.subr.bf16.mxu0 0
        %1977 = vmatpush1.bf16.msra.mxu0 0
        %1978 = vmatprep.subr.bf16.mxu0 0
        %1979 = vmatpush1.bf16.msra.mxu0 0
        %1980 = vmatprep.subr.bf16.mxu0 0
        %1981 = vmatpush1.bf16.msra.mxu0 0
        %1982 = vmatprep.subr.bf16.mxu0 0
        %1983 = vmatpush1.bf16.msra.mxu0 0
        %1984 = vmatprep.mubr.bf16.mxu0 0
        %1985 = vmatmul.mubr.bf16.gmra.mrb[0].mxu0 %v1734
        %v1986 = vpop.f32.mrb[0].mxu0
        %v1987 = vadd.f32 %v1902, %v1986
        %v1988 = vpop.f32.mrb[0].mxu0
        %v1989 = vpop.f32.mrb[0].mxu0
        %v1990 = vadd.f32 %v1902, %v1989
        %v1991 = vpop.f32.mrb[0].mxu0
        %1992 = vdwg.mxu0
        %v1994 = vlaneseq
        %v1995 = vshrl.u32 %v1994, 7
        %v1996 = vsub.s32 0, %v1995
        %v1997 = vrot.slane %v1785, %v1996
        %v2015 = vunpack.c.l.b16 %v1769
        %v2016 = vunpack.c.l.b16 %v1770
        %v2017 = vunpack.c.l.b16 %v1771
        %v2018 = vunpack.c.l.b16 %v1772
        %v2019 = vunpack.c.l.b16 %v1773
        %v2020 = vunpack.c.l.b16 %v1774
        %v2021 = vunpack.c.l.b16 %v1775
        %v2022 = vunpack.c.l.b16 %v1776
        %v2023 = vunpack.c.l.b16 %v1777
        %v2024 = vunpack.c.l.b16 %v1778
        %v2025 = vunpack.c.l.b16 %v1779
        %v2026 = vunpack.c.l.b16 %v1780
        %v2027 = vunpack.c.l.b16 %v1781
        %v2028 = vunpack.c.l.b16 %v1782
        %v2029 = vunpack.c.l.b16 %v1783
        %v2030 = vunpack.c.l.b16 %v1784
        %v2031 = vpack.c.b16 %v2016, %v2015
        %v2032 = vpack.c.b16 %v2018, %v2017
        %v2033 = vpack.c.b16 %v2020, %v2019
        %v2034 = vpack.c.b16 %v2022, %v2021
        %v2035 = vpack.c.b16 %v2024, %v2023
        %v2036 = vpack.c.b16 %v2026, %v2025
        %v2037 = vpack.c.b16 %v2028, %v2027
        %v2038 = vpack.c.b16 %v2030, %v2029
        %2047 = vmatprep.subr.bf16.mxu0 0
        %2048 = vmatpush1.bf16.msra.mxu0 %v2031
        %2049 = vmatprep.subr.bf16.mxu0 0
        %2050 = vmatpush1.bf16.msra.mxu0 %v2032
        %2051 = vmatprep.subr.bf16.mxu0 0
        %2052 = vmatpush1.bf16.msra.mxu0 %v2033
        %2053 = vmatprep.subr.bf16.mxu0 0
        %2054 = vmatpush1.bf16.msra.mxu0 %v2034
        %2055 = vmatprep.subr.bf16.mxu0 0
        %2056 = vmatpush1.bf16.msra.mxu0 %v2035
        %2057 = vmatprep.subr.bf16.mxu0 0
        %2058 = vmatpush1.bf16.msra.mxu0 %v2036
        %2059 = vmatprep.subr.bf16.mxu0 0
        %2060 = vmatpush1.bf16.msra.mxu0 %v2037
        %2061 = vmatprep.subr.bf16.mxu0 0
        %2062 = vmatpush1.bf16.msra.mxu0 %v2038
        %2063 = vmatprep.subr.bf16.mxu0 0
        %2064 = vmatpush1.bf16.msra.mxu0 0
        %2065 = vmatprep.subr.bf16.mxu0 0
        %2066 = vmatpush1.bf16.msra.mxu0 0
        %2067 = vmatprep.subr.bf16.mxu0 0
        %2068 = vmatpush1.bf16.msra.mxu0 0
        %2069 = vmatprep.subr.bf16.mxu0 0
        %2070 = vmatpush1.bf16.msra.mxu0 0
        %2071 = vmatprep.subr.bf16.mxu0 0
        %2072 = vmatpush1.bf16.msra.mxu0 0
        %2073 = vmatprep.subr.bf16.mxu0 0
        %2074 = vmatpush1.bf16.msra.mxu0 0
        %2075 = vmatprep.subr.bf16.mxu0 0
        %2076 = vmatpush1.bf16.msra.mxu0 0
        %2077 = vmatprep.subr.bf16.mxu0 0
        %2078 = vmatpush1.bf16.msra.mxu0 0
        %2079 = vmatprep.mubr.bf16.mxu0 0
        %2080 = vmatmul.mubr.bf16.gmra.mrb[0].mxu0 %v1734
        %v2081 = vpop.f32.mrb[0].mxu0
        %v2082 = vadd.f32 %v1997, %v2081
        %v2083 = vpop.f32.mrb[0].mxu0
        %v2084 = vpop.f32.mrb[0].mxu0
        %v2085 = vadd.f32 %v1997, %v2084
        %v2086 = vpop.f32.mrb[0].mxu0
        %2087 = vdwg.mxu0
        %v2088 = vpack.c.bf16 %v1895, %v1892
        %v2090 = vunpack.c.l.b16 %v2088
        %v2091 = vunpack.c.h.b16 %v2088
        %v2092 = vpack.c.b16 %v2090, %v2090
        %v2093 = vpack.c.b16 %v2091, %v2091
        %v2094 = vpack.c.bf16 %v1990, %v1987
        %v2096 = vunpack.c.l.b16 %v2094
        %v2097 = vunpack.c.h.b16 %v2094
        %v2098 = vpack.c.b16 %v2096, %v2096
        %v2099 = vpack.c.b16 %v2097, %v2097
        %v2100 = vpack.c.bf16 %v2085, %v2082
        %v2102 = vunpack.c.l.b16 %v2100
        %v2103 = vunpack.c.h.b16 %v2100
        %v2104 = vpack.c.b16 %v2102, %v2102
        %v2105 = vpack.c.b16 %v2103, %v2103
        %vm2106 = vcmask 261120
        %v2108 = vsel %vm2106, %v2092, 0
        %v2111 = vsel %vm2106, %v2098, 0
        %2113 = vmatprep.subr.bf16.mxu0 0
        %2114 = vmatpush1.bf16.xpose.msra.mxu0 %v2111
        %2115 = vmatprep.subr.bf16.mxu0 0
        %2116 = vmatpush1.bf16.xpose.msra.mxu0 0
        %2117 = vmatprep.subr.bf16.mxu0 0
        %2118 = vmatpush1.bf16.xpose.msra.mxu0 0
        %2119 = vmatprep.subr.bf16.mxu0 0
        %2120 = vmatpush1.bf16.xpose.msra.mxu0 0
        %2121 = vmatprep.subr.bf16.mxu0 0
        %2122 = vmatpush1.bf16.xpose.msra.mxu0 0
        %2123 = vmatprep.subr.bf16.mxu0 0
        %2124 = vmatpush1.bf16.xpose.msra.mxu0 0
        %2125 = vmatprep.subr.bf16.mxu0 0
        %2126 = vmatpush1.bf16.xpose.msra.mxu0 0
        %2127 = vmatprep.subr.bf16.mxu0 0
        %2128 = vmatpush1.bf16.xpose.msra.mxu0 0
        %2129 = vmatprep.subr.bf16.mxu0 0
        %2130 = vmatpush1.bf16.xpose.msra.mxu0 0
        %2131 = vmatprep.subr.bf16.mxu0 0
        %2132 = vmatpush1.bf16.xpose.msra.mxu0 0
        %2133 = vmatprep.subr.bf16.mxu0 0
        %2134 = vmatpush1.bf16.xpose.msra.mxu0 0
        %2135 = vmatprep.subr.bf16.mxu0 0
        %2136 = vmatpush1.bf16.xpose.msra.mxu0 0
        %2137 = vmatprep.subr.bf16.mxu0 0
        %2138 = vmatpush1.bf16.xpose.msra.mxu0 0
        %2139 = vmatprep.subr.bf16.mxu0 0
        %2140 = vmatpush1.bf16.xpose.msra.mxu0 0
        %2141 = vmatprep.subr.bf16.mxu0 0
        %2142 = vmatpush1.bf16.xpose.msra.mxu0 0
        %2143 = vmatprep.subr.bf16.mxu0 0
        %2144 = vmatpush1.bf16.xpose.msra.mxu0 0
        %2145 = vmatprep.mubr.bf16.mxu0 0
        %2146 = vmatmul.mubr.bf16.gmra.mrb[0].mxu0 %v2108
        %v2147 = vpop.f32.mrb[0].mxu0
        %v2148 = vadd.f32 %v1677, %v2147
        %v2149 = vpop.f32.mrb[0].mxu0
        %v2150 = vpop.f32.mrb[0].mxu0
        %v2151 = vpop.f32.mrb[0].mxu0
        %2152 = vdwg.mxu0
        %v2154 = vsel %vm2106, %v2093, 0
        %v2157 = vsel %vm2106, %v2099, 0
        %2159 = vmatprep.subr.bf16.mxu0 0
        %2160 = vmatpush1.bf16.xpose.msra.mxu0 %v2157
        %2161 = vmatprep.subr.bf16.mxu0 0
        %2162 = vmatpush1.bf16.xpose.msra.mxu0 0
        %2163 = vmatprep.subr.bf16.mxu0 0
        %2164 = vmatpush1.bf16.xpose.msra.mxu0 0
        %2165 = vmatprep.subr.bf16.mxu0 0
        %2166 = vmatpush1.bf16.xpose.msra.mxu0 0
        %2167 = vmatprep.subr.bf16.mxu0 0
        %2168 = vmatpush1.bf16.xpose.msra.mxu0 0
        %2169 = vmatprep.subr.bf16.mxu0 0
        %2170 = vmatpush1.bf16.xpose.msra.mxu0 0
        %2171 = vmatprep.subr.bf16.mxu0 0
        %2172 = vmatpush1.bf16.xpose.msra.mxu0 0
        %2173 = vmatprep.subr.bf16.mxu0 0
        %2174 = vmatpush1.bf16.xpose.msra.mxu0 0
        %2175 = vmatprep.subr.bf16.mxu0 0
        %2176 = vmatpush1.bf16.xpose.msra.mxu0 0
        %2177 = vmatprep.subr.bf16.mxu0 0
        %2178 = vmatpush1.bf16.xpose.msra.mxu0 0
        %2179 = vmatprep.subr.bf16.mxu0 0
        %2180 = vmatpush1.bf16.xpose.msra.mxu0 0
        %2181 = vmatprep.subr.bf16.mxu0 0
        %2182 = vmatpush1.bf16.xpose.msra.mxu0 0
        %2183 = vmatprep.subr.bf16.mxu0 0
        %2184 = vmatpush1.bf16.xpose.msra.mxu0 0
        %2185 = vmatprep.subr.bf16.mxu0 0
        %2186 = vmatpush1.bf16.xpose.msra.mxu0 0
        %2187 = vmatprep.subr.bf16.mxu0 0
        %2188 = vmatpush1.bf16.xpose.msra.mxu0 0
        %2189 = vmatprep.subr.bf16.mxu0 0
        %2190 = vmatpush1.bf16.xpose.msra.mxu0 0
        %2191 = vmatprep.mubr.bf16.mxu0 0
        %2192 = vmatmul.mubr.bf16.gmra.mrb[0].mxu0 %v2154
        %v2193 = vpop.f32.mrb[0].mxu0
        %v2194 = vadd.f32 %v1677, %v2193
        %v2195 = vpop.f32.mrb[0].mxu0
        %v2196 = vpop.f32.mrb[0].mxu0
        %v2197 = vpop.f32.mrb[0].mxu0
        %2198 = vdwg.mxu0
        %vm2199 = vcmask 64512
        %v2200 = vsel %vm2199, %v2148, -inf
        %2201 = vmax.xlane.f32.xlu0 %v2200
        %v2202 = vpop.xlane.xlu0 %2201
        %v2203 = vsel %vm2199, %v2194, -inf
        %2204 = vmax.xlane.f32.xlu0 %v2203
        %v2205 = vpop.xlane.xlu0 %2204
        %v2206 = vsub.f32 %v2148, %v2202
        %v2207 = vsub.f32 %v2194, %v2205
        %v2208 = vmul.f32 %v2206, 1.442695
        %v2209 = vpow.pop %v2208
        %v2210 = vmul.f32 %v2207, 1.442695
        %v2211 = vpow.pop %v2210
        %v2212 = vsel %vm2199, %v2209, 0.0
        %2213 = vadd.xlane.f32.xlu0 %v2212
        %v2214 = vpop.xlane.xlu0 %2213
        %v2215 = vsel %vm2199, %v2211, 0.0
        %2216 = vadd.xlane.f32.xlu0 %v2215
        %v2217 = vpop.xlane.xlu0 %2216
        %v2218 = vrcp.pop %v2214
        %v2219 = vrcp.pop %v2217
        %v2220 = vmul.f32 %v2209, %v2218
        %v2221 = vmul.f32 %v2211, %v2219
        %v2222 = vpack.c.bf16 %v2220, %v2220
        %v2223 = vpack.c.bf16 %v2221, %v2221
        %v2225 = vsel %vm2199, %v2222, 0
        %vm2227 = vcmask 1043456
        %v2229 = vsel %vm2227, %v2104, 0
        %2231 = vmatprep.subr.bf16.mxu0 0
        %2232 = vmatpush1.bf16.msra.mxu0 %v2229
        %2233 = vmatprep.subr.bf16.mxu0 0
        %2234 = vmatpush1.bf16.msra.mxu0 0
        %2235 = vmatprep.subr.bf16.mxu0 0
        %2236 = vmatpush1.bf16.msra.mxu0 0
        %2237 = vmatprep.subr.bf16.mxu0 0
        %2238 = vmatpush1.bf16.msra.mxu0 0
        %2239 = vmatprep.subr.bf16.mxu0 0
        %2240 = vmatpush1.bf16.msra.mxu0 0
        %2241 = vmatprep.subr.bf16.mxu0 0
        %2242 = vmatpush1.bf16.msra.mxu0 0
        %2243 = vmatprep.subr.bf16.mxu0 0
        %2244 = vmatpush1.bf16.msra.mxu0 0
        %2245 = vmatprep.subr.bf16.mxu0 0
        %2246 = vmatpush1.bf16.msra.mxu0 0
        %2247 = vmatprep.subr.bf16.mxu0 0
        %2248 = vmatpush1.bf16.msra.mxu0 0
        %2249 = vmatprep.subr.bf16.mxu0 0
        %2250 = vmatpush1.bf16.msra.mxu0 0
        %2251 = vmatprep.subr.bf16.mxu0 0
        %2252 = vmatpush1.bf16.msra.mxu0 0
        %2253 = vmatprep.subr.bf16.mxu0 0
        %2254 = vmatpush1.bf16.msra.mxu0 0
        %2255 = vmatprep.subr.bf16.mxu0 0
        %2256 = vmatpush1.bf16.msra.mxu0 0
        %2257 = vmatprep.subr.bf16.mxu0 0
        %2258 = vmatpush1.bf16.msra.mxu0 0
        %2259 = vmatprep.subr.bf16.mxu0 0
        %2260 = vmatpush1.bf16.msra.mxu0 0
        %2261 = vmatprep.subr.bf16.mxu0 0
        %2262 = vmatpush1.bf16.msra.mxu0 0
        %2263 = vmatprep.mubr.bf16.mxu0 0
        %2264 = vmatmul.mubr.bf16.gmra.mrb[0].mxu0 %v2225
        %v2265 = vpop.f32.mrb[0].mxu0
        %v2266 = vadd.f32 0.0, %v2265
        %v2267 = vpop.f32.mrb[0].mxu0
        %v2268 = vpop.f32.mrb[0].mxu0
        %v2269 = vpop.f32.mrb[0].mxu0
        %2270 = vdwg.mxu0
        %v2272 = vsel %vm2199, %v2223, 0
        %v2275 = vsel %vm2227, %v2105, 0
        %2277 = vmatprep.subr.bf16.mxu0 0
        %2278 = vmatpush1.bf16.msra.mxu0 %v2275
        %2279 = vmatprep.subr.bf16.mxu0 0
        %2280 = vmatpush1.bf16.msra.mxu0 0
        %2281 = vmatprep.subr.bf16.mxu0 0
        %2282 = vmatpush1.bf16.msra.mxu0 0
        %2283 = vmatprep.subr.bf16.mxu0 0
        %2284 = vmatpush1.bf16.msra.mxu0 0
        %2285 = vmatprep.subr.bf16.mxu0 0
        %2286 = vmatpush1.bf16.msra.mxu0 0
        %2287 = vmatprep.subr.bf16.mxu0 0
        %2288 = vmatpush1.bf16.msra.mxu0 0
        %2289 = vmatprep.subr.bf16.mxu0 0
        %2290 = vmatpush1.bf16.msra.mxu0 0
        %2291 = vmatprep.subr.bf16.mxu0 0
        %2292 = vmatpush1.bf16.msra.mxu0 0
        %2293 = vmatprep.subr.bf16.mxu0 0
        %2294 = vmatpush1.bf16.msra.mxu0 0
        %2295 = vmatprep.subr.bf16.mxu0 0
        %2296 = vmatpush1.bf16.msra.mxu0 0
        %2297 = vmatprep.subr.bf16.mxu0 0
        %2298 = vmatpush1.bf16.msra.mxu0 0
        %2299 = vmatprep.subr.bf16.mxu0 0
        %2300 = vmatpush1.bf16.msra.mxu0 0
        %2301 = vmatprep.subr.bf16.mxu0 0
        %2302 = vmatpush1.bf16.msra.mxu0 0
        %2303 = vmatprep.subr.bf16.mxu0 0
        %2304 = vmatpush1.bf16.msra.mxu0 0
        %2305 = vmatprep.subr.bf16.mxu0 0
        %2306 = vmatpush1.bf16.msra.mxu0 0
        %2307 = vmatprep.subr.bf16.mxu0 0
        %2308 = vmatpush1.bf16.msra.mxu0 0
        %2309 = vmatprep.mubr.bf16.mxu0 0
        %2310 = vmatmul.mubr.bf16.gmra.mrb[0].mxu0 %v2272
        %v2311 = vpop.f32.mrb[0].mxu0
        %v2312 = vadd.f32 0.0, %v2311
        %v2313 = vpop.f32.mrb[0].mxu0
        %v2314 = vpop.f32.mrb[0].mxu0
        %v2315 = vpop.f32.mrb[0].mxu0
        %2316 = vdwg.mxu0
        %v2317 = vpack.c.bf16 %v2312, %v2266
        %2318 = vrot.lane.b32.xlu0 %v2092, 96
        %v2319 = vpop.permute.xlu0 %2318
        %2320 = vrot.lane.b32.xlu0 %v2098, 96
        %v2321 = vpop.permute.xlu0 %2320
        %v2323 = vsel %vm2106, %v2319, 0
        %v2326 = vsel %vm2106, %v2321, 0
        %2328 = vmatprep.subr.bf16.mxu0 0
        %2329 = vmatpush1.bf16.xpose.msra.mxu0 %v2326
        %2330 = vmatprep.subr.bf16.mxu0 0
        %2331 = vmatpush1.bf16.xpose.msra.mxu0 0
        %2332 = vmatprep.subr.bf16.mxu0 0
        %2333 = vmatpush1.bf16.xpose.msra.mxu0 0
        %2334 = vmatprep.subr.bf16.mxu0 0
        %2335 = vmatpush1.bf16.xpose.msra.mxu0 0
        %2336 = vmatprep.subr.bf16.mxu0 0
        %2337 = vmatpush1.bf16.xpose.msra.mxu0 0
        %2338 = vmatprep.subr.bf16.mxu0 0
        %2339 = vmatpush1.bf16.xpose.msra.mxu0 0
        %2340 = vmatprep.subr.bf16.mxu0 0
        %2341 = vmatpush1.bf16.xpose.msra.mxu0 0
        %2342 = vmatprep.subr.bf16.mxu0 0
        %2343 = vmatpush1.bf16.xpose.msra.mxu0 0
        %2344 = vmatprep.subr.bf16.mxu0 0
        %2345 = vmatpush1.bf16.xpose.msra.mxu0 0
        %2346 = vmatprep.subr.bf16.mxu0 0
        %2347 = vmatpush1.bf16.xpose.msra.mxu0 0
        %2348 = vmatprep.subr.bf16.mxu0 0
        %2349 = vmatpush1.bf16.xpose.msra.mxu0 0
        %2350 = vmatprep.subr.bf16.mxu0 0
        %2351 = vmatpush1.bf16.xpose.msra.mxu0 0
        %2352 = vmatprep.subr.bf16.mxu0 0
        %2353 = vmatpush1.bf16.xpose.msra.mxu0 0
        %2354 = vmatprep.subr.bf16.mxu0 0
        %2355 = vmatpush1.bf16.xpose.msra.mxu0 0
        %2356 = vmatprep.subr.bf16.mxu0 0
        %2357 = vmatpush1.bf16.xpose.msra.mxu0 0
        %2358 = vmatprep.subr.bf16.mxu0 0
        %2359 = vmatpush1.bf16.xpose.msra.mxu0 0
        %2360 = vmatprep.mubr.bf16.mxu0 0
        %2361 = vmatmul.mubr.bf16.gmra.mrb[0].mxu0 %v2323
        %v2362 = vpop.f32.mrb[0].mxu0
        %v2363 = vadd.f32 %v1677, %v2362
        %v2364 = vpop.f32.mrb[0].mxu0
        %v2365 = vpop.f32.mrb[0].mxu0
        %v2366 = vpop.f32.mrb[0].mxu0
        %2367 = vdwg.mxu0
        %2368 = vrot.lane.b32.xlu0 %v2093, 96
        %v2369 = vpop.permute.xlu0 %2368
        %2370 = vrot.lane.b32.xlu0 %v2099, 96
        %v2371 = vpop.permute.xlu0 %2370
        %v2373 = vsel %vm2106, %v2369, 0
        %v2376 = vsel %vm2106, %v2371, 0
        %2378 = vmatprep.subr.bf16.mxu0 0
        %2379 = vmatpush1.bf16.xpose.msra.mxu0 %v2376
        %2380 = vmatprep.subr.bf16.mxu0 0
        %2381 = vmatpush1.bf16.xpose.msra.mxu0 0
        %2382 = vmatprep.subr.bf16.mxu0 0
        %2383 = vmatpush1.bf16.xpose.msra.mxu0 0
        %2384 = vmatprep.subr.bf16.mxu0 0
        %2385 = vmatpush1.bf16.xpose.msra.mxu0 0
        %2386 = vmatprep.subr.bf16.mxu0 0
        %2387 = vmatpush1.bf16.xpose.msra.mxu0 0
        %2388 = vmatprep.subr.bf16.mxu0 0
        %2389 = vmatpush1.bf16.xpose.msra.mxu0 0
        %2390 = vmatprep.subr.bf16.mxu0 0
        %2391 = vmatpush1.bf16.xpose.msra.mxu0 0
        %2392 = vmatprep.subr.bf16.mxu0 0
        %2393 = vmatpush1.bf16.xpose.msra.mxu0 0
        %2394 = vmatprep.subr.bf16.mxu0 0
        %2395 = vmatpush1.bf16.xpose.msra.mxu0 0
        %2396 = vmatprep.subr.bf16.mxu0 0
        %2397 = vmatpush1.bf16.xpose.msra.mxu0 0
        %2398 = vmatprep.subr.bf16.mxu0 0
        %2399 = vmatpush1.bf16.xpose.msra.mxu0 0
        %2400 = vmatprep.subr.bf16.mxu0 0
        %2401 = vmatpush1.bf16.xpose.msra.mxu0 0
        %2402 = vmatprep.subr.bf16.mxu0 0
        %2403 = vmatpush1.bf16.xpose.msra.mxu0 0
        %2404 = vmatprep.subr.bf16.mxu0 0
        %2405 = vmatpush1.bf16.xpose.msra.mxu0 0
        %2406 = vmatprep.subr.bf16.mxu0 0
        %2407 = vmatpush1.bf16.xpose.msra.mxu0 0
        %2408 = vmatprep.subr.bf16.mxu0 0
        %2409 = vmatpush1.bf16.xpose.msra.mxu0 0
        %2410 = vmatprep.mubr.bf16.mxu0 0
        %2411 = vmatmul.mubr.bf16.gmra.mrb[0].mxu0 %v2373
        %v2412 = vpop.f32.mrb[0].mxu0
        %v2413 = vadd.f32 %v1677, %v2412
        %v2414 = vpop.f32.mrb[0].mxu0
        %v2415 = vpop.f32.mrb[0].mxu0
        %v2416 = vpop.f32.mrb[0].mxu0
        %2417 = vdwg.mxu0
        %v2418 = vsel %vm2199, %v2363, -inf
        %2419 = vmax.xlane.f32.xlu0 %v2418
        %v2420 = vpop.xlane.xlu0 %2419
        %v2421 = vsel %vm2199, %v2413, -inf
        %2422 = vmax.xlane.f32.xlu0 %v2421
        %v2423 = vpop.xlane.xlu0 %2422
        %v2424 = vsub.f32 %v2363, %v2420
        %v2425 = vsub.f32 %v2413, %v2423
        %v2426 = vmul.f32 %v2424, 1.442695
        %v2427 = vpow.pop %v2426
        %v2428 = vmul.f32 %v2425, 1.442695
        %v2429 = vpow.pop %v2428
        %v2430 = vsel %vm2199, %v2427, 0.0
        %2431 = vadd.xlane.f32.xlu0 %v2430
        %v2432 = vpop.xlane.xlu0 %2431
        %v2433 = vsel %vm2199, %v2429, 0.0
        %2434 = vadd.xlane.f32.xlu0 %v2433
        %v2435 = vpop.xlane.xlu0 %2434
        %v2436 = vrcp.pop %v2432
        %v2437 = vrcp.pop %v2435
        %v2438 = vmul.f32 %v2427, %v2436
        %v2439 = vmul.f32 %v2429, %v2437
        %v2440 = vpack.c.bf16 %v2438, %v2438
        %v2441 = vpack.c.bf16 %v2439, %v2439
        %2442 = vrot.lane.b32.xlu0 %v2104, 96
        %v2443 = vpop.permute.xlu0 %2442
        %v2445 = vsel %vm2199, %v2440, 0
        %v2448 = vsel %vm2227, %v2443, 0
        %2450 = vmatprep.subr.bf16.mxu0 0
        %2451 = vmatpush1.bf16.msra.mxu0 %v2448
        %2452 = vmatprep.subr.bf16.mxu0 0
        %2453 = vmatpush1.bf16.msra.mxu0 0
        %2454 = vmatprep.subr.bf16.mxu0 0
        %2455 = vmatpush1.bf16.msra.mxu0 0
        %2456 = vmatprep.subr.bf16.mxu0 0
        %2457 = vmatpush1.bf16.msra.mxu0 0
        %2458 = vmatprep.subr.bf16.mxu0 0
        %2459 = vmatpush1.bf16.msra.mxu0 0
        %2460 = vmatprep.subr.bf16.mxu0 0
        %2461 = vmatpush1.bf16.msra.mxu0 0
        %2462 = vmatprep.subr.bf16.mxu0 0
        %2463 = vmatpush1.bf16.msra.mxu0 0
        %2464 = vmatprep.subr.bf16.mxu0 0
        %2465 = vmatpush1.bf16.msra.mxu0 0
        %2466 = vmatprep.subr.bf16.mxu0 0
        %2467 = vmatpush1.bf16.msra.mxu0 0
        %2468 = vmatprep.subr.bf16.mxu0 0
        %2469 = vmatpush1.bf16.msra.mxu0 0
        %2470 = vmatprep.subr.bf16.mxu0 0
        %2471 = vmatpush1.bf16.msra.mxu0 0
        %2472 = vmatprep.subr.bf16.mxu0 0
        %2473 = vmatpush1.bf16.msra.mxu0 0
        %2474 = vmatprep.subr.bf16.mxu0 0
        %2475 = vmatpush1.bf16.msra.mxu0 0
        %2476 = vmatprep.subr.bf16.mxu0 0
        %2477 = vmatpush1.bf16.msra.mxu0 0
        %2478 = vmatprep.subr.bf16.mxu0 0
        %2479 = vmatpush1.bf16.msra.mxu0 0
        %2480 = vmatprep.subr.bf16.mxu0 0
        %2481 = vmatpush1.bf16.msra.mxu0 0
        %2482 = vmatprep.mubr.bf16.mxu0 0
        %2483 = vmatmul.mubr.bf16.gmra.mrb[0].mxu0 %v2445
        %v2484 = vpop.f32.mrb[0].mxu0
        %v2485 = vadd.f32 0.0, %v2484
        %v2486 = vpop.f32.mrb[0].mxu0
        %v2487 = vpop.f32.mrb[0].mxu0
        %v2488 = vpop.f32.mrb[0].mxu0
        %2489 = vdwg.mxu0
        %2490 = vrot.lane.b32.xlu0 %v2105, 96
        %v2491 = vpop.permute.xlu0 %2490
        %v2493 = vsel %vm2199, %v2441, 0
        %v2496 = vsel %vm2227, %v2491, 0
        %2498 = vmatprep.subr.bf16.mxu0 0
        %2499 = vmatpush1.bf16.msra.mxu0 %v2496
        %2500 = vmatprep.subr.bf16.mxu0 0
        %2501 = vmatpush1.bf16.msra.mxu0 0
        %2502 = vmatprep.subr.bf16.mxu0 0
        %2503 = vmatpush1.bf16.msra.mxu0 0
        %2504 = vmatprep.subr.bf16.mxu0 0
        %2505 = vmatpush1.bf16.msra.mxu0 0
        %2506 = vmatprep.subr.bf16.mxu0 0
        %2507 = vmatpush1.bf16.msra.mxu0 0
        %2508 = vmatprep.subr.bf16.mxu0 0
        %2509 = vmatpush1.bf16.msra.mxu0 0
        %2510 = vmatprep.subr.bf16.mxu0 0
        %2511 = vmatpush1.bf16.msra.mxu0 0
        %2512 = vmatprep.subr.bf16.mxu0 0
        %2513 = vmatpush1.bf16.msra.mxu0 0
        %2514 = vmatprep.subr.bf16.mxu0 0
        %2515 = vmatpush1.bf16.msra.mxu0 0
        %2516 = vmatprep.subr.bf16.mxu0 0
        %2517 = vmatpush1.bf16.msra.mxu0 0
        %2518 = vmatprep.subr.bf16.mxu0 0
        %2519 = vmatpush1.bf16.msra.mxu0 0
        %2520 = vmatprep.subr.bf16.mxu0 0
        %2521 = vmatpush1.bf16.msra.mxu0 0
        %2522 = vmatprep.subr.bf16.mxu0 0
        %2523 = vmatpush1.bf16.msra.mxu0 0
        %2524 = vmatprep.subr.bf16.mxu0 0
        %2525 = vmatpush1.bf16.msra.mxu0 0
        %2526 = vmatprep.subr.bf16.mxu0 0
        %2527 = vmatpush1.bf16.msra.mxu0 0
        %2528 = vmatprep.subr.bf16.mxu0 0
        %2529 = vmatpush1.bf16.msra.mxu0 0
        %2530 = vmatprep.mubr.bf16.mxu0 0
        %2531 = vmatmul.mubr.bf16.gmra.mrb[0].mxu0 %v2493
        %v2532 = vpop.f32.mrb[0].mxu0
        %v2533 = vadd.f32 0.0, %v2532
        %v2534 = vpop.f32.mrb[0].mxu0
        %v2535 = vpop.f32.mrb[0].mxu0
        %v2536 = vpop.f32.mrb[0].mxu0
        %2537 = vdwg.mxu0
        %v2538 = vpack.c.bf16 %v2533, %v2485
        %v2543 = vunpack.c.l.b16 %v1790
        %v2544 = vunpack.c.l.b16 %v1791
        %v2545 = vunpack.c.l.b16 %v1792
        %v2546 = vunpack.c.l.b16 %v1793
        %v2547 = vpack.c.b16 %v2544, %v2543
        %v2548 = vpack.c.b16 %v2546, %v2545
        %v2552 = vsel %vm2106, %v2538, 0
        %2554 = vmatprep.subr.bf16.mxu0 0
        %2555 = vmatpush1.bf16.msra.mxu0 %v2547
        %2556 = vmatprep.subr.bf16.mxu0 0
        %2557 = vmatpush1.bf16.msra.mxu0 %v2548
        %2558 = vmatprep.subr.bf16.mxu0 0
        %2559 = vmatpush1.bf16.msra.mxu0 0
        %2560 = vmatprep.subr.bf16.mxu0 0
        %2561 = vmatpush1.bf16.msra.mxu0 0
        %2562 = vmatprep.subr.bf16.mxu0 0
        %2563 = vmatpush1.bf16.msra.mxu0 0
        %2564 = vmatprep.subr.bf16.mxu0 0
        %2565 = vmatpush1.bf16.msra.mxu0 0
        %2566 = vmatprep.subr.bf16.mxu0 0
        %2567 = vmatpush1.bf16.msra.mxu0 0
        %2568 = vmatprep.subr.bf16.mxu0 0
        %2569 = vmatpush1.bf16.msra.mxu0 0
        %2570 = vmatprep.subr.bf16.mxu0 0
        %2571 = vmatpush1.bf16.msra.mxu0 0
        %2572 = vmatprep.subr.bf16.mxu0 0
        %2573 = vmatpush1.bf16.msra.mxu0 0
        %2574 = vmatprep.subr.bf16.mxu0 0
        %2575 = vmatpush1.bf16.msra.mxu0 0
        %2576 = vmatprep.subr.bf16.mxu0 0
        %2577 = vmatpush1.bf16.msra.mxu0 0
        %2578 = vmatprep.subr.bf16.mxu0 0
        %2579 = vmatpush1.bf16.msra.mxu0 0
        %2580 = vmatprep.subr.bf16.mxu0 0
        %2581 = vmatpush1.bf16.msra.mxu0 0
        %2582 = vmatprep.subr.bf16.mxu0 0
        %2583 = vmatpush1.bf16.msra.mxu0 0
        %2584 = vmatprep.subr.bf16.mxu0 0
        %2585 = vmatpush1.bf16.msra.mxu0 0
        %2586 = vmatprep.mubr.bf16.mxu0 0
        %2587 = vmatmul.mubr.bf16.gmra.mrb[0].mxu0 %v2552
        %v2588 = vpop.f32.mrb[0].mxu0
        %v2589 = vadd.f32 0.0, %v2588
        %v2590 = vpop.f32.mrb[0].mxu0
        %v2591 = vpop.f32.mrb[0].mxu0
        %v2592 = vadd.f32 0.0, %v2591
        %v2593 = vpop.f32.mrb[0].mxu0
        %2594 = vdwg.mxu0
        %v2599 = vunpack.c.l.b16 %v1786
        %v2600 = vunpack.c.l.b16 %v1787
        %v2601 = vunpack.c.l.b16 %v1788
        %v2602 = vunpack.c.l.b16 %v1789
        %v2603 = vpack.c.b16 %v2600, %v2599
        %v2604 = vpack.c.b16 %v2602, %v2601
        %v2608 = vsel %vm2106, %v2317, 0
        %2610 = vmatprep.subr.bf16.mxu0 0
        %2611 = vmatpush1.bf16.msra.mxu0 %v2603
        %2612 = vmatprep.subr.bf16.mxu0 0
        %2613 = vmatpush1.bf16.msra.mxu0 %v2604
        %2614 = vmatprep.subr.bf16.mxu0 0
        %2615 = vmatpush1.bf16.msra.mxu0 0
        %2616 = vmatprep.subr.bf16.mxu0 0
        %2617 = vmatpush1.bf16.msra.mxu0 0
        %2618 = vmatprep.subr.bf16.mxu0 0
        %2619 = vmatpush1.bf16.msra.mxu0 0
        %2620 = vmatprep.subr.bf16.mxu0 0
        %2621 = vmatpush1.bf16.msra.mxu0 0
        %2622 = vmatprep.subr.bf16.mxu0 0
        %2623 = vmatpush1.bf16.msra.mxu0 0
        %2624 = vmatprep.subr.bf16.mxu0 0
        %2625 = vmatpush1.bf16.msra.mxu0 0
        %2626 = vmatprep.subr.bf16.mxu0 0
        %2627 = vmatpush1.bf16.msra.mxu0 0
        %2628 = vmatprep.subr.bf16.mxu0 0
        %2629 = vmatpush1.bf16.msra.mxu0 0
        %2630 = vmatprep.subr.bf16.mxu0 0
        %2631 = vmatpush1.bf16.msra.mxu0 0
        %2632 = vmatprep.subr.bf16.mxu0 0
        %2633 = vmatpush1.bf16.msra.mxu0 0
        %2634 = vmatprep.subr.bf16.mxu0 0
        %2635 = vmatpush1.bf16.msra.mxu0 0
        %2636 = vmatprep.subr.bf16.mxu0 0
        %2637 = vmatpush1.bf16.msra.mxu0 0
        %2638 = vmatprep.subr.bf16.mxu0 0
        %2639 = vmatpush1.bf16.msra.mxu0 0
        %2640 = vmatprep.subr.bf16.mxu0 0
        %2641 = vmatpush1.bf16.msra.mxu0 0
        %2642 = vmatprep.mubr.bf16.mxu0 0
        %2643 = vmatmul.mubr.bf16.gmra.mrb[0].mxu0 %v2608
        %v2644 = vpop.f32.mrb[0].mxu0
        %v2645 = vadd.f32 %v2589, %v2644
        %v2646 = vpop.f32.mrb[0].mxu0
        %v2647 = vpop.f32.mrb[0].mxu0
        %v2648 = vadd.f32 %v2592, %v2647
        %v2649 = vpop.f32.mrb[0].mxu0
        %2650 = vdwg.mxu0
        %2651 = vrot.lane.b32.xlu0 %v2092, 64
        %v2652 = vpop.permute.xlu0 %2651
        %2653 = vrot.lane.b32.xlu0 %v2098, 64
        %v2654 = vpop.permute.xlu0 %2653
        %v2656 = vsel %vm2106, %v2652, 0
        %v2659 = vsel %vm2106, %v2654, 0
        %2661 = vmatprep.subr.bf16.mxu0 0
        %2662 = vmatpush1.bf16.xpose.msra.mxu0 %v2659
        %2663 = vmatprep.subr.bf16.mxu0 0
        %2664 = vmatpush1.bf16.xpose.msra.mxu0 0
        %2665 = vmatprep.subr.bf16.mxu0 0
        %2666 = vmatpush1.bf16.xpose.msra.mxu0 0
        %2667 = vmatprep.subr.bf16.mxu0 0
        %2668 = vmatpush1.bf16.xpose.msra.mxu0 0
        %2669 = vmatprep.subr.bf16.mxu0 0
        %2670 = vmatpush1.bf16.xpose.msra.mxu0 0
        %2671 = vmatprep.subr.bf16.mxu0 0
        %2672 = vmatpush1.bf16.xpose.msra.mxu0 0
        %2673 = vmatprep.subr.bf16.mxu0 0
        %2674 = vmatpush1.bf16.xpose.msra.mxu0 0
        %2675 = vmatprep.subr.bf16.mxu0 0
        %2676 = vmatpush1.bf16.xpose.msra.mxu0 0
        %2677 = vmatprep.subr.bf16.mxu0 0
        %2678 = vmatpush1.bf16.xpose.msra.mxu0 0
        %2679 = vmatprep.subr.bf16.mxu0 0
        %2680 = vmatpush1.bf16.xpose.msra.mxu0 0
        %2681 = vmatprep.subr.bf16.mxu0 0
        %2682 = vmatpush1.bf16.xpose.msra.mxu0 0
        %2683 = vmatprep.subr.bf16.mxu0 0
        %2684 = vmatpush1.bf16.xpose.msra.mxu0 0
        %2685 = vmatprep.subr.bf16.mxu0 0
        %2686 = vmatpush1.bf16.xpose.msra.mxu0 0
        %2687 = vmatprep.subr.bf16.mxu0 0
        %2688 = vmatpush1.bf16.xpose.msra.mxu0 0
        %2689 = vmatprep.subr.bf16.mxu0 0
        %2690 = vmatpush1.bf16.xpose.msra.mxu0 0
        %2691 = vmatprep.subr.bf16.mxu0 0
        %2692 = vmatpush1.bf16.xpose.msra.mxu0 0
        %2693 = vmatprep.mubr.bf16.mxu0 0
        %2694 = vmatmul.mubr.bf16.gmra.mrb[0].mxu0 %v2656
        %v2695 = vpop.f32.mrb[0].mxu0
        %v2696 = vadd.f32 %v1677, %v2695
        %v2697 = vpop.f32.mrb[0].mxu0
        %v2698 = vpop.f32.mrb[0].mxu0
        %v2699 = vpop.f32.mrb[0].mxu0
        %2700 = vdwg.mxu0
        %2701 = vrot.lane.b32.xlu0 %v2093, 64
        %v2702 = vpop.permute.xlu0 %2701
        %2703 = vrot.lane.b32.xlu0 %v2099, 64
        %v2704 = vpop.permute.xlu0 %2703
        %v2706 = vsel %vm2106, %v2702, 0
        %v2709 = vsel %vm2106, %v2704, 0
        %2711 = vmatprep.subr.bf16.mxu0 0
        %2712 = vmatpush1.bf16.xpose.msra.mxu0 %v2709
        %2713 = vmatprep.subr.bf16.mxu0 0
        %2714 = vmatpush1.bf16.xpose.msra.mxu0 0
        %2715 = vmatprep.subr.bf16.mxu0 0
        %2716 = vmatpush1.bf16.xpose.msra.mxu0 0
        %2717 = vmatprep.subr.bf16.mxu0 0
        %2718 = vmatpush1.bf16.xpose.msra.mxu0 0
        %2719 = vmatprep.subr.bf16.mxu0 0
        %2720 = vmatpush1.bf16.xpose.msra.mxu0 0
        %2721 = vmatprep.subr.bf16.mxu0 0
        %2722 = vmatpush1.bf16.xpose.msra.mxu0 0
        %2723 = vmatprep.subr.bf16.mxu0 0
        %2724 = vmatpush1.bf16.xpose.msra.mxu0 0
        %2725 = vmatprep.subr.bf16.mxu0 0
        %2726 = vmatpush1.bf16.xpose.msra.mxu0 0
        %2727 = vmatprep.subr.bf16.mxu0 0
        %2728 = vmatpush1.bf16.xpose.msra.mxu0 0
        %2729 = vmatprep.subr.bf16.mxu0 0
        %2730 = vmatpush1.bf16.xpose.msra.mxu0 0
        %2731 = vmatprep.subr.bf16.mxu0 0
        %2732 = vmatpush1.bf16.xpose.msra.mxu0 0
        %2733 = vmatprep.subr.bf16.mxu0 0
        %2734 = vmatpush1.bf16.xpose.msra.mxu0 0
        %2735 = vmatprep.subr.bf16.mxu0 0
        %2736 = vmatpush1.bf16.xpose.msra.mxu0 0
        %2737 = vmatprep.subr.bf16.mxu0 0
        %2738 = vmatpush1.bf16.xpose.msra.mxu0 0
        %2739 = vmatprep.subr.bf16.mxu0 0
        %2740 = vmatpush1.bf16.xpose.msra.mxu0 0
        %2741 = vmatprep.subr.bf16.mxu0 0
        %2742 = vmatpush1.bf16.xpose.msra.mxu0 0
        %2743 = vmatprep.mubr.bf16.mxu0 0
        %2744 = vmatmul.mubr.bf16.gmra.mrb[0].mxu0 %v2706
        %v2745 = vpop.f32.mrb[0].mxu0
        %v2746 = vadd.f32 %v1677, %v2745
        %v2747 = vpop.f32.mrb[0].mxu0
        %v2748 = vpop.f32.mrb[0].mxu0
        %v2749 = vpop.f32.mrb[0].mxu0
        %2750 = vdwg.mxu0
        %v2751 = vsel %vm2199, %v2696, -inf
        %2752 = vmax.xlane.f32.xlu0 %v2751
        %v2753 = vpop.xlane.xlu0 %2752
        %v2754 = vsel %vm2199, %v2746, -inf
        %2755 = vmax.xlane.f32.xlu0 %v2754
        %v2756 = vpop.xlane.xlu0 %2755
        %v2757 = vsub.f32 %v2696, %v2753
        %v2758 = vsub.f32 %v2746, %v2756
        %v2759 = vmul.f32 %v2757, 1.442695
        %v2760 = vpow.pop %v2759
        %v2761 = vmul.f32 %v2758, 1.442695
        %v2762 = vpow.pop %v2761
        %v2763 = vsel %vm2199, %v2760, 0.0
        %2764 = vadd.xlane.f32.xlu0 %v2763
        %v2765 = vpop.xlane.xlu0 %2764
        %v2766 = vsel %vm2199, %v2762, 0.0
        %2767 = vadd.xlane.f32.xlu0 %v2766
        %v2768 = vpop.xlane.xlu0 %2767
        %v2769 = vrcp.pop %v2765
        %v2770 = vrcp.pop %v2768
        %v2771 = vmul.f32 %v2760, %v2769
        %v2772 = vmul.f32 %v2762, %v2770
        %v2773 = vpack.c.bf16 %v2771, %v2771
        %v2774 = vpack.c.bf16 %v2772, %v2772
        %2775 = vrot.lane.b32.xlu0 %v2104, 64
        %v2776 = vpop.permute.xlu0 %2775
        %v2778 = vsel %vm2199, %v2773, 0
        %v2781 = vsel %vm2227, %v2776, 0
        %2783 = vmatprep.subr.bf16.mxu0 0
        %2784 = vmatpush1.bf16.msra.mxu0 %v2781
        %2785 = vmatprep.subr.bf16.mxu0 0
        %2786 = vmatpush1.bf16.msra.mxu0 0
        %2787 = vmatprep.subr.bf16.mxu0 0
        %2788 = vmatpush1.bf16.msra.mxu0 0
        %2789 = vmatprep.subr.bf16.mxu0 0
        %2790 = vmatpush1.bf16.msra.mxu0 0
        %2791 = vmatprep.subr.bf16.mxu0 0
        %2792 = vmatpush1.bf16.msra.mxu0 0
        %2793 = vmatprep.subr.bf16.mxu0 0
        %2794 = vmatpush1.bf16.msra.mxu0 0
        %2795 = vmatprep.subr.bf16.mxu0 0
        %2796 = vmatpush1.bf16.msra.mxu0 0
        %2797 = vmatprep.subr.bf16.mxu0 0
        %2798 = vmatpush1.bf16.msra.mxu0 0
        %2799 = vmatprep.subr.bf16.mxu0 0
        %2800 = vmatpush1.bf16.msra.mxu0 0
        %2801 = vmatprep.subr.bf16.mxu0 0
        %2802 = vmatpush1.bf16.msra.mxu0 0
        %2803 = vmatprep.subr.bf16.mxu0 0
        %2804 = vmatpush1.bf16.msra.mxu0 0
        %2805 = vmatprep.subr.bf16.mxu0 0
        %2806 = vmatpush1.bf16.msra.mxu0 0
        %2807 = vmatprep.subr.bf16.mxu0 0
        %2808 = vmatpush1.bf16.msra.mxu0 0
        %2809 = vmatprep.subr.bf16.mxu0 0
        %2810 = vmatpush1.bf16.msra.mxu0 0
        %2811 = vmatprep.subr.bf16.mxu0 0
        %2812 = vmatpush1.bf16.msra.mxu0 0
        %2813 = vmatprep.subr.bf16.mxu0 0
        %2814 = vmatpush1.bf16.msra.mxu0 0
        %2815 = vmatprep.mubr.bf16.mxu0 0
        %2816 = vmatmul.mubr.bf16.gmra.mrb[0].mxu0 %v2778
        %v2817 = vpop.f32.mrb[0].mxu0
        %v2818 = vadd.f32 0.0, %v2817
        %v2819 = vpop.f32.mrb[0].mxu0
        %v2820 = vpop.f32.mrb[0].mxu0
        %v2821 = vpop.f32.mrb[0].mxu0
        %2822 = vdwg.mxu0
        %2823 = vrot.lane.b32.xlu0 %v2105, 64
        %v2824 = vpop.permute.xlu0 %2823
        %v2826 = vsel %vm2199, %v2774, 0
        %v2829 = vsel %vm2227, %v2824, 0
        %2831 = vmatprep.subr.bf16.mxu0 0
        %2832 = vmatpush1.bf16.msra.mxu0 %v2829
        %2833 = vmatprep.subr.bf16.mxu0 0
        %2834 = vmatpush1.bf16.msra.mxu0 0
        %2835 = vmatprep.subr.bf16.mxu0 0
        %2836 = vmatpush1.bf16.msra.mxu0 0
        %2837 = vmatprep.subr.bf16.mxu0 0
        %2838 = vmatpush1.bf16.msra.mxu0 0
        %2839 = vmatprep.subr.bf16.mxu0 0
        %2840 = vmatpush1.bf16.msra.mxu0 0
        %2841 = vmatprep.subr.bf16.mxu0 0
        %2842 = vmatpush1.bf16.msra.mxu0 0
        %2843 = vmatprep.subr.bf16.mxu0 0
        %2844 = vmatpush1.bf16.msra.mxu0 0
        %2845 = vmatprep.subr.bf16.mxu0 0
        %2846 = vmatpush1.bf16.msra.mxu0 0
        %2847 = vmatprep.subr.bf16.mxu0 0
        %2848 = vmatpush1.bf16.msra.mxu0 0
        %2849 = vmatprep.subr.bf16.mxu0 0
        %2850 = vmatpush1.bf16.msra.mxu0 0
        %2851 = vmatprep.subr.bf16.mxu0 0
        %2852 = vmatpush1.bf16.msra.mxu0 0
        %2853 = vmatprep.subr.bf16.mxu0 0
        %2854 = vmatpush1.bf16.msra.mxu0 0
        %2855 = vmatprep.subr.bf16.mxu0 0
        %2856 = vmatpush1.bf16.msra.mxu0 0
        %2857 = vmatprep.subr.bf16.mxu0 0
        %2858 = vmatpush1.bf16.msra.mxu0 0
        %2859 = vmatprep.subr.bf16.mxu0 0
        %2860 = vmatpush1.bf16.msra.mxu0 0
        %2861 = vmatprep.subr.bf16.mxu0 0
        %2862 = vmatpush1.bf16.msra.mxu0 0
        %2863 = vmatprep.mubr.bf16.mxu0 0
        %2864 = vmatmul.mubr.bf16.gmra.mrb[0].mxu0 %v2826
        %v2865 = vpop.f32.mrb[0].mxu0
        %v2866 = vadd.f32 0.0, %v2865
        %v2867 = vpop.f32.mrb[0].mxu0
        %v2868 = vpop.f32.mrb[0].mxu0
        %v2869 = vpop.f32.mrb[0].mxu0
        %2870 = vdwg.mxu0
        %v2871 = vpack.c.bf16 %v2866, %v2818
        %v2876 = vunpack.c.l.b16 %v1794
        %v2877 = vunpack.c.l.b16 %v1795
        %v2878 = vunpack.c.l.b16 %v1796
        %v2879 = vunpack.c.l.b16 %v1797
        %v2880 = vpack.c.b16 %v2877, %v2876
        %v2881 = vpack.c.b16 %v2879, %v2878
        %v2885 = vsel %vm2106, %v2871, 0
        %2887 = vmatprep.subr.bf16.mxu0 0
        %2888 = vmatpush1.bf16.msra.mxu0 %v2880
        %2889 = vmatprep.subr.bf16.mxu0 0
        %2890 = vmatpush1.bf16.msra.mxu0 %v2881
        %2891 = vmatprep.subr.bf16.mxu0 0
        %2892 = vmatpush1.bf16.msra.mxu0 0
        %2893 = vmatprep.subr.bf16.mxu0 0
        %2894 = vmatpush1.bf16.msra.mxu0 0
        %2895 = vmatprep.subr.bf16.mxu0 0
        %2896 = vmatpush1.bf16.msra.mxu0 0
        %2897 = vmatprep.subr.bf16.mxu0 0
        %2898 = vmatpush1.bf16.msra.mxu0 0
        %2899 = vmatprep.subr.bf16.mxu0 0
        %2900 = vmatpush1.bf16.msra.mxu0 0
        %2901 = vmatprep.subr.bf16.mxu0 0
        %2902 = vmatpush1.bf16.msra.mxu0 0
        %2903 = vmatprep.subr.bf16.mxu0 0
        %2904 = vmatpush1.bf16.msra.mxu0 0
        %2905 = vmatprep.subr.bf16.mxu0 0
        %2906 = vmatpush1.bf16.msra.mxu0 0
        %2907 = vmatprep.subr.bf16.mxu0 0
        %2908 = vmatpush1.bf16.msra.mxu0 0
        %2909 = vmatprep.subr.bf16.mxu0 0
        %2910 = vmatpush1.bf16.msra.mxu0 0
        %2911 = vmatprep.subr.bf16.mxu0 0
        %2912 = vmatpush1.bf16.msra.mxu0 0
        %2913 = vmatprep.subr.bf16.mxu0 0
        %2914 = vmatpush1.bf16.msra.mxu0 0
        %2915 = vmatprep.subr.bf16.mxu0 0
        %2916 = vmatpush1.bf16.msra.mxu0 0
        %2917 = vmatprep.subr.bf16.mxu0 0
        %2918 = vmatpush1.bf16.msra.mxu0 0
        %2919 = vmatprep.mubr.bf16.mxu0 0
        %2920 = vmatmul.mubr.bf16.gmra.mrb[0].mxu0 %v2885
        %v2921 = vpop.f32.mrb[0].mxu0
        %v2922 = vadd.f32 0.0, %v2921
        %v2923 = vpop.f32.mrb[0].mxu0
        %v2924 = vpop.f32.mrb[0].mxu0
        %v2925 = vadd.f32 0.0, %v2924
        %v2926 = vpop.f32.mrb[0].mxu0
        %2927 = vdwg.mxu0
        %v2928 = vadd.f32 %v2645, %v2922
        %v2929 = vadd.f32 %v2648, %v2925
        %2930 = vrot.lane.b32.xlu0 %v2092, 32
        %v2931 = vpop.permute.xlu0 %2930
        %2932 = vrot.lane.b32.xlu0 %v2098, 32
        %v2933 = vpop.permute.xlu0 %2932
        %v2935 = vsel %vm2106, %v2931, 0
        %v2938 = vsel %vm2106, %v2933, 0
        %2940 = vmatprep.subr.bf16.mxu0 0
        %2941 = vmatpush1.bf16.xpose.msra.mxu0 %v2938
        %2942 = vmatprep.subr.bf16.mxu0 0
        %2943 = vmatpush1.bf16.xpose.msra.mxu0 0
        %2944 = vmatprep.subr.bf16.mxu0 0
        %2945 = vmatpush1.bf16.xpose.msra.mxu0 0
        %2946 = vmatprep.subr.bf16.mxu0 0
        %2947 = vmatpush1.bf16.xpose.msra.mxu0 0
        %2948 = vmatprep.subr.bf16.mxu0 0
        %2949 = vmatpush1.bf16.xpose.msra.mxu0 0
        %2950 = vmatprep.subr.bf16.mxu0 0
        %2951 = vmatpush1.bf16.xpose.msra.mxu0 0
        %2952 = vmatprep.subr.bf16.mxu0 0
        %2953 = vmatpush1.bf16.xpose.msra.mxu0 0
        %2954 = vmatprep.subr.bf16.mxu0 0
        %2955 = vmatpush1.bf16.xpose.msra.mxu0 0
        %2956 = vmatprep.subr.bf16.mxu0 0
        %2957 = vmatpush1.bf16.xpose.msra.mxu0 0
        %2958 = vmatprep.subr.bf16.mxu0 0
        %2959 = vmatpush1.bf16.xpose.msra.mxu0 0
        %2960 = vmatprep.subr.bf16.mxu0 0
        %2961 = vmatpush1.bf16.xpose.msra.mxu0 0
        %2962 = vmatprep.subr.bf16.mxu0 0
        %2963 = vmatpush1.bf16.xpose.msra.mxu0 0
        %2964 = vmatprep.subr.bf16.mxu0 0
        %2965 = vmatpush1.bf16.xpose.msra.mxu0 0
        %2966 = vmatprep.subr.bf16.mxu0 0
        %2967 = vmatpush1.bf16.xpose.msra.mxu0 0
        %2968 = vmatprep.subr.bf16.mxu0 0
        %2969 = vmatpush1.bf16.xpose.msra.mxu0 0
        %2970 = vmatprep.subr.bf16.mxu0 0
        %2971 = vmatpush1.bf16.xpose.msra.mxu0 0
        %2972 = vmatprep.mubr.bf16.mxu0 0
        %2973 = vmatmul.mubr.bf16.gmra.mrb[0].mxu0 %v2935
        %v2974 = vpop.f32.mrb[0].mxu0
        %v2975 = vadd.f32 %v1677, %v2974
        %v2976 = vpop.f32.mrb[0].mxu0
        %v2977 = vpop.f32.mrb[0].mxu0
        %v2978 = vpop.f32.mrb[0].mxu0
        %2979 = vdwg.mxu0
        %2980 = vrot.lane.b32.xlu0 %v2093, 32
        %v2981 = vpop.permute.xlu0 %2980
        %2982 = vrot.lane.b32.xlu0 %v2099, 32
        %v2983 = vpop.permute.xlu0 %2982
        %v2985 = vsel %vm2106, %v2981, 0
        %v2988 = vsel %vm2106, %v2983, 0
        %2990 = vmatprep.subr.bf16.mxu0 0
        %2991 = vmatpush1.bf16.xpose.msra.mxu0 %v2988
        %2992 = vmatprep.subr.bf16.mxu0 0
        %2993 = vmatpush1.bf16.xpose.msra.mxu0 0
        %2994 = vmatprep.subr.bf16.mxu0 0
        %2995 = vmatpush1.bf16.xpose.msra.mxu0 0
        %2996 = vmatprep.subr.bf16.mxu0 0
        %2997 = vmatpush1.bf16.xpose.msra.mxu0 0
        %2998 = vmatprep.subr.bf16.mxu0 0
        %2999 = vmatpush1.bf16.xpose.msra.mxu0 0
        %3000 = vmatprep.subr.bf16.mxu0 0
        %3001 = vmatpush1.bf16.xpose.msra.mxu0 0
        %3002 = vmatprep.subr.bf16.mxu0 0
        %3003 = vmatpush1.bf16.xpose.msra.mxu0 0
        %3004 = vmatprep.subr.bf16.mxu0 0
        %3005 = vmatpush1.bf16.xpose.msra.mxu0 0
        %3006 = vmatprep.subr.bf16.mxu0 0
        %3007 = vmatpush1.bf16.xpose.msra.mxu0 0
        %3008 = vmatprep.subr.bf16.mxu0 0
        %3009 = vmatpush1.bf16.xpose.msra.mxu0 0
        %3010 = vmatprep.subr.bf16.mxu0 0
        %3011 = vmatpush1.bf16.xpose.msra.mxu0 0
        %3012 = vmatprep.subr.bf16.mxu0 0
        %3013 = vmatpush1.bf16.xpose.msra.mxu0 0
        %3014 = vmatprep.subr.bf16.mxu0 0
        %3015 = vmatpush1.bf16.xpose.msra.mxu0 0
        %3016 = vmatprep.subr.bf16.mxu0 0
        %3017 = vmatpush1.bf16.xpose.msra.mxu0 0
        %3018 = vmatprep.subr.bf16.mxu0 0
        %3019 = vmatpush1.bf16.xpose.msra.mxu0 0
        %3020 = vmatprep.subr.bf16.mxu0 0
        %3021 = vmatpush1.bf16.xpose.msra.mxu0 0
        %3022 = vmatprep.mubr.bf16.mxu0 0
        %3023 = vmatmul.mubr.bf16.gmra.mrb[0].mxu0 %v2985
        %v3024 = vpop.f32.mrb[0].mxu0
        %v3025 = vadd.f32 %v1677, %v3024
        %v3026 = vpop.f32.mrb[0].mxu0
        %v3027 = vpop.f32.mrb[0].mxu0
        %v3028 = vpop.f32.mrb[0].mxu0
        %3029 = vdwg.mxu0
        %v3030 = vsel %vm2199, %v2975, -inf
        %3031 = vmax.xlane.f32.xlu0 %v3030
        %v3032 = vpop.xlane.xlu0 %3031
        %v3033 = vsel %vm2199, %v3025, -inf
        %3034 = vmax.xlane.f32.xlu0 %v3033
        %v3035 = vpop.xlane.xlu0 %3034
        %v3036 = vsub.f32 %v2975, %v3032
        %v3037 = vsub.f32 %v3025, %v3035
        %v3038 = vmul.f32 %v3036, 1.442695
        %v3039 = vpow.pop %v3038
        %v3040 = vmul.f32 %v3037, 1.442695
        %v3041 = vpow.pop %v3040
        %v3042 = vsel %vm2199, %v3039, 0.0
        %3043 = vadd.xlane.f32.xlu0 %v3042
        %v3044 = vpop.xlane.xlu0 %3043
        %v3045 = vsel %vm2199, %v3041, 0.0
        %3046 = vadd.xlane.f32.xlu0 %v3045
        %v3047 = vpop.xlane.xlu0 %3046
        %v3048 = vrcp.pop %v3044
        %v3049 = vrcp.pop %v3047
        %v3050 = vmul.f32 %v3039, %v3048
        %v3051 = vmul.f32 %v3041, %v3049
        %v3052 = vpack.c.bf16 %v3050, %v3050
        %v3053 = vpack.c.bf16 %v3051, %v3051
        %3054 = vrot.lane.b32.xlu0 %v2104, 32
        %v3055 = vpop.permute.xlu0 %3054
        %v3057 = vsel %vm2199, %v3052, 0
        %v3060 = vsel %vm2227, %v3055, 0
        %3062 = vmatprep.subr.bf16.mxu0 0
        %3063 = vmatpush1.bf16.msra.mxu0 %v3060
        %3064 = vmatprep.subr.bf16.mxu0 0
        %3065 = vmatpush1.bf16.msra.mxu0 0
        %3066 = vmatprep.subr.bf16.mxu0 0
        %3067 = vmatpush1.bf16.msra.mxu0 0
        %3068 = vmatprep.subr.bf16.mxu0 0
        %3069 = vmatpush1.bf16.msra.mxu0 0
        %3070 = vmatprep.subr.bf16.mxu0 0
        %3071 = vmatpush1.bf16.msra.mxu0 0
        %3072 = vmatprep.subr.bf16.mxu0 0
        %3073 = vmatpush1.bf16.msra.mxu0 0
        %3074 = vmatprep.subr.bf16.mxu0 0
        %3075 = vmatpush1.bf16.msra.mxu0 0
        %3076 = vmatprep.subr.bf16.mxu0 0
        %3077 = vmatpush1.bf16.msra.mxu0 0
        %3078 = vmatprep.subr.bf16.mxu0 0
        %3079 = vmatpush1.bf16.msra.mxu0 0
        %3080 = vmatprep.subr.bf16.mxu0 0
        %3081 = vmatpush1.bf16.msra.mxu0 0
        %3082 = vmatprep.subr.bf16.mxu0 0
        %3083 = vmatpush1.bf16.msra.mxu0 0
        %3084 = vmatprep.subr.bf16.mxu0 0
        %3085 = vmatpush1.bf16.msra.mxu0 0
        %3086 = vmatprep.subr.bf16.mxu0 0
        %3087 = vmatpush1.bf16.msra.mxu0 0
        %3088 = vmatprep.subr.bf16.mxu0 0
        %3089 = vmatpush1.bf16.msra.mxu0 0
        %3090 = vmatprep.subr.bf16.mxu0 0
        %3091 = vmatpush1.bf16.msra.mxu0 0
        %3092 = vmatprep.subr.bf16.mxu0 0
        %3093 = vmatpush1.bf16.msra.mxu0 0
        %3094 = vmatprep.mubr.bf16.mxu0 0
        %3095 = vmatmul.mubr.bf16.gmra.mrb[0].mxu0 %v3057
        %v3096 = vpop.f32.mrb[0].mxu0
        %v3097 = vadd.f32 0.0, %v3096
        %v3098 = vpop.f32.mrb[0].mxu0
        %v3099 = vpop.f32.mrb[0].mxu0
        %v3100 = vpop.f32.mrb[0].mxu0
        %3101 = vdwg.mxu0
        %3102 = vrot.lane.b32.xlu0 %v2105, 32
        %v3103 = vpop.permute.xlu0 %3102
        %v3105 = vsel %vm2199, %v3053, 0
        %v3108 = vsel %vm2227, %v3103, 0
        %3110 = vmatprep.subr.bf16.mxu0 0
        %3111 = vmatpush1.bf16.msra.mxu0 %v3108
        %3112 = vmatprep.subr.bf16.mxu0 0
        %3113 = vmatpush1.bf16.msra.mxu0 0
        %3114 = vmatprep.subr.bf16.mxu0 0
        %3115 = vmatpush1.bf16.msra.mxu0 0
        %3116 = vmatprep.subr.bf16.mxu0 0
        %3117 = vmatpush1.bf16.msra.mxu0 0
        %3118 = vmatprep.subr.bf16.mxu0 0
        %3119 = vmatpush1.bf16.msra.mxu0 0
        %3120 = vmatprep.subr.bf16.mxu0 0
        %3121 = vmatpush1.bf16.msra.mxu0 0
        %3122 = vmatprep.subr.bf16.mxu0 0
        %3123 = vmatpush1.bf16.msra.mxu0 0
        %3124 = vmatprep.subr.bf16.mxu0 0
        %3125 = vmatpush1.bf16.msra.mxu0 0
        %3126 = vmatprep.subr.bf16.mxu0 0
        %3127 = vmatpush1.bf16.msra.mxu0 0
        %3128 = vmatprep.subr.bf16.mxu0 0
        %3129 = vmatpush1.bf16.msra.mxu0 0
        %3130 = vmatprep.subr.bf16.mxu0 0
        %3131 = vmatpush1.bf16.msra.mxu0 0
        %3132 = vmatprep.subr.bf16.mxu0 0
        %3133 = vmatpush1.bf16.msra.mxu0 0
        %3134 = vmatprep.subr.bf16.mxu0 0
        %3135 = vmatpush1.bf16.msra.mxu0 0
        %3136 = vmatprep.subr.bf16.mxu0 0
        %3137 = vmatpush1.bf16.msra.mxu0 0
        %3138 = vmatprep.subr.bf16.mxu0 0
        %3139 = vmatpush1.bf16.msra.mxu0 0
        %3140 = vmatprep.subr.bf16.mxu0 0
        %3141 = vmatpush1.bf16.msra.mxu0 0
        %3142 = vmatprep.mubr.bf16.mxu0 0
        %3143 = vmatmul.mubr.bf16.gmra.mrb[0].mxu0 %v3105
        %v3144 = vpop.f32.mrb[0].mxu0
        %v3145 = vadd.f32 0.0, %v3144
        %v3146 = vpop.f32.mrb[0].mxu0
        %v3147 = vpop.f32.mrb[0].mxu0
        %v3148 = vpop.f32.mrb[0].mxu0
        %3149 = vdwg.mxu0
        %v3150 = vpack.c.bf16 %v3145, %v3097
        %v3155 = vunpack.c.l.b16 %v1798
        %v3156 = vunpack.c.l.b16 %v1799
        %v3157 = vunpack.c.l.b16 %v1800
        %v3158 = vunpack.c.l.b16 %v1801
        %v3159 = vpack.c.b16 %v3156, %v3155
        %v3160 = vpack.c.b16 %v3158, %v3157
        %v3164 = vsel %vm2106, %v3150, 0
        %3166 = vmatprep.subr.bf16.mxu0 0
        %3167 = vmatpush1.bf16.msra.mxu0 %v3159
        %3168 = vmatprep.subr.bf16.mxu0 0
        %3169 = vmatpush1.bf16.msra.mxu0 %v3160
        %3170 = vmatprep.subr.bf16.mxu0 0
        %3171 = vmatpush1.bf16.msra.mxu0 0
        %3172 = vmatprep.subr.bf16.mxu0 0
        %3173 = vmatpush1.bf16.msra.mxu0 0
        %3174 = vmatprep.subr.bf16.mxu0 0
        %3175 = vmatpush1.bf16.msra.mxu0 0
        %3176 = vmatprep.subr.bf16.mxu0 0
        %3177 = vmatpush1.bf16.msra.mxu0 0
        %3178 = vmatprep.subr.bf16.mxu0 0
        %3179 = vmatpush1.bf16.msra.mxu0 0
        %3180 = vmatprep.subr.bf16.mxu0 0
        %3181 = vmatpush1.bf16.msra.mxu0 0
        %3182 = vmatprep.subr.bf16.mxu0 0
        %3183 = vmatpush1.bf16.msra.mxu0 0
        %3184 = vmatprep.subr.bf16.mxu0 0
        %3185 = vmatpush1.bf16.msra.mxu0 0
        %3186 = vmatprep.subr.bf16.mxu0 0
        %3187 = vmatpush1.bf16.msra.mxu0 0
        %3188 = vmatprep.subr.bf16.mxu0 0
        %3189 = vmatpush1.bf16.msra.mxu0 0
        %3190 = vmatprep.subr.bf16.mxu0 0
        %3191 = vmatpush1.bf16.msra.mxu0 0
        %3192 = vmatprep.subr.bf16.mxu0 0
        %3193 = vmatpush1.bf16.msra.mxu0 0
        %3194 = vmatprep.subr.bf16.mxu0 0
        %3195 = vmatpush1.bf16.msra.mxu0 0
        %3196 = vmatprep.subr.bf16.mxu0 0
        %3197 = vmatpush1.bf16.msra.mxu0 0
        %3198 = vmatprep.mubr.bf16.mxu0 0
        %3199 = vmatmul.mubr.bf16.gmra.mrb[0].mxu0 %v3164
        %v3200 = vpop.f32.mrb[0].mxu0
        %v3201 = vadd.f32 0.0, %v3200
        %v3202 = vpop.f32.mrb[0].mxu0
        %v3203 = vpop.f32.mrb[0].mxu0
        %v3204 = vadd.f32 0.0, %v3203
        %v3205 = vpop.f32.mrb[0].mxu0
        %3206 = vdwg.mxu0
        %v3207 = vadd.f32 %v2928, %v3201
        %v3208 = vadd.f32 %v2929, %v3204
        %v3210 = vlaneseq
        %v3211 = vshrl.u32 %v3210, 7
        %v3212 = vsub.s32 0, %v3211
        %v3213 = vrot.slane %v1802, %v3212
        %v3215 = vadd.f32 %v3207, %v3213
        %v3216 = vadd.f32 %v3208, %v3213
        %v3217 = vadd.f32 %v1672, %v3215
        %v3218 = vadd.f32 %v1673, %v3216
        %v3219 = vld [vmem:[%s1633] sm:$0x1]
        %v3220 = vld [vmem:[%s1636] sm:$0x1]
        %3221 = vadd.xlane.f32.xlu0 %v3217
        %v3222 = vpop.xlane.xlu0 %3221
        %3223 = vadd.xlane.f32.xlu0 %v3218
        %v3224 = vpop.xlane.xlu0 %3223
        %v3225 = vmul.f32 %v3222, %v1685
        %v3226 = vmul.f32 %v3224, %v1685
        %v3227 = vsub.f32 %v3217, %v3225
        %v3228 = vsub.f32 %v3218, %v3226
        %v3229 = vmul.f32 %v3227, %v3227
        %v3230 = vmul.f32 %v3228, %v3228
        %3231 = vadd.xlane.f32.xlu0 %v3229
        %v3232 = vpop.xlane.xlu0 %3231
        %3233 = vadd.xlane.f32.xlu0 %v3230
        %v3234 = vpop.xlane.xlu0 %3233
        %v3235 = vmul.f32 %v3232, 0.007874016
        %v3236 = vmul.f32 %v3234, 0.007874016
        %v3237 = vrsqrt.pop %v3235
        %v3238 = vmul.f32 %v3235, %v3237
        %vm3239 = vcmp.eq.f32.partialorder %v3235, inf
        %v3240 = vsel %vm3239, %v3235, %v3238
        %vm3241 = vcmp.eq.f32.partialorder %v3235, 0.0
        %v3242 = vand.u32 %v3235, 2147483648
        %v3243 = vsel %vm3241, %v3242, %v3240
        %v3244 = vrsqrt.pop %v3236
        %v3245 = vmul.f32 %v3236, %v3244
        %vm3246 = vcmp.eq.f32.partialorder %v3236, inf
        %v3247 = vsel %vm3246, %v3236, %v3245
        %vm3248 = vcmp.eq.f32.partialorder %v3236, 0.0
        %v3249 = vand.u32 %v3236, 2147483648
        %v3250 = vsel %vm3248, %v3249, %v3247
        %v3251 = vadd.f32 %v3243, 1e-06
        %v3252 = vadd.f32 %v3250, 1e-06
        %v3253 = vrcp.pop %v3251
        %v3254 = vrcp.pop %v3252
        %v3255 = vmul.f32 %v3227, %v3253
        %v3256 = vmul.f32 %v3228, %v3254
        %v3258 = vlaneseq
        %v3259 = vshrl.u32 %v3258, 7
        %v3260 = vsub.s32 0, %v3259
        %v3261 = vrot.slane %v3219, %v3260
        %v3263 = vmul.f32 %v3261, %v3255
        %v3264 = vmul.f32 %v3261, %v3256
        %v3266 = vlaneseq
        %v3267 = vshrl.u32 %v3266, 7
        %v3268 = vsub.s32 0, %v3267
        %v3269 = vrot.slane %v3220, %v3268
        %v3271 = vadd.f32 %v3263, %v3269
        %v3272 = vadd.f32 %v3264, %v3269
        %v3273 = vpack.c.bf16 %v3272, %v3271
        %v3274 = vld [vmem:[%s1398] sm:$0xf]
        %v3275 = vld [vmem:[%s1398 + $0x4] sm:$0xf]
        %v3276 = vld [vmem:[%s1398 + $0x8] sm:$0xf]
        %v3277 = vld [vmem:[%s1398 + $0xc] sm:$0xf]
        %v3278 = vld [vmem:[%s1398 + $0x10] sm:$0xf]
        %v3279 = vld [vmem:[%s1398 + $0x14] sm:$0xf]
        %v3280 = vld [vmem:[%s1398 + $0x18] sm:$0xf]
        %v3281 = vld [vmem:[%s1398 + $0x1c] sm:$0xf]
        %v3282 = vld [vmem:[%s1398 + $0x20] sm:$0xf]
        %v3283 = vld [vmem:[%s1398 + $0x24] sm:$0xf]
        %v3284 = vld [vmem:[%s1398 + $0x28] sm:$0xf]
        %v3285 = vld [vmem:[%s1398 + $0x2c] sm:$0xf]
        %v3286 = vld [vmem:[%s1398 + $0x30] sm:$0xf]
        %v3287 = vld [vmem:[%s1398 + $0x34] sm:$0xf]
        %v3288 = vld [vmem:[%s1398 + $0x38] sm:$0xf]
        %v3289 = vld [vmem:[%s1398 + $0x3c] sm:$0xf]
        %v3290 = vld [vmem:[%s1639] sm:$0x1]
        %v3291 = vld [vmem:[%s1407] sm:$0xf]
        %v3292 = vld [vmem:[%s1407 + $0x4] sm:$0xf]
        %v3293 = vld [vmem:[%s1407 + $0x8] sm:$0xf]
        %v3294 = vld [vmem:[%s1407 + $0xc] sm:$0xf]
        %v3295 = vld [vmem:[%s1407 + $0x10] sm:$0xf]
        %v3296 = vld [vmem:[%s1407 + $0x14] sm:$0xf]
        %v3297 = vld [vmem:[%s1407 + $0x18] sm:$0xf]
        %v3298 = vld [vmem:[%s1407 + $0x1c] sm:$0xf]
        %v3299 = vld [vmem:[%s1407 + $0x20] sm:$0xf]
        %v3300 = vld [vmem:[%s1407 + $0x24] sm:$0xf]
        %v3301 = vld [vmem:[%s1407 + $0x28] sm:$0xf]
        %v3302 = vld [vmem:[%s1407 + $0x2c] sm:$0xf]
        %v3303 = vld [vmem:[%s1407 + $0x30] sm:$0xf]
        %v3304 = vld [vmem:[%s1407 + $0x34] sm:$0xf]
        %v3305 = vld [vmem:[%s1407 + $0x38] sm:$0xf]
        %v3306 = vld [vmem:[%s1407 + $0x3c] sm:$0xf]
        %v3307 = vld [vmem:[%s1642] sm:$0x1]
        %v3308 = vld [vmem:[%s1416] sm:$0xf]
        %v3309 = vld [vmem:[%s1416 + $0x4] sm:$0xf]
        %v3310 = vld [vmem:[%s1416 + $0x8] sm:$0xf]
        %v3311 = vld [vmem:[%s1416 + $0xc] sm:$0xf]
        %v3312 = vld [vmem:[%s1416 + $0x10] sm:$0xf]
        %v3313 = vld [vmem:[%s1416 + $0x14] sm:$0xf]
        %v3314 = vld [vmem:[%s1416 + $0x18] sm:$0xf]
        %v3315 = vld [vmem:[%s1416 + $0x1c] sm:$0xf]
        %v3316 = vld [vmem:[%s1416 + $0x20] sm:$0xf]
        %v3317 = vld [vmem:[%s1416 + $0x24] sm:$0xf]
        %v3318 = vld [vmem:[%s1416 + $0x28] sm:$0xf]
        %v3319 = vld [vmem:[%s1416 + $0x2c] sm:$0xf]
        %v3320 = vld [vmem:[%s1416 + $0x30] sm:$0xf]
        %v3321 = vld [vmem:[%s1416 + $0x34] sm:$0xf]
        %v3322 = vld [vmem:[%s1416 + $0x38] sm:$0xf]
        %v3323 = vld [vmem:[%s1416 + $0x3c] sm:$0xf]
        %v3324 = vld [vmem:[%s1645] sm:$0x1]
        %v3325 = vld [vmem:[%s1425] sm:$0xf]
        %v3326 = vld [vmem:[%s1425 + $0x4] sm:$0xf]
        %v3327 = vld [vmem:[%s1425 + $0x8] sm:$0xf]
        %v3328 = vld [vmem:[%s1425 + $0xc] sm:$0xf]
        %v3329 = vld [vmem:[%s1425 + $0x10] sm:$0xf]
        %v3330 = vld [vmem:[%s1425 + $0x14] sm:$0xf]
        %v3331 = vld [vmem:[%s1425 + $0x18] sm:$0xf]
        %v3332 = vld [vmem:[%s1425 + $0x1c] sm:$0xf]
        %v3333 = vld [vmem:[%s1425 + $0x20] sm:$0xf]
        %v3334 = vld [vmem:[%s1425 + $0x24] sm:$0xf]
        %v3335 = vld [vmem:[%s1425 + $0x28] sm:$0xf]
        %v3336 = vld [vmem:[%s1425 + $0x2c] sm:$0xf]
        %v3337 = vld [vmem:[%s1425 + $0x30] sm:$0xf]
        %v3338 = vld [vmem:[%s1425 + $0x34] sm:$0xf]
        %v3339 = vld [vmem:[%s1425 + $0x38] sm:$0xf]
        %v3340 = vld [vmem:[%s1425 + $0x3c] sm:$0xf]
        %v3341 = vld [vmem:[%s1648] sm:$0x1]
        %v3343 = vlaneseq
        %v3344 = vshrl.u32 %v3343, 7
        %v3345 = vsub.s32 0, %v3344
        %v3346 = vrot.slane %v3290, %v3345
        %v3364 = vunpack.c.l.b16 %v3274
        %v3365 = vunpack.c.l.b16 %v3275
        %v3366 = vunpack.c.l.b16 %v3276
        %v3367 = vunpack.c.l.b16 %v3277
        %v3368 = vunpack.c.l.b16 %v3278
        %v3369 = vunpack.c.l.b16 %v3279
        %v3370 = vunpack.c.l.b16 %v3280
        %v3371 = vunpack.c.l.b16 %v3281
        %v3372 = vunpack.c.l.b16 %v3282
        %v3373 = vunpack.c.l.b16 %v3283
        %v3374 = vunpack.c.l.b16 %v3284
        %v3375 = vunpack.c.l.b16 %v3285
        %v3376 = vunpack.c.l.b16 %v3286
        %v3377 = vunpack.c.l.b16 %v3287
        %v3378 = vunpack.c.l.b16 %v3288
        %v3379 = vunpack.c.l.b16 %v3289
        %v3380 = vpack.c.b16 %v3365, %v3364
        %v3381 = vpack.c.b16 %v3367, %v3366
        %v3382 = vpack.c.b16 %v3369, %v3368
        %v3383 = vpack.c.b16 %v3371, %v3370
        %v3384 = vpack.c.b16 %v3373, %v3372
        %v3385 = vpack.c.b16 %v3375, %v3374
        %v3386 = vpack.c.b16 %v3377, %v3376
        %v3387 = vpack.c.b16 %v3379, %v3378
        %3396 = vmatprep.subr.bf16.mxu0 0
        %3397 = vmatpush1.bf16.msra.mxu0 %v3380
        %3398 = vmatprep.subr.bf16.mxu0 0
        %3399 = vmatpush1.bf16.msra.mxu0 %v3381
        %3400 = vmatprep.subr.bf16.mxu0 0
        %3401 = vmatpush1.bf16.msra.mxu0 %v3382
        %3402 = vmatprep.subr.bf16.mxu0 0
        %3403 = vmatpush1.bf16.msra.mxu0 %v3383
        %3404 = vmatprep.subr.bf16.mxu0 0
        %3405 = vmatpush1.bf16.msra.mxu0 %v3384
        %3406 = vmatprep.subr.bf16.mxu0 0
        %3407 = vmatpush1.bf16.msra.mxu0 %v3385
        %3408 = vmatprep.subr.bf16.mxu0 0
        %3409 = vmatpush1.bf16.msra.mxu0 %v3386
        %3410 = vmatprep.subr.bf16.mxu0 0
        %3411 = vmatpush1.bf16.msra.mxu0 %v3387
        %3412 = vmatprep.subr.bf16.mxu0 0
        %3413 = vmatpush1.bf16.msra.mxu0 0
        %3414 = vmatprep.subr.bf16.mxu0 0
        %3415 = vmatpush1.bf16.msra.mxu0 0
        %3416 = vmatprep.subr.bf16.mxu0 0
        %3417 = vmatpush1.bf16.msra.mxu0 0
        %3418 = vmatprep.subr.bf16.mxu0 0
        %3419 = vmatpush1.bf16.msra.mxu0 0
        %3420 = vmatprep.subr.bf16.mxu0 0
        %3421 = vmatpush1.bf16.msra.mxu0 0
        %3422 = vmatprep.subr.bf16.mxu0 0
        %3423 = vmatpush1.bf16.msra.mxu0 0
        %3424 = vmatprep.subr.bf16.mxu0 0
        %3425 = vmatpush1.bf16.msra.mxu0 0
        %3426 = vmatprep.subr.bf16.mxu0 0
        %3427 = vmatpush1.bf16.msra.mxu0 0
        %3428 = vmatprep.mubr.bf16.mxu0 0
        %3429 = vmatmul.mubr.bf16.gmra.mrb[0].mxu0 %v3273
        %v3430 = vpop.f32.mrb[0].mxu0
        %v3431 = vadd.f32 %v3346, %v3430
        %v3432 = vpop.f32.mrb[0].mxu0
        %v3433 = vpop.f32.mrb[0].mxu0
        %v3434 = vadd.f32 %v3346, %v3433
        %v3435 = vpop.f32.mrb[0].mxu0
        %3436 = vdwg.mxu0
        %v3438 = vlaneseq
        %v3439 = vshrl.u32 %v3438, 7
        %v3440 = vsub.s32 0, %v3439
        %v3441 = vrot.slane %v3307, %v3440
        %v3459 = vunpack.c.l.b16 %v3291
        %v3460 = vunpack.c.l.b16 %v3292
        %v3461 = vunpack.c.l.b16 %v3293
        %v3462 = vunpack.c.l.b16 %v3294
        %v3463 = vunpack.c.l.b16 %v3295
        %v3464 = vunpack.c.l.b16 %v3296
        %v3465 = vunpack.c.l.b16 %v3297
        %v3466 = vunpack.c.l.b16 %v3298
        %v3467 = vunpack.c.l.b16 %v3299
        %v3468 = vunpack.c.l.b16 %v3300
        %v3469 = vunpack.c.l.b16 %v3301
        %v3470 = vunpack.c.l.b16 %v3302
        %v3471 = vunpack.c.l.b16 %v3303
        %v3472 = vunpack.c.l.b16 %v3304
        %v3473 = vunpack.c.l.b16 %v3305
        %v3474 = vunpack.c.l.b16 %v3306
        %v3475 = vpack.c.b16 %v3460, %v3459
        %v3476 = vpack.c.b16 %v3462, %v3461
        %v3477 = vpack.c.b16 %v3464, %v3463
        %v3478 = vpack.c.b16 %v3466, %v3465
        %v3479 = vpack.c.b16 %v3468, %v3467
        %v3480 = vpack.c.b16 %v3470, %v3469
        %v3481 = vpack.c.b16 %v3472, %v3471
        %v3482 = vpack.c.b16 %v3474, %v3473
        %3491 = vmatprep.subr.bf16.mxu0 0
        %3492 = vmatpush1.bf16.msra.mxu0 %v3475
        %3493 = vmatprep.subr.bf16.mxu0 0
        %3494 = vmatpush1.bf16.msra.mxu0 %v3476
        %3495 = vmatprep.subr.bf16.mxu0 0
        %3496 = vmatpush1.bf16.msra.mxu0 %v3477
        %3497 = vmatprep.subr.bf16.mxu0 0
        %3498 = vmatpush1.bf16.msra.mxu0 %v3478
        %3499 = vmatprep.subr.bf16.mxu0 0
        %3500 = vmatpush1.bf16.msra.mxu0 %v3479
        %3501 = vmatprep.subr.bf16.mxu0 0
        %3502 = vmatpush1.bf16.msra.mxu0 %v3480
        %3503 = vmatprep.subr.bf16.mxu0 0
        %3504 = vmatpush1.bf16.msra.mxu0 %v3481
        %3505 = vmatprep.subr.bf16.mxu0 0
        %3506 = vmatpush1.bf16.msra.mxu0 %v3482
        %3507 = vmatprep.subr.bf16.mxu0 0
        %3508 = vmatpush1.bf16.msra.mxu0 0
        %3509 = vmatprep.subr.bf16.mxu0 0
        %3510 = vmatpush1.bf16.msra.mxu0 0
        %3511 = vmatprep.subr.bf16.mxu0 0
        %3512 = vmatpush1.bf16.msra.mxu0 0
        %3513 = vmatprep.subr.bf16.mxu0 0
        %3514 = vmatpush1.bf16.msra.mxu0 0
        %3515 = vmatprep.subr.bf16.mxu0 0
        %3516 = vmatpush1.bf16.msra.mxu0 0
        %3517 = vmatprep.subr.bf16.mxu0 0
        %3518 = vmatpush1.bf16.msra.mxu0 0
        %3519 = vmatprep.subr.bf16.mxu0 0
        %3520 = vmatpush1.bf16.msra.mxu0 0
        %3521 = vmatprep.subr.bf16.mxu0 0
        %3522 = vmatpush1.bf16.msra.mxu0 0
        %3523 = vmatprep.mubr.bf16.mxu0 0
        %3524 = vmatmul.mubr.bf16.gmra.mrb[0].mxu0 %v1676
        %v3525 = vpop.f32.mrb[0].mxu0
        %v3526 = vadd.f32 %v3441, %v3525
        %v3527 = vpop.f32.mrb[0].mxu0
        %v3528 = vpop.f32.mrb[0].mxu0
        %v3529 = vadd.f32 %v3441, %v3528
        %v3530 = vpop.f32.mrb[0].mxu0
        %3531 = vdwg.mxu0
        %v3533 = vlaneseq
        %v3534 = vshrl.u32 %v3533, 7
        %v3535 = vsub.s32 0, %v3534
        %v3536 = vrot.slane %v3324, %v3535
        %v3554 = vunpack.c.l.b16 %v3308
        %v3555 = vunpack.c.l.b16 %v3309
        %v3556 = vunpack.c.l.b16 %v3310
        %v3557 = vunpack.c.l.b16 %v3311
        %v3558 = vunpack.c.l.b16 %v3312
        %v3559 = vunpack.c.l.b16 %v3313
        %v3560 = vunpack.c.l.b16 %v3314
        %v3561 = vunpack.c.l.b16 %v3315
        %v3562 = vunpack.c.l.b16 %v3316
        %v3563 = vunpack.c.l.b16 %v3317
        %v3564 = vunpack.c.l.b16 %v3318
        %v3565 = vunpack.c.l.b16 %v3319
        %v3566 = vunpack.c.l.b16 %v3320
        %v3567 = vunpack.c.l.b16 %v3321
        %v3568 = vunpack.c.l.b16 %v3322
        %v3569 = vunpack.c.l.b16 %v3323
        %v3570 = vpack.c.b16 %v3555, %v3554
        %v3571 = vpack.c.b16 %v3557, %v3556
        %v3572 = vpack.c.b16 %v3559, %v3558
        %v3573 = vpack.c.b16 %v3561, %v3560
        %v3574 = vpack.c.b16 %v3563, %v3562
        %v3575 = vpack.c.b16 %v3565, %v3564
        %v3576 = vpack.c.b16 %v3567, %v3566
        %v3577 = vpack.c.b16 %v3569, %v3568
        %3586 = vmatprep.subr.bf16.mxu0 0
        %3587 = vmatpush1.bf16.msra.mxu0 %v3570
        %3588 = vmatprep.subr.bf16.mxu0 0
        %3589 = vmatpush1.bf16.msra.mxu0 %v3571
        %3590 = vmatprep.subr.bf16.mxu0 0
        %3591 = vmatpush1.bf16.msra.mxu0 %v3572
        %3592 = vmatprep.subr.bf16.mxu0 0
        %3593 = vmatpush1.bf16.msra.mxu0 %v3573
        %3594 = vmatprep.subr.bf16.mxu0 0
        %3595 = vmatpush1.bf16.msra.mxu0 %v3574
        %3596 = vmatprep.subr.bf16.mxu0 0
        %3597 = vmatpush1.bf16.msra.mxu0 %v3575
        %3598 = vmatprep.subr.bf16.mxu0 0
        %3599 = vmatpush1.bf16.msra.mxu0 %v3576
        %3600 = vmatprep.subr.bf16.mxu0 0
        %3601 = vmatpush1.bf16.msra.mxu0 %v3577
        %3602 = vmatprep.subr.bf16.mxu0 0
        %3603 = vmatpush1.bf16.msra.mxu0 0
        %3604 = vmatprep.subr.bf16.mxu0 0
        %3605 = vmatpush1.bf16.msra.mxu0 0
        %3606 = vmatprep.subr.bf16.mxu0 0
        %3607 = vmatpush1.bf16.msra.mxu0 0
        %3608 = vmatprep.subr.bf16.mxu0 0
        %3609 = vmatpush1.bf16.msra.mxu0 0
        %3610 = vmatprep.subr.bf16.mxu0 0
        %3611 = vmatpush1.bf16.msra.mxu0 0
        %3612 = vmatprep.subr.bf16.mxu0 0
        %3613 = vmatpush1.bf16.msra.mxu0 0
        %3614 = vmatprep.subr.bf16.mxu0 0
        %3615 = vmatpush1.bf16.msra.mxu0 0
        %3616 = vmatprep.subr.bf16.mxu0 0
        %3617 = vmatpush1.bf16.msra.mxu0 0
        %3618 = vmatprep.mubr.bf16.mxu0 0
        %3619 = vmatmul.mubr.bf16.gmra.mrb[0].mxu0 %v1676
        %v3620 = vpop.f32.mrb[0].mxu0
        %v3621 = vadd.f32 %v3536, %v3620
        %v3622 = vpop.f32.mrb[0].mxu0
        %v3623 = vpop.f32.mrb[0].mxu0
        %v3624 = vadd.f32 %v3536, %v3623
        %v3625 = vpop.f32.mrb[0].mxu0
        %3626 = vdwg.mxu0
        %v3627 = vpack.c.bf16 %v3434, %v3431
        %v3629 = vunpack.c.l.b16 %v3627
        %v3630 = vunpack.c.h.b16 %v3627
        %v3631 = vpack.c.b16 %v3629, %v3629
        %v3632 = vpack.c.b16 %v3630, %v3630
        %v3633 = vpack.c.bf16 %v3529, %v3526
        %v3635 = vunpack.c.l.b16 %v3633
        %v3636 = vunpack.c.h.b16 %v3633
        %v3637 = vpack.c.b16 %v3635, %v3635
        %v3638 = vpack.c.b16 %v3636, %v3636
        %v3639 = vpack.c.bf16 %v3624, %v3621
        %v3641 = vunpack.c.l.b16 %v3639
        %v3642 = vunpack.c.h.b16 %v3639
        %v3643 = vpack.c.b16 %v3641, %v3641
        %v3644 = vpack.c.b16 %v3642, %v3642
        %v3646 = vsel %vm2106, %v3631, 0
        %v3649 = vsel %vm2106, %v3637, 0
        %3651 = vmatprep.subr.bf16.mxu0 0
        %3652 = vmatpush1.bf16.xpose.msra.mxu0 %v3649
        %3653 = vmatprep.subr.bf16.mxu0 0
        %3654 = vmatpush1.bf16.xpose.msra.mxu0 0
        %3655 = vmatprep.subr.bf16.mxu0 0
        %3656 = vmatpush1.bf16.xpose.msra.mxu0 0
        %3657 = vmatprep.subr.bf16.mxu0 0
        %3658 = vmatpush1.bf16.xpose.msra.mxu0 0
        %3659 = vmatprep.subr.bf16.mxu0 0
        %3660 = vmatpush1.bf16.xpose.msra.mxu0 0
        %3661 = vmatprep.subr.bf16.mxu0 0
        %3662 = vmatpush1.bf16.xpose.msra.mxu0 0
        %3663 = vmatprep.subr.bf16.mxu0 0
        %3664 = vmatpush1.bf16.xpose.msra.mxu0 0
        %3665 = vmatprep.subr.bf16.mxu0 0
        %3666 = vmatpush1.bf16.xpose.msra.mxu0 0
        %3667 = vmatprep.subr.bf16.mxu0 0
        %3668 = vmatpush1.bf16.xpose.msra.mxu0 0
        %3669 = vmatprep.subr.bf16.mxu0 0
        %3670 = vmatpush1.bf16.xpose.msra.mxu0 0
        %3671 = vmatprep.subr.bf16.mxu0 0
        %3672 = vmatpush1.bf16.xpose.msra.mxu0 0
        %3673 = vmatprep.subr.bf16.mxu0 0
        %3674 = vmatpush1.bf16.xpose.msra.mxu0 0
        %3675 = vmatprep.subr.bf16.mxu0 0
        %3676 = vmatpush1.bf16.xpose.msra.mxu0 0
        %3677 = vmatprep.subr.bf16.mxu0 0
        %3678 = vmatpush1.bf16.xpose.msra.mxu0 0
        %3679 = vmatprep.subr.bf16.mxu0 0
        %3680 = vmatpush1.bf16.xpose.msra.mxu0 0
        %3681 = vmatprep.subr.bf16.mxu0 0
        %3682 = vmatpush1.bf16.xpose.msra.mxu0 0
        %3683 = vmatprep.mubr.bf16.mxu0 0
        %3684 = vmatmul.mubr.bf16.gmra.mrb[0].mxu0 %v3646
        %v3685 = vpop.f32.mrb[0].mxu0
        %v3686 = vadd.f32 %v1678, %v3685
        %v3687 = vpop.f32.mrb[0].mxu0
        %v3688 = vpop.f32.mrb[0].mxu0
        %v3689 = vpop.f32.mrb[0].mxu0
        %3690 = vdwg.mxu0
        %v3692 = vsel %vm2106, %v3632, 0
        %v3695 = vsel %vm2106, %v3638, 0
        %3697 = vmatprep.subr.bf16.mxu0 0
        %3698 = vmatpush1.bf16.xpose.msra.mxu0 %v3695
        %3699 = vmatprep.subr.bf16.mxu0 0
        %3700 = vmatpush1.bf16.xpose.msra.mxu0 0
        %3701 = vmatprep.subr.bf16.mxu0 0
        %3702 = vmatpush1.bf16.xpose.msra.mxu0 0
        %3703 = vmatprep.subr.bf16.mxu0 0
        %3704 = vmatpush1.bf16.xpose.msra.mxu0 0
        %3705 = vmatprep.subr.bf16.mxu0 0
        %3706 = vmatpush1.bf16.xpose.msra.mxu0 0
        %3707 = vmatprep.subr.bf16.mxu0 0
        %3708 = vmatpush1.bf16.xpose.msra.mxu0 0
        %3709 = vmatprep.subr.bf16.mxu0 0
        %3710 = vmatpush1.bf16.xpose.msra.mxu0 0
        %3711 = vmatprep.subr.bf16.mxu0 0
        %3712 = vmatpush1.bf16.xpose.msra.mxu0 0
        %3713 = vmatprep.subr.bf16.mxu0 0
        %3714 = vmatpush1.bf16.xpose.msra.mxu0 0
        %3715 = vmatprep.subr.bf16.mxu0 0
        %3716 = vmatpush1.bf16.xpose.msra.mxu0 0
        %3717 = vmatprep.subr.bf16.mxu0 0
        %3718 = vmatpush1.bf16.xpose.msra.mxu0 0
        %3719 = vmatprep.subr.bf16.mxu0 0
        %3720 = vmatpush1.bf16.xpose.msra.mxu0 0
        %3721 = vmatprep.subr.bf16.mxu0 0
        %3722 = vmatpush1.bf16.xpose.msra.mxu0 0
        %3723 = vmatprep.subr.bf16.mxu0 0
        %3724 = vmatpush1.bf16.xpose.msra.mxu0 0
        %3725 = vmatprep.subr.bf16.mxu0 0
        %3726 = vmatpush1.bf16.xpose.msra.mxu0 0
        %3727 = vmatprep.subr.bf16.mxu0 0
        %3728 = vmatpush1.bf16.xpose.msra.mxu0 0
        %3729 = vmatprep.mubr.bf16.mxu0 0
        %3730 = vmatmul.mubr.bf16.gmra.mrb[0].mxu0 %v3692
        %v3731 = vpop.f32.mrb[0].mxu0
        %v3732 = vadd.f32 %v1678, %v3731
        %v3733 = vpop.f32.mrb[0].mxu0
        %v3734 = vpop.f32.mrb[0].mxu0
        %v3735 = vpop.f32.mrb[0].mxu0
        %3736 = vdwg.mxu0
        %v3737 = vsel %vm2199, %v3686, -inf
        %3738 = vmax.xlane.f32.xlu0 %v3737
        %v3739 = vpop.xlane.xlu0 %3738
        %v3740 = vsel %vm2199, %v3732, -inf
        %3741 = vmax.xlane.f32.xlu0 %v3740
        %v3742 = vpop.xlane.xlu0 %3741
        %v3743 = vsub.f32 %v3686, %v3739
        %v3744 = vsub.f32 %v3732, %v3742
        %v3745 = vmul.f32 %v3743, 1.442695
        %v3746 = vpow.pop %v3745
        %v3747 = vmul.f32 %v3744, 1.442695
        %v3748 = vpow.pop %v3747
        %v3749 = vsel %vm2199, %v3746, 0.0
        %3750 = vadd.xlane.f32.xlu0 %v3749
        %v3751 = vpop.xlane.xlu0 %3750
        %v3752 = vsel %vm2199, %v3748, 0.0
        %3753 = vadd.xlane.f32.xlu0 %v3752
        %v3754 = vpop.xlane.xlu0 %3753
        %v3755 = vrcp.pop %v3751
        %v3756 = vrcp.pop %v3754
        %v3757 = vmul.f32 %v3746, %v3755
        %v3758 = vmul.f32 %v3748, %v3756
        %v3759 = vpack.c.bf16 %v3757, %v3757
        %v3760 = vpack.c.bf16 %v3758, %v3758
        %v3762 = vsel %vm2199, %v3759, 0
        %v3765 = vsel %vm2227, %v3643, 0
        %3767 = vmatprep.subr.bf16.mxu0 0
        %3768 = vmatpush1.bf16.msra.mxu0 %v3765
        %3769 = vmatprep.subr.bf16.mxu0 0
        %3770 = vmatpush1.bf16.msra.mxu0 0
        %3771 = vmatprep.subr.bf16.mxu0 0
        %3772 = vmatpush1.bf16.msra.mxu0 0
        %3773 = vmatprep.subr.bf16.mxu0 0
        %3774 = vmatpush1.bf16.msra.mxu0 0
        %3775 = vmatprep.subr.bf16.mxu0 0
        %3776 = vmatpush1.bf16.msra.mxu0 0
        %3777 = vmatprep.subr.bf16.mxu0 0
        %3778 = vmatpush1.bf16.msra.mxu0 0
        %3779 = vmatprep.subr.bf16.mxu0 0
        %3780 = vmatpush1.bf16.msra.mxu0 0
        %3781 = vmatprep.subr.bf16.mxu0 0
        %3782 = vmatpush1.bf16.msra.mxu0 0
        %3783 = vmatprep.subr.bf16.mxu0 0
        %3784 = vmatpush1.bf16.msra.mxu0 0
        %3785 = vmatprep.subr.bf16.mxu0 0
        %3786 = vmatpush1.bf16.msra.mxu0 0
        %3787 = vmatprep.subr.bf16.mxu0 0
        %3788 = vmatpush1.bf16.msra.mxu0 0
        %3789 = vmatprep.subr.bf16.mxu0 0
        %3790 = vmatpush1.bf16.msra.mxu0 0
        %3791 = vmatprep.subr.bf16.mxu0 0
        %3792 = vmatpush1.bf16.msra.mxu0 0
        %3793 = vmatprep.subr.bf16.mxu0 0
        %3794 = vmatpush1.bf16.msra.mxu0 0
        %3795 = vmatprep.subr.bf16.mxu0 0
        %3796 = vmatpush1.bf16.msra.mxu0 0
        %3797 = vmatprep.subr.bf16.mxu0 0
        %3798 = vmatpush1.bf16.msra.mxu0 0
        %3799 = vmatprep.mubr.bf16.mxu0 0
        %3800 = vmatmul.mubr.bf16.gmra.mrb[0].mxu0 %v3762
        %v3801 = vpop.f32.mrb[0].mxu0
        %v3802 = vadd.f32 0.0, %v3801
        %v3803 = vpop.f32.mrb[0].mxu0
        %v3804 = vpop.f32.mrb[0].mxu0
        %v3805 = vpop.f32.mrb[0].mxu0
        %3806 = vdwg.mxu0
        %v3808 = vsel %vm2199, %v3760, 0
        %v3811 = vsel %vm2227, %v3644, 0
        %3813 = vmatprep.subr.bf16.mxu0 0
        %3814 = vmatpush1.bf16.msra.mxu0 %v3811
        %3815 = vmatprep.subr.bf16.mxu0 0
        %3816 = vmatpush1.bf16.msra.mxu0 0
        %3817 = vmatprep.subr.bf16.mxu0 0
        %3818 = vmatpush1.bf16.msra.mxu0 0
        %3819 = vmatprep.subr.bf16.mxu0 0
        %3820 = vmatpush1.bf16.msra.mxu0 0
        %3821 = vmatprep.subr.bf16.mxu0 0
        %3822 = vmatpush1.bf16.msra.mxu0 0
        %3823 = vmatprep.subr.bf16.mxu0 0
        %3824 = vmatpush1.bf16.msra.mxu0 0
        %3825 = vmatprep.subr.bf16.mxu0 0
        %3826 = vmatpush1.bf16.msra.mxu0 0
        %3827 = vmatprep.subr.bf16.mxu0 0
        %3828 = vmatpush1.bf16.msra.mxu0 0
        %3829 = vmatprep.subr.bf16.mxu0 0
        %3830 = vmatpush1.bf16.msra.mxu0 0
        %3831 = vmatprep.subr.bf16.mxu0 0
        %3832 = vmatpush1.bf16.msra.mxu0 0
        %3833 = vmatprep.subr.bf16.mxu0 0
        %3834 = vmatpush1.bf16.msra.mxu0 0
        %3835 = vmatprep.subr.bf16.mxu0 0
        %3836 = vmatpush1.bf16.msra.mxu0 0
        %3837 = vmatprep.subr.bf16.mxu0 0
        %3838 = vmatpush1.bf16.msra.mxu0 0
        %3839 = vmatprep.subr.bf16.mxu0 0
        %3840 = vmatpush1.bf16.msra.mxu0 0
        %3841 = vmatprep.subr.bf16.mxu0 0
        %3842 = vmatpush1.bf16.msra.mxu0 0
        %3843 = vmatprep.subr.bf16.mxu0 0
        %3844 = vmatpush1.bf16.msra.mxu0 0
        %3845 = vmatprep.mubr.bf16.mxu0 0
        %3846 = vmatmul.mubr.bf16.gmra.mrb[0].mxu0 %v3808
        %v3847 = vpop.f32.mrb[0].mxu0
        %v3848 = vadd.f32 0.0, %v3847
        %v3849 = vpop.f32.mrb[0].mxu0
        %v3850 = vpop.f32.mrb[0].mxu0
        %v3851 = vpop.f32.mrb[0].mxu0
        %3852 = vdwg.mxu0
        %v3853 = vpack.c.bf16 %v3848, %v3802
        %3854 = vrot.lane.b32.xlu0 %v3631, 96
        %v3855 = vpop.permute.xlu0 %3854
        %3856 = vrot.lane.b32.xlu0 %v3637, 96
        %v3857 = vpop.permute.xlu0 %3856
        %v3859 = vsel %vm2106, %v3855, 0
        %v3862 = vsel %vm2106, %v3857, 0
        %3864 = vmatprep.subr.bf16.mxu0 0
        %3865 = vmatpush1.bf16.xpose.msra.mxu0 %v3862
        %3866 = vmatprep.subr.bf16.mxu0 0
        %3867 = vmatpush1.bf16.xpose.msra.mxu0 0
        %3868 = vmatprep.subr.bf16.mxu0 0
        %3869 = vmatpush1.bf16.xpose.msra.mxu0 0
        %3870 = vmatprep.subr.bf16.mxu0 0
        %3871 = vmatpush1.bf16.xpose.msra.mxu0 0
        %3872 = vmatprep.subr.bf16.mxu0 0
        %3873 = vmatpush1.bf16.xpose.msra.mxu0 0
        %3874 = vmatprep.subr.bf16.mxu0 0
        %3875 = vmatpush1.bf16.xpose.msra.mxu0 0
        %3876 = vmatprep.subr.bf16.mxu0 0
        %3877 = vmatpush1.bf16.xpose.msra.mxu0 0
        %3878 = vmatprep.subr.bf16.mxu0 0
        %3879 = vmatpush1.bf16.xpose.msra.mxu0 0
        %3880 = vmatprep.subr.bf16.mxu0 0
        %3881 = vmatpush1.bf16.xpose.msra.mxu0 0
        %3882 = vmatprep.subr.bf16.mxu0 0
        %3883 = vmatpush1.bf16.xpose.msra.mxu0 0
        %3884 = vmatprep.subr.bf16.mxu0 0
        %3885 = vmatpush1.bf16.xpose.msra.mxu0 0
        %3886 = vmatprep.subr.bf16.mxu0 0
        %3887 = vmatpush1.bf16.xpose.msra.mxu0 0
        %3888 = vmatprep.subr.bf16.mxu0 0
        %3889 = vmatpush1.bf16.xpose.msra.mxu0 0
        %3890 = vmatprep.subr.bf16.mxu0 0
        %3891 = vmatpush1.bf16.xpose.msra.mxu0 0
        %3892 = vmatprep.subr.bf16.mxu0 0
        %3893 = vmatpush1.bf16.xpose.msra.mxu0 0
        %3894 = vmatprep.subr.bf16.mxu0 0
        %3895 = vmatpush1.bf16.xpose.msra.mxu0 0
        %3896 = vmatprep.mubr.bf16.mxu0 0
        %3897 = vmatmul.mubr.bf16.gmra.mrb[0].mxu0 %v3859
        %v3898 = vpop.f32.mrb[0].mxu0
        %v3899 = vadd.f32 %v1678, %v3898
        %v3900 = vpop.f32.mrb[0].mxu0
        %v3901 = vpop.f32.mrb[0].mxu0
        %v3902 = vpop.f32.mrb[0].mxu0
        %3903 = vdwg.mxu0
        %3904 = vrot.lane.b32.xlu0 %v3632, 96
        %v3905 = vpop.permute.xlu0 %3904
        %3906 = vrot.lane.b32.xlu0 %v3638, 96
        %v3907 = vpop.permute.xlu0 %3906
        %v3909 = vsel %vm2106, %v3905, 0
        %v3912 = vsel %vm2106, %v3907, 0
        %3914 = vmatprep.subr.bf16.mxu0 0
        %3915 = vmatpush1.bf16.xpose.msra.mxu0 %v3912
        %3916 = vmatprep.subr.bf16.mxu0 0
        %3917 = vmatpush1.bf16.xpose.msra.mxu0 0
        %3918 = vmatprep.subr.bf16.mxu0 0
        %3919 = vmatpush1.bf16.xpose.msra.mxu0 0
        %3920 = vmatprep.subr.bf16.mxu0 0
        %3921 = vmatpush1.bf16.xpose.msra.mxu0 0
        %3922 = vmatprep.subr.bf16.mxu0 0
        %3923 = vmatpush1.bf16.xpose.msra.mxu0 0
        %3924 = vmatprep.subr.bf16.mxu0 0
        %3925 = vmatpush1.bf16.xpose.msra.mxu0 0
        %3926 = vmatprep.subr.bf16.mxu0 0
        %3927 = vmatpush1.bf16.xpose.msra.mxu0 0
        %3928 = vmatprep.subr.bf16.mxu0 0
        %3929 = vmatpush1.bf16.xpose.msra.mxu0 0
        %3930 = vmatprep.subr.bf16.mxu0 0
        %3931 = vmatpush1.bf16.xpose.msra.mxu0 0
        %3932 = vmatprep.subr.bf16.mxu0 0
        %3933 = vmatpush1.bf16.xpose.msra.mxu0 0
        %3934 = vmatprep.subr.bf16.mxu0 0
        %3935 = vmatpush1.bf16.xpose.msra.mxu0 0
        %3936 = vmatprep.subr.bf16.mxu0 0
        %3937 = vmatpush1.bf16.xpose.msra.mxu0 0
        %3938 = vmatprep.subr.bf16.mxu0 0
        %3939 = vmatpush1.bf16.xpose.msra.mxu0 0
        %3940 = vmatprep.subr.bf16.mxu0 0
        %3941 = vmatpush1.bf16.xpose.msra.mxu0 0
        %3942 = vmatprep.subr.bf16.mxu0 0
        %3943 = vmatpush1.bf16.xpose.msra.mxu0 0
        %3944 = vmatprep.subr.bf16.mxu0 0
        %3945 = vmatpush1.bf16.xpose.msra.mxu0 0
        %3946 = vmatprep.mubr.bf16.mxu0 0
        %3947 = vmatmul.mubr.bf16.gmra.mrb[0].mxu0 %v3909
        %v3948 = vpop.f32.mrb[0].mxu0
        %v3949 = vadd.f32 %v1678, %v3948
        %v3950 = vpop.f32.mrb[0].mxu0
        %v3951 = vpop.f32.mrb[0].mxu0
        %v3952 = vpop.f32.mrb[0].mxu0
        %3953 = vdwg.mxu0
        %v3954 = vsel %vm2199, %v3899, -inf
        %3955 = vmax.xlane.f32.xlu0 %v3954
        %v3956 = vpop.xlane.xlu0 %3955
        %v3957 = vsel %vm2199, %v3949, -inf
        %3958 = vmax.xlane.f32.xlu0 %v3957
        %v3959 = vpop.xlane.xlu0 %3958
        %v3960 = vsub.f32 %v3899, %v3956
        %v3961 = vsub.f32 %v3949, %v3959
        %v3962 = vmul.f32 %v3960, 1.442695
        %v3963 = vpow.pop %v3962
        %v3964 = vmul.f32 %v3961, 1.442695
        %v3965 = vpow.pop %v3964
        %v3966 = vsel %vm2199, %v3963, 0.0
        %3967 = vadd.xlane.f32.xlu0 %v3966
        %v3968 = vpop.xlane.xlu0 %3967
        %v3969 = vsel %vm2199, %v3965, 0.0
        %3970 = vadd.xlane.f32.xlu0 %v3969
        %v3971 = vpop.xlane.xlu0 %3970
        %v3972 = vrcp.pop %v3968
        %v3973 = vrcp.pop %v3971
        %v3974 = vmul.f32 %v3963, %v3972
        %v3975 = vmul.f32 %v3965, %v3973
        %v3976 = vpack.c.bf16 %v3974, %v3974
        %v3977 = vpack.c.bf16 %v3975, %v3975
        %3978 = vrot.lane.b32.xlu0 %v3643, 96
        %v3979 = vpop.permute.xlu0 %3978
        %v3981 = vsel %vm2199, %v3976, 0
        %v3984 = vsel %vm2227, %v3979, 0
        %3986 = vmatprep.subr.bf16.mxu0 0
        %3987 = vmatpush1.bf16.msra.mxu0 %v3984
        %3988 = vmatprep.subr.bf16.mxu0 0
        %3989 = vmatpush1.bf16.msra.mxu0 0
        %3990 = vmatprep.subr.bf16.mxu0 0
        %3991 = vmatpush1.bf16.msra.mxu0 0
        %3992 = vmatprep.subr.bf16.mxu0 0
        %3993 = vmatpush1.bf16.msra.mxu0 0
        %3994 = vmatprep.subr.bf16.mxu0 0
        %3995 = vmatpush1.bf16.msra.mxu0 0
        %3996 = vmatprep.subr.bf16.mxu0 0
        %3997 = vmatpush1.bf16.msra.mxu0 0
        %3998 = vmatprep.subr.bf16.mxu0 0
        %3999 = vmatpush1.bf16.msra.mxu0 0
        %4000 = vmatprep.subr.bf16.mxu0 0
        %4001 = vmatpush1.bf16.msra.mxu0 0
        %4002 = vmatprep.subr.bf16.mxu0 0
        %4003 = vmatpush1.bf16.msra.mxu0 0
        %4004 = vmatprep.subr.bf16.mxu0 0
        %4005 = vmatpush1.bf16.msra.mxu0 0
        %4006 = vmatprep.subr.bf16.mxu0 0
        %4007 = vmatpush1.bf16.msra.mxu0 0
        %4008 = vmatprep.subr.bf16.mxu0 0
        %4009 = vmatpush1.bf16.msra.mxu0 0
        %4010 = vmatprep.subr.bf16.mxu0 0
        %4011 = vmatpush1.bf16.msra.mxu0 0
        %4012 = vmatprep.subr.bf16.mxu0 0
        %4013 = vmatpush1.bf16.msra.mxu0 0
        %4014 = vmatprep.subr.bf16.mxu0 0
        %4015 = vmatpush1.bf16.msra.mxu0 0
        %4016 = vmatprep.subr.bf16.mxu0 0
        %4017 = vmatpush1.bf16.msra.mxu0 0
        %4018 = vmatprep.mubr.bf16.mxu0 0
        %4019 = vmatmul.mubr.bf16.gmra.mrb[0].mxu0 %v3981
        %v4020 = vpop.f32.mrb[0].mxu0
        %v4021 = vadd.f32 0.0, %v4020
        %v4022 = vpop.f32.mrb[0].mxu0
        %v4023 = vpop.f32.mrb[0].mxu0
        %v4024 = vpop.f32.mrb[0].mxu0
        %4025 = vdwg.mxu0
        %4026 = vrot.lane.b32.xlu0 %v3644, 96
        %v4027 = vpop.permute.xlu0 %4026
        %v4029 = vsel %vm2199, %v3977, 0
        %v4032 = vsel %vm2227, %v4027, 0
        %4034 = vmatprep.subr.bf16.mxu0 0
        %4035 = vmatpush1.bf16.msra.mxu0 %v4032
        %4036 = vmatprep.subr.bf16.mxu0 0
        %4037 = vmatpush1.bf16.msra.mxu0 0
        %4038 = vmatprep.subr.bf16.mxu0 0
        %4039 = vmatpush1.bf16.msra.mxu0 0
        %4040 = vmatprep.subr.bf16.mxu0 0
        %4041 = vmatpush1.bf16.msra.mxu0 0
        %4042 = vmatprep.subr.bf16.mxu0 0
        %4043 = vmatpush1.bf16.msra.mxu0 0
        %4044 = vmatprep.subr.bf16.mxu0 0
        %4045 = vmatpush1.bf16.msra.mxu0 0
        %4046 = vmatprep.subr.bf16.mxu0 0
        %4047 = vmatpush1.bf16.msra.mxu0 0
        %4048 = vmatprep.subr.bf16.mxu0 0
        %4049 = vmatpush1.bf16.msra.mxu0 0
        %4050 = vmatprep.subr.bf16.mxu0 0
        %4051 = vmatpush1.bf16.msra.mxu0 0
        %4052 = vmatprep.subr.bf16.mxu0 0
        %4053 = vmatpush1.bf16.msra.mxu0 0
        %4054 = vmatprep.subr.bf16.mxu0 0
        %4055 = vmatpush1.bf16.msra.mxu0 0
        %4056 = vmatprep.subr.bf16.mxu0 0
        %4057 = vmatpush1.bf16.msra.mxu0 0
        %4058 = vmatprep.subr.bf16.mxu0 0
        %4059 = vmatpush1.bf16.msra.mxu0 0
        %4060 = vmatprep.subr.bf16.mxu0 0
        %4061 = vmatpush1.bf16.msra.mxu0 0
        %4062 = vmatprep.subr.bf16.mxu0 0
        %4063 = vmatpush1.bf16.msra.mxu0 0
        %4064 = vmatprep.subr.bf16.mxu0 0
        %4065 = vmatpush1.bf16.msra.mxu0 0
        %4066 = vmatprep.mubr.bf16.mxu0 0
        %4067 = vmatmul.mubr.bf16.gmra.mrb[0].mxu0 %v4029
        %v4068 = vpop.f32.mrb[0].mxu0
        %v4069 = vadd.f32 0.0, %v4068
        %v4070 = vpop.f32.mrb[0].mxu0
        %v4071 = vpop.f32.mrb[0].mxu0
        %v4072 = vpop.f32.mrb[0].mxu0
        %4073 = vdwg.mxu0
        %v4074 = vpack.c.bf16 %v4069, %v4021
        %v4079 = vunpack.c.l.b16 %v3329
        %v4080 = vunpack.c.l.b16 %v3330
        %v4081 = vunpack.c.l.b16 %v3331
        %v4082 = vunpack.c.l.b16 %v3332
        %v4083 = vpack.c.b16 %v4080, %v4079
        %v4084 = vpack.c.b16 %v4082, %v4081
        %v4088 = vsel %vm2106, %v4074, 0
        %4090 = vmatprep.subr.bf16.mxu0 0
        %4091 = vmatpush1.bf16.msra.mxu0 %v4083
        %4092 = vmatprep.subr.bf16.mxu0 0
        %4093 = vmatpush1.bf16.msra.mxu0 %v4084
        %4094 = vmatprep.subr.bf16.mxu0 0
        %4095 = vmatpush1.bf16.msra.mxu0 0
        %4096 = vmatprep.subr.bf16.mxu0 0
        %4097 = vmatpush1.bf16.msra.mxu0 0
        %4098 = vmatprep.subr.bf16.mxu0 0
        %4099 = vmatpush1.bf16.msra.mxu0 0
        %4100 = vmatprep.subr.bf16.mxu0 0
        %4101 = vmatpush1.bf16.msra.mxu0 0
        %4102 = vmatprep.subr.bf16.mxu0 0
        %4103 = vmatpush1.bf16.msra.mxu0 0
        %4104 = vmatprep.subr.bf16.mxu0 0
        %4105 = vmatpush1.bf16.msra.mxu0 0
        %4106 = vmatprep.subr.bf16.mxu0 0
        %4107 = vmatpush1.bf16.msra.mxu0 0
        %4108 = vmatprep.subr.bf16.mxu0 0
        %4109 = vmatpush1.bf16.msra.mxu0 0
        %4110 = vmatprep.subr.bf16.mxu0 0
        %4111 = vmatpush1.bf16.msra.mxu0 0
        %4112 = vmatprep.subr.bf16.mxu0 0
        %4113 = vmatpush1.bf16.msra.mxu0 0
        %4114 = vmatprep.subr.bf16.mxu0 0
        %4115 = vmatpush1.bf16.msra.mxu0 0
        %4116 = vmatprep.subr.bf16.mxu0 0
        %4117 = vmatpush1.bf16.msra.mxu0 0
        %4118 = vmatprep.subr.bf16.mxu0 0
        %4119 = vmatpush1.bf16.msra.mxu0 0
        %4120 = vmatprep.subr.bf16.mxu0 0
        %4121 = vmatpush1.bf16.msra.mxu0 0
        %4122 = vmatprep.mubr.bf16.mxu0 0
        %4123 = vmatmul.mubr.bf16.gmra.mrb[0].mxu0 %v4088
        %v4124 = vpop.f32.mrb[0].mxu0
        %v4125 = vadd.f32 0.0, %v4124
        %v4126 = vpop.f32.mrb[0].mxu0
        %v4127 = vpop.f32.mrb[0].mxu0
        %v4128 = vadd.f32 0.0, %v4127
        %v4129 = vpop.f32.mrb[0].mxu0
        %4130 = vdwg.mxu0
        %v4135 = vunpack.c.l.b16 %v3325
        %v4136 = vunpack.c.l.b16 %v3326
        %v4137 = vunpack.c.l.b16 %v3327
        %v4138 = vunpack.c.l.b16 %v3328
        %v4139 = vpack.c.b16 %v4136, %v4135
        %v4140 = vpack.c.b16 %v4138, %v4137
        %v4144 = vsel %vm2106, %v3853, 0
        %4146 = vmatprep.subr.bf16.mxu0 0
        %4147 = vmatpush1.bf16.msra.mxu0 %v4139
        %4148 = vmatprep.subr.bf16.mxu0 0
        %4149 = vmatpush1.bf16.msra.mxu0 %v4140
        %4150 = vmatprep.subr.bf16.mxu0 0
        %4151 = vmatpush1.bf16.msra.mxu0 0
        %4152 = vmatprep.subr.bf16.mxu0 0
        %4153 = vmatpush1.bf16.msra.mxu0 0
        %4154 = vmatprep.subr.bf16.mxu0 0
        %4155 = vmatpush1.bf16.msra.mxu0 0
        %4156 = vmatprep.subr.bf16.mxu0 0
        %4157 = vmatpush1.bf16.msra.mxu0 0
        %4158 = vmatprep.subr.bf16.mxu0 0
        %4159 = vmatpush1.bf16.msra.mxu0 0
        %4160 = vmatprep.subr.bf16.mxu0 0
        %4161 = vmatpush1.bf16.msra.mxu0 0
        %4162 = vmatprep.subr.bf16.mxu0 0
        %4163 = vmatpush1.bf16.msra.mxu0 0
        %4164 = vmatprep.subr.bf16.mxu0 0
        %4165 = vmatpush1.bf16.msra.mxu0 0
        %4166 = vmatprep.subr.bf16.mxu0 0
        %4167 = vmatpush1.bf16.msra.mxu0 0
        %4168 = vmatprep.subr.bf16.mxu0 0
        %4169 = vmatpush1.bf16.msra.mxu0 0
        %4170 = vmatprep.subr.bf16.mxu0 0
        %4171 = vmatpush1.bf16.msra.mxu0 0
        %4172 = vmatprep.subr.bf16.mxu0 0
        %4173 = vmatpush1.bf16.msra.mxu0 0
        %4174 = vmatprep.subr.bf16.mxu0 0
        %4175 = vmatpush1.bf16.msra.mxu0 0
        %4176 = vmatprep.subr.bf16.mxu0 0
        %4177 = vmatpush1.bf16.msra.mxu0 0
        %4178 = vmatprep.mubr.bf16.mxu0 0
        %4179 = vmatmul.mubr.bf16.gmra.mrb[0].mxu0 %v4144
        %v4180 = vpop.f32.mrb[0].mxu0
        %v4181 = vadd.f32 %v4125, %v4180
        %v4182 = vpop.f32.mrb[0].mxu0
        %v4183 = vpop.f32.mrb[0].mxu0
        %v4184 = vadd.f32 %v4128, %v4183
        %v4185 = vpop.f32.mrb[0].mxu0
        %4186 = vdwg.mxu0
        %4187 = vrot.lane.b32.xlu0 %v3631, 64
        %v4188 = vpop.permute.xlu0 %4187
        %4189 = vrot.lane.b32.xlu0 %v3637, 64
        %v4190 = vpop.permute.xlu0 %4189
        %v4192 = vsel %vm2106, %v4188, 0
        %v4195 = vsel %vm2106, %v4190, 0
        %4197 = vmatprep.subr.bf16.mxu0 0
        %4198 = vmatpush1.bf16.xpose.msra.mxu0 %v4195
        %4199 = vmatprep.subr.bf16.mxu0 0
        %4200 = vmatpush1.bf16.xpose.msra.mxu0 0
        %4201 = vmatprep.subr.bf16.mxu0 0
        %4202 = vmatpush1.bf16.xpose.msra.mxu0 0
        %4203 = vmatprep.subr.bf16.mxu0 0
        %4204 = vmatpush1.bf16.xpose.msra.mxu0 0
        %4205 = vmatprep.subr.bf16.mxu0 0
        %4206 = vmatpush1.bf16.xpose.msra.mxu0 0
        %4207 = vmatprep.subr.bf16.mxu0 0
        %4208 = vmatpush1.bf16.xpose.msra.mxu0 0
        %4209 = vmatprep.subr.bf16.mxu0 0
        %4210 = vmatpush1.bf16.xpose.msra.mxu0 0
        %4211 = vmatprep.subr.bf16.mxu0 0
        %4212 = vmatpush1.bf16.xpose.msra.mxu0 0
        %4213 = vmatprep.subr.bf16.mxu0 0
        %4214 = vmatpush1.bf16.xpose.msra.mxu0 0
        %4215 = vmatprep.subr.bf16.mxu0 0
        %4216 = vmatpush1.bf16.xpose.msra.mxu0 0
        %4217 = vmatprep.subr.bf16.mxu0 0
        %4218 = vmatpush1.bf16.xpose.msra.mxu0 0
        %4219 = vmatprep.subr.bf16.mxu0 0
        %4220 = vmatpush1.bf16.xpose.msra.mxu0 0
        %4221 = vmatprep.subr.bf16.mxu0 0
        %4222 = vmatpush1.bf16.xpose.msra.mxu0 0
        %4223 = vmatprep.subr.bf16.mxu0 0
        %4224 = vmatpush1.bf16.xpose.msra.mxu0 0
        %4225 = vmatprep.subr.bf16.mxu0 0
        %4226 = vmatpush1.bf16.xpose.msra.mxu0 0
        %4227 = vmatprep.subr.bf16.mxu0 0
        %4228 = vmatpush1.bf16.xpose.msra.mxu0 0
        %4229 = vmatprep.mubr.bf16.mxu0 0
        %4230 = vmatmul.mubr.bf16.gmra.mrb[0].mxu0 %v4192
        %v4231 = vpop.f32.mrb[0].mxu0
        %v4232 = vadd.f32 %v1678, %v4231
        %v4233 = vpop.f32.mrb[0].mxu0
        %v4234 = vpop.f32.mrb[0].mxu0
        %v4235 = vpop.f32.mrb[0].mxu0
        %4236 = vdwg.mxu0
        %4237 = vrot.lane.b32.xlu0 %v3632, 64
        %v4238 = vpop.permute.xlu0 %4237
        %4239 = vrot.lane.b32.xlu0 %v3638, 64
        %v4240 = vpop.permute.xlu0 %4239
        %v4242 = vsel %vm2106, %v4238, 0
        %v4245 = vsel %vm2106, %v4240, 0
        %4247 = vmatprep.subr.bf16.mxu0 0
        %4248 = vmatpush1.bf16.xpose.msra.mxu0 %v4245
        %4249 = vmatprep.subr.bf16.mxu0 0
        %4250 = vmatpush1.bf16.xpose.msra.mxu0 0
        %4251 = vmatprep.subr.bf16.mxu0 0
        %4252 = vmatpush1.bf16.xpose.msra.mxu0 0
        %4253 = vmatprep.subr.bf16.mxu0 0
        %4254 = vmatpush1.bf16.xpose.msra.mxu0 0
        %4255 = vmatprep.subr.bf16.mxu0 0
        %4256 = vmatpush1.bf16.xpose.msra.mxu0 0
        %4257 = vmatprep.subr.bf16.mxu0 0
        %4258 = vmatpush1.bf16.xpose.msra.mxu0 0
        %4259 = vmatprep.subr.bf16.mxu0 0
        %4260 = vmatpush1.bf16.xpose.msra.mxu0 0
        %4261 = vmatprep.subr.bf16.mxu0 0
        %4262 = vmatpush1.bf16.xpose.msra.mxu0 0
        %4263 = vmatprep.subr.bf16.mxu0 0
        %4264 = vmatpush1.bf16.xpose.msra.mxu0 0
        %4265 = vmatprep.subr.bf16.mxu0 0
        %4266 = vmatpush1.bf16.xpose.msra.mxu0 0
        %4267 = vmatprep.subr.bf16.mxu0 0
        %4268 = vmatpush1.bf16.xpose.msra.mxu0 0
        %4269 = vmatprep.subr.bf16.mxu0 0
        %4270 = vmatpush1.bf16.xpose.msra.mxu0 0
        %4271 = vmatprep.subr.bf16.mxu0 0
        %4272 = vmatpush1.bf16.xpose.msra.mxu0 0
        %4273 = vmatprep.subr.bf16.mxu0 0
        %4274 = vmatpush1.bf16.xpose.msra.mxu0 0
        %4275 = vmatprep.subr.bf16.mxu0 0
        %4276 = vmatpush1.bf16.xpose.msra.mxu0 0
        %4277 = vmatprep.subr.bf16.mxu0 0
        %4278 = vmatpush1.bf16.xpose.msra.mxu0 0
        %4279 = vmatprep.mubr.bf16.mxu0 0
        %4280 = vmatmul.mubr.bf16.gmra.mrb[0].mxu0 %v4242
        %v4281 = vpop.f32.mrb[0].mxu0
        %v4282 = vadd.f32 %v1678, %v4281
        %v4283 = vpop.f32.mrb[0].mxu0
        %v4284 = vpop.f32.mrb[0].mxu0
        %v4285 = vpop.f32.mrb[0].mxu0
        %4286 = vdwg.mxu0
        %v4287 = vsel %vm2199, %v4232, -inf
        %4288 = vmax.xlane.f32.xlu0 %v4287
        %v4289 = vpop.xlane.xlu0 %4288
        %v4290 = vsel %vm2199, %v4282, -inf
        %4291 = vmax.xlane.f32.xlu0 %v4290
        %v4292 = vpop.xlane.xlu0 %4291
        %v4293 = vsub.f32 %v4232, %v4289
        %v4294 = vsub.f32 %v4282, %v4292
        %v4295 = vmul.f32 %v4293, 1.442695
        %v4296 = vpow.pop %v4295
        %v4297 = vmul.f32 %v4294, 1.442695
        %v4298 = vpow.pop %v4297
        %v4299 = vsel %vm2199, %v4296, 0.0
        %4300 = vadd.xlane.f32.xlu0 %v4299
        %v4301 = vpop.xlane.xlu0 %4300
        %v4302 = vsel %vm2199, %v4298, 0.0
        %4303 = vadd.xlane.f32.xlu0 %v4302
        %v4304 = vpop.xlane.xlu0 %4303
        %v4305 = vrcp.pop %v4301
        %v4306 = vrcp.pop %v4304
        %v4307 = vmul.f32 %v4296, %v4305
        %v4308 = vmul.f32 %v4298, %v4306
        %v4309 = vpack.c.bf16 %v4307, %v4307
        %v4310 = vpack.c.bf16 %v4308, %v4308
        %4311 = vrot.lane.b32.xlu0 %v3643, 64
        %v4312 = vpop.permute.xlu0 %4311
        %v4314 = vsel %vm2199, %v4309, 0
        %v4317 = vsel %vm2227, %v4312, 0
        %4319 = vmatprep.subr.bf16.mxu0 0
        %4320 = vmatpush1.bf16.msra.mxu0 %v4317
        %4321 = vmatprep.subr.bf16.mxu0 0
        %4322 = vmatpush1.bf16.msra.mxu0 0
        %4323 = vmatprep.subr.bf16.mxu0 0
        %4324 = vmatpush1.bf16.msra.mxu0 0
        %4325 = vmatprep.subr.bf16.mxu0 0
        %4326 = vmatpush1.bf16.msra.mxu0 0
        %4327 = vmatprep.subr.bf16.mxu0 0
        %4328 = vmatpush1.bf16.msra.mxu0 0
        %4329 = vmatprep.subr.bf16.mxu0 0
        %4330 = vmatpush1.bf16.msra.mxu0 0
        %4331 = vmatprep.subr.bf16.mxu0 0
        %4332 = vmatpush1.bf16.msra.mxu0 0
        %4333 = vmatprep.subr.bf16.mxu0 0
        %4334 = vmatpush1.bf16.msra.mxu0 0
        %4335 = vmatprep.subr.bf16.mxu0 0
        %4336 = vmatpush1.bf16.msra.mxu0 0
        %4337 = vmatprep.subr.bf16.mxu0 0
        %4338 = vmatpush1.bf16.msra.mxu0 0
        %4339 = vmatprep.subr.bf16.mxu0 0
        %4340 = vmatpush1.bf16.msra.mxu0 0
        %4341 = vmatprep.subr.bf16.mxu0 0
        %4342 = vmatpush1.bf16.msra.mxu0 0
        %4343 = vmatprep.subr.bf16.mxu0 0
        %4344 = vmatpush1.bf16.msra.mxu0 0
        %4345 = vmatprep.subr.bf16.mxu0 0
        %4346 = vmatpush1.bf16.msra.mxu0 0
        %4347 = vmatprep.subr.bf16.mxu0 0
        %4348 = vmatpush1.bf16.msra.mxu0 0
        %4349 = vmatprep.subr.bf16.mxu0 0
        %4350 = vmatpush1.bf16.msra.mxu0 0
        %4351 = vmatprep.mubr.bf16.mxu0 0
        %4352 = vmatmul.mubr.bf16.gmra.mrb[0].mxu0 %v4314
        %v4353 = vpop.f32.mrb[0].mxu0
        %v4354 = vadd.f32 0.0, %v4353
        %v4355 = vpop.f32.mrb[0].mxu0
        %v4356 = vpop.f32.mrb[0].mxu0
        %v4357 = vpop.f32.mrb[0].mxu0
        %4358 = vdwg.mxu0
        %4359 = vrot.lane.b32.xlu0 %v3644, 64
        %v4360 = vpop.permute.xlu0 %4359
        %v4362 = vsel %vm2199, %v4310, 0
        %v4365 = vsel %vm2227, %v4360, 0
        %4367 = vmatprep.subr.bf16.mxu0 0
        %4368 = vmatpush1.bf16.msra.mxu0 %v4365
        %4369 = vmatprep.subr.bf16.mxu0 0
        %4370 = vmatpush1.bf16.msra.mxu0 0
        %4371 = vmatprep.subr.bf16.mxu0 0
        %4372 = vmatpush1.bf16.msra.mxu0 0
        %4373 = vmatprep.subr.bf16.mxu0 0
        %4374 = vmatpush1.bf16.msra.mxu0 0
        %4375 = vmatprep.subr.bf16.mxu0 0
        %4376 = vmatpush1.bf16.msra.mxu0 0
        %4377 = vmatprep.subr.bf16.mxu0 0
        %4378 = vmatpush1.bf16.msra.mxu0 0
        %4379 = vmatprep.subr.bf16.mxu0 0
        %4380 = vmatpush1.bf16.msra.mxu0 0
        %4381 = vmatprep.subr.bf16.mxu0 0
        %4382 = vmatpush1.bf16.msra.mxu0 0
        %4383 = vmatprep.subr.bf16.mxu0 0
        %4384 = vmatpush1.bf16.msra.mxu0 0
        %4385 = vmatprep.subr.bf16.mxu0 0
        %4386 = vmatpush1.bf16.msra.mxu0 0
        %4387 = vmatprep.subr.bf16.mxu0 0
        %4388 = vmatpush1.bf16.msra.mxu0 0
        %4389 = vmatprep.subr.bf16.mxu0 0
        %4390 = vmatpush1.bf16.msra.mxu0 0
        %4391 = vmatprep.subr.bf16.mxu0 0
        %4392 = vmatpush1.bf16.msra.mxu0 0
        %4393 = vmatprep.subr.bf16.mxu0 0
        %4394 = vmatpush1.bf16.msra.mxu0 0
        %4395 = vmatprep.subr.bf16.mxu0 0
        %4396 = vmatpush1.bf16.msra.mxu0 0
        %4397 = vmatprep.subr.bf16.mxu0 0
        %4398 = vmatpush1.bf16.msra.mxu0 0
        %4399 = vmatprep.mubr.bf16.mxu0 0
        %4400 = vmatmul.mubr.bf16.gmra.mrb[0].mxu0 %v4362
        %v4401 = vpop.f32.mrb[0].mxu0
        %v4402 = vadd.f32 0.0, %v4401
        %v4403 = vpop.f32.mrb[0].mxu0
        %v4404 = vpop.f32.mrb[0].mxu0
        %v4405 = vpop.f32.mrb[0].mxu0
        %4406 = vdwg.mxu0
        %v4407 = vpack.c.bf16 %v4402, %v4354
        %v4412 = vunpack.c.l.b16 %v3333
        %v4413 = vunpack.c.l.b16 %v3334
        %v4414 = vunpack.c.l.b16 %v3335
        %v4415 = vunpack.c.l.b16 %v3336
        %v4416 = vpack.c.b16 %v4413, %v4412
        %v4417 = vpack.c.b16 %v4415, %v4414
        %v4421 = vsel %vm2106, %v4407, 0
        %4423 = vmatprep.subr.bf16.mxu0 0
        %4424 = vmatpush1.bf16.msra.mxu0 %v4416
        %4425 = vmatprep.subr.bf16.mxu0 0
        %4426 = vmatpush1.bf16.msra.mxu0 %v4417
        %4427 = vmatprep.subr.bf16.mxu0 0
        %4428 = vmatpush1.bf16.msra.mxu0 0
        %4429 = vmatprep.subr.bf16.mxu0 0
        %4430 = vmatpush1.bf16.msra.mxu0 0
        %4431 = vmatprep.subr.bf16.mxu0 0
        %4432 = vmatpush1.bf16.msra.mxu0 0
        %4433 = vmatprep.subr.bf16.mxu0 0
        %4434 = vmatpush1.bf16.msra.mxu0 0
        %4435 = vmatprep.subr.bf16.mxu0 0
        %4436 = vmatpush1.bf16.msra.mxu0 0
        %4437 = vmatprep.subr.bf16.mxu0 0
        %4438 = vmatpush1.bf16.msra.mxu0 0
        %4439 = vmatprep.subr.bf16.mxu0 0
        %4440 = vmatpush1.bf16.msra.mxu0 0
        %4441 = vmatprep.subr.bf16.mxu0 0
        %4442 = vmatpush1.bf16.msra.mxu0 0
        %4443 = vmatprep.subr.bf16.mxu0 0
        %4444 = vmatpush1.bf16.msra.mxu0 0
        %4445 = vmatprep.subr.bf16.mxu0 0
        %4446 = vmatpush1.bf16.msra.mxu0 0
        %4447 = vmatprep.subr.bf16.mxu0 0
        %4448 = vmatpush1.bf16.msra.mxu0 0
        %4449 = vmatprep.subr.bf16.mxu0 0
        %4450 = vmatpush1.bf16.msra.mxu0 0
        %4451 = vmatprep.subr.bf16.mxu0 0
        %4452 = vmatpush1.bf16.msra.mxu0 0
        %4453 = vmatprep.subr.bf16.mxu0 0
        %4454 = vmatpush1.bf16.msra.mxu0 0
        %4455 = vmatprep.mubr.bf16.mxu0 0
        %4456 = vmatmul.mubr.bf16.gmra.mrb[0].mxu0 %v4421
        %v4457 = vpop.f32.mrb[0].mxu0
        %v4458 = vadd.f32 0.0, %v4457
        %v4459 = vpop.f32.mrb[0].mxu0
        %v4460 = vpop.f32.mrb[0].mxu0
        %v4461 = vadd.f32 0.0, %v4460
        %v4462 = vpop.f32.mrb[0].mxu0
        %4463 = vdwg.mxu0
        %v4464 = vadd.f32 %v4181, %v4458
        %v4465 = vadd.f32 %v4184, %v4461
        %4466 = vrot.lane.b32.xlu0 %v3631, 32
        %v4467 = vpop.permute.xlu0 %4466
        %4468 = vrot.lane.b32.xlu0 %v3637, 32
        %v4469 = vpop.permute.xlu0 %4468
        %v4471 = vsel %vm2106, %v4467, 0
        %v4474 = vsel %vm2106, %v4469, 0
        %4476 = vmatprep.subr.bf16.mxu0 0
        %4477 = vmatpush1.bf16.xpose.msra.mxu0 %v4474
        %4478 = vmatprep.subr.bf16.mxu0 0
        %4479 = vmatpush1.bf16.xpose.msra.mxu0 0
        %4480 = vmatprep.subr.bf16.mxu0 0
        %4481 = vmatpush1.bf16.xpose.msra.mxu0 0
        %4482 = vmatprep.subr.bf16.mxu0 0
        %4483 = vmatpush1.bf16.xpose.msra.mxu0 0
        %4484 = vmatprep.subr.bf16.mxu0 0
        %4485 = vmatpush1.bf16.xpose.msra.mxu0 0
        %4486 = vmatprep.subr.bf16.mxu0 0
        %4487 = vmatpush1.bf16.xpose.msra.mxu0 0
        %4488 = vmatprep.subr.bf16.mxu0 0
        %4489 = vmatpush1.bf16.xpose.msra.mxu0 0
        %4490 = vmatprep.subr.bf16.mxu0 0
        %4491 = vmatpush1.bf16.xpose.msra.mxu0 0
        %4492 = vmatprep.subr.bf16.mxu0 0
        %4493 = vmatpush1.bf16.xpose.msra.mxu0 0
        %4494 = vmatprep.subr.bf16.mxu0 0
        %4495 = vmatpush1.bf16.xpose.msra.mxu0 0
        %4496 = vmatprep.subr.bf16.mxu0 0
        %4497 = vmatpush1.bf16.xpose.msra.mxu0 0
        %4498 = vmatprep.subr.bf16.mxu0 0
        %4499 = vmatpush1.bf16.xpose.msra.mxu0 0
        %4500 = vmatprep.subr.bf16.mxu0 0
        %4501 = vmatpush1.bf16.xpose.msra.mxu0 0
        %4502 = vmatprep.subr.bf16.mxu0 0
        %4503 = vmatpush1.bf16.xpose.msra.mxu0 0
        %4504 = vmatprep.subr.bf16.mxu0 0
        %4505 = vmatpush1.bf16.xpose.msra.mxu0 0
        %4506 = vmatprep.subr.bf16.mxu0 0
        %4507 = vmatpush1.bf16.xpose.msra.mxu0 0
        %4508 = vmatprep.mubr.bf16.mxu0 0
        %4509 = vmatmul.mubr.bf16.gmra.mrb[0].mxu0 %v4471
        %v4510 = vpop.f32.mrb[0].mxu0
        %v4511 = vadd.f32 %v1678, %v4510
        %v4512 = vpop.f32.mrb[0].mxu0
        %v4513 = vpop.f32.mrb[0].mxu0
        %v4514 = vpop.f32.mrb[0].mxu0
        %4515 = vdwg.mxu0
        %4516 = vrot.lane.b32.xlu0 %v3632, 32
        %v4517 = vpop.permute.xlu0 %4516
        %4518 = vrot.lane.b32.xlu0 %v3638, 32
        %v4519 = vpop.permute.xlu0 %4518
        %v4521 = vsel %vm2106, %v4517, 0
        %v4524 = vsel %vm2106, %v4519, 0
        %4526 = vmatprep.subr.bf16.mxu0 0
        %4527 = vmatpush1.bf16.xpose.msra.mxu0 %v4524
        %4528 = vmatprep.subr.bf16.mxu0 0
        %4529 = vmatpush1.bf16.xpose.msra.mxu0 0
        %4530 = vmatprep.subr.bf16.mxu0 0
        %4531 = vmatpush1.bf16.xpose.msra.mxu0 0
        %4532 = vmatprep.subr.bf16.mxu0 0
        %4533 = vmatpush1.bf16.xpose.msra.mxu0 0
        %4534 = vmatprep.subr.bf16.mxu0 0
        %4535 = vmatpush1.bf16.xpose.msra.mxu0 0
        %4536 = vmatprep.subr.bf16.mxu0 0
        %4537 = vmatpush1.bf16.xpose.msra.mxu0 0
        %4538 = vmatprep.subr.bf16.mxu0 0
        %4539 = vmatpush1.bf16.xpose.msra.mxu0 0
        %4540 = vmatprep.subr.bf16.mxu0 0
        %4541 = vmatpush1.bf16.xpose.msra.mxu0 0
        %4542 = vmatprep.subr.bf16.mxu0 0
        %4543 = vmatpush1.bf16.xpose.msra.mxu0 0
        %4544 = vmatprep.subr.bf16.mxu0 0
        %4545 = vmatpush1.bf16.xpose.msra.mxu0 0
        %4546 = vmatprep.subr.bf16.mxu0 0
        %4547 = vmatpush1.bf16.xpose.msra.mxu0 0
        %4548 = vmatprep.subr.bf16.mxu0 0
        %4549 = vmatpush1.bf16.xpose.msra.mxu0 0
        %4550 = vmatprep.subr.bf16.mxu0 0
        %4551 = vmatpush1.bf16.xpose.msra.mxu0 0
        %4552 = vmatprep.subr.bf16.mxu0 0
        %4553 = vmatpush1.bf16.xpose.msra.mxu0 0
        %4554 = vmatprep.subr.bf16.mxu0 0
        %4555 = vmatpush1.bf16.xpose.msra.mxu0 0
        %4556 = vmatprep.subr.bf16.mxu0 0
        %4557 = vmatpush1.bf16.xpose.msra.mxu0 0
        %4558 = vmatprep.mubr.bf16.mxu0 0
        %4559 = vmatmul.mubr.bf16.gmra.mrb[0].mxu0 %v4521
        %v4560 = vpop.f32.mrb[0].mxu0
        %v4561 = vadd.f32 %v1678, %v4560
        %v4562 = vpop.f32.mrb[0].mxu0
        %v4563 = vpop.f32.mrb[0].mxu0
        %v4564 = vpop.f32.mrb[0].mxu0
        %4565 = vdwg.mxu0
        %v4566 = vsel %vm2199, %v4511, -inf
        %4567 = vmax.xlane.f32.xlu0 %v4566
        %v4568 = vpop.xlane.xlu0 %4567
        %v4569 = vsel %vm2199, %v4561, -inf
        %4570 = vmax.xlane.f32.xlu0 %v4569
        %v4571 = vpop.xlane.xlu0 %4570
        %v4572 = vsub.f32 %v4511, %v4568
        %v4573 = vsub.f32 %v4561, %v4571
        %v4574 = vmul.f32 %v4572, 1.442695
        %v4575 = vpow.pop %v4574
        %v4576 = vmul.f32 %v4573, 1.442695
        %v4577 = vpow.pop %v4576
        %v4578 = vsel %vm2199, %v4575, 0.0
        %4579 = vadd.xlane.f32.xlu0 %v4578
        %v4580 = vpop.xlane.xlu0 %4579
        %v4581 = vsel %vm2199, %v4577, 0.0
        %4582 = vadd.xlane.f32.xlu0 %v4581
        %v4583 = vpop.xlane.xlu0 %4582
        %v4584 = vrcp.pop %v4580
        %v4585 = vrcp.pop %v4583
        %v4586 = vmul.f32 %v4575, %v4584
        %v4587 = vmul.f32 %v4577, %v4585
        %v4588 = vpack.c.bf16 %v4586, %v4586
        %v4589 = vpack.c.bf16 %v4587, %v4587
        %4590 = vrot.lane.b32.xlu0 %v3643, 32
        %v4591 = vpop.permute.xlu0 %4590
        %v4593 = vsel %vm2199, %v4588, 0
        %v4596 = vsel %vm2227, %v4591, 0
        %4598 = vmatprep.subr.bf16.mxu0 0
        %4599 = vmatpush1.bf16.msra.mxu0 %v4596
        %4600 = vmatprep.subr.bf16.mxu0 0
        %4601 = vmatpush1.bf16.msra.mxu0 0
        %4602 = vmatprep.subr.bf16.mxu0 0
        %4603 = vmatpush1.bf16.msra.mxu0 0
        %4604 = vmatprep.subr.bf16.mxu0 0
        %4605 = vmatpush1.bf16.msra.mxu0 0
        %4606 = vmatprep.subr.bf16.mxu0 0
        %4607 = vmatpush1.bf16.msra.mxu0 0
        %4608 = vmatprep.subr.bf16.mxu0 0
        %4609 = vmatpush1.bf16.msra.mxu0 0
        %4610 = vmatprep.subr.bf16.mxu0 0
        %4611 = vmatpush1.bf16.msra.mxu0 0
        %4612 = vmatprep.subr.bf16.mxu0 0
        %4613 = vmatpush1.bf16.msra.mxu0 0
        %4614 = vmatprep.subr.bf16.mxu0 0
        %4615 = vmatpush1.bf16.msra.mxu0 0
        %4616 = vmatprep.subr.bf16.mxu0 0
        %4617 = vmatpush1.bf16.msra.mxu0 0
        %4618 = vmatprep.subr.bf16.mxu0 0
        %4619 = vmatpush1.bf16.msra.mxu0 0
        %4620 = vmatprep.subr.bf16.mxu0 0
        %4621 = vmatpush1.bf16.msra.mxu0 0
        %4622 = vmatprep.subr.bf16.mxu0 0
        %4623 = vmatpush1.bf16.msra.mxu0 0
        %4624 = vmatprep.subr.bf16.mxu0 0
        %4625 = vmatpush1.bf16.msra.mxu0 0
        %4626 = vmatprep.subr.bf16.mxu0 0
        %4627 = vmatpush1.bf16.msra.mxu0 0
        %4628 = vmatprep.subr.bf16.mxu0 0
        %4629 = vmatpush1.bf16.msra.mxu0 0
        %4630 = vmatprep.mubr.bf16.mxu0 0
        %4631 = vmatmul.mubr.bf16.gmra.mrb[0].mxu0 %v4593
        %v4632 = vpop.f32.mrb[0].mxu0
        %v4633 = vadd.f32 0.0, %v4632
        %v4634 = vpop.f32.mrb[0].mxu0
        %v4635 = vpop.f32.mrb[0].mxu0
        %v4636 = vpop.f32.mrb[0].mxu0
        %4637 = vdwg.mxu0
        %4638 = vrot.lane.b32.xlu0 %v3644, 32
        %v4639 = vpop.permute.xlu0 %4638
        %v4641 = vsel %vm2199, %v4589, 0
        %v4644 = vsel %vm2227, %v4639, 0
        %4646 = vmatprep.subr.bf16.mxu0 0
        %4647 = vmatpush1.bf16.msra.mxu0 %v4644
        %4648 = vmatprep.subr.bf16.mxu0 0
        %4649 = vmatpush1.bf16.msra.mxu0 0
        %4650 = vmatprep.subr.bf16.mxu0 0
        %4651 = vmatpush1.bf16.msra.mxu0 0
        %4652 = vmatprep.subr.bf16.mxu0 0
        %4653 = vmatpush1.bf16.msra.mxu0 0
        %4654 = vmatprep.subr.bf16.mxu0 0
        %4655 = vmatpush1.bf16.msra.mxu0 0
        %4656 = vmatprep.subr.bf16.mxu0 0
        %4657 = vmatpush1.bf16.msra.mxu0 0
        %4658 = vmatprep.subr.bf16.mxu0 0
        %4659 = vmatpush1.bf16.msra.mxu0 0
        %4660 = vmatprep.subr.bf16.mxu0 0
        %4661 = vmatpush1.bf16.msra.mxu0 0
        %4662 = vmatprep.subr.bf16.mxu0 0
        %4663 = vmatpush1.bf16.msra.mxu0 0
        %4664 = vmatprep.subr.bf16.mxu0 0
        %4665 = vmatpush1.bf16.msra.mxu0 0
        %4666 = vmatprep.subr.bf16.mxu0 0
        %4667 = vmatpush1.bf16.msra.mxu0 0
        %4668 = vmatprep.subr.bf16.mxu0 0
        %4669 = vmatpush1.bf16.msra.mxu0 0
        %4670 = vmatprep.subr.bf16.mxu0 0
        %4671 = vmatpush1.bf16.msra.mxu0 0
        %4672 = vmatprep.subr.bf16.mxu0 0
        %4673 = vmatpush1.bf16.msra.mxu0 0
        %4674 = vmatprep.subr.bf16.mxu0 0
        %4675 = vmatpush1.bf16.msra.mxu0 0
        %4676 = vmatprep.subr.bf16.mxu0 0
        %4677 = vmatpush1.bf16.msra.mxu0 0
        %4678 = vmatprep.mubr.bf16.mxu0 0
        %4679 = vmatmul.mubr.bf16.gmra.mrb[0].mxu0 %v4641
        %v4680 = vpop.f32.mrb[0].mxu0
        %v4681 = vadd.f32 0.0, %v4680
        %v4682 = vpop.f32.mrb[0].mxu0
        %v4683 = vpop.f32.mrb[0].mxu0
        %v4684 = vpop.f32.mrb[0].mxu0
        %4685 = vdwg.mxu0
        %v4686 = vpack.c.bf16 %v4681, %v4633
        %v4691 = vunpack.c.l.b16 %v3337
        %v4692 = vunpack.c.l.b16 %v3338
        %v4693 = vunpack.c.l.b16 %v3339
        %v4694 = vunpack.c.l.b16 %v3340
        %v4695 = vpack.c.b16 %v4692, %v4691
        %v4696 = vpack.c.b16 %v4694, %v4693
        %v4700 = vsel %vm2106, %v4686, 0
        %4702 = vmatprep.subr.bf16.mxu0 0
        %4703 = vmatpush1.bf16.msra.mxu0 %v4695
        %4704 = vmatprep.subr.bf16.mxu0 0
        %4705 = vmatpush1.bf16.msra.mxu0 %v4696
        %4706 = vmatprep.subr.bf16.mxu0 0
        %4707 = vmatpush1.bf16.msra.mxu0 0
        %4708 = vmatprep.subr.bf16.mxu0 0
        %4709 = vmatpush1.bf16.msra.mxu0 0
        %4710 = vmatprep.subr.bf16.mxu0 0
        %4711 = vmatpush1.bf16.msra.mxu0 0
        %4712 = vmatprep.subr.bf16.mxu0 0
        %4713 = vmatpush1.bf16.msra.mxu0 0
        %4714 = vmatprep.subr.bf16.mxu0 0
        %4715 = vmatpush1.bf16.msra.mxu0 0
        %4716 = vmatprep.subr.bf16.mxu0 0
        %4717 = vmatpush1.bf16.msra.mxu0 0
        %4718 = vmatprep.subr.bf16.mxu0 0
        %4719 = vmatpush1.bf16.msra.mxu0 0
        %4720 = vmatprep.subr.bf16.mxu0 0
        %4721 = vmatpush1.bf16.msra.mxu0 0
        %4722 = vmatprep.subr.bf16.mxu0 0
        %4723 = vmatpush1.bf16.msra.mxu0 0
        %4724 = vmatprep.subr.bf16.mxu0 0
        %4725 = vmatpush1.bf16.msra.mxu0 0
        %4726 = vmatprep.subr.bf16.mxu0 0
        %4727 = vmatpush1.bf16.msra.mxu0 0
        %4728 = vmatprep.subr.bf16.mxu0 0
        %4729 = vmatpush1.bf16.msra.mxu0 0
        %4730 = vmatprep.subr.bf16.mxu0 0
        %4731 = vmatpush1.bf16.msra.mxu0 0
        %4732 = vmatprep.subr.bf16.mxu0 0
        %4733 = vmatpush1.bf16.msra.mxu0 0
        %4734 = vmatprep.mubr.bf16.mxu0 0
        %4735 = vmatmul.mubr.bf16.gmra.mrb[0].mxu0 %v4700
        %v4736 = vpop.f32.mrb[0].mxu0
        %v4737 = vadd.f32 0.0, %v4736
        %v4738 = vpop.f32.mrb[0].mxu0
        %v4739 = vpop.f32.mrb[0].mxu0
        %v4740 = vadd.f32 0.0, %v4739
        %v4741 = vpop.f32.mrb[0].mxu0
        %4742 = vdwg.mxu0
        %v4743 = vadd.f32 %v4464, %v4737
        %v4744 = vadd.f32 %v4465, %v4740
        %v4746 = vlaneseq
        %v4747 = vshrl.u32 %v4746, 7
        %v4748 = vsub.s32 0, %v4747
        %v4749 = vrot.slane %v3341, %v4748
        %v4751 = vadd.f32 %v4743, %v4749
        %v4752 = vadd.f32 %v4744, %v4749
        %v4753 = vadd.f32 %v3217, %v4751
        %v4754 = vadd.f32 %v3218, %v4752
        %v4755 = vld [vmem:[%s1651] sm:$0x1]
        %v4756 = vld [vmem:[%s1654] sm:$0x1]
        %4757 = vadd.xlane.f32.xlu0 %v4753
        %v4758 = vpop.xlane.xlu0 %4757
        %4759 = vadd.xlane.f32.xlu0 %v4754
        %v4760 = vpop.xlane.xlu0 %4759
        %v4761 = vmul.f32 %v4758, %v1685
        %v4762 = vmul.f32 %v4760, %v1685
        %v4763 = vsub.f32 %v4753, %v4761
        %v4764 = vsub.f32 %v4754, %v4762
        %v4765 = vmul.f32 %v4763, %v4763
        %v4766 = vmul.f32 %v4764, %v4764
        %4767 = vadd.xlane.f32.xlu0 %v4765
        %v4768 = vpop.xlane.xlu0 %4767
        %4769 = vadd.xlane.f32.xlu0 %v4766
        %v4770 = vpop.xlane.xlu0 %4769
        %v4771 = vmul.f32 %v4768, 0.007874016
        %v4772 = vmul.f32 %v4770, 0.007874016
        %v4773 = vrsqrt.pop %v4771
        %v4774 = vmul.f32 %v4771, %v4773
        %vm4775 = vcmp.eq.f32.partialorder %v4771, inf
        %v4776 = vsel %vm4775, %v4771, %v4774
        %vm4777 = vcmp.eq.f32.partialorder %v4771, 0.0
        %v4778 = vand.u32 %v4771, 2147483648
        %v4779 = vsel %vm4777, %v4778, %v4776
        %v4780 = vrsqrt.pop %v4772
        %v4781 = vmul.f32 %v4772, %v4780
        %vm4782 = vcmp.eq.f32.partialorder %v4772, inf
        %v4783 = vsel %vm4782, %v4772, %v4781
        %vm4784 = vcmp.eq.f32.partialorder %v4772, 0.0
        %v4785 = vand.u32 %v4772, 2147483648
        %v4786 = vsel %vm4784, %v4785, %v4783
        %v4787 = vadd.f32 %v4779, 1e-06
        %v4788 = vadd.f32 %v4786, 1e-06
        %v4789 = vrcp.pop %v4787
        %v4790 = vrcp.pop %v4788
        %v4791 = vmul.f32 %v4763, %v4789
        %v4792 = vmul.f32 %v4764, %v4790
        %v4794 = vlaneseq
        %v4795 = vshrl.u32 %v4794, 7
        %v4796 = vsub.s32 0, %v4795
        %v4797 = vrot.slane %v4755, %v4796
        %v4799 = vmul.f32 %v4797, %v4791
        %v4800 = vmul.f32 %v4797, %v4792
        %v4802 = vlaneseq
        %v4803 = vshrl.u32 %v4802, 7
        %v4804 = vsub.s32 0, %v4803
        %v4805 = vrot.slane %v4756, %v4804
        %v4807 = vadd.f32 %v4799, %v4805
        %v4808 = vadd.f32 %v4800, %v4805
        %v4809 = vpack.c.bf16 %v4808, %v4807
        %v4810 = vld [vmem:[%s1434] sm:$0xff]
        %v4811 = vld [vmem:[%s1434 + $0x8] sm:$0xff]
        %v4812 = vld [vmem:[%s1434 + $0x10] sm:$0xff]
        %v4813 = vld [vmem:[%s1434 + $0x18] sm:$0xff]
        %v4814 = vld [vmem:[%s1434 + $0x20] sm:$0xff]
        %v4815 = vld [vmem:[%s1434 + $0x28] sm:$0xff]
        %v4816 = vld [vmem:[%s1434 + $0x30] sm:$0xff]
        %v4817 = vld [vmem:[%s1434 + $0x38] sm:$0xff]
        %v4818 = vld [vmem:[%s1434 + $0x40] sm:$0xff]
        %v4819 = vld [vmem:[%s1434 + $0x48] sm:$0xff]
        %v4820 = vld [vmem:[%s1434 + $0x50] sm:$0xff]
        %v4821 = vld [vmem:[%s1434 + $0x58] sm:$0xff]
        %v4822 = vld [vmem:[%s1434 + $0x60] sm:$0xff]
        %v4823 = vld [vmem:[%s1434 + $0x68] sm:$0xff]
        %v4824 = vld [vmem:[%s1434 + $0x70] sm:$0xff]
        %v4825 = vld [vmem:[%s1434 + $0x78] sm:$0xff]
        %v4826 = vld [vmem:[%s1434 + $0x80] sm:$0xff]
        %v4827 = vld [vmem:[%s1434 + $0x88] sm:$0xff]
        %v4828 = vld [vmem:[%s1434 + $0x90] sm:$0xff]
        %v4829 = vld [vmem:[%s1434 + $0x98] sm:$0xff]
        %v4830 = vld [vmem:[%s1434 + $0xa0] sm:$0xff]
        %v4831 = vld [vmem:[%s1434 + $0xa8] sm:$0xff]
        %v4832 = vld [vmem:[%s1434 + $0xb0] sm:$0xff]
        %v4833 = vld [vmem:[%s1434 + $0xb8] sm:$0xff]
        %v4834 = vld [vmem:[%s1434 + $0xc0] sm:$0xff]
        %v4835 = vld [vmem:[%s1434 + $0xc8] sm:$0xff]
        %v4836 = vld [vmem:[%s1434 + $0xd0] sm:$0xff]
        %v4837 = vld [vmem:[%s1434 + $0xd8] sm:$0xff]
        %v4838 = vld [vmem:[%s1434 + $0xe0] sm:$0xff]
        %v4839 = vld [vmem:[%s1434 + $0xe8] sm:$0xff]
        %v4840 = vld [vmem:[%s1434 + $0xf0] sm:$0xff]
        %v4841 = vld [vmem:[%s1434 + $0xf8] sm:$0xff]
        %v4842 = vld [vmem:[%s1658] sm:$0xf]
        %v4844 = vlaneseq
        %v4845 = vshrl.u32 %v4844, 7
        %v4846 = vsub.s32 0, %v4845
        %v4847 = vrot.slane %v4842, %v4846
        %v4848 = vlaneseq
        %v4849 = vshrl.u32 %v4848, 7
        %v4850 = vsub.s32 1, %v4849
        %v4851 = vrot.slane %v4842, %v4850
        %v4852 = vlaneseq
        %v4853 = vshrl.u32 %v4852, 7
        %v4854 = vsub.s32 2, %v4853
        %v4855 = vrot.slane %v4842, %v4854
        %v4856 = vlaneseq
        %v4857 = vshrl.u32 %v4856, 7
        %v4858 = vsub.s32 3, %v4857
        %v4859 = vrot.slane %v4842, %v4858
        %v4896 = vunpack.c.l.b16 %v4810
        %v4897 = vunpack.c.h.b16 %v4810
        %v4898 = vunpack.c.l.b16 %v4811
        %v4899 = vunpack.c.h.b16 %v4811
        %v4900 = vunpack.c.l.b16 %v4812
        %v4901 = vunpack.c.h.b16 %v4812
        %v4902 = vunpack.c.l.b16 %v4813
        %v4903 = vunpack.c.h.b16 %v4813
        %v4904 = vunpack.c.l.b16 %v4814
        %v4905 = vunpack.c.h.b16 %v4814
        %v4906 = vunpack.c.l.b16 %v4815
        %v4907 = vunpack.c.h.b16 %v4815
        %v4908 = vunpack.c.l.b16 %v4816
        %v4909 = vunpack.c.h.b16 %v4816
        %v4910 = vunpack.c.l.b16 %v4817
        %v4911 = vunpack.c.h.b16 %v4817
        %v4912 = vunpack.c.l.b16 %v4818
        %v4913 = vunpack.c.h.b16 %v4818
        %v4914 = vunpack.c.l.b16 %v4819
        %v4915 = vunpack.c.h.b16 %v4819
        %v4916 = vunpack.c.l.b16 %v4820
        %v4917 = vunpack.c.h.b16 %v4820
        %v4918 = vunpack.c.l.b16 %v4821
        %v4919 = vunpack.c.h.b16 %v4821
        %v4920 = vunpack.c.l.b16 %v4822
        %v4921 = vunpack.c.h.b16 %v4822
        %v4922 = vunpack.c.l.b16 %v4823
        %v4923 = vunpack.c.h.b16 %v4823
        %v4924 = vunpack.c.l.b16 %v4824
        %v4925 = vunpack.c.h.b16 %v4824
        %v4926 = vunpack.c.l.b16 %v4825
        %v4927 = vunpack.c.h.b16 %v4825
        %v4928 = vunpack.c.l.b16 %v4826
        %v4929 = vunpack.c.h.b16 %v4826
        %v4930 = vunpack.c.l.b16 %v4827
        %v4931 = vunpack.c.h.b16 %v4827
        %v4932 = vunpack.c.l.b16 %v4828
        %v4933 = vunpack.c.h.b16 %v4828
        %v4934 = vunpack.c.l.b16 %v4829
        %v4935 = vunpack.c.h.b16 %v4829
        %v4936 = vunpack.c.l.b16 %v4830
        %v4937 = vunpack.c.h.b16 %v4830
        %v4938 = vunpack.c.l.b16 %v4831
        %v4939 = vunpack.c.h.b16 %v4831
        %v4940 = vunpack.c.l.b16 %v4832
        %v4941 = vunpack.c.h.b16 %v4832
        %v4942 = vunpack.c.l.b16 %v4833
        %v4943 = vunpack.c.h.b16 %v4833
        %v4944 = vunpack.c.l.b16 %v4834
        %v4945 = vunpack.c.h.b16 %v4834
        %v4946 = vunpack.c.l.b16 %v4835
        %v4947 = vunpack.c.h.b16 %v4835
        %v4948 = vunpack.c.l.b16 %v4836
        %v4949 = vunpack.c.h.b16 %v4836
        %v4950 = vunpack.c.l.b16 %v4837
        %v4951 = vunpack.c.h.b16 %v4837
        %v4952 = vunpack.c.l.b16 %v4838
        %v4953 = vunpack.c.h.b16 %v4838
        %v4954 = vunpack.c.l.b16 %v4839
        %v4955 = vunpack.c.h.b16 %v4839
        %v4956 = vunpack.c.l.b16 %v4840
        %v4957 = vunpack.c.h.b16 %v4840
        %v4958 = vunpack.c.l.b16 %v4841
        %v4959 = vunpack.c.h.b16 %v4841
        %v4960 = vpack.c.b16 %v4900, %v4896
        %v4961 = vpack.c.b16 %v4901, %v4897
        %v4962 = vpack.c.b16 %v4902, %v4898
        %v4963 = vpack.c.b16 %v4903, %v4899
        %v4964 = vpack.c.b16 %v4908, %v4904
        %v4965 = vpack.c.b16 %v4909, %v4905
        %v4966 = vpack.c.b16 %v4910, %v4906
        %v4967 = vpack.c.b16 %v4911, %v4907
        %v4968 = vpack.c.b16 %v4916, %v4912
        %v4969 = vpack.c.b16 %v4917, %v4913
        %v4970 = vpack.c.b16 %v4918, %v4914
        %v4971 = vpack.c.b16 %v4919, %v4915
        %v4972 = vpack.c.b16 %v4924, %v4920
        %v4973 = vpack.c.b16 %v4925, %v4921
        %v4974 = vpack.c.b16 %v4926, %v4922
        %v4975 = vpack.c.b16 %v4927, %v4923
        %v4976 = vpack.c.b16 %v4932, %v4928
        %v4977 = vpack.c.b16 %v4933, %v4929
        %v4978 = vpack.c.b16 %v4934, %v4930
        %v4979 = vpack.c.b16 %v4935, %v4931
        %v4980 = vpack.c.b16 %v4940, %v4936
        %v4981 = vpack.c.b16 %v4941, %v4937
        %v4982 = vpack.c.b16 %v4942, %v4938
        %v4983 = vpack.c.b16 %v4943, %v4939
        %v4984 = vpack.c.b16 %v4948, %v4944
        %v4985 = vpack.c.b16 %v4949, %v4945
        %v4986 = vpack.c.b16 %v4950, %v4946
        %v4987 = vpack.c.b16 %v4951, %v4947
        %v4988 = vpack.c.b16 %v4956, %v4952
        %v4989 = vpack.c.b16 %v4957, %v4953
        %v4990 = vpack.c.b16 %v4958, %v4954
        %v4991 = vpack.c.b16 %v4959, %v4955
        %5024 = vmatprep.subr.bf16.mxu0 %v4961
        %5025 = vmatpush1.bf16.msra.mxu0 %v4960
        %5026 = vmatprep.subr.bf16.mxu0 %v4965
        %5027 = vmatpush1.bf16.msra.mxu0 %v4964
        %5028 = vmatprep.subr.bf16.mxu0 %v4969
        %5029 = vmatpush1.bf16.msra.mxu0 %v4968
        %5030 = vmatprep.subr.bf16.mxu0 %v4973
        %5031 = vmatpush1.bf16.msra.mxu0 %v4972
        %5032 = vmatprep.subr.bf16.mxu0 %v4977
        %5033 = vmatpush1.bf16.msra.mxu0 %v4976
        %5034 = vmatprep.subr.bf16.mxu0 %v4981
        %5035 = vmatpush1.bf16.msra.mxu0 %v4980
        %5036 = vmatprep.subr.bf16.mxu0 %v4985
        %5037 = vmatpush1.bf16.msra.mxu0 %v4984
        %5038 = vmatprep.subr.bf16.mxu0 %v4989
        %5039 = vmatpush1.bf16.msra.mxu0 %v4988
        %5040 = vmatprep.subr.bf16.mxu0 0
        %5041 = vmatpush1.bf16.msra.mxu0 0
        %5042 = vmatprep.subr.bf16.mxu0 0
        %5043 = vmatpush1.bf16.msra.mxu0 0
        %5044 = vmatprep.subr.bf16.mxu0 0
        %5045 = vmatpush1.bf16.msra.mxu0 0
        %5046 = vmatprep.subr.bf16.mxu0 0
        %5047 = vmatpush1.bf16.msra.mxu0 0
        %5048 = vmatprep.subr.bf16.mxu0 0
        %5049 = vmatpush1.bf16.msra.mxu0 0
        %5050 = vmatprep.subr.bf16.mxu0 0
        %5051 = vmatpush1.bf16.msra.mxu0 0
        %5052 = vmatprep.subr.bf16.mxu0 0
        %5053 = vmatpush1.bf16.msra.mxu0 0
        %5054 = vmatprep.subr.bf16.mxu0 0
        %5055 = vmatpush1.bf16.msra.mxu0 0
        %5056 = vmatprep.mubr.bf16.mxu0 0
        %5057 = vmatmul.mubr.bf16.gmra.mrb[0].mxu0 %v4809
        %v5058 = vpop.f32.mrb[0].mxu0
        %v5059 = vadd.f32 %v4847, %v5058
        %v5060 = vpop.f32.mrb[0].mxu0
        %v5061 = vadd.f32 %v4851, %v5060
        %v5062 = vpop.f32.mrb[0].mxu0
        %v5063 = vadd.f32 %v4847, %v5062
        %v5064 = vpop.f32.mrb[0].mxu0
        %v5065 = vadd.f32 %v4851, %v5064
        %5066 = vdwg.mxu0
        %5067 = vmatprep.subr.bf16.mxu0 %v4963
        %5068 = vmatpush1.bf16.msra.mxu0 %v4962
        %5069 = vmatprep.subr.bf16.mxu0 %v4967
        %5070 = vmatpush1.bf16.msra.mxu0 %v4966
        %5071 = vmatprep.subr.bf16.mxu0 %v4971
        %5072 = vmatpush1.bf16.msra.mxu0 %v4970
        %5073 = vmatprep.subr.bf16.mxu0 %v4975
        %5074 = vmatpush1.bf16.msra.mxu0 %v4974
        %5075 = vmatprep.subr.bf16.mxu0 %v4979
        %5076 = vmatpush1.bf16.msra.mxu0 %v4978
        %5077 = vmatprep.subr.bf16.mxu0 %v4983
        %5078 = vmatpush1.bf16.msra.mxu0 %v4982
        %5079 = vmatprep.subr.bf16.mxu0 %v4987
        %5080 = vmatpush1.bf16.msra.mxu0 %v4986
        %5081 = vmatprep.subr.bf16.mxu0 %v4991
        %5082 = vmatpush1.bf16.msra.mxu0 %v4990
        %5083 = vmatprep.subr.bf16.mxu0 0
        %5084 = vmatpush1.bf16.msra.mxu0 0
        %5085 = vmatprep.subr.bf16.mxu0 0
        %5086 = vmatpush1.bf16.msra.mxu0 0
        %5087 = vmatprep.subr.bf16.mxu0 0
        %5088 = vmatpush1.bf16.msra.mxu0 0
        %5089 = vmatprep.subr.bf16.mxu0 0
        %5090 = vmatpush1.bf16.msra.mxu0 0
        %5091 = vmatprep.subr.bf16.mxu0 0
        %5092 = vmatpush1.bf16.msra.mxu0 0
        %5093 = vmatprep.subr.bf16.mxu0 0
        %5094 = vmatpush1.bf16.msra.mxu0 0
        %5095 = vmatprep.subr.bf16.mxu0 0
        %5096 = vmatpush1.bf16.msra.mxu0 0
        %5097 = vmatprep.subr.bf16.mxu0 0
        %5098 = vmatpush1.bf16.msra.mxu0 0
        %5099 = vmatprep.mubr.bf16.mxu0 0
        %5100 = vmatmul.mubr.bf16.gmra.mrb[0].mxu0 %v4809
        %v5101 = vpop.f32.mrb[0].mxu0
        %v5102 = vadd.f32 %v4855, %v5101
        %v5103 = vpop.f32.mrb[0].mxu0
        %v5104 = vadd.f32 %v4859, %v5103
        %v5105 = vpop.f32.mrb[0].mxu0
        %v5106 = vadd.f32 %v4855, %v5105
        %v5107 = vpop.f32.mrb[0].mxu0
        %v5108 = vadd.f32 %v4859, %v5107
        %5109 = vdwg.mxu0
        %v5110 = vmax.f32 %v5059, 0.0
        %v5111 = vmax.f32 %v5061, 0.0
        %v5112 = vmax.f32 %v5102, 0.0
        %v5113 = vmax.f32 %v5104, 0.0
        %v5114 = vmax.f32 %v5063, 0.0
        %v5115 = vmax.f32 %v5065, 0.0
        %v5116 = vmax.f32 %v5106, 0.0
        %v5117 = vmax.f32 %v5108, 0.0
        %v5118 = vpack.c.bf16 %v5114, %v5110
        %v5119 = vpack.c.bf16 %v5115, %v5111
        %v5120 = vpack.c.bf16 %v5116, %v5112
        %v5121 = vpack.c.bf16 %v5117, %v5113
        %v5122 = vld [vmem:[%s1443] sm:$0xf]
        %v5123 = vld [vmem:[%s1443 + $0x4] sm:$0xf]
        %v5124 = vld [vmem:[%s1443 + $0x8] sm:$0xf]
        %v5125 = vld [vmem:[%s1443 + $0xc] sm:$0xf]
        %v5126 = vld [vmem:[%s1443 + $0x10] sm:$0xf]
        %v5127 = vld [vmem:[%s1443 + $0x14] sm:$0xf]
        %v5128 = vld [vmem:[%s1443 + $0x18] sm:$0xf]
        %v5129 = vld [vmem:[%s1443 + $0x1c] sm:$0xf]
        %v5130 = vld [vmem:[%s1443 + $0x20] sm:$0xf]
        %v5131 = vld [vmem:[%s1443 + $0x24] sm:$0xf]
        %v5132 = vld [vmem:[%s1443 + $0x28] sm:$0xf]
        %v5133 = vld [vmem:[%s1443 + $0x2c] sm:$0xf]
        %v5134 = vld [vmem:[%s1443 + $0x30] sm:$0xf]
        %v5135 = vld [vmem:[%s1443 + $0x34] sm:$0xf]
        %v5136 = vld [vmem:[%s1443 + $0x38] sm:$0xf]
        %v5137 = vld [vmem:[%s1443 + $0x3c] sm:$0xf]
        %v5138 = vld [vmem:[%s1443 + $0x40] sm:$0xf]
        %v5139 = vld [vmem:[%s1443 + $0x44] sm:$0xf]
        %v5140 = vld [vmem:[%s1443 + $0x48] sm:$0xf]
        %v5141 = vld [vmem:[%s1443 + $0x4c] sm:$0xf]
        %v5142 = vld [vmem:[%s1443 + $0x50] sm:$0xf]
        %v5143 = vld [vmem:[%s1443 + $0x54] sm:$0xf]
        %v5144 = vld [vmem:[%s1443 + $0x58] sm:$0xf]
        %v5145 = vld [vmem:[%s1443 + $0x5c] sm:$0xf]
        %v5146 = vld [vmem:[%s1443 + $0x60] sm:$0xf]
        %v5147 = vld [vmem:[%s1443 + $0x64] sm:$0xf]
        %v5148 = vld [vmem:[%s1443 + $0x68] sm:$0xf]
        %v5149 = vld [vmem:[%s1443 + $0x6c] sm:$0xf]
        %v5150 = vld [vmem:[%s1443 + $0x70] sm:$0xf]
        %v5151 = vld [vmem:[%s1443 + $0x74] sm:$0xf]
        %v5152 = vld [vmem:[%s1443 + $0x78] sm:$0xf]
        %v5153 = vld [vmem:[%s1443 + $0x7c] sm:$0xf]
        %v5154 = vld [vmem:[%s1443 + $0x80] sm:$0xf]
        %v5155 = vld [vmem:[%s1443 + $0x84] sm:$0xf]
        %v5156 = vld [vmem:[%s1443 + $0x88] sm:$0xf]
        %v5157 = vld [vmem:[%s1443 + $0x8c] sm:$0xf]
        %v5158 = vld [vmem:[%s1443 + $0x90] sm:$0xf]
        %v5159 = vld [vmem:[%s1443 + $0x94] sm:$0xf]
        %v5160 = vld [vmem:[%s1443 + $0x98] sm:$0xf]
        %v5161 = vld [vmem:[%s1443 + $0x9c] sm:$0xf]
        %v5162 = vld [vmem:[%s1443 + $0xa0] sm:$0xf]
        %v5163 = vld [vmem:[%s1443 + $0xa4] sm:$0xf]
        %v5164 = vld [vmem:[%s1443 + $0xa8] sm:$0xf]
        %v5165 = vld [vmem:[%s1443 + $0xac] sm:$0xf]
        %v5166 = vld [vmem:[%s1443 + $0xb0] sm:$0xf]
        %v5167 = vld [vmem:[%s1443 + $0xb4] sm:$0xf]
        %v5168 = vld [vmem:[%s1443 + $0xb8] sm:$0xf]
        %v5169 = vld [vmem:[%s1443 + $0xbc] sm:$0xf]
        %v5170 = vld [vmem:[%s1443 + $0xc0] sm:$0xf]
        %v5171 = vld [vmem:[%s1443 + $0xc4] sm:$0xf]
        %v5172 = vld [vmem:[%s1443 + $0xc8] sm:$0xf]
        %v5173 = vld [vmem:[%s1443 + $0xcc] sm:$0xf]
        %v5174 = vld [vmem:[%s1443 + $0xd0] sm:$0xf]
        %v5175 = vld [vmem:[%s1443 + $0xd4] sm:$0xf]
        %v5176 = vld [vmem:[%s1443 + $0xd8] sm:$0xf]
        %v5177 = vld [vmem:[%s1443 + $0xdc] sm:$0xf]
        %v5178 = vld [vmem:[%s1443 + $0xe0] sm:$0xf]
        %v5179 = vld [vmem:[%s1443 + $0xe4] sm:$0xf]
        %v5180 = vld [vmem:[%s1443 + $0xe8] sm:$0xf]
        %v5181 = vld [vmem:[%s1443 + $0xec] sm:$0xf]
        %v5182 = vld [vmem:[%s1443 + $0xf0] sm:$0xf]
        %v5183 = vld [vmem:[%s1443 + $0xf4] sm:$0xf]
        %v5184 = vld [vmem:[%s1443 + $0xf8] sm:$0xf]
        %v5185 = vld [vmem:[%s1443 + $0xfc] sm:$0xf]
        %v5250 = vunpack.c.l.b16 %v5122
        %v5251 = vunpack.c.l.b16 %v5123
        %v5252 = vunpack.c.l.b16 %v5124
        %v5253 = vunpack.c.l.b16 %v5125
        %v5254 = vunpack.c.l.b16 %v5126
        %v5255 = vunpack.c.l.b16 %v5127
        %v5256 = vunpack.c.l.b16 %v5128
        %v5257 = vunpack.c.l.b16 %v5129
        %v5258 = vunpack.c.l.b16 %v5130
        %v5259 = vunpack.c.l.b16 %v5131
        %v5260 = vunpack.c.l.b16 %v5132
        %v5261 = vunpack.c.l.b16 %v5133
        %v5262 = vunpack.c.l.b16 %v5134
        %v5263 = vunpack.c.l.b16 %v5135
        %v5264 = vunpack.c.l.b16 %v5136
        %v5265 = vunpack.c.l.b16 %v5137
        %v5266 = vunpack.c.l.b16 %v5138
        %v5267 = vunpack.c.l.b16 %v5139
        %v5268 = vunpack.c.l.b16 %v5140
        %v5269 = vunpack.c.l.b16 %v5141
        %v5270 = vunpack.c.l.b16 %v5142
        %v5271 = vunpack.c.l.b16 %v5143
        %v5272 = vunpack.c.l.b16 %v5144
        %v5273 = vunpack.c.l.b16 %v5145
        %v5274 = vunpack.c.l.b16 %v5146
        %v5275 = vunpack.c.l.b16 %v5147
        %v5276 = vunpack.c.l.b16 %v5148
        %v5277 = vunpack.c.l.b16 %v5149
        %v5278 = vunpack.c.l.b16 %v5150
        %v5279 = vunpack.c.l.b16 %v5151
        %v5280 = vunpack.c.l.b16 %v5152
        %v5281 = vunpack.c.l.b16 %v5153
        %v5282 = vunpack.c.l.b16 %v5154
        %v5283 = vunpack.c.l.b16 %v5155
        %v5284 = vunpack.c.l.b16 %v5156
        %v5285 = vunpack.c.l.b16 %v5157
        %v5286 = vunpack.c.l.b16 %v5158
        %v5287 = vunpack.c.l.b16 %v5159
        %v5288 = vunpack.c.l.b16 %v5160
        %v5289 = vunpack.c.l.b16 %v5161
        %v5290 = vunpack.c.l.b16 %v5162
        %v5291 = vunpack.c.l.b16 %v5163
        %v5292 = vunpack.c.l.b16 %v5164
        %v5293 = vunpack.c.l.b16 %v5165
        %v5294 = vunpack.c.l.b16 %v5166
        %v5295 = vunpack.c.l.b16 %v5167
        %v5296 = vunpack.c.l.b16 %v5168
        %v5297 = vunpack.c.l.b16 %v5169
        %v5298 = vunpack.c.l.b16 %v5170
        %v5299 = vunpack.c.l.b16 %v5171
        %v5300 = vunpack.c.l.b16 %v5172
        %v5301 = vunpack.c.l.b16 %v5173
        %v5302 = vunpack.c.l.b16 %v5174
        %v5303 = vunpack.c.l.b16 %v5175
        %v5304 = vunpack.c.l.b16 %v5176
        %v5305 = vunpack.c.l.b16 %v5177
        %v5306 = vunpack.c.l.b16 %v5178
        %v5307 = vunpack.c.l.b16 %v5179
        %v5308 = vunpack.c.l.b16 %v5180
        %v5309 = vunpack.c.l.b16 %v5181
        %v5310 = vunpack.c.l.b16 %v5182
        %v5311 = vunpack.c.l.b16 %v5183
        %v5312 = vunpack.c.l.b16 %v5184
        %v5313 = vunpack.c.l.b16 %v5185
        %v5314 = vpack.c.b16 %v5251, %v5250
        %v5315 = vpack.c.b16 %v5253, %v5252
        %v5316 = vpack.c.b16 %v5255, %v5254
        %v5317 = vpack.c.b16 %v5257, %v5256
        %v5318 = vpack.c.b16 %v5259, %v5258
        %v5319 = vpack.c.b16 %v5261, %v5260
        %v5320 = vpack.c.b16 %v5263, %v5262
        %v5321 = vpack.c.b16 %v5265, %v5264
        %v5322 = vpack.c.b16 %v5267, %v5266
        %v5323 = vpack.c.b16 %v5269, %v5268
        %v5324 = vpack.c.b16 %v5271, %v5270
        %v5325 = vpack.c.b16 %v5273, %v5272
        %v5326 = vpack.c.b16 %v5275, %v5274
        %v5327 = vpack.c.b16 %v5277, %v5276
        %v5328 = vpack.c.b16 %v5279, %v5278
        %v5329 = vpack.c.b16 %v5281, %v5280
        %v5330 = vpack.c.b16 %v5283, %v5282
        %v5331 = vpack.c.b16 %v5285, %v5284
        %v5332 = vpack.c.b16 %v5287, %v5286
        %v5333 = vpack.c.b16 %v5289, %v5288
        %v5334 = vpack.c.b16 %v5291, %v5290
        %v5335 = vpack.c.b16 %v5293, %v5292
        %v5336 = vpack.c.b16 %v5295, %v5294
        %v5337 = vpack.c.b16 %v5297, %v5296
        %v5338 = vpack.c.b16 %v5299, %v5298
        %v5339 = vpack.c.b16 %v5301, %v5300
        %v5340 = vpack.c.b16 %v5303, %v5302
        %v5341 = vpack.c.b16 %v5305, %v5304
        %v5342 = vpack.c.b16 %v5307, %v5306
        %v5343 = vpack.c.b16 %v5309, %v5308
        %v5344 = vpack.c.b16 %v5311, %v5310
        %v5345 = vpack.c.b16 %v5313, %v5312
        %5378 = vmatprep.subr.bf16.mxu0 0
        %5379 = vmatpush1.bf16.msra.mxu0 %v5314
        %5380 = vmatprep.subr.bf16.mxu0 0
        %5381 = vmatpush1.bf16.msra.mxu0 %v5315
        %5382 = vmatprep.subr.bf16.mxu0 0
        %5383 = vmatpush1.bf16.msra.mxu0 %v5316
        %5384 = vmatprep.subr.bf16.mxu0 0
        %5385 = vmatpush1.bf16.msra.mxu0 %v5317
        %5386 = vmatprep.subr.bf16.mxu0 0
        %5387 = vmatpush1.bf16.msra.mxu0 %v5318
        %5388 = vmatprep.subr.bf16.mxu0 0
        %5389 = vmatpush1.bf16.msra.mxu0 %v5319
        %5390 = vmatprep.subr.bf16.mxu0 0
        %5391 = vmatpush1.bf16.msra.mxu0 %v5320
        %5392 = vmatprep.subr.bf16.mxu0 0
        %5393 = vmatpush1.bf16.msra.mxu0 %v5321
        %5394 = vmatprep.subr.bf16.mxu0 0
        %5395 = vmatpush1.bf16.msra.mxu0 %v5322
        %5396 = vmatprep.subr.bf16.mxu0 0
        %5397 = vmatpush1.bf16.msra.mxu0 %v5323
        %5398 = vmatprep.subr.bf16.mxu0 0
        %5399 = vmatpush1.bf16.msra.mxu0 %v5324
        %5400 = vmatprep.subr.bf16.mxu0 0
        %5401 = vmatpush1.bf16.msra.mxu0 %v5325
        %5402 = vmatprep.subr.bf16.mxu0 0
        %5403 = vmatpush1.bf16.msra.mxu0 %v5326
        %5404 = vmatprep.subr.bf16.mxu0 0
        %5405 = vmatpush1.bf16.msra.mxu0 %v5327
        %5406 = vmatprep.subr.bf16.mxu0 0
        %5407 = vmatpush1.bf16.msra.mxu0 %v5328
        %5408 = vmatprep.subr.bf16.mxu0 0
        %5409 = vmatpush1.bf16.msra.mxu0 %v5329
        %5410 = vmatprep.mubr.bf16.mxu0 %v5119
        %5411 = vmatmul.mubr.bf16.gmra.mrb[0].mxu0 %v5118
        %v5412 = vpop.f32.mrb[0].mxu0
        %v5413 = vadd.f32 0.0, %v5412
        %v5414 = vpop.f32.mrb[0].mxu0
        %v5415 = vpop.f32.mrb[0].mxu0
        %v5416 = vadd.f32 0.0, %v5415
        %v5417 = vpop.f32.mrb[0].mxu0
        %5418 = vdwg.mxu0
        %5419 = vmatprep.subr.bf16.mxu0 0
        %5420 = vmatpush1.bf16.msra.mxu0 %v5330
        %5421 = vmatprep.subr.bf16.mxu0 0
        %5422 = vmatpush1.bf16.msra.mxu0 %v5331
        %5423 = vmatprep.subr.bf16.mxu0 0
        %5424 = vmatpush1.bf16.msra.mxu0 %v5332
        %5425 = vmatprep.subr.bf16.mxu0 0
        %5426 = vmatpush1.bf16.msra.mxu0 %v5333
        %5427 = vmatprep.subr.bf16.mxu0 0
        %5428 = vmatpush1.bf16.msra.mxu0 %v5334
        %5429 = vmatprep.subr.bf16.mxu0 0
        %5430 = vmatpush1.bf16.msra.mxu0 %v5335
        %5431 = vmatprep.subr.bf16.mxu0 0
        %5432 = vmatpush1.bf16.msra.mxu0 %v5336
        %5433 = vmatprep.subr.bf16.mxu0 0
        %5434 = vmatpush1.bf16.msra.mxu0 %v5337
        %5435 = vmatprep.subr.bf16.mxu0 0
        %5436 = vmatpush1.bf16.msra.mxu0 %v5338
        %5437 = vmatprep.subr.bf16.mxu0 0
        %5438 = vmatpush1.bf16.msra.mxu0 %v5339
        %5439 = vmatprep.subr.bf16.mxu0 0
        %5440 = vmatpush1.bf16.msra.mxu0 %v5340
        %5441 = vmatprep.subr.bf16.mxu0 0
        %5442 = vmatpush1.bf16.msra.mxu0 %v5341
        %5443 = vmatprep.subr.bf16.mxu0 0
        %5444 = vmatpush1.bf16.msra.mxu0 %v5342
        %5445 = vmatprep.subr.bf16.mxu0 0
        %5446 = vmatpush1.bf16.msra.mxu0 %v5343
        %5447 = vmatprep.subr.bf16.mxu0 0
        %5448 = vmatpush1.bf16.msra.mxu0 %v5344
        %5449 = vmatprep.subr.bf16.mxu0 0
        %5450 = vmatpush1.bf16.msra.mxu0 %v5345
        %5451 = vmatprep.mubr.bf16.mxu0 %v5121
        %5452 = vmatmul.mubr.bf16.gmra.mrb[0].mxu0 %v5120
        %v5453 = vpop.f32.mrb[0].mxu0
        %v5454 = vadd.f32 %v5413, %v5453
        %v5455 = vpop.f32.mrb[0].mxu0
        %v5456 = vpop.f32.mrb[0].mxu0
        %v5457 = vadd.f32 %v5416, %v5456
        %v5458 = vpop.f32.mrb[0].mxu0
        %5459 = vdwg.mxu0
        %v5460 = vadd.f32 %v4753, %v5454
        %v5461 = vadd.f32 %v4754, %v5457
        %v5462 = vld [vmem:[%s1661] sm:$0x1]
        %v5464 = vlaneseq
        %v5465 = vshrl.u32 %v5464, 7
        %v5466 = vsub.s32 0, %v5465
        %v5467 = vrot.slane %v5462, %v5466
        %v5469 = vadd.f32 %v5460, %v5467
        %v5470 = vadd.f32 %v5461, %v5467
        %5471 = vst [vmem:[#allocation2] sm:$0xff] %v5469
        %5472 = vst [vmem:[#allocation2 + $0x8] sm:$0xff] %v5470
        %p5473 = scmp.eq.s32.totalorder %s102, 1
        // Predicated region
        $region209: #{tpu_custom_call.1} parent=147 // pred_check
          %p5474 = pneg %p5473
        $region210: #{tpu_custom_call.1} parent=147 // pred_check_branch
          %5476 = sbr.rel (%p5474) target = $region212
        $region211: #{tpu_custom_call.1} parent=147 // pred_region
          %v5477 = vld [vmem:[%s61] sm:$0x1]
          %v5478 = vld [vmem:[%s63] sm:$0x1]
          %5479 = vadd.xlane.f32.xlu0 %v5469
          %v5480 = vpop.xlane.xlu0 %5479
          %5481 = vadd.xlane.f32.xlu0 %v5470
          %v5482 = vpop.xlane.xlu0 %5481
          %v5483 = vmul.f32 %v5480, %v1685
          %v5484 = vmul.f32 %v5482, %v1685
          %v5485 = vsub.f32 %v5469, %v5483
          %v5486 = vsub.f32 %v5470, %v5484
          %v5487 = vmul.f32 %v5485, %v5485
          %v5488 = vmul.f32 %v5486, %v5486
          %5489 = vadd.xlane.f32.xlu0 %v5487
          %v5490 = vpop.xlane.xlu0 %5489
          %5491 = vadd.xlane.f32.xlu0 %v5488
          %v5492 = vpop.xlane.xlu0 %5491
          %v5493 = vmul.f32 %v5490, 0.007874016
          %v5494 = vmul.f32 %v5492, 0.007874016
          %v5495 = vrsqrt.pop %v5493
          %v5496 = vmul.f32 %v5493, %v5495
          %vm5497 = vcmp.eq.f32.partialorder %v5493, inf
          %v5498 = vsel %vm5497, %v5493, %v5496
          %vm5499 = vcmp.eq.f32.partialorder %v5493, 0.0
          %v5500 = vand.u32 %v5493, 2147483648
          %v5501 = vsel %vm5499, %v5500, %v5498
          %v5502 = vrsqrt.pop %v5494
          %v5503 = vmul.f32 %v5494, %v5502
          %vm5504 = vcmp.eq.f32.partialorder %v5494, inf
          %v5505 = vsel %vm5504, %v5494, %v5503
          %vm5506 = vcmp.eq.f32.partialorder %v5494, 0.0
          %v5507 = vand.u32 %v5494, 2147483648
          %v5508 = vsel %vm5506, %v5507, %v5505
          %v5509 = vadd.f32 %v5501, 1e-06
          %v5510 = vadd.f32 %v5508, 1e-06
          %v5511 = vrcp.pop %v5509
          %v5512 = vrcp.pop %v5510
          %v5513 = vmul.f32 %v5485, %v5511
          %v5514 = vmul.f32 %v5486, %v5512
          %v5516 = vlaneseq
          %v5517 = vshrl.u32 %v5516, 7
          %v5518 = vsub.s32 0, %v5517
          %v5519 = vrot.slane %v5477, %v5518
          %v5521 = vmul.f32 %v5519, %v5513
          %v5522 = vmul.f32 %v5519, %v5514
          %v5524 = vlaneseq
          %v5525 = vshrl.u32 %v5524, 7
          %v5526 = vsub.s32 0, %v5525
          %v5527 = vrot.slane %v5478, %v5526
          %v5529 = vadd.f32 %v5521, %v5527
          %v5530 = vadd.f32 %v5522, %v5527
          %5531 = vst [vmem:[#allocation26] sm:$0xff] %v5529
          %5532 = vst [vmem:[#allocation26 + $0x8] sm:$0xff] %v5530
        $region212: #{tpu_custom_call.1} parent=147 // pred_fallthru
          _
        // Predicated region
        $region213: #{tpu_custom_call.1} parent=147 // pred_check
          %p5533 = pneg %p939
        $region214: #{tpu_custom_call.1} parent=147 // pred_check_branch
          %5535 = sbr.rel (%p5533) target = $region216
        $region215: #{tpu_custom_call.1} parent=147 // pred_region
          %s5536 = smul.u32 2, %s101
          %s5538 = ssub.s32 256, 256
          %5539 = vsyncadd [#allocation5], %s5538
          %s5540 = smul.addr %s5536, 128
          %s5541 = scalar_lea.hbm %s65, %s5540
          %s5542 = sshll.u32 [#allocation26], 4
          %s5543 = int_to_ptr.vmem [resolvable:$true] %s5542
          %5548 = dma.vmem_to_hbm [thread:$0]  %s5543, 256, %s5541, [#allocation5], 128, 128, 8
        $region216: #{tpu_custom_call.1} parent=147 // pred_fallthru
          _
        // Predicated region
        $region217: #{tpu_custom_call.1} parent=147 // pred_check
          %p5549 = pneg %p939
        $region218: #{tpu_custom_call.1} parent=147 // pred_check_branch
          %5551 = sbr.rel (%p5549) target = $region220
        $region219: #{tpu_custom_call.1} parent=147 // pred_region
          %5552 = dma.done [#allocation5], 256
        $region220: #{tpu_custom_call.1} parent=147 // pred_fallthru
          _
      $region148: #{tpu_custom_call.1} parent=5 // pred_fallthru
        _
      %p5553 = scmp.le.s32.totalorder 2, %s92
      // Predicated region
      $region221: #{tpu_custom_call.1} parent=5 // pred_check
        %p5554 = pneg %p5553
      $region222: #{tpu_custom_call.1} parent=5 // pred_check_branch
        %5556 = sbr.rel (%p5554) target = $region224
      $region223: #{tpu_custom_call.1} parent=5 // pred_region
        %s5557 = ssub.s32 %s92, 2
      $region224: #{tpu_custom_call.1} parent=5 // pred_fallthru
        _
    $region6: #{tpu_custom_call.1} parent=1 // loop_footer
      %s96 = sadd.s32 1, %s92
    $region7: #{tpu_custom_call.1} parent=1 // loop_footer_branch
      %91 = sbr.rel target = $region3
    $region8: #{tpu_custom_call.1} parent=1 // loop_exit
      _
    %5558 = vsyncpa [#allocation4], 1
    %s5559 = scalar_lea.sflag [#allocation4], 1
    %5560 = vsyncpa %s5559, 1
    %5561 = vsyncpa [#allocation7], 1
    %5562 = vsyncpa [#allocation10], 1
    %s5563 = scalar_lea.sflag [#allocation10], 1
    %5564 = vsyncpa %s5563, 1
    %5565 = vsyncpa [#allocation13], 1
    %s5566 = scalar_lea.sflag [#allocation13], 1
    %5567 = vsyncpa %s5566, 1
    %5568 = vsyncpa [#allocation16], 1
    %s5569 = scalar_lea.sflag [#allocation16], 1
    %5570 = vsyncpa %s5569, 1
    %5571 = vsyncpa [#allocation19], 1
    %s5572 = scalar_lea.sflag [#allocation19], 1
    %5573 = vsyncpa %s5572, 1
    %5574 = vsyncpa [#allocation22], 1
    %s5575 = scalar_lea.sflag [#allocation22], 1
    %5576 = vsyncpa %s5575, 1
    %5577 = vsyncpa [#allocation25], 1
    %s5578 = scalar_lea.sflag [#allocation25], 1
    %5579 = vsyncpa %s5578, 1
    %5580 = vsyncpa [#allocation5], 1
    %s5581 = scalar_lea.sflag [#allocation5], 1
    %5582 = vsyncpa %s5581, 1

</llo_original>
